<compile_context>
chip_gen: v7x
topology: tpu7x:2x2x1
jax: 0.10.0
libtpu: 0.0.40
codegen_flags: <defaults>
</compile_context>

<pallas_src>
import functools

import jax
import jax.numpy as jnp
from jax.experimental import pallas as pl
from jax.experimental.pallas import tpu as pltpu


def _position_encode_kernel(xyz_ref,    # (N, 3)   all-point coordinates (per batch)
                            feat_ref,   # (N, C)   all-point features    (per batch)
                            xx_ref,     # (1, N)   per-point |feat|^2
                            out_ref,    # (TN, K*10) output row tile
                            *, k, d, tn):
    n = feat_ref.shape[0]
    row0 = pl.multiple_of(pl.program_id(1) * tn, tn)

    a_feat = feat_ref[...]                          # (N, C)
    a_xyz = xyz_ref[...]                            # (N, 3)
    q_feat = feat_ref[pl.ds(row0, tn), :]           # (TN, C) query rows (already in VMEM)
    q_xyz = xyz_ref[pl.ds(row0, tn), :]             # (TN, 3)
    xx = xx_ref[...]                                # (1, N)

    # Ordering score: ||x_j||^2 - 2<q_i, x_j>.  The per-row constant ||q_i||^2 does
    # not change the per-row ordering, so it is dropped (same neighbours as
    # torch.topk(-adj)).  The -2 is folded into the small (TN,C) operand.
    score = xx + jax.lax.dot_general(
        q_feat * jnp.float32(-2.0), a_feat,
        (((1,), (1,)), ((), ())), preferred_element_type=jnp.float32)     # (TN, N)

    lane_f = jax.lax.broadcasted_iota(jnp.int32, (tn, n), 1).astype(jnp.float32)
    comp = jax.lax.broadcasted_iota(jnp.int32, (tn, 3), 1)                # xyz component id
    out_col = jax.lax.broadcasted_iota(jnp.int32, (tn, k * 10), 1)
    col_mod = out_col % 10
    big = jnp.float32(jnp.finfo(jnp.float32).max)
    n_f = jnp.float32(n)

    def comp_col(v3, ci):                            # (TN,3) -> (TN,1) component ci
        return jnp.sum(jnp.where(comp == ci, v3, 0.0), axis=-1, keepdims=True)

    q_x = comp_col(q_xyz, 0)
    q_y = comp_col(q_xyz, 1)
    q_z = comp_col(q_xyz, 2)

    # xyz_tile columns (base+4..6) are identical for every neighbour: place once.
    acc = jnp.where(col_mod == 4, q_x,
          jnp.where(col_mod == 5, q_y,
          jnp.where(col_mod == 6, q_z, jnp.float32(0.0))))

    def place(a, col, val):                          # val: (TN, 1)
        return jnp.where(out_col == col, val, a)

    # Dilated kNN == torch.topk(-adj, k*d).indices[:, :, ::d]:
    # k*d unrolled iterative arg-mins; keep every d-th selection.
    vals = score
    for j in range(k * d):
        m = jnp.min(vals, axis=-1, keepdims=True)                         # (TN,1) row min
        first = jnp.min(jnp.where(vals == m, lane_f, n_f),
                        axis=-1, keepdims=True)                           # first arg-min
        sel = lane_f == first                                             # (TN,N) one-hot
        if j % d == 0:
            # Gather the selected neighbour's xyz with one MXU matmul.
            nb = jax.lax.dot_general(
                sel.astype(jnp.float32), a_xyz,
                (((1,), (0,)), ((), ())), preferred_element_type=jnp.float32)   # (TN,3)
            nb_x = comp_col(nb, 0)
            nb_y = comp_col(nb, 1)
            nb_z = comp_col(nb, 2)
            rel_x = q_x - nb_x
            rel_y = q_y - nb_y
            rel_z = q_z - nb_z
            dis = jnp.sqrt(rel_x * rel_x + rel_y * rel_y + rel_z * rel_z)
            base = (j // d) * 10
            acc = place(acc, base + 0, dis)
            acc = place(acc, base + 1, rel_x)
            acc = place(acc, base + 2, rel_y)
            acc = place(acc, base + 3, rel_z)
            acc = place(acc, base + 7, nb_x)
            acc = place(acc, base + 8, nb_y)
            acc = place(acc, base + 9, nb_z)
        if j + 1 < k * d:
            vals = jnp.where(sel, big, vals)                              # drop the taken one

    out_ref[...] = acc                                                    # dense block store


def position_encode_forward(new_xyz, new_points, *, k, d=1, tn=128):
    """Pallas TPU forward of PSegNet position_encode.

    new_xyz:    [B, N, 3] coordinates; new_points: [B, N, C] features.
    Returns [B, N, k, 10] = cat([rel_dis, rel_xyz, xyz_tile, neighbor_xyz], -1).
    """
    b, n, _ = new_xyz.shape
    c = new_points.shape[-1]
    assert k * d <= n, "need k*d <= N neighbours"
    tn = min(tn, n)
    assert n % tn == 0 and (tn % 8 == 0 or tn == n), "row tile must divide N"

    xyz = new_xyz.astype(jnp.float32)
    feat = new_points.astype(jnp.float32)
    # Only O(B*N)-sized helper array prepared outside the kernel.
    xx = jnp.sum(feat * feat, axis=-1)[:, None, :]                        # (B, 1, N)

    kernel = functools.partial(_position_encode_kernel, k=k, d=d, tn=tn)

    out = pl.pallas_call(
        kernel,
        out_shape=jax.ShapeDtypeStruct((b, n, k * 10), jnp.float32),
        grid_spec=pltpu.PrefetchScalarGridSpec(
            num_scalar_prefetch=0,
            grid=(b, n // tn),
            in_specs=[
                # Full per-batch blocks, grid-invariant along the row-tile axis
                # (no re-DMA across row tiles of the same batch).
                pl.BlockSpec((None, n, 3), lambda bi, i: (bi, 0, 0)),     # xyz
                pl.BlockSpec((None, n, c), lambda bi, i: (bi, 0, 0)),     # features
                pl.BlockSpec((None, 1, n), lambda bi, i: (bi, 0, 0)),     # |feat|^2
            ],
            out_specs=pl.BlockSpec((None, tn, k * 10), lambda bi, i: (bi, i, 0)),
        ),
        compiler_params=pltpu.CompilerParams(
            dimension_semantics=("parallel", "parallel")),
    )(xyz, feat, xx)

    # [B, N, k*10] -> [B, N, k, 10] (row-major, matches the torch.cat layout).
    return out.reshape(b, n, k, 10)


if __name__ == "__main__":
    B, N, C = 2, 128, 16
    K, D = 8, 2          # dilated kNN: search the 16 nearest, keep every 2nd

    key = jax.random.PRNGKey(0)
    kxyz, kfeat = jax.random.split(key)
    new_xyz = jax.random.normal(kxyz, (B, N, 3), jnp.float32)
    new_points = jax.random.normal(kfeat, (B, N, C), jnp.float32)

    out = position_encode_forward(new_xyz, new_points, k=K, d=D, tn=128)
    out = jax.block_until_ready(out)

    assert out.shape == (B, N, K, 10), out.shape
    assert bool(jnp.all(jnp.isfinite(out)))

    rel_dis = out[..., 0]
    rel_xyz = out[..., 1:4]
    xyz_tile = out[..., 4:7]
    neigh_xyz = out[..., 7:10]

    # relative_pos_encoding invariants (deterministic, independent of kNN ties):
    assert bool(jnp.allclose(
        xyz_tile, jnp.broadcast_to(new_xyz[:, :, None, :], xyz_tile.shape)))
    assert bool(jnp.allclose(rel_xyz, xyz_tile - neigh_xyz))
    assert bool(jnp.allclose(rel_dis, jnp.linalg.norm(rel_xyz, axis=-1), atol=1e-4))
    # The nearest neighbour of every point in feature space is itself -> slot 0
    # has zero relative offset/distance and neighbor_xyz == new_xyz.
    assert bool(jnp.allclose(out[..., 0, :4], 0.0, atol=1e-5))
    assert bool(jnp.allclose(neigh_xyz[..., 0, :], new_xyz, atol=1e-5))

    print("KERNEL_OK")
</pallas_src>

<mosaic_0001>
module attributes {stable_mosaic.version = 11 : i64} {
  func.func @_position_encode_kernel(%arg0: i32, %arg1: i32, %arg2: memref<1x128x3xf32, #tpu.memory_space<vmem>>, %arg3: memref<1x128x16xf32, #tpu.memory_space<vmem>>, %arg4: memref<1x1x128xf32, #tpu.memory_space<vmem>>, %arg5: memref<1x128x80xf32, #tpu.memory_space<vmem>>) attributes {dimension_semantics = [#tpu.dimension_semantics<parallel>, #tpu.dimension_semantics<parallel>], iteration_bounds = array<i64: 2, 1>, scalar_prefetch = 0 : i64, scratch_operands = 0 : i64, tpu.core_type = #tpu.core_type<tc>, window_params = [{transform_indices = @transform_0, window_bounds = array<i64: 1, 128, 3>}, {transform_indices = @transform_1, window_bounds = array<i64: 1, 128, 16>}, {transform_indices = @transform_2, window_bounds = array<i64: 1, 1, 128>}, {transform_indices = @transform_3, window_bounds = array<i64: 1, 128, 80>}]} {
    %c128_i32 = arith.constant 128 : i32
    %0 = arith.muli %arg1, %c128_i32 : i32
    %1 = tpu.assume_multiple %0, 128 : i32
    %c0 = arith.constant 0 : index
    %c0_0 = arith.constant 0 : index
    %c0_1 = arith.constant 0 : index
    %2 = vector.load %arg3[%c0, %c0_0, %c0_1] : memref<1x128x16xf32, #tpu.memory_space<vmem>>, vector<1x128x16xf32>
    %3 = vector.shape_cast %2 : vector<1x128x16xf32> to vector<128x16xf32>
    %c0_2 = arith.constant 0 : index
    %c0_3 = arith.constant 0 : index
    %c0_4 = arith.constant 0 : index
    %4 = vector.load %arg2[%c0_2, %c0_3, %c0_4] : memref<1x128x3xf32, #tpu.memory_space<vmem>>, vector<1x128x3xf32>
    %5 = vector.shape_cast %4 : vector<1x128x3xf32> to vector<128x3xf32>
    %c0_5 = arith.constant 0 : index
    %6 = arith.index_cast %1 : i32 to index
    %c0_6 = arith.constant 0 : index
    %7 = vector.load %arg3[%c0_5, %6, %c0_6] : memref<1x128x16xf32, #tpu.memory_space<vmem>>, vector<1x128x16xf32>
    %8 = vector.shape_cast %7 : vector<1x128x16xf32> to vector<128x16xf32>
    %c0_7 = arith.constant 0 : index
    %9 = arith.index_cast %1 : i32 to index
    %c0_8 = arith.constant 0 : index
    %10 = vector.load %arg2[%c0_7, %9, %c0_8] : memref<1x128x3xf32, #tpu.memory_space<vmem>>, vector<1x128x3xf32>
    %11 = vector.shape_cast %10 : vector<1x128x3xf32> to vector<128x3xf32>
    %c0_9 = arith.constant 0 : index
    %c0_10 = arith.constant 0 : index
    %c0_11 = arith.constant 0 : index
    %12 = vector.load %arg4[%c0_9, %c0_10, %c0_11] : memref<1x1x128xf32, #tpu.memory_space<vmem>>, vector<1x1x128xf32>
    %13 = vector.shape_cast %12 : vector<1x1x128xf32> to vector<1x128xf32>
    %cst = arith.constant -2.000000e+00 : f32
    %14 = vector.broadcast %cst : f32 to vector<128x16xf32>
    %15 = arith.mulf %8, %14 : vector<128x16xf32>
    %cst_12 = arith.constant dense<0.000000e+00> : vector<128x128xf32>
    %16 = tpu.matmul %15, %3, %cst_12 {dimension_numbers = #tpu.dot_dimension_numbers<[1], [1], [0], [0], [0, 0, 1, 0], [], []>} : vector<128x16xf32>, vector<128x16xf32>, vector<128x128xf32> -> vector<128x128xf32>
    %17 = vector.broadcast %13 : vector<1x128xf32> to vector<128x128xf32>
    %18 = arith.addf %17, %16 : vector<128x128xf32>
    %19 = tpu.iota {dimensions = array<i32: 1>} : vector<128x128xi32>
    %20 = arith.sitofp %19 : vector<128x128xi32> to vector<128x128xf32>
    %21 = tpu.iota {dimensions = array<i32: 1>} : vector<128x3xi32>
    %22 = tpu.iota {dimensions = array<i32: 1>} : vector<128x80xi32>
    %c10_i32 = arith.constant 10 : i32
    %c0_i32 = arith.constant 0 : i32
    %23 = arith.cmpi eq, %c10_i32, %c0_i32 : i32
    %c1_i32 = arith.constant 1 : i32
    %24 = arith.select %23, %c1_i32, %c10_i32 : i32
    %25 = vector.broadcast %24 : i32 to vector<128x80xi32>
    %26 = arith.remsi %22, %25 : vector<128x80xi32>
    %c0_i32_13 = arith.constant 0 : i32
    %27 = vector.broadcast %c0_i32_13 : i32 to vector<128x80xi32>
    %28 = arith.cmpi ne, %26, %27 : vector<128x80xi32>
    %c0_i32_14 = arith.constant 0 : i32
    %29 = vector.broadcast %c0_i32_14 : i32 to vector<128x80xi32>
    %30 = arith.cmpi slt, %26, %29 : vector<128x80xi32>
    %c0_i32_15 = arith.constant 0 : i32
    %31 = arith.cmpi slt, %24, %c0_i32_15 : i32
    %32 = vector.broadcast %31 : i1 to vector<128x80xi1>
    %33 = vector.broadcast %32 : vector<128x80xi1> to vector<128x80xi1>
    %34 = arith.xori %30, %33 : vector<128x80xi1>
    %35 = arith.andi %34, %28 : vector<128x80xi1>
    %36 = vector.broadcast %24 : i32 to vector<128x80xi32>
    %37 = arith.addi %26, %36 : vector<128x80xi32>
    %38 = arith.select %35, %37, %26 : vector<128x80xi1>, vector<128x80xi32>
    %c0_i32_16 = arith.constant 0 : i32
    %39 = vector.broadcast %c0_i32_16 : i32 to vector<128x3xi32>
    %40 = arith.cmpi eq, %21, %39 : vector<128x3xi32>
    %cst_17 = arith.constant 0.000000e+00 : f32
    %41 = vector.broadcast %cst_17 : f32 to vector<128x3xf32>
    %42 = arith.select %40, %11, %41 : vector<128x3xi1>, vector<128x3xf32>
    %cst_18 = arith.constant dense<0.000000e+00> : vector<128xf32>
    %43 = vector.multi_reduction <add>, %42, %cst_18 [1] : vector<128x3xf32> to vector<128xf32>
    %44 = vector.shape_cast %43 : vector<128xf32> to vector<128x1xf32>
    %c1_i32_19 = arith.constant 1 : i32
    %45 = vector.broadcast %c1_i32_19 : i32 to vector<128x3xi32>
    %46 = arith.cmpi eq, %21, %45 : vector<128x3xi32>
    %cst_20 = arith.constant 0.000000e+00 : f32
    %47 = vector.broadcast %cst_20 : f32 to vector<128x3xf32>
    %48 = arith.select %46, %11, %47 : vector<128x3xi1>, vector<128x3xf32>
    %cst_21 = arith.constant dense<0.000000e+00> : vector<128xf32>
    %49 = vector.multi_reduction <add>, %48, %cst_21 [1] : vector<128x3xf32> to vector<128xf32>
    %50 = vector.shape_cast %49 : vector<128xf32> to vector<128x1xf32>
    %c2_i32 = arith.constant 2 : i32
    %51 = vector.broadcast %c2_i32 : i32 to vector<128x3xi32>
    %52 = arith.cmpi eq, %21, %51 : vector<128x3xi32>
    %cst_22 = arith.constant 0.000000e+00 : f32
    %53 = vector.broadcast %cst_22 : f32 to vector<128x3xf32>
    %54 = arith.select %52, %11, %53 : vector<128x3xi1>, vector<128x3xf32>
    %cst_23 = arith.constant dense<0.000000e+00> : vector<128xf32>
    %55 = vector.multi_reduction <add>, %54, %cst_23 [1] : vector<128x3xf32> to vector<128xf32>
    %56 = vector.shape_cast %55 : vector<128xf32> to vector<128x1xf32>
    %c4_i32 = arith.constant 4 : i32
    %57 = vector.broadcast %c4_i32 : i32 to vector<128x80xi32>
    %58 = arith.cmpi eq, %38, %57 : vector<128x80xi32>
    %c5_i32 = arith.constant 5 : i32
    %59 = vector.broadcast %c5_i32 : i32 to vector<128x80xi32>
    %60 = arith.cmpi eq, %38, %59 : vector<128x80xi32>
    %c6_i32 = arith.constant 6 : i32
    %61 = vector.broadcast %c6_i32 : i32 to vector<128x80xi32>
    %62 = arith.cmpi eq, %38, %61 : vector<128x80xi32>
    %cst_24 = arith.constant 0.000000e+00 : f32
    %63 = vector.shape_cast %56 : vector<128x1xf32> to vector<128x1xf32>
    %64 = vector.broadcast %63 : vector<128x1xf32> to vector<128x80xf32>
    %65 = vector.broadcast %cst_24 : f32 to vector<128x80xf32>
    %66 = arith.select %62, %64, %65 : vector<128x80xi1>, vector<128x80xf32>
    %67 = vector.shape_cast %50 : vector<128x1xf32> to vector<128x1xf32>
    %68 = vector.broadcast %67 : vector<128x1xf32> to vector<128x80xf32>
    %69 = arith.select %60, %68, %66 : vector<128x80xi1>, vector<128x80xf32>
    %70 = vector.shape_cast %44 : vector<128x1xf32> to vector<128x1xf32>
    %71 = vector.broadcast %70 : vector<128x1xf32> to vector<128x80xf32>
    %72 = arith.select %58, %71, %69 : vector<128x80xi1>, vector<128x80xf32>
    %cst_25 = arith.constant dense<0x7F800000> : vector<128xf32>
    %73 = vector.multi_reduction <minimumf>, %18, %cst_25 [1] : vector<128x128xf32> to vector<128xf32>
    %74 = vector.shape_cast %73 : vector<128xf32> to vector<128x1xf32>
    %75 = vector.broadcast %74 : vector<128x1xf32> to vector<128x128xf32>
    %76 = arith.cmpf oeq, %18, %75 : vector<128x128xf32>
    %cst_26 = arith.constant 1.280000e+02 : f32
    %77 = vector.broadcast %cst_26 : f32 to vector<128x128xf32>
    %78 = arith.select %76, %20, %77 : vector<128x128xi1>, vector<128x128xf32>
    %cst_27 = arith.constant dense<0x7F800000> : vector<128xf32>
    %79 = vector.multi_reduction <minimumf>, %78, %cst_27 [1] : vector<128x128xf32> to vector<128xf32>
    %80 = vector.shape_cast %79 : vector<128xf32> to vector<128x1xf32>
    %81 = vector.broadcast %80 : vector<128x1xf32> to vector<128x128xf32>
    %82 = arith.cmpf oeq, %20, %81 : vector<128x128xf32>
    %83 = arith.extui %82 : vector<128x128xi1> to vector<128x128xi32>
    %84 = arith.sitofp %83 : vector<128x128xi32> to vector<128x128xf32>
    %cst_28 = arith.constant dense<0.000000e+00> : vector<128x3xf32>
    %85 = tpu.matmul %84, %5, %cst_28 {dimension_numbers = #tpu.dot_dimension_numbers<[1], [0], [0], [1], [0, 0, 1, 1], [], []>} : vector<128x128xf32>, vector<128x3xf32>, vector<128x3xf32> -> vector<128x3xf32>
    %c0_i32_29 = arith.constant 0 : i32
    %86 = vector.broadcast %c0_i32_29 : i32 to vector<128x3xi32>
    %87 = arith.cmpi eq, %21, %86 : vector<128x3xi32>
    %cst_30 = arith.constant 0.000000e+00 : f32
    %88 = vector.broadcast %cst_30 : f32 to vector<128x3xf32>
    %89 = arith.select %87, %85, %88 : vector<128x3xi1>, vector<128x3xf32>
    %cst_31 = arith.constant dense<0.000000e+00> : vector<128xf32>
    %90 = vector.multi_reduction <add>, %89, %cst_31 [1] : vector<128x3xf32> to vector<128xf32>
    %91 = vector.shape_cast %90 : vector<128xf32> to vector<128x1xf32>
    %c1_i32_32 = arith.constant 1 : i32
    %92 = vector.broadcast %c1_i32_32 : i32 to vector<128x3xi32>
    %93 = arith.cmpi eq, %21, %92 : vector<128x3xi32>
    %cst_33 = arith.constant 0.000000e+00 : f32
    %94 = vector.broadcast %cst_33 : f32 to vector<128x3xf32>
    %95 = arith.select %93, %85, %94 : vector<128x3xi1>, vector<128x3xf32>
    %cst_34 = arith.constant dense<0.000000e+00> : vector<128xf32>
    %96 = vector.multi_reduction <add>, %95, %cst_34 [1] : vector<128x3xf32> to vector<128xf32>
    %97 = vector.shape_cast %96 : vector<128xf32> to vector<128x1xf32>
    %c2_i32_35 = arith.constant 2 : i32
    %98 = vector.broadcast %c2_i32_35 : i32 to vector<128x3xi32>
    %99 = arith.cmpi eq, %21, %98 : vector<128x3xi32>
    %cst_36 = arith.constant 0.000000e+00 : f32
    %100 = vector.broadcast %cst_36 : f32 to vector<128x3xf32>
    %101 = arith.select %99, %85, %100 : vector<128x3xi1>, vector<128x3xf32>
    %cst_37 = arith.constant dense<0.000000e+00> : vector<128xf32>
    %102 = vector.multi_reduction <add>, %101, %cst_37 [1] : vector<128x3xf32> to vector<128xf32>
    %103 = vector.shape_cast %102 : vector<128xf32> to vector<128x1xf32>
    %104 = arith.subf %44, %91 : vector<128x1xf32>
    %105 = arith.subf %50, %97 : vector<128x1xf32>
    %106 = arith.subf %56, %103 : vector<128x1xf32>
    %107 = arith.mulf %104, %104 : vector<128x1xf32>
    %108 = arith.mulf %105, %105 : vector<128x1xf32>
    %109 = arith.addf %107, %108 : vector<128x1xf32>
    %110 = arith.mulf %106, %106 : vector<128x1xf32>
    %111 = arith.addf %109, %110 : vector<128x1xf32>
    %112 = math.sqrt %111 : vector<128x1xf32>
    %c0_i32_38 = arith.constant 0 : i32
    %113 = vector.broadcast %c0_i32_38 : i32 to vector<128x80xi32>
    %114 = arith.cmpi eq, %22, %113 : vector<128x80xi32>
    %115 = vector.shape_cast %112 : vector<128x1xf32> to vector<128x1xf32>
    %116 = vector.broadcast %115 : vector<128x1xf32> to vector<128x80xf32>
    %117 = arith.select %114, %116, %72 : vector<128x80xi1>, vector<128x80xf32>
    %c1_i32_39 = arith.constant 1 : i32
    %118 = vector.broadcast %c1_i32_39 : i32 to vector<128x80xi32>
    %119 = arith.cmpi eq, %22, %118 : vector<128x80xi32>
    %120 = vector.shape_cast %104 : vector<128x1xf32> to vector<128x1xf32>
    %121 = vector.broadcast %120 : vector<128x1xf32> to vector<128x80xf32>
    %122 = arith.select %119, %121, %117 : vector<128x80xi1>, vector<128x80xf32>
    %c2_i32_40 = arith.constant 2 : i32
    %123 = vector.broadcast %c2_i32_40 : i32 to vector<128x80xi32>
    %124 = arith.cmpi eq, %22, %123 : vector<128x80xi32>
    %125 = vector.shape_cast %105 : vector<128x1xf32> to vector<128x1xf32>
    %126 = vector.broadcast %125 : vector<128x1xf32> to vector<128x80xf32>
    %127 = arith.select %124, %126, %122 : vector<128x80xi1>, vector<128x80xf32>
    %c3_i32 = arith.constant 3 : i32
    %128 = vector.broadcast %c3_i32 : i32 to vector<128x80xi32>
    %129 = arith.cmpi eq, %22, %128 : vector<128x80xi32>
    %130 = vector.shape_cast %106 : vector<128x1xf32> to vector<128x1xf32>
    %131 = vector.broadcast %130 : vector<128x1xf32> to vector<128x80xf32>
    %132 = arith.select %129, %131, %127 : vector<128x80xi1>, vector<128x80xf32>
    %c7_i32 = arith.constant 7 : i32
    %133 = vector.broadcast %c7_i32 : i32 to vector<128x80xi32>
    %134 = arith.cmpi eq, %22, %133 : vector<128x80xi32>
    %135 = vector.shape_cast %91 : vector<128x1xf32> to vector<128x1xf32>
    %136 = vector.broadcast %135 : vector<128x1xf32> to vector<128x80xf32>
    %137 = arith.select %134, %136, %132 : vector<128x80xi1>, vector<128x80xf32>
    %c8_i32 = arith.constant 8 : i32
    %138 = vector.broadcast %c8_i32 : i32 to vector<128x80xi32>
    %139 = arith.cmpi eq, %22, %138 : vector<128x80xi32>
    %140 = vector.shape_cast %97 : vector<128x1xf32> to vector<128x1xf32>
    %141 = vector.broadcast %140 : vector<128x1xf32> to vector<128x80xf32>
    %142 = arith.select %139, %141, %137 : vector<128x80xi1>, vector<128x80xf32>
    %c9_i32 = arith.constant 9 : i32
    %143 = vector.broadcast %c9_i32 : i32 to vector<128x80xi32>
    %144 = arith.cmpi eq, %22, %143 : vector<128x80xi32>
    %145 = vector.shape_cast %103 : vector<128x1xf32> to vector<128x1xf32>
    %146 = vector.broadcast %145 : vector<128x1xf32> to vector<128x80xf32>
    %147 = arith.select %144, %146, %142 : vector<128x80xi1>, vector<128x80xf32>
    %cst_41 = arith.constant 3.40282347E+38 : f32
    %148 = vector.broadcast %cst_41 : f32 to vector<128x128xf32>
    %149 = arith.select %82, %148, %18 : vector<128x128xi1>, vector<128x128xf32>
    %cst_42 = arith.constant dense<0x7F800000> : vector<128xf32>
    %150 = vector.multi_reduction <minimumf>, %149, %cst_42 [1] : vector<128x128xf32> to vector<128xf32>
    %151 = vector.shape_cast %150 : vector<128xf32> to vector<128x1xf32>
    %152 = vector.broadcast %151 : vector<128x1xf32> to vector<128x128xf32>
    %153 = arith.cmpf oeq, %149, %152 : vector<128x128xf32>
    %cst_43 = arith.constant 1.280000e+02 : f32
    %154 = vector.broadcast %cst_43 : f32 to vector<128x128xf32>
    %155 = arith.select %153, %20, %154 : vector<128x128xi1>, vector<128x128xf32>
    %cst_44 = arith.constant dense<0x7F800000> : vector<128xf32>
    %156 = vector.multi_reduction <minimumf>, %155, %cst_44 [1] : vector<128x128xf32> to vector<128xf32>
    %157 = vector.shape_cast %156 : vector<128xf32> to vector<128x1xf32>
    %158 = vector.broadcast %157 : vector<128x1xf32> to vector<128x128xf32>
    %159 = arith.cmpf oeq, %20, %158 : vector<128x128xf32>
    %cst_45 = arith.constant 3.40282347E+38 : f32
    %160 = vector.broadcast %cst_45 : f32 to vector<128x128xf32>
    %161 = arith.select %159, %160, %149 : vector<128x128xi1>, vector<128x128xf32>
    %cst_46 = arith.constant dense<0x7F800000> : vector<128xf32>
    %162 = vector.multi_reduction <minimumf>, %161, %cst_46 [1] : vector<128x128xf32> to vector<128xf32>
    %163 = vector.shape_cast %162 : vector<128xf32> to vector<128x1xf32>
    %164 = vector.broadcast %163 : vector<128x1xf32> to vector<128x128xf32>
    %165 = arith.cmpf oeq, %161, %164 : vector<128x128xf32>
    %cst_47 = arith.constant 1.280000e+02 : f32
    %166 = vector.broadcast %cst_47 : f32 to vector<128x128xf32>
    %167 = arith.select %165, %20, %166 : vector<128x128xi1>, vector<128x128xf32>
    %cst_48 = arith.constant dense<0x7F800000> : vector<128xf32>
    %168 = vector.multi_reduction <minimumf>, %167, %cst_48 [1] : vector<128x128xf32> to vector<128xf32>
    %169 = vector.shape_cast %168 : vector<128xf32> to vector<128x1xf32>
    %170 = vector.broadcast %169 : vector<128x1xf32> to vector<128x128xf32>
    %171 = arith.cmpf oeq, %20, %170 : vector<128x128xf32>
    %172 = arith.extui %171 : vector<128x128xi1> to vector<128x128xi32>
    %173 = arith.sitofp %172 : vector<128x128xi32> to vector<128x128xf32>
    %cst_49 = arith.constant dense<0.000000e+00> : vector<128x3xf32>
    %174 = tpu.matmul %173, %5, %cst_49 {dimension_numbers = #tpu.dot_dimension_numbers<[1], [0], [0], [1], [0, 0, 1, 1], [], []>} : vector<128x128xf32>, vector<128x3xf32>, vector<128x3xf32> -> vector<128x3xf32>
    %c0_i32_50 = arith.constant 0 : i32
    %175 = vector.broadcast %c0_i32_50 : i32 to vector<128x3xi32>
    %176 = arith.cmpi eq, %21, %175 : vector<128x3xi32>
    %cst_51 = arith.constant 0.000000e+00 : f32
    %177 = vector.broadcast %cst_51 : f32 to vector<128x3xf32>
    %178 = arith.select %176, %174, %177 : vector<128x3xi1>, vector<128x3xf32>
    %cst_52 = arith.constant dense<0.000000e+00> : vector<128xf32>
    %179 = vector.multi_reduction <add>, %178, %cst_52 [1] : vector<128x3xf32> to vector<128xf32>
    %180 = vector.shape_cast %179 : vector<128xf32> to vector<128x1xf32>
    %c1_i32_53 = arith.constant 1 : i32
    %181 = vector.broadcast %c1_i32_53 : i32 to vector<128x3xi32>
    %182 = arith.cmpi eq, %21, %181 : vector<128x3xi32>
    %cst_54 = arith.constant 0.000000e+00 : f32
    %183 = vector.broadcast %cst_54 : f32 to vector<128x3xf32>
    %184 = arith.select %182, %174, %183 : vector<128x3xi1>, vector<128x3xf32>
    %cst_55 = arith.constant dense<0.000000e+00> : vector<128xf32>
    %185 = vector.multi_reduction <add>, %184, %cst_55 [1] : vector<128x3xf32> to vector<128xf32>
    %186 = vector.shape_cast %185 : vector<128xf32> to vector<128x1xf32>
    %c2_i32_56 = arith.constant 2 : i32
    %187 = vector.broadcast %c2_i32_56 : i32 to vector<128x3xi32>
    %188 = arith.cmpi eq, %21, %187 : vector<128x3xi32>
    %cst_57 = arith.constant 0.000000e+00 : f32
    %189 = vector.broadcast %cst_57 : f32 to vector<128x3xf32>
    %190 = arith.select %188, %174, %189 : vector<128x3xi1>, vector<128x3xf32>
    %cst_58 = arith.constant dense<0.000000e+00> : vector<128xf32>
    %191 = vector.multi_reduction <add>, %190, %cst_58 [1] : vector<128x3xf32> to vector<128xf32>
    %192 = vector.shape_cast %191 : vector<128xf32> to vector<128x1xf32>
    %193 = arith.subf %44, %180 : vector<128x1xf32>
    %194 = arith.subf %50, %186 : vector<128x1xf32>
    %195 = arith.subf %56, %192 : vector<128x1xf32>
    %196 = arith.mulf %193, %193 : vector<128x1xf32>
    %197 = arith.mulf %194, %194 : vector<128x1xf32>
    %198 = arith.addf %196, %197 : vector<128x1xf32>
    %199 = arith.mulf %195, %195 : vector<128x1xf32>
    %200 = arith.addf %198, %199 : vector<128x1xf32>
    %201 = math.sqrt %200 : vector<128x1xf32>
    %c10_i32_59 = arith.constant 10 : i32
    %202 = vector.broadcast %c10_i32_59 : i32 to vector<128x80xi32>
    %203 = arith.cmpi eq, %22, %202 : vector<128x80xi32>
    %204 = vector.shape_cast %201 : vector<128x1xf32> to vector<128x1xf32>
    %205 = vector.broadcast %204 : vector<128x1xf32> to vector<128x80xf32>
    %206 = arith.select %203, %205, %147 : vector<128x80xi1>, vector<128x80xf32>
    %c11_i32 = arith.constant 11 : i32
    %207 = vector.broadcast %c11_i32 : i32 to vector<128x80xi32>
    %208 = arith.cmpi eq, %22, %207 : vector<128x80xi32>
    %209 = vector.shape_cast %193 : vector<128x1xf32> to vector<128x1xf32>
    %210 = vector.broadcast %209 : vector<128x1xf32> to vector<128x80xf32>
    %211 = arith.select %208, %210, %206 : vector<128x80xi1>, vector<128x80xf32>
    %c12_i32 = arith.constant 12 : i32
    %212 = vector.broadcast %c12_i32 : i32 to vector<128x80xi32>
    %213 = arith.cmpi eq, %22, %212 : vector<128x80xi32>
    %214 = vector.shape_cast %194 : vector<128x1xf32> to vector<128x1xf32>
    %215 = vector.broadcast %214 : vector<128x1xf32> to vector<128x80xf32>
    %216 = arith.select %213, %215, %211 : vector<128x80xi1>, vector<128x80xf32>
    %c13_i32 = arith.constant 13 : i32
    %217 = vector.broadcast %c13_i32 : i32 to vector<128x80xi32>
    %218 = arith.cmpi eq, %22, %217 : vector<128x80xi32>
    %219 = vector.shape_cast %195 : vector<128x1xf32> to vector<128x1xf32>
    %220 = vector.broadcast %219 : vector<128x1xf32> to vector<128x80xf32>
    %221 = arith.select %218, %220, %216 : vector<128x80xi1>, vector<128x80xf32>
    %c17_i32 = arith.constant 17 : i32
    %222 = vector.broadcast %c17_i32 : i32 to vector<128x80xi32>
    %223 = arith.cmpi eq, %22, %222 : vector<128x80xi32>
    %224 = vector.shape_cast %180 : vector<128x1xf32> to vector<128x1xf32>
    %225 = vector.broadcast %224 : vector<128x1xf32> to vector<128x80xf32>
    %226 = arith.select %223, %225, %221 : vector<128x80xi1>, vector<128x80xf32>
    %c18_i32 = arith.constant 18 : i32
    %227 = vector.broadcast %c18_i32 : i32 to vector<128x80xi32>
    %228 = arith.cmpi eq, %22, %227 : vector<128x80xi32>
    %229 = vector.shape_cast %186 : vector<128x1xf32> to vector<128x1xf32>
    %230 = vector.broadcast %229 : vector<128x1xf32> to vector<128x80xf32>
    %231 = arith.select %228, %230, %226 : vector<128x80xi1>, vector<128x80xf32>
    %c19_i32 = arith.constant 19 : i32
    %232 = vector.broadcast %c19_i32 : i32 to vector<128x80xi32>
    %233 = arith.cmpi eq, %22, %232 : vector<128x80xi32>
    %234 = vector.shape_cast %192 : vector<128x1xf32> to vector<128x1xf32>
    %235 = vector.broadcast %234 : vector<128x1xf32> to vector<128x80xf32>
    %236 = arith.select %233, %235, %231 : vector<128x80xi1>, vector<128x80xf32>
    %cst_60 = arith.constant 3.40282347E+38 : f32
    %237 = vector.broadcast %cst_60 : f32 to vector<128x128xf32>
    %238 = arith.select %171, %237, %161 : vector<128x128xi1>, vector<128x128xf32>
    %cst_61 = arith.constant dense<0x7F800000> : vector<128xf32>
    %239 = vector.multi_reduction <minimumf>, %238, %cst_61 [1] : vector<128x128xf32> to vector<128xf32>
    %240 = vector.shape_cast %239 : vector<128xf32> to vector<128x1xf32>
    %241 = vector.broadcast %240 : vector<128x1xf32> to vector<128x128xf32>
    %242 = arith.cmpf oeq, %238, %241 : vector<128x128xf32>
    %cst_62 = arith.constant 1.280000e+02 : f32
    %243 = vector.broadcast %cst_62 : f32 to vector<128x128xf32>
    %244 = arith.select %242, %20, %243 : vector<128x128xi1>, vector<128x128xf32>
    %cst_63 = arith.constant dense<0x7F800000> : vector<128xf32>
    %245 = vector.multi_reduction <minimumf>, %244, %cst_63 [1] : vector<128x128xf32> to vector<128xf32>
    %246 = vector.shape_cast %245 : vector<128xf32> to vector<128x1xf32>
    %247 = vector.broadcast %246 : vector<128x1xf32> to vector<128x128xf32>
    %248 = arith.cmpf oeq, %20, %247 : vector<128x128xf32>
    %cst_64 = arith.constant 3.40282347E+38 : f32
    %249 = vector.broadcast %cst_64 : f32 to vector<128x128xf32>
    %250 = arith.select %248, %249, %238 : vector<128x128xi1>, vector<128x128xf32>
    %cst_65 = arith.constant dense<0x7F800000> : vector<128xf32>
    %251 = vector.multi_reduction <minimumf>, %250, %cst_65 [1] : vector<128x128xf32> to vector<128xf32>
    %252 = vector.shape_cast %251 : vector<128xf32> to vector<128x1xf32>
    %253 = vector.broadcast %252 : vector<128x1xf32> to vector<128x128xf32>
    %254 = arith.cmpf oeq, %250, %253 : vector<128x128xf32>
    %cst_66 = arith.constant 1.280000e+02 : f32
    %255 = vector.broadcast %cst_66 : f32 to vector<128x128xf32>
    %256 = arith.select %254, %20, %255 : vector<128x128xi1>, vector<128x128xf32>
    %cst_67 = arith.constant dense<0x7F800000> : vector<128xf32>
    %257 = vector.multi_reduction <minimumf>, %256, %cst_67 [1] : vector<128x128xf32> to vector<128xf32>
    %258 = vector.shape_cast %257 : vector<128xf32> to vector<128x1xf32>
    %259 = vector.broadcast %258 : vector<128x1xf32> to vector<128x128xf32>
    %260 = arith.cmpf oeq, %20, %259 : vector<128x128xf32>
    %261 = arith.extui %260 : vector<128x128xi1> to vector<128x128xi32>
    %262 = arith.sitofp %261 : vector<128x128xi32> to vector<128x128xf32>
    %cst_68 = arith.constant dense<0.000000e+00> : vector<128x3xf32>
    %263 = tpu.matmul %262, %5, %cst_68 {dimension_numbers = #tpu.dot_dimension_numbers<[1], [0], [0], [1], [0, 0, 1, 1], [], []>} : vector<128x128xf32>, vector<128x3xf32>, vector<128x3xf32> -> vector<128x3xf32>
    %c0_i32_69 = arith.constant 0 : i32
    %264 = vector.broadcast %c0_i32_69 : i32 to vector<128x3xi32>
    %265 = arith.cmpi eq, %21, %264 : vector<128x3xi32>
    %cst_70 = arith.constant 0.000000e+00 : f32
    %266 = vector.broadcast %cst_70 : f32 to vector<128x3xf32>
    %267 = arith.select %265, %263, %266 : vector<128x3xi1>, vector<128x3xf32>
    %cst_71 = arith.constant dense<0.000000e+00> : vector<128xf32>
    %268 = vector.multi_reduction <add>, %267, %cst_71 [1] : vector<128x3xf32> to vector<128xf32>
    %269 = vector.shape_cast %268 : vector<128xf32> to vector<128x1xf32>
    %c1_i32_72 = arith.constant 1 : i32
    %270 = vector.broadcast %c1_i32_72 : i32 to vector<128x3xi32>
    %271 = arith.cmpi eq, %21, %270 : vector<128x3xi32>
    %cst_73 = arith.constant 0.000000e+00 : f32
    %272 = vector.broadcast %cst_73 : f32 to vector<128x3xf32>
    %273 = arith.select %271, %263, %272 : vector<128x3xi1>, vector<128x3xf32>
    %cst_74 = arith.constant dense<0.000000e+00> : vector<128xf32>
    %274 = vector.multi_reduction <add>, %273, %cst_74 [1] : vector<128x3xf32> to vector<128xf32>
    %275 = vector.shape_cast %274 : vector<128xf32> to vector<128x1xf32>
    %c2_i32_75 = arith.constant 2 : i32
    %276 = vector.broadcast %c2_i32_75 : i32 to vector<128x3xi32>
    %277 = arith.cmpi eq, %21, %276 : vector<128x3xi32>
    %cst_76 = arith.constant 0.000000e+00 : f32
    %278 = vector.broadcast %cst_76 : f32 to vector<128x3xf32>
    %279 = arith.select %277, %263, %278 : vector<128x3xi1>, vector<128x3xf32>
    %cst_77 = arith.constant dense<0.000000e+00> : vector<128xf32>
    %280 = vector.multi_reduction <add>, %279, %cst_77 [1] : vector<128x3xf32> to vector<128xf32>
    %281 = vector.shape_cast %280 : vector<128xf32> to vector<128x1xf32>
    %282 = arith.subf %44, %269 : vector<128x1xf32>
    %283 = arith.subf %50, %275 : vector<128x1xf32>
    %284 = arith.subf %56, %281 : vector<128x1xf32>
    %285 = arith.mulf %282, %282 : vector<128x1xf32>
    %286 = arith.mulf %283, %283 : vector<128x1xf32>
    %287 = arith.addf %285, %286 : vector<128x1xf32>
    %288 = arith.mulf %284, %284 : vector<128x1xf32>
    %289 = arith.addf %287, %288 : vector<128x1xf32>
    %290 = math.sqrt %289 : vector<128x1xf32>
    %c20_i32 = arith.constant 20 : i32
    %291 = vector.broadcast %c20_i32 : i32 to vector<128x80xi32>
    %292 = arith.cmpi eq, %22, %291 : vector<128x80xi32>
    %293 = vector.shape_cast %290 : vector<128x1xf32> to vector<128x1xf32>
    %294 = vector.broadcast %293 : vector<128x1xf32> to vector<128x80xf32>
    %295 = arith.select %292, %294, %236 : vector<128x80xi1>, vector<128x80xf32>
    %c21_i32 = arith.constant 21 : i32
    %296 = vector.broadcast %c21_i32 : i32 to vector<128x80xi32>
    %297 = arith.cmpi eq, %22, %296 : vector<128x80xi32>
    %298 = vector.shape_cast %282 : vector<128x1xf32> to vector<128x1xf32>
    %299 = vector.broadcast %298 : vector<128x1xf32> to vector<128x80xf32>
    %300 = arith.select %297, %299, %295 : vector<128x80xi1>, vector<128x80xf32>
    %c22_i32 = arith.constant 22 : i32
    %301 = vector.broadcast %c22_i32 : i32 to vector<128x80xi32>
    %302 = arith.cmpi eq, %22, %301 : vector<128x80xi32>
    %303 = vector.shape_cast %283 : vector<128x1xf32> to vector<128x1xf32>
    %304 = vector.broadcast %303 : vector<128x1xf32> to vector<128x80xf32>
    %305 = arith.select %302, %304, %300 : vector<128x80xi1>, vector<128x80xf32>
    %c23_i32 = arith.constant 23 : i32
    %306 = vector.broadcast %c23_i32 : i32 to vector<128x80xi32>
    %307 = arith.cmpi eq, %22, %306 : vector<128x80xi32>
    %308 = vector.shape_cast %284 : vector<128x1xf32> to vector<128x1xf32>
    %309 = vector.broadcast %308 : vector<128x1xf32> to vector<128x80xf32>
    %310 = arith.select %307, %309, %305 : vector<128x80xi1>, vector<128x80xf32>
    %c27_i32 = arith.constant 27 : i32
    %311 = vector.broadcast %c27_i32 : i32 to vector<128x80xi32>
    %312 = arith.cmpi eq, %22, %311 : vector<128x80xi32>
    %313 = vector.shape_cast %269 : vector<128x1xf32> to vector<128x1xf32>
    %314 = vector.broadcast %313 : vector<128x1xf32> to vector<128x80xf32>
    %315 = arith.select %312, %314, %310 : vector<128x80xi1>, vector<128x80xf32>
    %c28_i32 = arith.constant 28 : i32
    %316 = vector.broadcast %c28_i32 : i32 to vector<128x80xi32>
    %317 = arith.cmpi eq, %22, %316 : vector<128x80xi32>
    %318 = vector.shape_cast %275 : vector<128x1xf32> to vector<128x1xf32>
    %319 = vector.broadcast %318 : vector<128x1xf32> to vector<128x80xf32>
    %320 = arith.select %317, %319, %315 : vector<128x80xi1>, vector<128x80xf32>
    %c29_i32 = arith.constant 29 : i32
    %321 = vector.broadcast %c29_i32 : i32 to vector<128x80xi32>
    %322 = arith.cmpi eq, %22, %321 : vector<128x80xi32>
    %323 = vector.shape_cast %281 : vector<128x1xf32> to vector<128x1xf32>
    %324 = vector.broadcast %323 : vector<128x1xf32> to vector<128x80xf32>
    %325 = arith.select %322, %324, %320 : vector<128x80xi1>, vector<128x80xf32>
    %cst_78 = arith.constant 3.40282347E+38 : f32
    %326 = vector.broadcast %cst_78 : f32 to vector<128x128xf32>
    %327 = arith.select %260, %326, %250 : vector<128x128xi1>, vector<128x128xf32>
    %cst_79 = arith.constant dense<0x7F800000> : vector<128xf32>
    %328 = vector.multi_reduction <minimumf>, %327, %cst_79 [1] : vector<128x128xf32> to vector<128xf32>
    %329 = vector.shape_cast %328 : vector<128xf32> to vector<128x1xf32>
    %330 = vector.broadcast %329 : vector<128x1xf32> to vector<128x128xf32>
    %331 = arith.cmpf oeq, %327, %330 : vector<128x128xf32>
    %cst_80 = arith.constant 1.280000e+02 : f32
    %332 = vector.broadcast %cst_80 : f32 to vector<128x128xf32>
    %333 = arith.select %331, %20, %332 : vector<128x128xi1>, vector<128x128xf32>
    %cst_81 = arith.constant dense<0x7F800000> : vector<128xf32>
    %334 = vector.multi_reduction <minimumf>, %333, %cst_81 [1] : vector<128x128xf32> to vector<128xf32>
    %335 = vector.shape_cast %334 : vector<128xf32> to vector<128x1xf32>
    %336 = vector.broadcast %335 : vector<128x1xf32> to vector<128x128xf32>
    %337 = arith.cmpf oeq, %20, %336 : vector<128x128xf32>
    %cst_82 = arith.constant 3.40282347E+38 : f32
    %338 = vector.broadcast %cst_82 : f32 to vector<128x128xf32>
    %339 = arith.select %337, %338, %327 : vector<128x128xi1>, vector<128x128xf32>
    %cst_83 = arith.constant dense<0x7F800000> : vector<128xf32>
    %340 = vector.multi_reduction <minimumf>, %339, %cst_83 [1] : vector<128x128xf32> to vector<128xf32>
    %341 = vector.shape_cast %340 : vector<128xf32> to vector<128x1xf32>
    %342 = vector.broadcast %341 : vector<128x1xf32> to vector<128x128xf32>
    %343 = arith.cmpf oeq, %339, %342 : vector<128x128xf32>
    %cst_84 = arith.constant 1.280000e+02 : f32
    %344 = vector.broadcast %cst_84 : f32 to vector<128x128xf32>
    %345 = arith.select %343, %20, %344 : vector<128x128xi1>, vector<128x128xf32>
    %cst_85 = arith.constant dense<0x7F800000> : vector<128xf32>
    %346 = vector.multi_reduction <minimumf>, %345, %cst_85 [1] : vector<128x128xf32> to vector<128xf32>
    %347 = vector.shape_cast %346 : vector<128xf32> to vector<128x1xf32>
    %348 = vector.broadcast %347 : vector<128x1xf32> to vector<128x128xf32>
    %349 = arith.cmpf oeq, %20, %348 : vector<128x128xf32>
    %350 = arith.extui %349 : vector<128x128xi1> to vector<128x128xi32>
    %351 = arith.sitofp %350 : vector<128x128xi32> to vector<128x128xf32>
    %cst_86 = arith.constant dense<0.000000e+00> : vector<128x3xf32>
    %352 = tpu.matmul %351, %5, %cst_86 {dimension_numbers = #tpu.dot_dimension_numbers<[1], [0], [0], [1], [0, 0, 1, 1], [], []>} : vector<128x128xf32>, vector<128x3xf32>, vector<128x3xf32> -> vector<128x3xf32>
    %c0_i32_87 = arith.constant 0 : i32
    %353 = vector.broadcast %c0_i32_87 : i32 to vector<128x3xi32>
    %354 = arith.cmpi eq, %21, %353 : vector<128x3xi32>
    %cst_88 = arith.constant 0.000000e+00 : f32
    %355 = vector.broadcast %cst_88 : f32 to vector<128x3xf32>
    %356 = arith.select %354, %352, %355 : vector<128x3xi1>, vector<128x3xf32>
    %cst_89 = arith.constant dense<0.000000e+00> : vector<128xf32>
    %357 = vector.multi_reduction <add>, %356, %cst_89 [1] : vector<128x3xf32> to vector<128xf32>
    %358 = vector.shape_cast %357 : vector<128xf32> to vector<128x1xf32>
    %c1_i32_90 = arith.constant 1 : i32
    %359 = vector.broadcast %c1_i32_90 : i32 to vector<128x3xi32>
    %360 = arith.cmpi eq, %21, %359 : vector<128x3xi32>
    %cst_91 = arith.constant 0.000000e+00 : f32
    %361 = vector.broadcast %cst_91 : f32 to vector<128x3xf32>
    %362 = arith.select %360, %352, %361 : vector<128x3xi1>, vector<128x3xf32>
    %cst_92 = arith.constant dense<0.000000e+00> : vector<128xf32>
    %363 = vector.multi_reduction <add>, %362, %cst_92 [1] : vector<128x3xf32> to vector<128xf32>
    %364 = vector.shape_cast %363 : vector<128xf32> to vector<128x1xf32>
    %c2_i32_93 = arith.constant 2 : i32
    %365 = vector.broadcast %c2_i32_93 : i32 to vector<128x3xi32>
    %366 = arith.cmpi eq, %21, %365 : vector<128x3xi32>
    %cst_94 = arith.constant 0.000000e+00 : f32
    %367 = vector.broadcast %cst_94 : f32 to vector<128x3xf32>
    %368 = arith.select %366, %352, %367 : vector<128x3xi1>, vector<128x3xf32>
    %cst_95 = arith.constant dense<0.000000e+00> : vector<128xf32>
    %369 = vector.multi_reduction <add>, %368, %cst_95 [1] : vector<128x3xf32> to vector<128xf32>
    %370 = vector.shape_cast %369 : vector<128xf32> to vector<128x1xf32>
    %371 = arith.subf %44, %358 : vector<128x1xf32>
    %372 = arith.subf %50, %364 : vector<128x1xf32>
    %373 = arith.subf %56, %370 : vector<128x1xf32>
    %374 = arith.mulf %371, %371 : vector<128x1xf32>
    %375 = arith.mulf %372, %372 : vector<128x1xf32>
    %376 = arith.addf %374, %375 : vector<128x1xf32>
    %377 = arith.mulf %373, %373 : vector<128x1xf32>
    %378 = arith.addf %376, %377 : vector<128x1xf32>
    %379 = math.sqrt %378 : vector<128x1xf32>
    %c30_i32 = arith.constant 30 : i32
    %380 = vector.broadcast %c30_i32 : i32 to vector<128x80xi32>
    %381 = arith.cmpi eq, %22, %380 : vector<128x80xi32>
    %382 = vector.shape_cast %379 : vector<128x1xf32> to vector<128x1xf32>
    %383 = vector.broadcast %382 : vector<128x1xf32> to vector<128x80xf32>
    %384 = arith.select %381, %383, %325 : vector<128x80xi1>, vector<128x80xf32>
    %c31_i32 = arith.constant 31 : i32
    %385 = vector.broadcast %c31_i32 : i32 to vector<128x80xi32>
    %386 = arith.cmpi eq, %22, %385 : vector<128x80xi32>
    %387 = vector.shape_cast %371 : vector<128x1xf32> to vector<128x1xf32>
    %388 = vector.broadcast %387 : vector<128x1xf32> to vector<128x80xf32>
    %389 = arith.select %386, %388, %384 : vector<128x80xi1>, vector<128x80xf32>
    %c32_i32 = arith.constant 32 : i32
    %390 = vector.broadcast %c32_i32 : i32 to vector<128x80xi32>
    %391 = arith.cmpi eq, %22, %390 : vector<128x80xi32>
    %392 = vector.shape_cast %372 : vector<128x1xf32> to vector<128x1xf32>
    %393 = vector.broadcast %392 : vector<128x1xf32> to vector<128x80xf32>
    %394 = arith.select %391, %393, %389 : vector<128x80xi1>, vector<128x80xf32>
    %c33_i32 = arith.constant 33 : i32
    %395 = vector.broadcast %c33_i32 : i32 to vector<128x80xi32>
    %396 = arith.cmpi eq, %22, %395 : vector<128x80xi32>
    %397 = vector.shape_cast %373 : vector<128x1xf32> to vector<128x1xf32>
    %398 = vector.broadcast %397 : vector<128x1xf32> to vector<128x80xf32>
    %399 = arith.select %396, %398, %394 : vector<128x80xi1>, vector<128x80xf32>
    %c37_i32 = arith.constant 37 : i32
    %400 = vector.broadcast %c37_i32 : i32 to vector<128x80xi32>
    %401 = arith.cmpi eq, %22, %400 : vector<128x80xi32>
    %402 = vector.shape_cast %358 : vector<128x1xf32> to vector<128x1xf32>
    %403 = vector.broadcast %402 : vector<128x1xf32> to vector<128x80xf32>
    %404 = arith.select %401, %403, %399 : vector<128x80xi1>, vector<128x80xf32>
    %c38_i32 = arith.constant 38 : i32
    %405 = vector.broadcast %c38_i32 : i32 to vector<128x80xi32>
    %406 = arith.cmpi eq, %22, %405 : vector<128x80xi32>
    %407 = vector.shape_cast %364 : vector<128x1xf32> to vector<128x1xf32>
    %408 = vector.broadcast %407 : vector<128x1xf32> to vector<128x80xf32>
    %409 = arith.select %406, %408, %404 : vector<128x80xi1>, vector<128x80xf32>
    %c39_i32 = arith.constant 39 : i32
    %410 = vector.broadcast %c39_i32 : i32 to vector<128x80xi32>
    %411 = arith.cmpi eq, %22, %410 : vector<128x80xi32>
    %412 = vector.shape_cast %370 : vector<128x1xf32> to vector<128x1xf32>
    %413 = vector.broadcast %412 : vector<128x1xf32> to vector<128x80xf32>
    %414 = arith.select %411, %413, %409 : vector<128x80xi1>, vector<128x80xf32>
    %cst_96 = arith.constant 3.40282347E+38 : f32
    %415 = vector.broadcast %cst_96 : f32 to vector<128x128xf32>
    %416 = arith.select %349, %415, %339 : vector<128x128xi1>, vector<128x128xf32>
    %cst_97 = arith.constant dense<0x7F800000> : vector<128xf32>
    %417 = vector.multi_reduction <minimumf>, %416, %cst_97 [1] : vector<128x128xf32> to vector<128xf32>
    %418 = vector.shape_cast %417 : vector<128xf32> to vector<128x1xf32>
    %419 = vector.broadcast %418 : vector<128x1xf32> to vector<128x128xf32>
    %420 = arith.cmpf oeq, %416, %419 : vector<128x128xf32>
    %cst_98 = arith.constant 1.280000e+02 : f32
    %421 = vector.broadcast %cst_98 : f32 to vector<128x128xf32>
    %422 = arith.select %420, %20, %421 : vector<128x128xi1>, vector<128x128xf32>
    %cst_99 = arith.constant dense<0x7F800000> : vector<128xf32>
    %423 = vector.multi_reduction <minimumf>, %422, %cst_99 [1] : vector<128x128xf32> to vector<128xf32>
    %424 = vector.shape_cast %423 : vector<128xf32> to vector<128x1xf32>
    %425 = vector.broadcast %424 : vector<128x1xf32> to vector<128x128xf32>
    %426 = arith.cmpf oeq, %20, %425 : vector<128x128xf32>
    %cst_100 = arith.constant 3.40282347E+38 : f32
    %427 = vector.broadcast %cst_100 : f32 to vector<128x128xf32>
    %428 = arith.select %426, %427, %416 : vector<128x128xi1>, vector<128x128xf32>
    %cst_101 = arith.constant dense<0x7F800000> : vector<128xf32>
    %429 = vector.multi_reduction <minimumf>, %428, %cst_101 [1] : vector<128x128xf32> to vector<128xf32>
    %430 = vector.shape_cast %429 : vector<128xf32> to vector<128x1xf32>
    %431 = vector.broadcast %430 : vector<128x1xf32> to vector<128x128xf32>
    %432 = arith.cmpf oeq, %428, %431 : vector<128x128xf32>
    %cst_102 = arith.constant 1.280000e+02 : f32
    %433 = vector.broadcast %cst_102 : f32 to vector<128x128xf32>
    %434 = arith.select %432, %20, %433 : vector<128x128xi1>, vector<128x128xf32>
    %cst_103 = arith.constant dense<0x7F800000> : vector<128xf32>
    %435 = vector.multi_reduction <minimumf>, %434, %cst_103 [1] : vector<128x128xf32> to vector<128xf32>
    %436 = vector.shape_cast %435 : vector<128xf32> to vector<128x1xf32>
    %437 = vector.broadcast %436 : vector<128x1xf32> to vector<128x128xf32>
    %438 = arith.cmpf oeq, %20, %437 : vector<128x128xf32>
    %439 = arith.extui %438 : vector<128x128xi1> to vector<128x128xi32>
    %440 = arith.sitofp %439 : vector<128x128xi32> to vector<128x128xf32>
    %cst_104 = arith.constant dense<0.000000e+00> : vector<128x3xf32>
    %441 = tpu.matmul %440, %5, %cst_104 {dimension_numbers = #tpu.dot_dimension_numbers<[1], [0], [0], [1], [0, 0, 1, 1], [], []>} : vector<128x128xf32>, vector<128x3xf32>, vector<128x3xf32> -> vector<128x3xf32>
    %c0_i32_105 = arith.constant 0 : i32
    %442 = vector.broadcast %c0_i32_105 : i32 to vector<128x3xi32>
    %443 = arith.cmpi eq, %21, %442 : vector<128x3xi32>
    %cst_106 = arith.constant 0.000000e+00 : f32
    %444 = vector.broadcast %cst_106 : f32 to vector<128x3xf32>
    %445 = arith.select %443, %441, %444 : vector<128x3xi1>, vector<128x3xf32>
    %cst_107 = arith.constant dense<0.000000e+00> : vector<128xf32>
    %446 = vector.multi_reduction <add>, %445, %cst_107 [1] : vector<128x3xf32> to vector<128xf32>
    %447 = vector.shape_cast %446 : vector<128xf32> to vector<128x1xf32>
    %c1_i32_108 = arith.constant 1 : i32
    %448 = vector.broadcast %c1_i32_108 : i32 to vector<128x3xi32>
    %449 = arith.cmpi eq, %21, %448 : vector<128x3xi32>
    %cst_109 = arith.constant 0.000000e+00 : f32
    %450 = vector.broadcast %cst_109 : f32 to vector<128x3xf32>
    %451 = arith.select %449, %441, %450 : vector<128x3xi1>, vector<128x3xf32>
    %cst_110 = arith.constant dense<0.000000e+00> : vector<128xf32>
    %452 = vector.multi_reduction <add>, %451, %cst_110 [1] : vector<128x3xf32> to vector<128xf32>
    %453 = vector.shape_cast %452 : vector<128xf32> to vector<128x1xf32>
    %c2_i32_111 = arith.constant 2 : i32
    %454 = vector.broadcast %c2_i32_111 : i32 to vector<128x3xi32>
    %455 = arith.cmpi eq, %21, %454 : vector<128x3xi32>
    %cst_112 = arith.constant 0.000000e+00 : f32
    %456 = vector.broadcast %cst_112 : f32 to vector<128x3xf32>
    %457 = arith.select %455, %441, %456 : vector<128x3xi1>, vector<128x3xf32>
    %cst_113 = arith.constant dense<0.000000e+00> : vector<128xf32>
    %458 = vector.multi_reduction <add>, %457, %cst_113 [1] : vector<128x3xf32> to vector<128xf32>
    %459 = vector.shape_cast %458 : vector<128xf32> to vector<128x1xf32>
    %460 = arith.subf %44, %447 : vector<128x1xf32>
    %461 = arith.subf %50, %453 : vector<128x1xf32>
    %462 = arith.subf %56, %459 : vector<128x1xf32>
    %463 = arith.mulf %460, %460 : vector<128x1xf32>
    %464 = arith.mulf %461, %461 : vector<128x1xf32>
    %465 = arith.addf %463, %464 : vector<128x1xf32>
    %466 = arith.mulf %462, %462 : vector<128x1xf32>
    %467 = arith.addf %465, %466 : vector<128x1xf32>
    %468 = math.sqrt %467 : vector<128x1xf32>
    %c40_i32 = arith.constant 40 : i32
    %469 = vector.broadcast %c40_i32 : i32 to vector<128x80xi32>
    %470 = arith.cmpi eq, %22, %469 : vector<128x80xi32>
    %471 = vector.shape_cast %468 : vector<128x1xf32> to vector<128x1xf32>
    %472 = vector.broadcast %471 : vector<128x1xf32> to vector<128x80xf32>
    %473 = arith.select %470, %472, %414 : vector<128x80xi1>, vector<128x80xf32>
    %c41_i32 = arith.constant 41 : i32
    %474 = vector.broadcast %c41_i32 : i32 to vector<128x80xi32>
    %475 = arith.cmpi eq, %22, %474 : vector<128x80xi32>
    %476 = vector.shape_cast %460 : vector<128x1xf32> to vector<128x1xf32>
    %477 = vector.broadcast %476 : vector<128x1xf32> to vector<128x80xf32>
    %478 = arith.select %475, %477, %473 : vector<128x80xi1>, vector<128x80xf32>
    %c42_i32 = arith.constant 42 : i32
    %479 = vector.broadcast %c42_i32 : i32 to vector<128x80xi32>
    %480 = arith.cmpi eq, %22, %479 : vector<128x80xi32>
    %481 = vector.shape_cast %461 : vector<128x1xf32> to vector<128x1xf32>
    %482 = vector.broadcast %481 : vector<128x1xf32> to vector<128x80xf32>
    %483 = arith.select %480, %482, %478 : vector<128x80xi1>, vector<128x80xf32>
    %c43_i32 = arith.constant 43 : i32
    %484 = vector.broadcast %c43_i32 : i32 to vector<128x80xi32>
    %485 = arith.cmpi eq, %22, %484 : vector<128x80xi32>
    %486 = vector.shape_cast %462 : vector<128x1xf32> to vector<128x1xf32>
    %487 = vector.broadcast %486 : vector<128x1xf32> to vector<128x80xf32>
    %488 = arith.select %485, %487, %483 : vector<128x80xi1>, vector<128x80xf32>
    %c47_i32 = arith.constant 47 : i32
    %489 = vector.broadcast %c47_i32 : i32 to vector<128x80xi32>
    %490 = arith.cmpi eq, %22, %489 : vector<128x80xi32>
    %491 = vector.shape_cast %447 : vector<128x1xf32> to vector<128x1xf32>
    %492 = vector.broadcast %491 : vector<128x1xf32> to vector<128x80xf32>
    %493 = arith.select %490, %492, %488 : vector<128x80xi1>, vector<128x80xf32>
    %c48_i32 = arith.constant 48 : i32
    %494 = vector.broadcast %c48_i32 : i32 to vector<128x80xi32>
    %495 = arith.cmpi eq, %22, %494 : vector<128x80xi32>
    %496 = vector.shape_cast %453 : vector<128x1xf32> to vector<128x1xf32>
    %497 = vector.broadcast %496 : vector<128x1xf32> to vector<128x80xf32>
    %498 = arith.select %495, %497, %493 : vector<128x80xi1>, vector<128x80xf32>
    %c49_i32 = arith.constant 49 : i32
    %499 = vector.broadcast %c49_i32 : i32 to vector<128x80xi32>
    %500 = arith.cmpi eq, %22, %499 : vector<128x80xi32>
    %501 = vector.shape_cast %459 : vector<128x1xf32> to vector<128x1xf32>
    %502 = vector.broadcast %501 : vector<128x1xf32> to vector<128x80xf32>
    %503 = arith.select %500, %502, %498 : vector<128x80xi1>, vector<128x80xf32>
    %cst_114 = arith.constant 3.40282347E+38 : f32
    %504 = vector.broadcast %cst_114 : f32 to vector<128x128xf32>
    %505 = arith.select %438, %504, %428 : vector<128x128xi1>, vector<128x128xf32>
    %cst_115 = arith.constant dense<0x7F800000> : vector<128xf32>
    %506 = vector.multi_reduction <minimumf>, %505, %cst_115 [1] : vector<128x128xf32> to vector<128xf32>
    %507 = vector.shape_cast %506 : vector<128xf32> to vector<128x1xf32>
    %508 = vector.broadcast %507 : vector<128x1xf32> to vector<128x128xf32>
    %509 = arith.cmpf oeq, %505, %508 : vector<128x128xf32>
    %cst_116 = arith.constant 1.280000e+02 : f32
    %510 = vector.broadcast %cst_116 : f32 to vector<128x128xf32>
    %511 = arith.select %509, %20, %510 : vector<128x128xi1>, vector<128x128xf32>
    %cst_117 = arith.constant dense<0x7F800000> : vector<128xf32>
    %512 = vector.multi_reduction <minimumf>, %511, %cst_117 [1] : vector<128x128xf32> to vector<128xf32>
    %513 = vector.shape_cast %512 : vector<128xf32> to vector<128x1xf32>
    %514 = vector.broadcast %513 : vector<128x1xf32> to vector<128x128xf32>
    %515 = arith.cmpf oeq, %20, %514 : vector<128x128xf32>
    %cst_118 = arith.constant 3.40282347E+38 : f32
    %516 = vector.broadcast %cst_118 : f32 to vector<128x128xf32>
    %517 = arith.select %515, %516, %505 : vector<128x128xi1>, vector<128x128xf32>
    %cst_119 = arith.constant dense<0x7F800000> : vector<128xf32>
    %518 = vector.multi_reduction <minimumf>, %517, %cst_119 [1] : vector<128x128xf32> to vector<128xf32>
    %519 = vector.shape_cast %518 : vector<128xf32> to vector<128x1xf32>
    %520 = vector.broadcast %519 : vector<128x1xf32> to vector<128x128xf32>
    %521 = arith.cmpf oeq, %517, %520 : vector<128x128xf32>
    %cst_120 = arith.constant 1.280000e+02 : f32
    %522 = vector.broadcast %cst_120 : f32 to vector<128x128xf32>
    %523 = arith.select %521, %20, %522 : vector<128x128xi1>, vector<128x128xf32>
    %cst_121 = arith.constant dense<0x7F800000> : vector<128xf32>
    %524 = vector.multi_reduction <minimumf>, %523, %cst_121 [1] : vector<128x128xf32> to vector<128xf32>
    %525 = vector.shape_cast %524 : vector<128xf32> to vector<128x1xf32>
    %526 = vector.broadcast %525 : vector<128x1xf32> to vector<128x128xf32>
    %527 = arith.cmpf oeq, %20, %526 : vector<128x128xf32>
    %528 = arith.extui %527 : vector<128x128xi1> to vector<128x128xi32>
    %529 = arith.sitofp %528 : vector<128x128xi32> to vector<128x128xf32>
    %cst_122 = arith.constant dense<0.000000e+00> : vector<128x3xf32>
    %530 = tpu.matmul %529, %5, %cst_122 {dimension_numbers = #tpu.dot_dimension_numbers<[1], [0], [0], [1], [0, 0, 1, 1], [], []>} : vector<128x128xf32>, vector<128x3xf32>, vector<128x3xf32> -> vector<128x3xf32>
    %c0_i32_123 = arith.constant 0 : i32
    %531 = vector.broadcast %c0_i32_123 : i32 to vector<128x3xi32>
    %532 = arith.cmpi eq, %21, %531 : vector<128x3xi32>
    %cst_124 = arith.constant 0.000000e+00 : f32
    %533 = vector.broadcast %cst_124 : f32 to vector<128x3xf32>
    %534 = arith.select %532, %530, %533 : vector<128x3xi1>, vector<128x3xf32>
    %cst_125 = arith.constant dense<0.000000e+00> : vector<128xf32>
    %535 = vector.multi_reduction <add>, %534, %cst_125 [1] : vector<128x3xf32> to vector<128xf32>
    %536 = vector.shape_cast %535 : vector<128xf32> to vector<128x1xf32>
    %c1_i32_126 = arith.constant 1 : i32
    %537 = vector.broadcast %c1_i32_126 : i32 to vector<128x3xi32>
    %538 = arith.cmpi eq, %21, %537 : vector<128x3xi32>
    %cst_127 = arith.constant 0.000000e+00 : f32
    %539 = vector.broadcast %cst_127 : f32 to vector<128x3xf32>
    %540 = arith.select %538, %530, %539 : vector<128x3xi1>, vector<128x3xf32>
    %cst_128 = arith.constant dense<0.000000e+00> : vector<128xf32>
    %541 = vector.multi_reduction <add>, %540, %cst_128 [1] : vector<128x3xf32> to vector<128xf32>
    %542 = vector.shape_cast %541 : vector<128xf32> to vector<128x1xf32>
    %c2_i32_129 = arith.constant 2 : i32
    %543 = vector.broadcast %c2_i32_129 : i32 to vector<128x3xi32>
    %544 = arith.cmpi eq, %21, %543 : vector<128x3xi32>
    %cst_130 = arith.constant 0.000000e+00 : f32
    %545 = vector.broadcast %cst_130 : f32 to vector<128x3xf32>
    %546 = arith.select %544, %530, %545 : vector<128x3xi1>, vector<128x3xf32>
    %cst_131 = arith.constant dense<0.000000e+00> : vector<128xf32>
    %547 = vector.multi_reduction <add>, %546, %cst_131 [1] : vector<128x3xf32> to vector<128xf32>
    %548 = vector.shape_cast %547 : vector<128xf32> to vector<128x1xf32>
    %549 = arith.subf %44, %536 : vector<128x1xf32>
    %550 = arith.subf %50, %542 : vector<128x1xf32>
    %551 = arith.subf %56, %548 : vector<128x1xf32>
    %552 = arith.mulf %549, %549 : vector<128x1xf32>
    %553 = arith.mulf %550, %550 : vector<128x1xf32>
    %554 = arith.addf %552, %553 : vector<128x1xf32>
    %555 = arith.mulf %551, %551 : vector<128x1xf32>
    %556 = arith.addf %554, %555 : vector<128x1xf32>
    %557 = math.sqrt %556 : vector<128x1xf32>
    %c50_i32 = arith.constant 50 : i32
    %558 = vector.broadcast %c50_i32 : i32 to vector<128x80xi32>
    %559 = arith.cmpi eq, %22, %558 : vector<128x80xi32>
    %560 = vector.shape_cast %557 : vector<128x1xf32> to vector<128x1xf32>
    %561 = vector.broadcast %560 : vector<128x1xf32> to vector<128x80xf32>
    %562 = arith.select %559, %561, %503 : vector<128x80xi1>, vector<128x80xf32>
    %c51_i32 = arith.constant 51 : i32
    %563 = vector.broadcast %c51_i32 : i32 to vector<128x80xi32>
    %564 = arith.cmpi eq, %22, %563 : vector<128x80xi32>
    %565 = vector.shape_cast %549 : vector<128x1xf32> to vector<128x1xf32>
    %566 = vector.broadcast %565 : vector<128x1xf32> to vector<128x80xf32>
    %567 = arith.select %564, %566, %562 : vector<128x80xi1>, vector<128x80xf32>
    %c52_i32 = arith.constant 52 : i32
    %568 = vector.broadcast %c52_i32 : i32 to vector<128x80xi32>
    %569 = arith.cmpi eq, %22, %568 : vector<128x80xi32>
    %570 = vector.shape_cast %550 : vector<128x1xf32> to vector<128x1xf32>
    %571 = vector.broadcast %570 : vector<128x1xf32> to vector<128x80xf32>
    %572 = arith.select %569, %571, %567 : vector<128x80xi1>, vector<128x80xf32>
    %c53_i32 = arith.constant 53 : i32
    %573 = vector.broadcast %c53_i32 : i32 to vector<128x80xi32>
    %574 = arith.cmpi eq, %22, %573 : vector<128x80xi32>
    %575 = vector.shape_cast %551 : vector<128x1xf32> to vector<128x1xf32>
    %576 = vector.broadcast %575 : vector<128x1xf32> to vector<128x80xf32>
    %577 = arith.select %574, %576, %572 : vector<128x80xi1>, vector<128x80xf32>
    %c57_i32 = arith.constant 57 : i32
    %578 = vector.broadcast %c57_i32 : i32 to vector<128x80xi32>
    %579 = arith.cmpi eq, %22, %578 : vector<128x80xi32>
    %580 = vector.shape_cast %536 : vector<128x1xf32> to vector<128x1xf32>
    %581 = vector.broadcast %580 : vector<128x1xf32> to vector<128x80xf32>
    %582 = arith.select %579, %581, %577 : vector<128x80xi1>, vector<128x80xf32>
    %c58_i32 = arith.constant 58 : i32
    %583 = vector.broadcast %c58_i32 : i32 to vector<128x80xi32>
    %584 = arith.cmpi eq, %22, %583 : vector<128x80xi32>
    %585 = vector.shape_cast %542 : vector<128x1xf32> to vector<128x1xf32>
    %586 = vector.broadcast %585 : vector<128x1xf32> to vector<128x80xf32>
    %587 = arith.select %584, %586, %582 : vector<128x80xi1>, vector<128x80xf32>
    %c59_i32 = arith.constant 59 : i32
    %588 = vector.broadcast %c59_i32 : i32 to vector<128x80xi32>
    %589 = arith.cmpi eq, %22, %588 : vector<128x80xi32>
    %590 = vector.shape_cast %548 : vector<128x1xf32> to vector<128x1xf32>
    %591 = vector.broadcast %590 : vector<128x1xf32> to vector<128x80xf32>
    %592 = arith.select %589, %591, %587 : vector<128x80xi1>, vector<128x80xf32>
    %cst_132 = arith.constant 3.40282347E+38 : f32
    %593 = vector.broadcast %cst_132 : f32 to vector<128x128xf32>
    %594 = arith.select %527, %593, %517 : vector<128x128xi1>, vector<128x128xf32>
    %cst_133 = arith.constant dense<0x7F800000> : vector<128xf32>
    %595 = vector.multi_reduction <minimumf>, %594, %cst_133 [1] : vector<128x128xf32> to vector<128xf32>
    %596 = vector.shape_cast %595 : vector<128xf32> to vector<128x1xf32>
    %597 = vector.broadcast %596 : vector<128x1xf32> to vector<128x128xf32>
    %598 = arith.cmpf oeq, %594, %597 : vector<128x128xf32>
    %cst_134 = arith.constant 1.280000e+02 : f32
    %599 = vector.broadcast %cst_134 : f32 to vector<128x128xf32>
    %600 = arith.select %598, %20, %599 : vector<128x128xi1>, vector<128x128xf32>
    %cst_135 = arith.constant dense<0x7F800000> : vector<128xf32>
    %601 = vector.multi_reduction <minimumf>, %600, %cst_135 [1] : vector<128x128xf32> to vector<128xf32>
    %602 = vector.shape_cast %601 : vector<128xf32> to vector<128x1xf32>
    %603 = vector.broadcast %602 : vector<128x1xf32> to vector<128x128xf32>
    %604 = arith.cmpf oeq, %20, %603 : vector<128x128xf32>
    %cst_136 = arith.constant 3.40282347E+38 : f32
    %605 = vector.broadcast %cst_136 : f32 to vector<128x128xf32>
    %606 = arith.select %604, %605, %594 : vector<128x128xi1>, vector<128x128xf32>
    %cst_137 = arith.constant dense<0x7F800000> : vector<128xf32>
    %607 = vector.multi_reduction <minimumf>, %606, %cst_137 [1] : vector<128x128xf32> to vector<128xf32>
    %608 = vector.shape_cast %607 : vector<128xf32> to vector<128x1xf32>
    %609 = vector.broadcast %608 : vector<128x1xf32> to vector<128x128xf32>
    %610 = arith.cmpf oeq, %606, %609 : vector<128x128xf32>
    %cst_138 = arith.constant 1.280000e+02 : f32
    %611 = vector.broadcast %cst_138 : f32 to vector<128x128xf32>
    %612 = arith.select %610, %20, %611 : vector<128x128xi1>, vector<128x128xf32>
    %cst_139 = arith.constant dense<0x7F800000> : vector<128xf32>
    %613 = vector.multi_reduction <minimumf>, %612, %cst_139 [1] : vector<128x128xf32> to vector<128xf32>
    %614 = vector.shape_cast %613 : vector<128xf32> to vector<128x1xf32>
    %615 = vector.broadcast %614 : vector<128x1xf32> to vector<128x128xf32>
    %616 = arith.cmpf oeq, %20, %615 : vector<128x128xf32>
    %617 = arith.extui %616 : vector<128x128xi1> to vector<128x128xi32>
    %618 = arith.sitofp %617 : vector<128x128xi32> to vector<128x128xf32>
    %cst_140 = arith.constant dense<0.000000e+00> : vector<128x3xf32>
    %619 = tpu.matmul %618, %5, %cst_140 {dimension_numbers = #tpu.dot_dimension_numbers<[1], [0], [0], [1], [0, 0, 1, 1], [], []>} : vector<128x128xf32>, vector<128x3xf32>, vector<128x3xf32> -> vector<128x3xf32>
    %c0_i32_141 = arith.constant 0 : i32
    %620 = vector.broadcast %c0_i32_141 : i32 to vector<128x3xi32>
    %621 = arith.cmpi eq, %21, %620 : vector<128x3xi32>
    %cst_142 = arith.constant 0.000000e+00 : f32
    %622 = vector.broadcast %cst_142 : f32 to vector<128x3xf32>
    %623 = arith.select %621, %619, %622 : vector<128x3xi1>, vector<128x3xf32>
    %cst_143 = arith.constant dense<0.000000e+00> : vector<128xf32>
    %624 = vector.multi_reduction <add>, %623, %cst_143 [1] : vector<128x3xf32> to vector<128xf32>
    %625 = vector.shape_cast %624 : vector<128xf32> to vector<128x1xf32>
    %c1_i32_144 = arith.constant 1 : i32
    %626 = vector.broadcast %c1_i32_144 : i32 to vector<128x3xi32>
    %627 = arith.cmpi eq, %21, %626 : vector<128x3xi32>
    %cst_145 = arith.constant 0.000000e+00 : f32
    %628 = vector.broadcast %cst_145 : f32 to vector<128x3xf32>
    %629 = arith.select %627, %619, %628 : vector<128x3xi1>, vector<128x3xf32>
    %cst_146 = arith.constant dense<0.000000e+00> : vector<128xf32>
    %630 = vector.multi_reduction <add>, %629, %cst_146 [1] : vector<128x3xf32> to vector<128xf32>
    %631 = vector.shape_cast %630 : vector<128xf32> to vector<128x1xf32>
    %c2_i32_147 = arith.constant 2 : i32
    %632 = vector.broadcast %c2_i32_147 : i32 to vector<128x3xi32>
    %633 = arith.cmpi eq, %21, %632 : vector<128x3xi32>
    %cst_148 = arith.constant 0.000000e+00 : f32
    %634 = vector.broadcast %cst_148 : f32 to vector<128x3xf32>
    %635 = arith.select %633, %619, %634 : vector<128x3xi1>, vector<128x3xf32>
    %cst_149 = arith.constant dense<0.000000e+00> : vector<128xf32>
    %636 = vector.multi_reduction <add>, %635, %cst_149 [1] : vector<128x3xf32> to vector<128xf32>
    %637 = vector.shape_cast %636 : vector<128xf32> to vector<128x1xf32>
    %638 = arith.subf %44, %625 : vector<128x1xf32>
    %639 = arith.subf %50, %631 : vector<128x1xf32>
    %640 = arith.subf %56, %637 : vector<128x1xf32>
    %641 = arith.mulf %638, %638 : vector<128x1xf32>
    %642 = arith.mulf %639, %639 : vector<128x1xf32>
    %643 = arith.addf %641, %642 : vector<128x1xf32>
    %644 = arith.mulf %640, %640 : vector<128x1xf32>
    %645 = arith.addf %643, %644 : vector<128x1xf32>
    %646 = math.sqrt %645 : vector<128x1xf32>
    %c60_i32 = arith.constant 60 : i32
    %647 = vector.broadcast %c60_i32 : i32 to vector<128x80xi32>
    %648 = arith.cmpi eq, %22, %647 : vector<128x80xi32>
    %649 = vector.shape_cast %646 : vector<128x1xf32> to vector<128x1xf32>
    %650 = vector.broadcast %649 : vector<128x1xf32> to vector<128x80xf32>
    %651 = arith.select %648, %650, %592 : vector<128x80xi1>, vector<128x80xf32>
    %c61_i32 = arith.constant 61 : i32
    %652 = vector.broadcast %c61_i32 : i32 to vector<128x80xi32>
    %653 = arith.cmpi eq, %22, %652 : vector<128x80xi32>
    %654 = vector.shape_cast %638 : vector<128x1xf32> to vector<128x1xf32>
    %655 = vector.broadcast %654 : vector<128x1xf32> to vector<128x80xf32>
    %656 = arith.select %653, %655, %651 : vector<128x80xi1>, vector<128x80xf32>
    %c62_i32 = arith.constant 62 : i32
    %657 = vector.broadcast %c62_i32 : i32 to vector<128x80xi32>
    %658 = arith.cmpi eq, %22, %657 : vector<128x80xi32>
    %659 = vector.shape_cast %639 : vector<128x1xf32> to vector<128x1xf32>
    %660 = vector.broadcast %659 : vector<128x1xf32> to vector<128x80xf32>
    %661 = arith.select %658, %660, %656 : vector<128x80xi1>, vector<128x80xf32>
    %c63_i32 = arith.constant 63 : i32
    %662 = vector.broadcast %c63_i32 : i32 to vector<128x80xi32>
    %663 = arith.cmpi eq, %22, %662 : vector<128x80xi32>
    %664 = vector.shape_cast %640 : vector<128x1xf32> to vector<128x1xf32>
    %665 = vector.broadcast %664 : vector<128x1xf32> to vector<128x80xf32>
    %666 = arith.select %663, %665, %661 : vector<128x80xi1>, vector<128x80xf32>
    %c67_i32 = arith.constant 67 : i32
    %667 = vector.broadcast %c67_i32 : i32 to vector<128x80xi32>
    %668 = arith.cmpi eq, %22, %667 : vector<128x80xi32>
    %669 = vector.shape_cast %625 : vector<128x1xf32> to vector<128x1xf32>
    %670 = vector.broadcast %669 : vector<128x1xf32> to vector<128x80xf32>
    %671 = arith.select %668, %670, %666 : vector<128x80xi1>, vector<128x80xf32>
    %c68_i32 = arith.constant 68 : i32
    %672 = vector.broadcast %c68_i32 : i32 to vector<128x80xi32>
    %673 = arith.cmpi eq, %22, %672 : vector<128x80xi32>
    %674 = vector.shape_cast %631 : vector<128x1xf32> to vector<128x1xf32>
    %675 = vector.broadcast %674 : vector<128x1xf32> to vector<128x80xf32>
    %676 = arith.select %673, %675, %671 : vector<128x80xi1>, vector<128x80xf32>
    %c69_i32 = arith.constant 69 : i32
    %677 = vector.broadcast %c69_i32 : i32 to vector<128x80xi32>
    %678 = arith.cmpi eq, %22, %677 : vector<128x80xi32>
    %679 = vector.shape_cast %637 : vector<128x1xf32> to vector<128x1xf32>
    %680 = vector.broadcast %679 : vector<128x1xf32> to vector<128x80xf32>
    %681 = arith.select %678, %680, %676 : vector<128x80xi1>, vector<128x80xf32>
    %cst_150 = arith.constant 3.40282347E+38 : f32
    %682 = vector.broadcast %cst_150 : f32 to vector<128x128xf32>
    %683 = arith.select %616, %682, %606 : vector<128x128xi1>, vector<128x128xf32>
    %cst_151 = arith.constant dense<0x7F800000> : vector<128xf32>
    %684 = vector.multi_reduction <minimumf>, %683, %cst_151 [1] : vector<128x128xf32> to vector<128xf32>
    %685 = vector.shape_cast %684 : vector<128xf32> to vector<128x1xf32>
    %686 = vector.broadcast %685 : vector<128x1xf32> to vector<128x128xf32>
    %687 = arith.cmpf oeq, %683, %686 : vector<128x128xf32>
    %cst_152 = arith.constant 1.280000e+02 : f32
    %688 = vector.broadcast %cst_152 : f32 to vector<128x128xf32>
    %689 = arith.select %687, %20, %688 : vector<128x128xi1>, vector<128x128xf32>
    %cst_153 = arith.constant dense<0x7F800000> : vector<128xf32>
    %690 = vector.multi_reduction <minimumf>, %689, %cst_153 [1] : vector<128x128xf32> to vector<128xf32>
    %691 = vector.shape_cast %690 : vector<128xf32> to vector<128x1xf32>
    %692 = vector.broadcast %691 : vector<128x1xf32> to vector<128x128xf32>
    %693 = arith.cmpf oeq, %20, %692 : vector<128x128xf32>
    %cst_154 = arith.constant 3.40282347E+38 : f32
    %694 = vector.broadcast %cst_154 : f32 to vector<128x128xf32>
    %695 = arith.select %693, %694, %683 : vector<128x128xi1>, vector<128x128xf32>
    %cst_155 = arith.constant dense<0x7F800000> : vector<128xf32>
    %696 = vector.multi_reduction <minimumf>, %695, %cst_155 [1] : vector<128x128xf32> to vector<128xf32>
    %697 = vector.shape_cast %696 : vector<128xf32> to vector<128x1xf32>
    %698 = vector.broadcast %697 : vector<128x1xf32> to vector<128x128xf32>
    %699 = arith.cmpf oeq, %695, %698 : vector<128x128xf32>
    %cst_156 = arith.constant 1.280000e+02 : f32
    %700 = vector.broadcast %cst_156 : f32 to vector<128x128xf32>
    %701 = arith.select %699, %20, %700 : vector<128x128xi1>, vector<128x128xf32>
    %cst_157 = arith.constant dense<0x7F800000> : vector<128xf32>
    %702 = vector.multi_reduction <minimumf>, %701, %cst_157 [1] : vector<128x128xf32> to vector<128xf32>
    %703 = vector.shape_cast %702 : vector<128xf32> to vector<128x1xf32>
    %704 = vector.broadcast %703 : vector<128x1xf32> to vector<128x128xf32>
    %705 = arith.cmpf oeq, %20, %704 : vector<128x128xf32>
    %706 = arith.extui %705 : vector<128x128xi1> to vector<128x128xi32>
    %707 = arith.sitofp %706 : vector<128x128xi32> to vector<128x128xf32>
    %cst_158 = arith.constant dense<0.000000e+00> : vector<128x3xf32>
    %708 = tpu.matmul %707, %5, %cst_158 {dimension_numbers = #tpu.dot_dimension_numbers<[1], [0], [0], [1], [0, 0, 1, 1], [], []>} : vector<128x128xf32>, vector<128x3xf32>, vector<128x3xf32> -> vector<128x3xf32>
    %c0_i32_159 = arith.constant 0 : i32
    %709 = vector.broadcast %c0_i32_159 : i32 to vector<128x3xi32>
    %710 = arith.cmpi eq, %21, %709 : vector<128x3xi32>
    %cst_160 = arith.constant 0.000000e+00 : f32
    %711 = vector.broadcast %cst_160 : f32 to vector<128x3xf32>
    %712 = arith.select %710, %708, %711 : vector<128x3xi1>, vector<128x3xf32>
    %cst_161 = arith.constant dense<0.000000e+00> : vector<128xf32>
    %713 = vector.multi_reduction <add>, %712, %cst_161 [1] : vector<128x3xf32> to vector<128xf32>
    %714 = vector.shape_cast %713 : vector<128xf32> to vector<128x1xf32>
    %c1_i32_162 = arith.constant 1 : i32
    %715 = vector.broadcast %c1_i32_162 : i32 to vector<128x3xi32>
    %716 = arith.cmpi eq, %21, %715 : vector<128x3xi32>
    %cst_163 = arith.constant 0.000000e+00 : f32
    %717 = vector.broadcast %cst_163 : f32 to vector<128x3xf32>
    %718 = arith.select %716, %708, %717 : vector<128x3xi1>, vector<128x3xf32>
    %cst_164 = arith.constant dense<0.000000e+00> : vector<128xf32>
    %719 = vector.multi_reduction <add>, %718, %cst_164 [1] : vector<128x3xf32> to vector<128xf32>
    %720 = vector.shape_cast %719 : vector<128xf32> to vector<128x1xf32>
    %c2_i32_165 = arith.constant 2 : i32
    %721 = vector.broadcast %c2_i32_165 : i32 to vector<128x3xi32>
    %722 = arith.cmpi eq, %21, %721 : vector<128x3xi32>
    %cst_166 = arith.constant 0.000000e+00 : f32
    %723 = vector.broadcast %cst_166 : f32 to vector<128x3xf32>
    %724 = arith.select %722, %708, %723 : vector<128x3xi1>, vector<128x3xf32>
    %cst_167 = arith.constant dense<0.000000e+00> : vector<128xf32>
    %725 = vector.multi_reduction <add>, %724, %cst_167 [1] : vector<128x3xf32> to vector<128xf32>
    %726 = vector.shape_cast %725 : vector<128xf32> to vector<128x1xf32>
    %727 = arith.subf %44, %714 : vector<128x1xf32>
    %728 = arith.subf %50, %720 : vector<128x1xf32>
    %729 = arith.subf %56, %726 : vector<128x1xf32>
    %730 = arith.mulf %727, %727 : vector<128x1xf32>
    %731 = arith.mulf %728, %728 : vector<128x1xf32>
    %732 = arith.addf %730, %731 : vector<128x1xf32>
    %733 = arith.mulf %729, %729 : vector<128x1xf32>
    %734 = arith.addf %732, %733 : vector<128x1xf32>
    %735 = math.sqrt %734 : vector<128x1xf32>
    %c70_i32 = arith.constant 70 : i32
    %736 = vector.broadcast %c70_i32 : i32 to vector<128x80xi32>
    %737 = arith.cmpi eq, %22, %736 : vector<128x80xi32>
    %738 = vector.shape_cast %735 : vector<128x1xf32> to vector<128x1xf32>
    %739 = vector.broadcast %738 : vector<128x1xf32> to vector<128x80xf32>
    %740 = arith.select %737, %739, %681 : vector<128x80xi1>, vector<128x80xf32>
    %c71_i32 = arith.constant 71 : i32
    %741 = vector.broadcast %c71_i32 : i32 to vector<128x80xi32>
    %742 = arith.cmpi eq, %22, %741 : vector<128x80xi32>
    %743 = vector.shape_cast %727 : vector<128x1xf32> to vector<128x1xf32>
    %744 = vector.broadcast %743 : vector<128x1xf32> to vector<128x80xf32>
    %745 = arith.select %742, %744, %740 : vector<128x80xi1>, vector<128x80xf32>
    %c72_i32 = arith.constant 72 : i32
    %746 = vector.broadcast %c72_i32 : i32 to vector<128x80xi32>
    %747 = arith.cmpi eq, %22, %746 : vector<128x80xi32>
    %748 = vector.shape_cast %728 : vector<128x1xf32> to vector<128x1xf32>
    %749 = vector.broadcast %748 : vector<128x1xf32> to vector<128x80xf32>
    %750 = arith.select %747, %749, %745 : vector<128x80xi1>, vector<128x80xf32>
    %c73_i32 = arith.constant 73 : i32
    %751 = vector.broadcast %c73_i32 : i32 to vector<128x80xi32>
    %752 = arith.cmpi eq, %22, %751 : vector<128x80xi32>
    %753 = vector.shape_cast %729 : vector<128x1xf32> to vector<128x1xf32>
    %754 = vector.broadcast %753 : vector<128x1xf32> to vector<128x80xf32>
    %755 = arith.select %752, %754, %750 : vector<128x80xi1>, vector<128x80xf32>
    %c77_i32 = arith.constant 77 : i32
    %756 = vector.broadcast %c77_i32 : i32 to vector<128x80xi32>
    %757 = arith.cmpi eq, %22, %756 : vector<128x80xi32>
    %758 = vector.shape_cast %714 : vector<128x1xf32> to vector<128x1xf32>
    %759 = vector.broadcast %758 : vector<128x1xf32> to vector<128x80xf32>
    %760 = arith.select %757, %759, %755 : vector<128x80xi1>, vector<128x80xf32>
    %c78_i32 = arith.constant 78 : i32
    %761 = vector.broadcast %c78_i32 : i32 to vector<128x80xi32>
    %762 = arith.cmpi eq, %22, %761 : vector<128x80xi32>
    %763 = vector.shape_cast %720 : vector<128x1xf32> to vector<128x1xf32>
    %764 = vector.broadcast %763 : vector<128x1xf32> to vector<128x80xf32>
    %765 = arith.select %762, %764, %760 : vector<128x80xi1>, vector<128x80xf32>
    %c79_i32 = arith.constant 79 : i32
    %766 = vector.broadcast %c79_i32 : i32 to vector<128x80xi32>
    %767 = arith.cmpi eq, %22, %766 : vector<128x80xi32>
    %768 = vector.shape_cast %726 : vector<128x1xf32> to vector<128x1xf32>
    %769 = vector.broadcast %768 : vector<128x1xf32> to vector<128x80xf32>
    %770 = arith.select %767, %769, %765 : vector<128x80xi1>, vector<128x80xf32>
    %c0_168 = arith.constant 0 : index
    %c0_169 = arith.constant 0 : index
    %c0_170 = arith.constant 0 : index
    %771 = vector.load %arg5[%c0_168, %c0_169, %c0_170] : memref<1x128x80xf32, #tpu.memory_space<vmem>>, vector<1x128x80xf32>
    %772 = vector.shape_cast %771 : vector<1x128x80xf32> to vector<128x80xf32>
    %773 = vector.shape_cast %770 : vector<128x80xf32> to vector<1x128x80xf32>
    tpu.vector_store %arg5[%c0_168, %c0_169, %c0_170], %773 {strides = array<i32>} : memref<1x128x80xf32, #tpu.memory_space<vmem>>, vector<1x128x80xf32>,
    return
  }
  func.func @transform_0(%arg0: i32, %arg1: i32) -> (i32, i32, i32) {
    %c0_i32 = arith.constant 0 : i32
    %c0_i32_0 = arith.constant 0 : i32
    %c0_i32_1 = arith.constant 0 : i32
    return %arg0, %c0_i32, %c0_i32_0 : i32, i32, i32
  }
  func.func @transform_1(%arg0: i32, %arg1: i32) -> (i32, i32, i32) {
    %c0_i32 = arith.constant 0 : i32
    %c0_i32_0 = arith.constant 0 : i32
    %c0_i32_1 = arith.constant 0 : i32
    return %arg0, %c0_i32, %c0_i32_0 : i32, i32, i32
  }
  func.func @transform_2(%arg0: i32, %arg1: i32) -> (i32, i32, i32) {
    %c0_i32 = arith.constant 0 : i32
    %c0_i32_0 = arith.constant 0 : i32
    %c0_i32_1 = arith.constant 0 : i32
    return %arg0, %c0_i32, %c0_i32_0 : i32, i32, i32
  }
  func.func @transform_3(%arg0: i32, %arg1: i32) -> (i32, i32, i32) {
    %c0_i32 = arith.constant 0 : i32
    %c0_i32_0 = arith.constant 0 : i32
    return %arg0, %arg1, %c0_i32 : i32, i32, i32
  }
}

</mosaic_0001>

<llo_original>
// kernel: tpu_custom_call.1
$region0: #{tpu_custom_call.1}
  #allocation0 [shape = 'u32[]', space=smem, size = 0x4, offset = 0x4, fixed_abs, tag = 'smem constant byte address 0x4 - core index']
  #allocation1 [shape = 'u32[144,128]{1,0:T(1,128)}', space=vmem, size = 0x12000, scoped, tag = 'internal scratch']
  %s0 = inlined_call_operand.vmem [shape: f32[2,128,3], index: 0, kind: input, shape index: {}]
  %s1 = inlined_call_operand.vmem [shape: f32[2,128,16], index: 1, kind: input, shape index: {}]
  %s2 = inlined_call_operand.vmem [shape: f32[2,1,128], index: 2, kind: input, shape index: {}]
  %s3 = inlined_call_operand.vmem [shape: f32[2,128,80], index: 3, kind: output, shape index: {}]
  %s4 = sld [smem:[#allocation0]]
  $region45: #{tpu_custom_call.1} parent=0
    _
  %s6 = ssub.s32 1, %s4
  %s7 = scalar_select 0, %s6, %s4
  loop: start=0, step=1, limit=4
  $region2: #{tpu_custom_call.1} parent=0 // loop_pre_header
    _
  $region3: #{tpu_custom_call.1} parent=0 // loop_header
    %s9 = sphi 0, %s13
    %p10 = scmp.ge.s32.totalorder %s9, 4
    %s16 = sphi 0, %s28
    %s17 = sphi 0, %s24
    %s18 = sphi 0, %s16
    %s19 = sphi 0, %s17
    %s20 = sphi 0, %s18
    %s21 = sphi 0, %s19
    %s31 = sphi 0, %s33
    %s34 = sphi 0, %s31
    %s35 = sphi 0, %s34
    %s51 = sphi 0, %s35
    %s57 = sphi 0, %s59
    %s60 = sphi 0, %s57
    %s61 = sphi 0, %s60
    %s77 = sphi 0, %s61
    %s83 = sphi 0, %s85
    %s86 = sphi 0, %s83
    %s87 = sphi 0, %s86
    %s103 = sphi 0, %s87
    %s111 = sphi 0, %s113
    %s114 = sphi 0, %s111
    %s115 = sphi 0, %s114
    %s131 = sphi 0, %s115
  $region4: #{tpu_custom_call.1} parent=0 // loop_header_branch
    %12 = sbr.rel (%p10) target = $region8
  $region5: #{tpu_custom_call.1} parent=0 // loop_body
    %s14 = ssub.s32 %s9, 1
    %s15 = ssub.s32 %s9, 2
    %s22 = sadd.s32 1, %s17
    %p23 = scmp.ge.s32.totalorder %s22, 1
    %s24 = scalar_select %p23, 0, %s22
    %s25 = sadd.s32 1, %s16
    %s26 = scalar_select %p23, %s25, %s16
    %p27 = scmp.ge.s32.totalorder %s26, 2
    %s28 = scalar_select %p27, 0, %s26
    %s29 = ssub.s32 %s16, %s28
    %p30 = scmp.eq.s32.totalorder %s29, 0
    %s32 = sadd.s32 %s31, 1
    %s33 = scalar_select %p30, %s31, %s32
    %p36 = pneg %p30
    %p37 = scmp.eq.s32.totalorder %s9, 1
    %p38 = por %p36, %p37
    %p39 = scmp.ne.s32.totalorder %s31, %s34
    %p40 = scmp.eq.s32.totalorder %s9, 0
    %p41 = por %p39, %p40
    %p42 = scmp.ne.s32.totalorder %s31, %s34
    %p43 = scmp.eq.s32.totalorder %s14, 1
    %p44 = por %p42, %p43
    %p45 = scmp.ne.s32.totalorder %s34, %s35
    %p46 = scmp.eq.s32.totalorder %s14, 0
    %p47 = por %p45, %p46
    %p48 = scmp.ne.s32.totalorder %s34, %s35
    %p49 = scmp.eq.s32.totalorder %s15, 1
    %p50 = por %p48, %p49
    %p52 = scmp.ne.s32.totalorder %s35, %s51
    %p53 = scmp.eq.s32.totalorder %s15, 0
    %p54 = por %p52, %p53
    %s55 = ssub.s32 %s16, %s28
    %p56 = scmp.eq.s32.totalorder %s55, 0
    %s58 = sadd.s32 %s57, 1
    %s59 = scalar_select %p56, %s57, %s58
    %p62 = pneg %p56
    %p63 = scmp.eq.s32.totalorder %s9, 1
    %p64 = por %p62, %p63
    %p65 = scmp.ne.s32.totalorder %s57, %s60
    %p66 = scmp.eq.s32.totalorder %s9, 0
    %p67 = por %p65, %p66
    %p68 = scmp.ne.s32.totalorder %s57, %s60
    %p69 = scmp.eq.s32.totalorder %s14, 1
    %p70 = por %p68, %p69
    %p71 = scmp.ne.s32.totalorder %s60, %s61
    %p72 = scmp.eq.s32.totalorder %s14, 0
    %p73 = por %p71, %p72
    %p74 = scmp.ne.s32.totalorder %s60, %s61
    %p75 = scmp.eq.s32.totalorder %s15, 1
    %p76 = por %p74, %p75
    %p78 = scmp.ne.s32.totalorder %s61, %s77
    %p79 = scmp.eq.s32.totalorder %s15, 0
    %p80 = por %p78, %p79
    %s81 = ssub.s32 %s16, %s28
    %p82 = scmp.eq.s32.totalorder %s81, 0
    %s84 = sadd.s32 %s83, 1
    %s85 = scalar_select %p82, %s83, %s84
    %p88 = pneg %p82
    %p89 = scmp.eq.s32.totalorder %s9, 1
    %p90 = por %p88, %p89
    %p91 = scmp.ne.s32.totalorder %s83, %s86
    %p92 = scmp.eq.s32.totalorder %s9, 0
    %p93 = por %p91, %p92
    %p94 = scmp.ne.s32.totalorder %s83, %s86
    %p95 = scmp.eq.s32.totalorder %s14, 1
    %p96 = por %p94, %p95
    %p97 = scmp.ne.s32.totalorder %s86, %s87
    %p98 = scmp.eq.s32.totalorder %s14, 0
    %p99 = por %p97, %p98
    %p100 = scmp.ne.s32.totalorder %s86, %s87
    %p101 = scmp.eq.s32.totalorder %s15, 1
    %p102 = por %p100, %p101
    %p104 = scmp.ne.s32.totalorder %s87, %s103
    %p105 = scmp.eq.s32.totalorder %s15, 0
    %p106 = por %p104, %p105
    %s107 = ssub.s32 %s16, %s28
    %s108 = ssub.s32 %s17, %s24
    %s109 = sor.u32 %s107, %s108
    %p110 = scmp.eq.s32.totalorder %s109, 0
    %s112 = sadd.s32 %s111, 1
    %s113 = scalar_select %p110, %s111, %s112
    %p116 = pneg %p110
    %p117 = scmp.eq.s32.totalorder %s9, 1
    %p118 = por %p116, %p117
    %p119 = scmp.ne.s32.totalorder %s111, %s114
    %p120 = scmp.eq.s32.totalorder %s9, 0
    %p121 = por %p119, %p120
    %p122 = scmp.ne.s32.totalorder %s111, %s114
    %p123 = scmp.eq.s32.totalorder %s14, 1
    %p124 = por %p122, %p123
    %p125 = scmp.ne.s32.totalorder %s114, %s115
    %p126 = scmp.eq.s32.totalorder %s14, 0
    %p127 = por %p125, %p126
    %p128 = scmp.ne.s32.totalorder %s114, %s115
    %p129 = scmp.eq.s32.totalorder %s15, 1
    %p130 = por %p128, %p129
    %p132 = scmp.ne.s32.totalorder %s115, %s131
    %p133 = scmp.eq.s32.totalorder %s15, 0
    %p134 = por %p132, %p133
    %p135 = scmp.le.s32.totalorder 1, %s9
    %p136 = scmp.lt.s32.totalorder %s9, 3
    %p137 = pnand %p135, %p136
    %p138 = pneg %p137
    // Predicated region
    $region9: #{tpu_custom_call.1} parent=5 // pred_check
      _
    $region10: #{tpu_custom_call.1} parent=5 // pred_check_branch
      %140 = sbr.rel (%p137) target = $region12
    $region11: #{tpu_custom_call.1} parent=5 // pred_region
      %s141 = ssub.s32 %s9, 1
    $region12: #{tpu_custom_call.1} parent=5 // pred_fallthru
      _
    %p142 = scmp.lt.s32.totalorder %s9, 2
    // Predicated region
    $region13: #{tpu_custom_call.1} parent=5 // pred_check
      %p143 = pneg %p142
    $region14: #{tpu_custom_call.1} parent=5 // pred_check_branch
      %145 = sbr.rel (%p143) target = $region16
    $region15: #{tpu_custom_call.1} parent=5 // pred_region
      // Predicated region
      $region17: #{tpu_custom_call.1} parent=15 // pred_check
        %p146 = pneg %p41
      $region18: #{tpu_custom_call.1} parent=15 // pred_check_branch
        %148 = sbr.rel (%p146) target = $region20
      $region19: #{tpu_custom_call.1} parent=15 // pred_region
        %p149 = scmp.lt.s32.totalorder %s16, 1
        %s150 = scalar_select %p149, %s16, 1
        %s151 = smul.addr %s150, 16
        %s152 = smul.addr %s151, 8
        %s153 = scalar_lea.vmem %s0, %s152
      $region20: #{tpu_custom_call.1} parent=15 // pred_fallthru
        _
      // Predicated region
      $region21: #{tpu_custom_call.1} parent=15 // pred_check
        %p154 = pneg %p67
      $region22: #{tpu_custom_call.1} parent=15 // pred_check_branch
        %156 = sbr.rel (%p154) target = $region24
      $region23: #{tpu_custom_call.1} parent=15 // pred_region
        %p157 = scmp.lt.s32.totalorder %s16, 1
        %s158 = scalar_select %p157, %s16, 1
        %s159 = smul.addr %s158, 16
        %s160 = smul.addr %s159, 8
        %s161 = scalar_lea.vmem %s1, %s160
      $region24: #{tpu_custom_call.1} parent=15 // pred_fallthru
        _
      // Predicated region
      $region25: #{tpu_custom_call.1} parent=15 // pred_check
        %p162 = pneg %p93
      $region26: #{tpu_custom_call.1} parent=15 // pred_check_branch
        %164 = sbr.rel (%p162) target = $region28
      $region27: #{tpu_custom_call.1} parent=15 // pred_region
        %p165 = scmp.lt.s32.totalorder %s16, 1
        %s166 = scalar_select %p165, %s16, 1
        %s167 = scalar_lea.vmem %s2, %s166
      $region28: #{tpu_custom_call.1} parent=15 // pred_fallthru
        _
    $region16: #{tpu_custom_call.1} parent=5 // pred_fallthru
      _
    %p168 = scmp.le.s32.totalorder 1, %s9
    %p169 = scmp.lt.s32.totalorder %s9, 3
    %p170 = pnand %p168, %p169
    %p171 = pneg %p170
    // Predicated region
    $region29: #{tpu_custom_call.1} parent=5 // pred_check
      _
    $region30: #{tpu_custom_call.1} parent=5 // pred_check_branch
      %173 = sbr.rel (%p170) target = $region32
    $region31: #{tpu_custom_call.1} parent=5 // pred_region
      %s174 = ssub.s32 %s9, 1
      %p175 = scmp.lt.s32.totalorder %s18, 1
      %s176 = scalar_select %p175, %s18, 1
      %s177 = smul.addr %s176, 16
      %s178 = smul.addr %s177, 8
      %s179 = scalar_lea.vmem %s0, %s178
      %p180 = pneg %p47
      %p181 = pneg %p44
      %p182 = scmp.lt.s32.totalorder %s18, 1
      %s183 = scalar_select %p182, %s18, 1
      %s184 = smul.addr %s183, 16
      %s185 = smul.addr %s184, 8
      %s186 = scalar_lea.vmem %s1, %s185
      %p187 = pneg %p73
      %p188 = pneg %p70
      %p189 = scmp.lt.s32.totalorder %s18, 1
      %s190 = scalar_select %p189, %s18, 1
      %s191 = scalar_lea.vmem %s2, %s190
      %p192 = pneg %p99
      %p193 = pneg %p96
      %p194 = pneg %p127
      %p195 = pneg %p124
      %s196 = smul.u32 16, %s19
      %p197 = scmp.lt.s32.totalorder %s18, 1
      %s198 = scalar_select %p197, %s18, 1
      %p199 = scmp.lt.s32.totalorder %s196, 15
      %s200 = scalar_select %p199, %s196, 15
      %s201 = smul.addr %s198, 16
      %s202 = sadd.s32 %s200, %s201
      %s203 = smul.addr %s202, 8
      %s204 = scalar_lea.vmem %s3, %s203
      %p205 = scmp.lt.s32.totalorder %s18, 1
      %s206 = scalar_select %p205, %s18, 1
      %s207 = smul.addr %s206, 16
      %s208 = smul.addr %s207, 8
      %s209 = scalar_lea.vmem %s0, %s208
      %p210 = scmp.lt.s32.totalorder %s18, 1
      %s211 = scalar_select %p210, %s18, 1
      %s212 = smul.addr %s211, 16
      %s213 = smul.addr %s212, 8
      %s214 = scalar_lea.vmem %s1, %s213
      %p215 = scmp.lt.s32.totalorder %s18, 1
      %s216 = scalar_select %p215, %s18, 1
      %s217 = scalar_lea.vmem %s2, %s216
      %s218 = smul.u32 16, %s19
      %p219 = scmp.lt.s32.totalorder %s18, 1
      %s220 = scalar_select %p219, %s18, 1
      %p221 = scmp.lt.s32.totalorder %s218, 15
      %s222 = scalar_select %p221, %s218, 15
      %s223 = smul.addr %s220, 16
      %s224 = sadd.s32 %s222, %s223
      %s225 = smul.addr %s224, 8
      %s226 = scalar_lea.vmem %s3, %s225
      %s227 = smul.u32 16, %s19
      %s228 = smul.u32 %s19, 128
      %v229 = vld [vmem:[%s214] sm:$0xff]
      %v230 = vld [vmem:[%s214 + $0x8] sm:$0xff]
      %v231 = vld [vmem:[%s214 + $0x10] sm:$0xff]
      %v232 = vld [vmem:[%s214 + $0x18] sm:$0xff]
      %v233 = vld [vmem:[%s214 + $0x20] sm:$0xff]
      %v234 = vld [vmem:[%s214 + $0x28] sm:$0xff]
      %v235 = vld [vmem:[%s214 + $0x30] sm:$0xff]
      %v236 = vld [vmem:[%s214 + $0x38] sm:$0xff]
      %v237 = vld [vmem:[%s214 + $0x40] sm:$0xff]
      %v238 = vld [vmem:[%s214 + $0x48] sm:$0xff]
      %v239 = vld [vmem:[%s214 + $0x50] sm:$0xff]
      %v240 = vld [vmem:[%s214 + $0x58] sm:$0xff]
      %v241 = vld [vmem:[%s214 + $0x60] sm:$0xff]
      %v242 = vld [vmem:[%s214 + $0x68] sm:$0xff]
      %v243 = vld [vmem:[%s214 + $0x70] sm:$0xff]
      %v244 = vld [vmem:[%s214 + $0x78] sm:$0xff]
      %v245 = vld [vmem:[%s209] sm:$0xff]
      %v246 = vld [vmem:[%s209 + $0x8] sm:$0xff]
      %v247 = vld [vmem:[%s209 + $0x10] sm:$0xff]
      %v248 = vld [vmem:[%s209 + $0x18] sm:$0xff]
      %v249 = vld [vmem:[%s209 + $0x20] sm:$0xff]
      %v250 = vld [vmem:[%s209 + $0x28] sm:$0xff]
      %v251 = vld [vmem:[%s209 + $0x30] sm:$0xff]
      %v252 = vld [vmem:[%s209 + $0x38] sm:$0xff]
      %v253 = vld [vmem:[%s209 + $0x40] sm:$0xff]
      %v254 = vld [vmem:[%s209 + $0x48] sm:$0xff]
      %v255 = vld [vmem:[%s209 + $0x50] sm:$0xff]
      %v256 = vld [vmem:[%s209 + $0x58] sm:$0xff]
      %v257 = vld [vmem:[%s209 + $0x60] sm:$0xff]
      %v258 = vld [vmem:[%s209 + $0x68] sm:$0xff]
      %v259 = vld [vmem:[%s209 + $0x70] sm:$0xff]
      %v260 = vld [vmem:[%s209 + $0x78] sm:$0xff]
      %s261 = scalar_lea.vmem %s214, %s228
      %v262 = vld [vmem:[%s261] sm:$0xff]
      %v263 = vld [vmem:[%s261 + $0x8] sm:$0xff]
      %v264 = vld [vmem:[%s261 + $0x10] sm:$0xff]
      %v265 = vld [vmem:[%s261 + $0x18] sm:$0xff]
      %v266 = vld [vmem:[%s261 + $0x20] sm:$0xff]
      %v267 = vld [vmem:[%s261 + $0x28] sm:$0xff]
      %v268 = vld [vmem:[%s261 + $0x30] sm:$0xff]
      %v269 = vld [vmem:[%s261 + $0x38] sm:$0xff]
      %v270 = vld [vmem:[%s261 + $0x40] sm:$0xff]
      %v271 = vld [vmem:[%s261 + $0x48] sm:$0xff]
      %v272 = vld [vmem:[%s261 + $0x50] sm:$0xff]
      %v273 = vld [vmem:[%s261 + $0x58] sm:$0xff]
      %v274 = vld [vmem:[%s261 + $0x60] sm:$0xff]
      %v275 = vld [vmem:[%s261 + $0x68] sm:$0xff]
      %v276 = vld [vmem:[%s261 + $0x70] sm:$0xff]
      %v277 = vld [vmem:[%s261 + $0x78] sm:$0xff]
      %s278 = scalar_lea.vmem %s209, %s228
      %v279 = vld [vmem:[%s278] sm:$0xff]
      %v280 = vld [vmem:[%s278 + $0x8] sm:$0xff]
      %v281 = vld [vmem:[%s278 + $0x10] sm:$0xff]
      %v282 = vld [vmem:[%s278 + $0x18] sm:$0xff]
      %v283 = vld [vmem:[%s278 + $0x20] sm:$0xff]
      %v284 = vld [vmem:[%s278 + $0x28] sm:$0xff]
      %v285 = vld [vmem:[%s278 + $0x30] sm:$0xff]
      %v286 = vld [vmem:[%s278 + $0x38] sm:$0xff]
      %v287 = vld [vmem:[%s278 + $0x40] sm:$0xff]
      %v288 = vld [vmem:[%s278 + $0x48] sm:$0xff]
      %v289 = vld [vmem:[%s278 + $0x50] sm:$0xff]
      %v290 = vld [vmem:[%s278 + $0x58] sm:$0xff]
      %v291 = vld [vmem:[%s278 + $0x60] sm:$0xff]
      %v292 = vld [vmem:[%s278 + $0x68] sm:$0xff]
      %v293 = vld [vmem:[%s278 + $0x70] sm:$0xff]
      %v294 = vld [vmem:[%s278 + $0x78] sm:$0xff]
      %v295 = vld [vmem:[%s217] sm:$0x1]
      %v296 = vmul.f32 %v262, -2.0
      %v297 = vmul.f32 %v263, -2.0
      %v298 = vmul.f32 %v264, -2.0
      %v299 = vmul.f32 %v265, -2.0
      %v300 = vmul.f32 %v266, -2.0
      %v301 = vmul.f32 %v267, -2.0
      %v302 = vmul.f32 %v268, -2.0
      %v303 = vmul.f32 %v269, -2.0
      %v304 = vmul.f32 %v270, -2.0
      %v305 = vmul.f32 %v271, -2.0
      %v306 = vmul.f32 %v272, -2.0
      %v307 = vmul.f32 %v273, -2.0
      %v308 = vmul.f32 %v274, -2.0
      %v309 = vmul.f32 %v275, -2.0
      %v310 = vmul.f32 %v276, -2.0
      %v311 = vmul.f32 %v277, -2.0
      %vm312 = vcmask 130048
      %v314 = vsel %vm312, %v296, 0
      %v317 = vsel %vm312, %v297, 0
      %v320 = vsel %vm312, %v298, 0
      %v323 = vsel %vm312, %v299, 0
      %v326 = vsel %vm312, %v300, 0
      %v329 = vsel %vm312, %v301, 0
      %v332 = vsel %vm312, %v302, 0
      %v335 = vsel %vm312, %v303, 0
      %v338 = vsel %vm312, %v304, 0
      %v341 = vsel %vm312, %v305, 0
      %v344 = vsel %vm312, %v306, 0
      %v347 = vsel %vm312, %v307, 0
      %v350 = vsel %vm312, %v308, 0
      %v353 = vsel %vm312, %v309, 0
      %v356 = vsel %vm312, %v310, 0
      %v359 = vsel %vm312, %v311, 0
      %v362 = vsel %vm312, %v229, 0
      %v365 = vsel %vm312, %v230, 0
      %v368 = vsel %vm312, %v231, 0
      %v371 = vsel %vm312, %v232, 0
      %v374 = vsel %vm312, %v233, 0
      %v377 = vsel %vm312, %v234, 0
      %v380 = vsel %vm312, %v235, 0
      %v383 = vsel %vm312, %v236, 0
      %v386 = vsel %vm312, %v237, 0
      %v389 = vsel %vm312, %v238, 0
      %v392 = vsel %vm312, %v239, 0
      %v395 = vsel %vm312, %v240, 0
      %v398 = vsel %vm312, %v241, 0
      %v401 = vsel %vm312, %v242, 0
      %v404 = vsel %vm312, %v243, 0
      %v407 = vsel %vm312, %v244, 0
      %409 = vmatprep.subr.mxu0 0.0
      %410 = vmatpush1.xpose.msra.mxu0 %v362
      %411 = vmatprep.subr.mxu0 0.0
      %412 = vmatpush1.xpose.msra.mxu0 %v365
      %413 = vmatprep.subr.mxu0 0.0
      %414 = vmatpush1.xpose.msra.mxu0 %v368
      %415 = vmatprep.subr.mxu0 0.0
      %416 = vmatpush1.xpose.msra.mxu0 %v371
      %417 = vmatprep.subr.mxu0 0.0
      %418 = vmatpush1.xpose.msra.mxu0 %v374
      %419 = vmatprep.subr.mxu0 0.0
      %420 = vmatpush1.xpose.msra.mxu0 %v377
      %421 = vmatprep.subr.mxu0 0.0
      %422 = vmatpush1.xpose.msra.mxu0 %v380
      %423 = vmatprep.subr.mxu0 0.0
      %424 = vmatpush1.xpose.msra.mxu0 %v383
      %425 = vmatprep.subr.mxu0 0.0
      %426 = vmatpush1.xpose.msra.mxu0 %v386
      %427 = vmatprep.subr.mxu0 0.0
      %428 = vmatpush1.xpose.msra.mxu0 %v389
      %429 = vmatprep.subr.mxu0 0.0
      %430 = vmatpush1.xpose.msra.mxu0 %v392
      %431 = vmatprep.subr.mxu0 0.0
      %432 = vmatpush1.xpose.msra.mxu0 %v395
      %433 = vmatprep.subr.mxu0 0.0
      %434 = vmatpush1.xpose.msra.mxu0 %v398
      %435 = vmatprep.subr.mxu0 0.0
      %436 = vmatpush1.xpose.msra.mxu0 %v401
      %437 = vmatprep.subr.mxu0 0.0
      %438 = vmatpush1.xpose.msra.mxu0 %v404
      %439 = vmatprep.subr.mxu0 0.0
      %440 = vmatpush1.xpose.msra.mxu0 %v407
      %441 = vmatprep.subr.mxu0 0.0
      %442 = vmatpush1.xpose.msra.mxu0 0.0
      %443 = vmatprep.subr.mxu0 0.0
      %444 = vmatpush1.xpose.msra.mxu0 0.0
      %445 = vmatprep.subr.mxu0 0.0
      %446 = vmatpush1.xpose.msra.mxu0 0.0
      %447 = vmatprep.subr.mxu0 0.0
      %448 = vmatpush1.xpose.msra.mxu0 0.0
      %449 = vmatprep.subr.mxu0 0.0
      %450 = vmatpush1.xpose.msra.mxu0 0.0
      %451 = vmatprep.subr.mxu0 0.0
      %452 = vmatpush1.xpose.msra.mxu0 0.0
      %453 = vmatprep.subr.mxu0 0.0
      %454 = vmatpush1.xpose.msra.mxu0 0.0
      %455 = vmatprep.subr.mxu0 0.0
      %456 = vmatpush1.xpose.msra.mxu0 0.0
      %457 = vmatprep.subr.mxu0 0.0
      %458 = vmatpush1.xpose.msra.mxu0 0.0
      %459 = vmatprep.subr.mxu0 0.0
      %460 = vmatpush1.xpose.msra.mxu0 0.0
      %461 = vmatprep.subr.mxu0 0.0
      %462 = vmatpush1.xpose.msra.mxu0 0.0
      %463 = vmatprep.subr.mxu0 0.0
      %464 = vmatpush1.xpose.msra.mxu0 0.0
      %465 = vmatprep.subr.mxu0 0.0
      %466 = vmatpush1.xpose.msra.mxu0 0.0
      %467 = vmatprep.subr.mxu0 0.0
      %468 = vmatpush1.xpose.msra.mxu0 0.0
      %469 = vmatprep.subr.mxu0 0.0
      %470 = vmatpush1.xpose.msra.mxu0 0.0
      %471 = vmatprep.subr.mxu0 0.0
      %472 = vmatpush1.xpose.msra.mxu0 0.0
      %473 = vmatprep.mubr.f32.mxu0 0.0
      %474 = vmatmul.mubr.f32.gmra.mrb[0].mxu0 %v314
      %v475 = vpop.f32.mrb[0].mxu0
      %v476 = vadd.f32 0.0, %v475
      %v477 = vpop.f32.mrb[0].mxu0
      %478 = vmatprep.mubr.f32.mxu0 0.0
      %479 = vmatmul.mubr.f32.gmra.mrb[0].mxu0 %v317
      %v480 = vpop.f32.mrb[0].mxu0
      %v481 = vadd.f32 0.0, %v480
      %v482 = vpop.f32.mrb[0].mxu0
      %483 = vmatprep.mubr.f32.mxu0 0.0
      %484 = vmatmul.mubr.f32.gmra.mrb[0].mxu0 %v320
      %v485 = vpop.f32.mrb[0].mxu0
      %v486 = vadd.f32 0.0, %v485
      %v487 = vpop.f32.mrb[0].mxu0
      %488 = vmatprep.mubr.f32.mxu0 0.0
      %489 = vmatmul.mubr.f32.gmra.mrb[0].mxu0 %v323
      %v490 = vpop.f32.mrb[0].mxu0
      %v491 = vadd.f32 0.0, %v490
      %v492 = vpop.f32.mrb[0].mxu0
      %493 = vmatprep.mubr.f32.mxu0 0.0
      %494 = vmatmul.mubr.f32.gmra.mrb[0].mxu0 %v326
      %v495 = vpop.f32.mrb[0].mxu0
      %v496 = vadd.f32 0.0, %v495
      %v497 = vpop.f32.mrb[0].mxu0
      %498 = vmatprep.mubr.f32.mxu0 0.0
      %499 = vmatmul.mubr.f32.gmra.mrb[0].mxu0 %v329
      %v500 = vpop.f32.mrb[0].mxu0
      %v501 = vadd.f32 0.0, %v500
      %v502 = vpop.f32.mrb[0].mxu0
      %503 = vmatprep.mubr.f32.mxu0 0.0
      %504 = vmatmul.mubr.f32.gmra.mrb[0].mxu0 %v332
      %v505 = vpop.f32.mrb[0].mxu0
      %v506 = vadd.f32 0.0, %v505
      %v507 = vpop.f32.mrb[0].mxu0
      %508 = vmatprep.mubr.f32.mxu0 0.0
      %509 = vmatmul.mubr.f32.gmra.mrb[0].mxu0 %v335
      %v510 = vpop.f32.mrb[0].mxu0
      %v511 = vadd.f32 0.0, %v510
      %v512 = vpop.f32.mrb[0].mxu0
      %513 = vmatprep.mubr.f32.mxu0 0.0
      %514 = vmatmul.mubr.f32.gmra.mrb[0].mxu0 %v338
      %v515 = vpop.f32.mrb[0].mxu0
      %v516 = vadd.f32 0.0, %v515
      %v517 = vpop.f32.mrb[0].mxu0
      %518 = vmatprep.mubr.f32.mxu0 0.0
      %519 = vmatmul.mubr.f32.gmra.mrb[0].mxu0 %v341
      %v520 = vpop.f32.mrb[0].mxu0
      %v521 = vadd.f32 0.0, %v520
      %v522 = vpop.f32.mrb[0].mxu0
      %523 = vmatprep.mubr.f32.mxu0 0.0
      %524 = vmatmul.mubr.f32.gmra.mrb[0].mxu0 %v344
      %v525 = vpop.f32.mrb[0].mxu0
      %v526 = vadd.f32 0.0, %v525
      %v527 = vpop.f32.mrb[0].mxu0
      %528 = vmatprep.mubr.f32.mxu0 0.0
      %529 = vmatmul.mubr.f32.gmra.mrb[0].mxu0 %v347
      %v530 = vpop.f32.mrb[0].mxu0
      %v531 = vadd.f32 0.0, %v530
      %v532 = vpop.f32.mrb[0].mxu0
      %533 = vmatprep.mubr.f32.mxu0 0.0
      %534 = vmatmul.mubr.f32.gmra.mrb[0].mxu0 %v350
      %v535 = vpop.f32.mrb[0].mxu0
      %v536 = vadd.f32 0.0, %v535
      %v537 = vpop.f32.mrb[0].mxu0
      %538 = vmatprep.mubr.f32.mxu0 0.0
      %539 = vmatmul.mubr.f32.gmra.mrb[0].mxu0 %v353
      %v540 = vpop.f32.mrb[0].mxu0
      %v541 = vadd.f32 0.0, %v540
      %v542 = vpop.f32.mrb[0].mxu0
      %543 = vmatprep.mubr.f32.mxu0 0.0
      %544 = vmatmul.mubr.f32.gmra.mrb[0].mxu0 %v356
      %v545 = vpop.f32.mrb[0].mxu0
      %v546 = vadd.f32 0.0, %v545
      %v547 = vpop.f32.mrb[0].mxu0
      %548 = vmatprep.mubr.f32.mxu0 0.0
      %549 = vmatmul.mubr.f32.gmra.mrb[0].mxu0 %v359
      %v550 = vpop.f32.mrb[0].mxu0
      %v551 = vadd.f32 0.0, %v550
      %v552 = vpop.f32.mrb[0].mxu0
      %553 = vdwg.mxu0
      %v555 = vlaneseq
      %v556 = vshrl.u32 %v555, 7
      %v557 = vsub.s32 0, %v556
      %v558 = vrot.slane %v295, %v557
      %v560 = vadd.f32 %v558, %v476
      %v561 = vadd.f32 %v558, %v481
      %v562 = vadd.f32 %v558, %v486
      %v563 = vadd.f32 %v558, %v491
      %v564 = vadd.f32 %v558, %v496
      %v565 = vadd.f32 %v558, %v501
      %v566 = vadd.f32 %v558, %v506
      %v567 = vadd.f32 %v558, %v511
      %v568 = vadd.f32 %v558, %v516
      %v569 = vadd.f32 %v558, %v521
      %v570 = vadd.f32 %v558, %v526
      %v571 = vadd.f32 %v558, %v531
      %v572 = vadd.f32 %v558, %v536
      %v573 = vadd.f32 %v558, %v541
      %v574 = vadd.f32 %v558, %v546
      %v575 = vadd.f32 %v558, %v551
      %v576 = vlaneseq
      %v577 = vand.u32 %v576, 127
      %v578 = vcvt.s32.f32 %v577
      %vm579 = vcmp.lt.s32.totalorder %v577, 0
      %v580 = vsub.s32 0, %v577
      %v581 = vsel %vm579, %v580, %v577
      %v582 = vmul.u32.u64.compose %v581, 3435973837
      %v583 = vextract.low.u32 %v582
      %v584 = vextract.high.u32 %v582
      %v585 = vshrl.u32 %v584, 3
      %v586 = vmul.u32 %v585, 10
      %v587 = vsub.s32 %v581, %v586
      %v588 = vsub.s32 0, %v587
      %v589 = vsel %vm579, %v588, %v587
      %vm590 = vcmp.ne.s32.totalorder %v589, 0
      %vm591 = vcmp.lt.s32.totalorder %v589, 0
      %vm592 = vmand %vm591, %vm590
      %v593 = vadd.s32 %v589, 10
      %v594 = vsel %vm592, %v593, %v589
      %vm595 = vcmp.eq.s32.totalorder %v577, 0
      %v596 = vsel %vm595, %v279, 0.0
      %v597 = vsel %vm595, %v280, 0.0
      %v598 = vsel %vm595, %v281, 0.0
      %v599 = vsel %vm595, %v282, 0.0
      %v600 = vsel %vm595, %v283, 0.0
      %v601 = vsel %vm595, %v284, 0.0
      %v602 = vsel %vm595, %v285, 0.0
      %v603 = vsel %vm595, %v286, 0.0
      %v604 = vsel %vm595, %v287, 0.0
      %v605 = vsel %vm595, %v288, 0.0
      %v606 = vsel %vm595, %v289, 0.0
      %v607 = vsel %vm595, %v290, 0.0
      %v608 = vsel %vm595, %v291, 0.0
      %v609 = vsel %vm595, %v292, 0.0
      %v610 = vsel %vm595, %v293, 0.0
      %v611 = vsel %vm595, %v294, 0.0
      %vm612 = vcmask 23552
      %v613 = vsel %vm612, %v596, 0.0
      %614 = vadd.xlane.f32.xlu0 %v613
      %v615 = vpop.xlane.xlu0 %614
      %v616 = vsel %vm612, %v597, 0.0
      %617 = vadd.xlane.f32.xlu0 %v616
      %v618 = vpop.xlane.xlu0 %617
      %v619 = vsel %vm612, %v598, 0.0
      %620 = vadd.xlane.f32.xlu0 %v619
      %v621 = vpop.xlane.xlu0 %620
      %v622 = vsel %vm612, %v599, 0.0
      %623 = vadd.xlane.f32.xlu0 %v622
      %v624 = vpop.xlane.xlu0 %623
      %v625 = vsel %vm612, %v600, 0.0
      %626 = vadd.xlane.f32.xlu0 %v625
      %v627 = vpop.xlane.xlu0 %626
      %v628 = vsel %vm612, %v601, 0.0
      %629 = vadd.xlane.f32.xlu0 %v628
      %v630 = vpop.xlane.xlu0 %629
      %v631 = vsel %vm612, %v602, 0.0
      %632 = vadd.xlane.f32.xlu0 %v631
      %v633 = vpop.xlane.xlu0 %632
      %v634 = vsel %vm612, %v603, 0.0
      %635 = vadd.xlane.f32.xlu0 %v634
      %v636 = vpop.xlane.xlu0 %635
      %v637 = vsel %vm612, %v604, 0.0
      %638 = vadd.xlane.f32.xlu0 %v637
      %v639 = vpop.xlane.xlu0 %638
      %v640 = vsel %vm612, %v605, 0.0
      %641 = vadd.xlane.f32.xlu0 %v640
      %v642 = vpop.xlane.xlu0 %641
      %v643 = vsel %vm612, %v606, 0.0
      %644 = vadd.xlane.f32.xlu0 %v643
      %v645 = vpop.xlane.xlu0 %644
      %v646 = vsel %vm612, %v607, 0.0
      %647 = vadd.xlane.f32.xlu0 %v646
      %v648 = vpop.xlane.xlu0 %647
      %v649 = vsel %vm612, %v608, 0.0
      %650 = vadd.xlane.f32.xlu0 %v649
      %v651 = vpop.xlane.xlu0 %650
      %v652 = vsel %vm612, %v609, 0.0
      %653 = vadd.xlane.f32.xlu0 %v652
      %v654 = vpop.xlane.xlu0 %653
      %v655 = vsel %vm612, %v610, 0.0
      %656 = vadd.xlane.f32.xlu0 %v655
      %v657 = vpop.xlane.xlu0 %656
      %v658 = vsel %vm612, %v611, 0.0
      %659 = vadd.xlane.f32.xlu0 %v658
      %v660 = vpop.xlane.xlu0 %659
      %vm661 = vcmp.eq.s32.totalorder %v577, 1
      %v662 = vsel %vm661, %v279, 0.0
      %v663 = vsel %vm661, %v280, 0.0
      %v664 = vsel %vm661, %v281, 0.0
      %v665 = vsel %vm661, %v282, 0.0
      %v666 = vsel %vm661, %v283, 0.0
      %v667 = vsel %vm661, %v284, 0.0
      %v668 = vsel %vm661, %v285, 0.0
      %v669 = vsel %vm661, %v286, 0.0
      %v670 = vsel %vm661, %v287, 0.0
      %v671 = vsel %vm661, %v288, 0.0
      %v672 = vsel %vm661, %v289, 0.0
      %v673 = vsel %vm661, %v290, 0.0
      %v674 = vsel %vm661, %v291, 0.0
      %v675 = vsel %vm661, %v292, 0.0
      %v676 = vsel %vm661, %v293, 0.0
      %v677 = vsel %vm661, %v294, 0.0
      %v678 = vsel %vm612, %v662, 0.0
      %679 = vadd.xlane.f32.xlu0 %v678
      %v680 = vpop.xlane.xlu0 %679
      %v681 = vsel %vm612, %v663, 0.0
      %682 = vadd.xlane.f32.xlu0 %v681
      %v683 = vpop.xlane.xlu0 %682
      %v684 = vsel %vm612, %v664, 0.0
      %685 = vadd.xlane.f32.xlu0 %v684
      %v686 = vpop.xlane.xlu0 %685
      %v687 = vsel %vm612, %v665, 0.0
      %688 = vadd.xlane.f32.xlu0 %v687
      %v689 = vpop.xlane.xlu0 %688
      %v690 = vsel %vm612, %v666, 0.0
      %691 = vadd.xlane.f32.xlu0 %v690
      %v692 = vpop.xlane.xlu0 %691
      %v693 = vsel %vm612, %v667, 0.0
      %694 = vadd.xlane.f32.xlu0 %v693
      %v695 = vpop.xlane.xlu0 %694
      %v696 = vsel %vm612, %v668, 0.0
      %697 = vadd.xlane.f32.xlu0 %v696
      %v698 = vpop.xlane.xlu0 %697
      %v699 = vsel %vm612, %v669, 0.0
      %700 = vadd.xlane.f32.xlu0 %v699
      %v701 = vpop.xlane.xlu0 %700
      %v702 = vsel %vm612, %v670, 0.0
      %703 = vadd.xlane.f32.xlu0 %v702
      %v704 = vpop.xlane.xlu0 %703
      %v705 = vsel %vm612, %v671, 0.0
      %706 = vadd.xlane.f32.xlu0 %v705
      %v707 = vpop.xlane.xlu0 %706
      %v708 = vsel %vm612, %v672, 0.0
      %709 = vadd.xlane.f32.xlu0 %v708
      %v710 = vpop.xlane.xlu0 %709
      %v711 = vsel %vm612, %v673, 0.0
      %712 = vadd.xlane.f32.xlu0 %v711
      %v713 = vpop.xlane.xlu0 %712
      %v714 = vsel %vm612, %v674, 0.0
      %715 = vadd.xlane.f32.xlu0 %v714
      %v716 = vpop.xlane.xlu0 %715
      %v717 = vsel %vm612, %v675, 0.0
      %718 = vadd.xlane.f32.xlu0 %v717
      %v719 = vpop.xlane.xlu0 %718
      %v720 = vsel %vm612, %v676, 0.0
      %721 = vadd.xlane.f32.xlu0 %v720
      %v722 = vpop.xlane.xlu0 %721
      %v723 = vsel %vm612, %v677, 0.0
      %724 = vadd.xlane.f32.xlu0 %v723
      %v725 = vpop.xlane.xlu0 %724
      %vm726 = vcmp.eq.s32.totalorder %v577, 2
      %v727 = vsel %vm726, %v279, 0.0
      %v728 = vsel %vm726, %v280, 0.0
      %v729 = vsel %vm726, %v281, 0.0
      %v730 = vsel %vm726, %v282, 0.0
      %v731 = vsel %vm726, %v283, 0.0
      %v732 = vsel %vm726, %v284, 0.0
      %v733 = vsel %vm726, %v285, 0.0
      %v734 = vsel %vm726, %v286, 0.0
      %v735 = vsel %vm726, %v287, 0.0
      %v736 = vsel %vm726, %v288, 0.0
      %v737 = vsel %vm726, %v289, 0.0
      %v738 = vsel %vm726, %v290, 0.0
      %v739 = vsel %vm726, %v291, 0.0
      %v740 = vsel %vm726, %v292, 0.0
      %v741 = vsel %vm726, %v293, 0.0
      %v742 = vsel %vm726, %v294, 0.0
      %v743 = vsel %vm612, %v727, 0.0
      %744 = vadd.xlane.f32.xlu0 %v743
      %v745 = vpop.xlane.xlu0 %744
      %v746 = vsel %vm612, %v728, 0.0
      %747 = vadd.xlane.f32.xlu0 %v746
      %v748 = vpop.xlane.xlu0 %747
      %v749 = vsel %vm612, %v729, 0.0
      %750 = vadd.xlane.f32.xlu0 %v749
      %v751 = vpop.xlane.xlu0 %750
      %v752 = vsel %vm612, %v730, 0.0
      %753 = vadd.xlane.f32.xlu0 %v752
      %v754 = vpop.xlane.xlu0 %753
      %v755 = vsel %vm612, %v731, 0.0
      %756 = vadd.xlane.f32.xlu0 %v755
      %v757 = vpop.xlane.xlu0 %756
      %v758 = vsel %vm612, %v732, 0.0
      %759 = vadd.xlane.f32.xlu0 %v758
      %v760 = vpop.xlane.xlu0 %759
      %v761 = vsel %vm612, %v733, 0.0
      %762 = vadd.xlane.f32.xlu0 %v761
      %v763 = vpop.xlane.xlu0 %762
      %v764 = vsel %vm612, %v734, 0.0
      %765 = vadd.xlane.f32.xlu0 %v764
      %v766 = vpop.xlane.xlu0 %765
      %v767 = vsel %vm612, %v735, 0.0
      %768 = vadd.xlane.f32.xlu0 %v767
      %v769 = vpop.xlane.xlu0 %768
      %v770 = vsel %vm612, %v736, 0.0
      %771 = vadd.xlane.f32.xlu0 %v770
      %v772 = vpop.xlane.xlu0 %771
      %v773 = vsel %vm612, %v737, 0.0
      %774 = vadd.xlane.f32.xlu0 %v773
      %v775 = vpop.xlane.xlu0 %774
      %v776 = vsel %vm612, %v738, 0.0
      %777 = vadd.xlane.f32.xlu0 %v776
      %v778 = vpop.xlane.xlu0 %777
      %v779 = vsel %vm612, %v739, 0.0
      %780 = vadd.xlane.f32.xlu0 %v779
      %v781 = vpop.xlane.xlu0 %780
      %v782 = vsel %vm612, %v740, 0.0
      %783 = vadd.xlane.f32.xlu0 %v782
      %v784 = vpop.xlane.xlu0 %783
      %v785 = vsel %vm612, %v741, 0.0
      %786 = vadd.xlane.f32.xlu0 %v785
      %v787 = vpop.xlane.xlu0 %786
      %v788 = vsel %vm612, %v742, 0.0
      %789 = vadd.xlane.f32.xlu0 %v788
      %v790 = vpop.xlane.xlu0 %789
      %vm791 = vcmp.eq.s32.totalorder %v594, 4
      %vm792 = vcmp.eq.s32.totalorder %v594, 5
      %vm793 = vcmp.eq.s32.totalorder %v594, 6
      %v794 = vsel %vm793, %v745, 0.0
      %v795 = vsel %vm793, %v748, 0.0
      %v796 = vsel %vm793, %v751, 0.0
      %v797 = vsel %vm793, %v754, 0.0
      %v798 = vsel %vm793, %v757, 0.0
      %v799 = vsel %vm793, %v760, 0.0
      %v800 = vsel %vm793, %v763, 0.0
      %v801 = vsel %vm793, %v766, 0.0
      %v802 = vsel %vm793, %v769, 0.0
      %v803 = vsel %vm793, %v772, 0.0
      %v804 = vsel %vm793, %v775, 0.0
      %v805 = vsel %vm793, %v778, 0.0
      %v806 = vsel %vm793, %v781, 0.0
      %v807 = vsel %vm793, %v784, 0.0
      %v808 = vsel %vm793, %v787, 0.0
      %v809 = vsel %vm793, %v790, 0.0
      %v810 = vsel %vm792, %v680, %v794
      %v811 = vsel %vm792, %v683, %v795
      %v812 = vsel %vm792, %v686, %v796
      %v813 = vsel %vm792, %v689, %v797
      %v814 = vsel %vm792, %v692, %v798
      %v815 = vsel %vm792, %v695, %v799
      %v816 = vsel %vm792, %v698, %v800
      %v817 = vsel %vm792, %v701, %v801
      %v818 = vsel %vm792, %v704, %v802
      %v819 = vsel %vm792, %v707, %v803
      %v820 = vsel %vm792, %v710, %v804
      %v821 = vsel %vm792, %v713, %v805
      %v822 = vsel %vm792, %v716, %v806
      %v823 = vsel %vm792, %v719, %v807
      %v824 = vsel %vm792, %v722, %v808
      %v825 = vsel %vm792, %v725, %v809
      %v826 = vsel %vm791, %v615, %v810
      %v827 = vsel %vm791, %v618, %v811
      %v828 = vsel %vm791, %v621, %v812
      %v829 = vsel %vm791, %v624, %v813
      %v830 = vsel %vm791, %v627, %v814
      %v831 = vsel %vm791, %v630, %v815
      %v832 = vsel %vm791, %v633, %v816
      %v833 = vsel %vm791, %v636, %v817
      %v834 = vsel %vm791, %v639, %v818
      %v835 = vsel %vm791, %v642, %v819
      %v836 = vsel %vm791, %v645, %v820
      %v837 = vsel %vm791, %v648, %v821
      %v838 = vsel %vm791, %v651, %v822
      %v839 = vsel %vm791, %v654, %v823
      %v840 = vsel %vm791, %v657, %v824
      %v841 = vsel %vm791, %v660, %v825
      %842 = vmin.xlane.f32.xlu0 %v560
      %v843 = vpop.xlane.xlu0 %842
      %844 = vmin.xlane.f32.xlu0 %v561
      %v845 = vpop.xlane.xlu0 %844
      %846 = vmin.xlane.f32.xlu0 %v562
      %v847 = vpop.xlane.xlu0 %846
      %848 = vmin.xlane.f32.xlu0 %v563
      %v849 = vpop.xlane.xlu0 %848
      %850 = vmin.xlane.f32.xlu0 %v564
      %v851 = vpop.xlane.xlu0 %850
      %852 = vmin.xlane.f32.xlu0 %v565
      %v853 = vpop.xlane.xlu0 %852
      %854 = vmin.xlane.f32.xlu0 %v566
      %v855 = vpop.xlane.xlu0 %854
      %856 = vmin.xlane.f32.xlu0 %v567
      %v857 = vpop.xlane.xlu0 %856
      %858 = vmin.xlane.f32.xlu0 %v568
      %v859 = vpop.xlane.xlu0 %858
      %860 = vmin.xlane.f32.xlu0 %v569
      %v861 = vpop.xlane.xlu0 %860
      %862 = vmin.xlane.f32.xlu0 %v570
      %v863 = vpop.xlane.xlu0 %862
      %864 = vmin.xlane.f32.xlu0 %v571
      %v865 = vpop.xlane.xlu0 %864
      %866 = vmin.xlane.f32.xlu0 %v572
      %v867 = vpop.xlane.xlu0 %866
      %868 = vmin.xlane.f32.xlu0 %v573
      %v869 = vpop.xlane.xlu0 %868
      %870 = vmin.xlane.f32.xlu0 %v574
      %v871 = vpop.xlane.xlu0 %870
      %872 = vmin.xlane.f32.xlu0 %v575
      %v873 = vpop.xlane.xlu0 %872
      %vm874 = vcmp.eq.f32.partialorder %v560, %v843
      %vm875 = vcmp.eq.f32.partialorder %v561, %v845
      %vm876 = vcmp.eq.f32.partialorder %v562, %v847
      %vm877 = vcmp.eq.f32.partialorder %v563, %v849
      %vm878 = vcmp.eq.f32.partialorder %v564, %v851
      %vm879 = vcmp.eq.f32.partialorder %v565, %v853
      %vm880 = vcmp.eq.f32.partialorder %v566, %v855
      %vm881 = vcmp.eq.f32.partialorder %v567, %v857
      %vm882 = vcmp.eq.f32.partialorder %v568, %v859
      %vm883 = vcmp.eq.f32.partialorder %v569, %v861
      %vm884 = vcmp.eq.f32.partialorder %v570, %v863
      %vm885 = vcmp.eq.f32.partialorder %v571, %v865
      %vm886 = vcmp.eq.f32.partialorder %v572, %v867
      %vm887 = vcmp.eq.f32.partialorder %v573, %v869
      %vm888 = vcmp.eq.f32.partialorder %v574, %v871
      %vm889 = vcmp.eq.f32.partialorder %v575, %v873
      %v890 = vsel %vm874, %v578, 128.0
      %v891 = vsel %vm875, %v578, 128.0
      %v892 = vsel %vm876, %v578, 128.0
      %v893 = vsel %vm877, %v578, 128.0
      %v894 = vsel %vm878, %v578, 128.0
      %v895 = vsel %vm879, %v578, 128.0
      %v896 = vsel %vm880, %v578, 128.0
      %v897 = vsel %vm881, %v578, 128.0
      %v898 = vsel %vm882, %v578, 128.0
      %v899 = vsel %vm883, %v578, 128.0
      %v900 = vsel %vm884, %v578, 128.0
      %v901 = vsel %vm885, %v578, 128.0
      %v902 = vsel %vm886, %v578, 128.0
      %v903 = vsel %vm887, %v578, 128.0
      %v904 = vsel %vm888, %v578, 128.0
      %v905 = vsel %vm889, %v578, 128.0
      %906 = vmin.xlane.f32.xlu0 %v890
      %v907 = vpop.xlane.xlu0 %906
      %908 = vmin.xlane.f32.xlu0 %v891
      %v909 = vpop.xlane.xlu0 %908
      %910 = vmin.xlane.f32.xlu0 %v892
      %v911 = vpop.xlane.xlu0 %910
      %912 = vmin.xlane.f32.xlu0 %v893
      %v913 = vpop.xlane.xlu0 %912
      %914 = vmin.xlane.f32.xlu0 %v894
      %v915 = vpop.xlane.xlu0 %914
      %916 = vmin.xlane.f32.xlu0 %v895
      %v917 = vpop.xlane.xlu0 %916
      %918 = vmin.xlane.f32.xlu0 %v896
      %v919 = vpop.xlane.xlu0 %918
      %920 = vmin.xlane.f32.xlu0 %v897
      %v921 = vpop.xlane.xlu0 %920
      %922 = vmin.xlane.f32.xlu0 %v898
      %v923 = vpop.xlane.xlu0 %922
      %924 = vmin.xlane.f32.xlu0 %v899
      %v925 = vpop.xlane.xlu0 %924
      %926 = vmin.xlane.f32.xlu0 %v900
      %v927 = vpop.xlane.xlu0 %926
      %928 = vmin.xlane.f32.xlu0 %v901
      %v929 = vpop.xlane.xlu0 %928
      %930 = vmin.xlane.f32.xlu0 %v902
      %v931 = vpop.xlane.xlu0 %930
      %932 = vmin.xlane.f32.xlu0 %v903
      %v933 = vpop.xlane.xlu0 %932
      %934 = vmin.xlane.f32.xlu0 %v904
      %v935 = vpop.xlane.xlu0 %934
      %936 = vmin.xlane.f32.xlu0 %v905
      %v937 = vpop.xlane.xlu0 %936
      %vm938 = vcmp.eq.f32.partialorder %v578, %v907
      %vm939 = vcmp.eq.f32.partialorder %v578, %v909
      %vm940 = vcmp.eq.f32.partialorder %v578, %v911
      %vm941 = vcmp.eq.f32.partialorder %v578, %v913
      %vm942 = vcmp.eq.f32.partialorder %v578, %v915
      %vm943 = vcmp.eq.f32.partialorder %v578, %v917
      %vm944 = vcmp.eq.f32.partialorder %v578, %v919
      %vm945 = vcmp.eq.f32.partialorder %v578, %v921
      %vm946 = vcmp.eq.f32.partialorder %v578, %v923
      %vm947 = vcmp.eq.f32.partialorder %v578, %v925
      %vm948 = vcmp.eq.f32.partialorder %v578, %v927
      %vm949 = vcmp.eq.f32.partialorder %v578, %v929
      %vm950 = vcmp.eq.f32.partialorder %v578, %v931
      %vm951 = vcmp.eq.f32.partialorder %v578, %v933
      %vm952 = vcmp.eq.f32.partialorder %v578, %v935
      %vm953 = vcmp.eq.f32.partialorder %v578, %v937
      %v954 = vsel %vm938, 1, 0
      %v955 = vsel %vm939, 1, 0
      %v956 = vsel %vm940, 1, 0
      %v957 = vsel %vm941, 1, 0
      %v958 = vsel %vm942, 1, 0
      %v959 = vsel %vm943, 1, 0
      %v960 = vsel %vm944, 1, 0
      %v961 = vsel %vm945, 1, 0
      %v962 = vsel %vm946, 1, 0
      %v963 = vsel %vm947, 1, 0
      %v964 = vsel %vm948, 1, 0
      %v965 = vsel %vm949, 1, 0
      %v966 = vsel %vm950, 1, 0
      %v967 = vsel %vm951, 1, 0
      %v968 = vsel %vm952, 1, 0
      %v969 = vsel %vm953, 1, 0
      %v970 = vcvt.s32.f32 %v954
      %v971 = vcvt.s32.f32 %v955
      %v972 = vcvt.s32.f32 %v956
      %v973 = vcvt.s32.f32 %v957
      %v974 = vcvt.s32.f32 %v958
      %v975 = vcvt.s32.f32 %v959
      %v976 = vcvt.s32.f32 %v960
      %v977 = vcvt.s32.f32 %v961
      %v978 = vcvt.s32.f32 %v962
      %v979 = vcvt.s32.f32 %v963
      %v980 = vcvt.s32.f32 %v964
      %v981 = vcvt.s32.f32 %v965
      %v982 = vcvt.s32.f32 %v966
      %v983 = vcvt.s32.f32 %v967
      %v984 = vcvt.s32.f32 %v968
      %v985 = vcvt.s32.f32 %v969
      %986 = vmatprep.subr.mxu0 0.0
      %987 = vmatpush1.msra.mxu0 %v245
      %988 = vmatprep.subr.mxu0 0.0
      %989 = vmatpush1.msra.mxu0 %v246
      %990 = vmatprep.subr.mxu0 0.0
      %991 = vmatpush1.msra.mxu0 %v247
      %992 = vmatprep.subr.mxu0 0.0
      %993 = vmatpush1.msra.mxu0 %v248
      %994 = vmatprep.subr.mxu0 0.0
      %995 = vmatpush1.msra.mxu0 %v249
      %996 = vmatprep.subr.mxu0 0.0
      %997 = vmatpush1.msra.mxu0 %v250
      %998 = vmatprep.subr.mxu0 0.0
      %999 = vmatpush1.msra.mxu0 %v251
      %1000 = vmatprep.subr.mxu0 0.0
      %1001 = vmatpush1.msra.mxu0 %v252
      %1002 = vmatprep.subr.mxu0 0.0
      %1003 = vmatpush1.msra.mxu0 %v253
      %1004 = vmatprep.subr.mxu0 0.0
      %1005 = vmatpush1.msra.mxu0 %v254
      %1006 = vmatprep.subr.mxu0 0.0
      %1007 = vmatpush1.msra.mxu0 %v255
      %1008 = vmatprep.subr.mxu0 0.0
      %1009 = vmatpush1.msra.mxu0 %v256
      %1010 = vmatprep.subr.mxu0 0.0
      %1011 = vmatpush1.msra.mxu0 %v257
      %1012 = vmatprep.subr.mxu0 0.0
      %1013 = vmatpush1.msra.mxu0 %v258
      %1014 = vmatprep.subr.mxu0 0.0
      %1015 = vmatpush1.msra.mxu0 %v259
      %1016 = vmatprep.subr.mxu0 0.0
      %1017 = vmatpush1.msra.mxu0 %v260
      %1018 = vmatprep.subr.mxu0 0.0
      %1019 = vmatpush1.msra.mxu0 0.0
      %1020 = vmatprep.subr.mxu0 0.0
      %1021 = vmatpush1.msra.mxu0 0.0
      %1022 = vmatprep.subr.mxu0 0.0
      %1023 = vmatpush1.msra.mxu0 0.0
      %1024 = vmatprep.subr.mxu0 0.0
      %1025 = vmatpush1.msra.mxu0 0.0
      %1026 = vmatprep.subr.mxu0 0.0
      %1027 = vmatpush1.msra.mxu0 0.0
      %1028 = vmatprep.subr.mxu0 0.0
      %1029 = vmatpush1.msra.mxu0 0.0
      %1030 = vmatprep.subr.mxu0 0.0
      %1031 = vmatpush1.msra.mxu0 0.0
      %1032 = vmatprep.subr.mxu0 0.0
      %1033 = vmatpush1.msra.mxu0 0.0
      %1034 = vmatprep.subr.mxu0 0.0
      %1035 = vmatpush1.msra.mxu0 0.0
      %1036 = vmatprep.subr.mxu0 0.0
      %1037 = vmatpush1.msra.mxu0 0.0
      %1038 = vmatprep.subr.mxu0 0.0
      %1039 = vmatpush1.msra.mxu0 0.0
      %1040 = vmatprep.subr.mxu0 0.0
      %1041 = vmatpush1.msra.mxu0 0.0
      %1042 = vmatprep.subr.mxu0 0.0
      %1043 = vmatpush1.msra.mxu0 0.0
      %1044 = vmatprep.subr.mxu0 0.0
      %1045 = vmatpush1.msra.mxu0 0.0
      %1046 = vmatprep.subr.mxu0 0.0
      %1047 = vmatpush1.msra.mxu0 0.0
      %1048 = vmatprep.subr.mxu0 0.0
      %1049 = vmatpush1.msra.mxu0 0.0
      %1050 = vmatprep.mubr.f32.mxu0 0.0
      %1051 = vmatmul.mubr.f32.gmra.mrb[0].mxu0 %v970
      %v1052 = vpop.f32.mrb[0].mxu0
      %v1053 = vadd.f32 0.0, %v1052
      %v1054 = vpop.f32.mrb[0].mxu0
      %1055 = vmatprep.mubr.f32.mxu0 0.0
      %1056 = vmatmul.mubr.f32.gmra.mrb[0].mxu0 %v971
      %v1057 = vpop.f32.mrb[0].mxu0
      %v1058 = vadd.f32 0.0, %v1057
      %v1059 = vpop.f32.mrb[0].mxu0
      %1060 = vmatprep.mubr.f32.mxu0 0.0
      %1061 = vmatmul.mubr.f32.gmra.mrb[0].mxu0 %v972
      %v1062 = vpop.f32.mrb[0].mxu0
      %v1063 = vadd.f32 0.0, %v1062
      %v1064 = vpop.f32.mrb[0].mxu0
      %1065 = vmatprep.mubr.f32.mxu0 0.0
      %1066 = vmatmul.mubr.f32.gmra.mrb[0].mxu0 %v973
      %v1067 = vpop.f32.mrb[0].mxu0
      %v1068 = vadd.f32 0.0, %v1067
      %v1069 = vpop.f32.mrb[0].mxu0
      %1070 = vmatprep.mubr.f32.mxu0 0.0
      %1071 = vmatmul.mubr.f32.gmra.mrb[0].mxu0 %v974
      %v1072 = vpop.f32.mrb[0].mxu0
      %v1073 = vadd.f32 0.0, %v1072
      %v1074 = vpop.f32.mrb[0].mxu0
      %1075 = vmatprep.mubr.f32.mxu0 0.0
      %1076 = vmatmul.mubr.f32.gmra.mrb[0].mxu0 %v975
      %v1077 = vpop.f32.mrb[0].mxu0
      %v1078 = vadd.f32 0.0, %v1077
      %v1079 = vpop.f32.mrb[0].mxu0
      %1080 = vmatprep.mubr.f32.mxu0 0.0
      %1081 = vmatmul.mubr.f32.gmra.mrb[0].mxu0 %v976
      %v1082 = vpop.f32.mrb[0].mxu0
      %v1083 = vadd.f32 0.0, %v1082
      %v1084 = vpop.f32.mrb[0].mxu0
      %1085 = vmatprep.mubr.f32.mxu0 0.0
      %1086 = vmatmul.mubr.f32.gmra.mrb[0].mxu0 %v977
      %v1087 = vpop.f32.mrb[0].mxu0
      %v1088 = vadd.f32 0.0, %v1087
      %v1089 = vpop.f32.mrb[0].mxu0
      %1090 = vmatprep.mubr.f32.mxu0 0.0
      %1091 = vmatmul.mubr.f32.gmra.mrb[0].mxu0 %v978
      %v1092 = vpop.f32.mrb[0].mxu0
      %v1093 = vadd.f32 0.0, %v1092
      %v1094 = vpop.f32.mrb[0].mxu0
      %1095 = vmatprep.mubr.f32.mxu0 0.0
      %1096 = vmatmul.mubr.f32.gmra.mrb[0].mxu0 %v979
      %v1097 = vpop.f32.mrb[0].mxu0
      %v1098 = vadd.f32 0.0, %v1097
      %v1099 = vpop.f32.mrb[0].mxu0
      %1100 = vmatprep.mubr.f32.mxu0 0.0
      %1101 = vmatmul.mubr.f32.gmra.mrb[0].mxu0 %v980
      %v1102 = vpop.f32.mrb[0].mxu0
      %v1103 = vadd.f32 0.0, %v1102
      %v1104 = vpop.f32.mrb[0].mxu0
      %1105 = vmatprep.mubr.f32.mxu0 0.0
      %1106 = vmatmul.mubr.f32.gmra.mrb[0].mxu0 %v981
      %v1107 = vpop.f32.mrb[0].mxu0
      %v1108 = vadd.f32 0.0, %v1107
      %v1109 = vpop.f32.mrb[0].mxu0
      %1110 = vmatprep.mubr.f32.mxu0 0.0
      %1111 = vmatmul.mubr.f32.gmra.mrb[0].mxu0 %v982
      %v1112 = vpop.f32.mrb[0].mxu0
      %v1113 = vadd.f32 0.0, %v1112
      %v1114 = vpop.f32.mrb[0].mxu0
      %1115 = vmatprep.mubr.f32.mxu0 0.0
      %1116 = vmatmul.mubr.f32.gmra.mrb[0].mxu0 %v983
      %v1117 = vpop.f32.mrb[0].mxu0
      %v1118 = vadd.f32 0.0, %v1117
      %v1119 = vpop.f32.mrb[0].mxu0
      %1120 = vmatprep.mubr.f32.mxu0 0.0
      %1121 = vmatmul.mubr.f32.gmra.mrb[0].mxu0 %v984
      %v1122 = vpop.f32.mrb[0].mxu0
      %v1123 = vadd.f32 0.0, %v1122
      %v1124 = vpop.f32.mrb[0].mxu0
      %1125 = vmatprep.mubr.f32.mxu0 0.0
      %1126 = vmatmul.mubr.f32.gmra.mrb[0].mxu0 %v985
      %v1127 = vpop.f32.mrb[0].mxu0
      %v1128 = vadd.f32 0.0, %v1127
      %v1129 = vpop.f32.mrb[0].mxu0
      %1130 = vdwg.mxu0
      %v1131 = vsel %vm595, %v1053, 0.0
      %v1132 = vsel %vm595, %v1058, 0.0
      %v1133 = vsel %vm595, %v1063, 0.0
      %v1134 = vsel %vm595, %v1068, 0.0
      %v1135 = vsel %vm595, %v1073, 0.0
      %v1136 = vsel %vm595, %v1078, 0.0
      %v1137 = vsel %vm595, %v1083, 0.0
      %v1138 = vsel %vm595, %v1088, 0.0
      %v1139 = vsel %vm595, %v1093, 0.0
      %v1140 = vsel %vm595, %v1098, 0.0
      %v1141 = vsel %vm595, %v1103, 0.0
      %v1142 = vsel %vm595, %v1108, 0.0
      %v1143 = vsel %vm595, %v1113, 0.0
      %v1144 = vsel %vm595, %v1118, 0.0
      %v1145 = vsel %vm595, %v1123, 0.0
      %v1146 = vsel %vm595, %v1128, 0.0
      %v1147 = vsel %vm612, %v1131, 0.0
      %1148 = vadd.xlane.f32.xlu0 %v1147
      %v1149 = vpop.xlane.xlu0 %1148
      %v1150 = vsel %vm612, %v1132, 0.0
      %1151 = vadd.xlane.f32.xlu0 %v1150
      %v1152 = vpop.xlane.xlu0 %1151
      %v1153 = vsel %vm612, %v1133, 0.0
      %1154 = vadd.xlane.f32.xlu0 %v1153
      %v1155 = vpop.xlane.xlu0 %1154
      %v1156 = vsel %vm612, %v1134, 0.0
      %1157 = vadd.xlane.f32.xlu0 %v1156
      %v1158 = vpop.xlane.xlu0 %1157
      %v1159 = vsel %vm612, %v1135, 0.0
      %1160 = vadd.xlane.f32.xlu0 %v1159
      %v1161 = vpop.xlane.xlu0 %1160
      %v1162 = vsel %vm612, %v1136, 0.0
      %1163 = vadd.xlane.f32.xlu0 %v1162
      %v1164 = vpop.xlane.xlu0 %1163
      %v1165 = vsel %vm612, %v1137, 0.0
      %1166 = vadd.xlane.f32.xlu0 %v1165
      %v1167 = vpop.xlane.xlu0 %1166
      %v1168 = vsel %vm612, %v1138, 0.0
      %1169 = vadd.xlane.f32.xlu0 %v1168
      %v1170 = vpop.xlane.xlu0 %1169
      %v1171 = vsel %vm612, %v1139, 0.0
      %1172 = vadd.xlane.f32.xlu0 %v1171
      %v1173 = vpop.xlane.xlu0 %1172
      %v1174 = vsel %vm612, %v1140, 0.0
      %1175 = vadd.xlane.f32.xlu0 %v1174
      %v1176 = vpop.xlane.xlu0 %1175
      %v1177 = vsel %vm612, %v1141, 0.0
      %1178 = vadd.xlane.f32.xlu0 %v1177
      %v1179 = vpop.xlane.xlu0 %1178
      %v1180 = vsel %vm612, %v1142, 0.0
      %1181 = vadd.xlane.f32.xlu0 %v1180
      %v1182 = vpop.xlane.xlu0 %1181
      %v1183 = vsel %vm612, %v1143, 0.0
      %1184 = vadd.xlane.f32.xlu0 %v1183
      %v1185 = vpop.xlane.xlu0 %1184
      %v1186 = vsel %vm612, %v1144, 0.0
      %1187 = vadd.xlane.f32.xlu0 %v1186
      %v1188 = vpop.xlane.xlu0 %1187
      %v1189 = vsel %vm612, %v1145, 0.0
      %1190 = vadd.xlane.f32.xlu0 %v1189
      %v1191 = vpop.xlane.xlu0 %1190
      %v1192 = vsel %vm612, %v1146, 0.0
      %1193 = vadd.xlane.f32.xlu0 %v1192
      %v1194 = vpop.xlane.xlu0 %1193
      %v1195 = vsel %vm661, %v1053, 0.0
      %v1196 = vsel %vm661, %v1058, 0.0
      %v1197 = vsel %vm661, %v1063, 0.0
      %v1198 = vsel %vm661, %v1068, 0.0
      %v1199 = vsel %vm661, %v1073, 0.0
      %v1200 = vsel %vm661, %v1078, 0.0
      %v1201 = vsel %vm661, %v1083, 0.0
      %v1202 = vsel %vm661, %v1088, 0.0
      %v1203 = vsel %vm661, %v1093, 0.0
      %v1204 = vsel %vm661, %v1098, 0.0
      %v1205 = vsel %vm661, %v1103, 0.0
      %v1206 = vsel %vm661, %v1108, 0.0
      %v1207 = vsel %vm661, %v1113, 0.0
      %v1208 = vsel %vm661, %v1118, 0.0
      %v1209 = vsel %vm661, %v1123, 0.0
      %v1210 = vsel %vm661, %v1128, 0.0
      %v1211 = vsel %vm612, %v1195, 0.0
      %1212 = vadd.xlane.f32.xlu0 %v1211
      %v1213 = vpop.xlane.xlu0 %1212
      %v1214 = vsel %vm612, %v1196, 0.0
      %1215 = vadd.xlane.f32.xlu0 %v1214
      %v1216 = vpop.xlane.xlu0 %1215
      %v1217 = vsel %vm612, %v1197, 0.0
      %1218 = vadd.xlane.f32.xlu0 %v1217
      %v1219 = vpop.xlane.xlu0 %1218
      %v1220 = vsel %vm612, %v1198, 0.0
      %1221 = vadd.xlane.f32.xlu0 %v1220
      %v1222 = vpop.xlane.xlu0 %1221
      %v1223 = vsel %vm612, %v1199, 0.0
      %1224 = vadd.xlane.f32.xlu0 %v1223
      %v1225 = vpop.xlane.xlu0 %1224
      %v1226 = vsel %vm612, %v1200, 0.0
      %1227 = vadd.xlane.f32.xlu0 %v1226
      %v1228 = vpop.xlane.xlu0 %1227
      %v1229 = vsel %vm612, %v1201, 0.0
      %1230 = vadd.xlane.f32.xlu0 %v1229
      %v1231 = vpop.xlane.xlu0 %1230
      %v1232 = vsel %vm612, %v1202, 0.0
      %1233 = vadd.xlane.f32.xlu0 %v1232
      %v1234 = vpop.xlane.xlu0 %1233
      %v1235 = vsel %vm612, %v1203, 0.0
      %1236 = vadd.xlane.f32.xlu0 %v1235
      %v1237 = vpop.xlane.xlu0 %1236
      %v1238 = vsel %vm612, %v1204, 0.0
      %1239 = vadd.xlane.f32.xlu0 %v1238
      %v1240 = vpop.xlane.xlu0 %1239
      %v1241 = vsel %vm612, %v1205, 0.0
      %1242 = vadd.xlane.f32.xlu0 %v1241
      %v1243 = vpop.xlane.xlu0 %1242
      %v1244 = vsel %vm612, %v1206, 0.0
      %1245 = vadd.xlane.f32.xlu0 %v1244
      %v1246 = vpop.xlane.xlu0 %1245
      %v1247 = vsel %vm612, %v1207, 0.0
      %1248 = vadd.xlane.f32.xlu0 %v1247
      %v1249 = vpop.xlane.xlu0 %1248
      %v1250 = vsel %vm612, %v1208, 0.0
      %1251 = vadd.xlane.f32.xlu0 %v1250
      %v1252 = vpop.xlane.xlu0 %1251
      %v1253 = vsel %vm612, %v1209, 0.0
      %1254 = vadd.xlane.f32.xlu0 %v1253
      %v1255 = vpop.xlane.xlu0 %1254
      %v1256 = vsel %vm612, %v1210, 0.0
      %1257 = vadd.xlane.f32.xlu0 %v1256
      %v1258 = vpop.xlane.xlu0 %1257
      %v1259 = vsel %vm726, %v1053, 0.0
      %v1260 = vsel %vm726, %v1058, 0.0
      %v1261 = vsel %vm726, %v1063, 0.0
      %v1262 = vsel %vm726, %v1068, 0.0
      %v1263 = vsel %vm726, %v1073, 0.0
      %v1264 = vsel %vm726, %v1078, 0.0
      %v1265 = vsel %vm726, %v1083, 0.0
      %v1266 = vsel %vm726, %v1088, 0.0
      %v1267 = vsel %vm726, %v1093, 0.0
      %v1268 = vsel %vm726, %v1098, 0.0
      %v1269 = vsel %vm726, %v1103, 0.0
      %v1270 = vsel %vm726, %v1108, 0.0
      %v1271 = vsel %vm726, %v1113, 0.0
      %v1272 = vsel %vm726, %v1118, 0.0
      %v1273 = vsel %vm726, %v1123, 0.0
      %v1274 = vsel %vm726, %v1128, 0.0
      %v1275 = vsel %vm612, %v1259, 0.0
      %1276 = vadd.xlane.f32.xlu0 %v1275
      %v1277 = vpop.xlane.xlu0 %1276
      %v1278 = vsel %vm612, %v1260, 0.0
      %1279 = vadd.xlane.f32.xlu0 %v1278
      %v1280 = vpop.xlane.xlu0 %1279
      %v1281 = vsel %vm612, %v1261, 0.0
      %1282 = vadd.xlane.f32.xlu0 %v1281
      %v1283 = vpop.xlane.xlu0 %1282
      %v1284 = vsel %vm612, %v1262, 0.0
      %1285 = vadd.xlane.f32.xlu0 %v1284
      %v1286 = vpop.xlane.xlu0 %1285
      %v1287 = vsel %vm612, %v1263, 0.0
      %1288 = vadd.xlane.f32.xlu0 %v1287
      %v1289 = vpop.xlane.xlu0 %1288
      %v1290 = vsel %vm612, %v1264, 0.0
      %1291 = vadd.xlane.f32.xlu0 %v1290
      %v1292 = vpop.xlane.xlu0 %1291
      %v1293 = vsel %vm612, %v1265, 0.0
      %1294 = vadd.xlane.f32.xlu0 %v1293
      %v1295 = vpop.xlane.xlu0 %1294
      %v1296 = vsel %vm612, %v1266, 0.0
      %1297 = vadd.xlane.f32.xlu0 %v1296
      %v1298 = vpop.xlane.xlu0 %1297
      %v1299 = vsel %vm612, %v1267, 0.0
      %1300 = vadd.xlane.f32.xlu0 %v1299
      %v1301 = vpop.xlane.xlu0 %1300
      %v1302 = vsel %vm612, %v1268, 0.0
      %1303 = vadd.xlane.f32.xlu0 %v1302
      %v1304 = vpop.xlane.xlu0 %1303
      %v1305 = vsel %vm612, %v1269, 0.0
      %1306 = vadd.xlane.f32.xlu0 %v1305
      %v1307 = vpop.xlane.xlu0 %1306
      %v1308 = vsel %vm612, %v1270, 0.0
      %1309 = vadd.xlane.f32.xlu0 %v1308
      %v1310 = vpop.xlane.xlu0 %1309
      %v1311 = vsel %vm612, %v1271, 0.0
      %1312 = vadd.xlane.f32.xlu0 %v1311
      %v1313 = vpop.xlane.xlu0 %1312
      %v1314 = vsel %vm612, %v1272, 0.0
      %1315 = vadd.xlane.f32.xlu0 %v1314
      %v1316 = vpop.xlane.xlu0 %1315
      %v1317 = vsel %vm612, %v1273, 0.0
      %1318 = vadd.xlane.f32.xlu0 %v1317
      %v1319 = vpop.xlane.xlu0 %1318
      %v1320 = vsel %vm612, %v1274, 0.0
      %1321 = vadd.xlane.f32.xlu0 %v1320
      %v1322 = vpop.xlane.xlu0 %1321
      %v1323 = vsub.f32 %v615, %v1149
      %v1324 = vsub.f32 %v618, %v1152
      %v1325 = vsub.f32 %v621, %v1155
      %v1326 = vsub.f32 %v624, %v1158
      %v1327 = vsub.f32 %v627, %v1161
      %v1328 = vsub.f32 %v630, %v1164
      %v1329 = vsub.f32 %v633, %v1167
      %v1330 = vsub.f32 %v636, %v1170
      %v1331 = vsub.f32 %v639, %v1173
      %v1332 = vsub.f32 %v642, %v1176
      %v1333 = vsub.f32 %v645, %v1179
      %v1334 = vsub.f32 %v648, %v1182
      %v1335 = vsub.f32 %v651, %v1185
      %v1336 = vsub.f32 %v654, %v1188
      %v1337 = vsub.f32 %v657, %v1191
      %v1338 = vsub.f32 %v660, %v1194
      %v1339 = vsub.f32 %v680, %v1213
      %v1340 = vsub.f32 %v683, %v1216
      %v1341 = vsub.f32 %v686, %v1219
      %v1342 = vsub.f32 %v689, %v1222
      %v1343 = vsub.f32 %v692, %v1225
      %v1344 = vsub.f32 %v695, %v1228
      %v1345 = vsub.f32 %v698, %v1231
      %v1346 = vsub.f32 %v701, %v1234
      %v1347 = vsub.f32 %v704, %v1237
      %v1348 = vsub.f32 %v707, %v1240
      %v1349 = vsub.f32 %v710, %v1243
      %v1350 = vsub.f32 %v713, %v1246
      %v1351 = vsub.f32 %v716, %v1249
      %v1352 = vsub.f32 %v719, %v1252
      %v1353 = vsub.f32 %v722, %v1255
      %v1354 = vsub.f32 %v725, %v1258
      %v1355 = vsub.f32 %v745, %v1277
      %v1356 = vsub.f32 %v748, %v1280
      %v1357 = vsub.f32 %v751, %v1283
      %v1358 = vsub.f32 %v754, %v1286
      %v1359 = vsub.f32 %v757, %v1289
      %v1360 = vsub.f32 %v760, %v1292
      %v1361 = vsub.f32 %v763, %v1295
      %v1362 = vsub.f32 %v766, %v1298
      %v1363 = vsub.f32 %v769, %v1301
      %v1364 = vsub.f32 %v772, %v1304
      %v1365 = vsub.f32 %v775, %v1307
      %v1366 = vsub.f32 %v778, %v1310
      %v1367 = vsub.f32 %v781, %v1313
      %v1368 = vsub.f32 %v784, %v1316
      %v1369 = vsub.f32 %v787, %v1319
      %v1370 = vsub.f32 %v790, %v1322
      %v1371 = vmul.f32 %v1323, %v1323
      %v1372 = vmul.f32 %v1324, %v1324
      %v1373 = vmul.f32 %v1325, %v1325
      %v1374 = vmul.f32 %v1326, %v1326
      %v1375 = vmul.f32 %v1327, %v1327
      %v1376 = vmul.f32 %v1328, %v1328
      %v1377 = vmul.f32 %v1329, %v1329
      %v1378 = vmul.f32 %v1330, %v1330
      %v1379 = vmul.f32 %v1331, %v1331
      %v1380 = vmul.f32 %v1332, %v1332
      %v1381 = vmul.f32 %v1333, %v1333
      %v1382 = vmul.f32 %v1334, %v1334
      %v1383 = vmul.f32 %v1335, %v1335
      %v1384 = vmul.f32 %v1336, %v1336
      %v1385 = vmul.f32 %v1337, %v1337
      %v1386 = vmul.f32 %v1338, %v1338
      %v1387 = vmul.f32 %v1339, %v1339
      %v1388 = vmul.f32 %v1340, %v1340
      %v1389 = vmul.f32 %v1341, %v1341
      %v1390 = vmul.f32 %v1342, %v1342
      %v1391 = vmul.f32 %v1343, %v1343
      %v1392 = vmul.f32 %v1344, %v1344
      %v1393 = vmul.f32 %v1345, %v1345
      %v1394 = vmul.f32 %v1346, %v1346
      %v1395 = vmul.f32 %v1347, %v1347
      %v1396 = vmul.f32 %v1348, %v1348
      %v1397 = vmul.f32 %v1349, %v1349
      %v1398 = vmul.f32 %v1350, %v1350
      %v1399 = vmul.f32 %v1351, %v1351
      %v1400 = vmul.f32 %v1352, %v1352
      %v1401 = vmul.f32 %v1353, %v1353
      %v1402 = vmul.f32 %v1354, %v1354
      %v1403 = vadd.f32 %v1371, %v1387
      %v1404 = vadd.f32 %v1372, %v1388
      %v1405 = vadd.f32 %v1373, %v1389
      %v1406 = vadd.f32 %v1374, %v1390
      %v1407 = vadd.f32 %v1375, %v1391
      %v1408 = vadd.f32 %v1376, %v1392
      %v1409 = vadd.f32 %v1377, %v1393
      %v1410 = vadd.f32 %v1378, %v1394
      %v1411 = vadd.f32 %v1379, %v1395
      %v1412 = vadd.f32 %v1380, %v1396
      %v1413 = vadd.f32 %v1381, %v1397
      %v1414 = vadd.f32 %v1382, %v1398
      %v1415 = vadd.f32 %v1383, %v1399
      %v1416 = vadd.f32 %v1384, %v1400
      %v1417 = vadd.f32 %v1385, %v1401
      %v1418 = vadd.f32 %v1386, %v1402
      %v1419 = vmul.f32 %v1355, %v1355
      %v1420 = vmul.f32 %v1356, %v1356
      %v1421 = vmul.f32 %v1357, %v1357
      %v1422 = vmul.f32 %v1358, %v1358
      %v1423 = vmul.f32 %v1359, %v1359
      %v1424 = vmul.f32 %v1360, %v1360
      %v1425 = vmul.f32 %v1361, %v1361
      %v1426 = vmul.f32 %v1362, %v1362
      %v1427 = vmul.f32 %v1363, %v1363
      %v1428 = vmul.f32 %v1364, %v1364
      %v1429 = vmul.f32 %v1365, %v1365
      %v1430 = vmul.f32 %v1366, %v1366
      %v1431 = vmul.f32 %v1367, %v1367
      %v1432 = vmul.f32 %v1368, %v1368
      %v1433 = vmul.f32 %v1369, %v1369
      %v1434 = vmul.f32 %v1370, %v1370
      %v1435 = vadd.f32 %v1403, %v1419
      %v1436 = vadd.f32 %v1404, %v1420
      %v1437 = vadd.f32 %v1405, %v1421
      %v1438 = vadd.f32 %v1406, %v1422
      %v1439 = vadd.f32 %v1407, %v1423
      %v1440 = vadd.f32 %v1408, %v1424
      %v1441 = vadd.f32 %v1409, %v1425
      %v1442 = vadd.f32 %v1410, %v1426
      %v1443 = vadd.f32 %v1411, %v1427
      %v1444 = vadd.f32 %v1412, %v1428
      %v1445 = vadd.f32 %v1413, %v1429
      %v1446 = vadd.f32 %v1414, %v1430
      %v1447 = vadd.f32 %v1415, %v1431
      %v1448 = vadd.f32 %v1416, %v1432
      %v1449 = vadd.f32 %v1417, %v1433
      %v1450 = vadd.f32 %v1418, %v1434
      %v1451 = vrsqrt.pop %v1435
      %v1452 = vmul.f32 %v1435, %v1451
      %vm1453 = vcmp.eq.f32.partialorder %v1435, inf
      %v1454 = vsel %vm1453, %v1435, %v1452
      %vm1455 = vcmp.eq.f32.partialorder %v1435, 0.0
      %v1456 = vand.u32 %v1435, 2147483648
      %v1457 = vsel %vm1455, %v1456, %v1454
      %v1458 = vrsqrt.pop %v1436
      %v1459 = vmul.f32 %v1436, %v1458
      %vm1460 = vcmp.eq.f32.partialorder %v1436, inf
      %v1461 = vsel %vm1460, %v1436, %v1459
      %vm1462 = vcmp.eq.f32.partialorder %v1436, 0.0
      %v1463 = vand.u32 %v1436, 2147483648
      %v1464 = vsel %vm1462, %v1463, %v1461
      %v1465 = vrsqrt.pop %v1437
      %v1466 = vmul.f32 %v1437, %v1465
      %vm1467 = vcmp.eq.f32.partialorder %v1437, inf
      %v1468 = vsel %vm1467, %v1437, %v1466
      %vm1469 = vcmp.eq.f32.partialorder %v1437, 0.0
      %v1470 = vand.u32 %v1437, 2147483648
      %v1471 = vsel %vm1469, %v1470, %v1468
      %v1472 = vrsqrt.pop %v1438
      %v1473 = vmul.f32 %v1438, %v1472
      %vm1474 = vcmp.eq.f32.partialorder %v1438, inf
      %v1475 = vsel %vm1474, %v1438, %v1473
      %vm1476 = vcmp.eq.f32.partialorder %v1438, 0.0
      %v1477 = vand.u32 %v1438, 2147483648
      %v1478 = vsel %vm1476, %v1477, %v1475
      %v1479 = vrsqrt.pop %v1439
      %v1480 = vmul.f32 %v1439, %v1479
      %vm1481 = vcmp.eq.f32.partialorder %v1439, inf
      %v1482 = vsel %vm1481, %v1439, %v1480
      %vm1483 = vcmp.eq.f32.partialorder %v1439, 0.0
      %v1484 = vand.u32 %v1439, 2147483648
      %v1485 = vsel %vm1483, %v1484, %v1482
      %v1486 = vrsqrt.pop %v1440
      %v1487 = vmul.f32 %v1440, %v1486
      %vm1488 = vcmp.eq.f32.partialorder %v1440, inf
      %v1489 = vsel %vm1488, %v1440, %v1487
      %vm1490 = vcmp.eq.f32.partialorder %v1440, 0.0
      %v1491 = vand.u32 %v1440, 2147483648
      %v1492 = vsel %vm1490, %v1491, %v1489
      %v1493 = vrsqrt.pop %v1441
      %v1494 = vmul.f32 %v1441, %v1493
      %vm1495 = vcmp.eq.f32.partialorder %v1441, inf
      %v1496 = vsel %vm1495, %v1441, %v1494
      %vm1497 = vcmp.eq.f32.partialorder %v1441, 0.0
      %v1498 = vand.u32 %v1441, 2147483648
      %v1499 = vsel %vm1497, %v1498, %v1496
      %v1500 = vrsqrt.pop %v1442
      %v1501 = vmul.f32 %v1442, %v1500
      %vm1502 = vcmp.eq.f32.partialorder %v1442, inf
      %v1503 = vsel %vm1502, %v1442, %v1501
      %vm1504 = vcmp.eq.f32.partialorder %v1442, 0.0
      %v1505 = vand.u32 %v1442, 2147483648
      %v1506 = vsel %vm1504, %v1505, %v1503
      %v1507 = vrsqrt.pop %v1443
      %v1508 = vmul.f32 %v1443, %v1507
      %vm1509 = vcmp.eq.f32.partialorder %v1443, inf
      %v1510 = vsel %vm1509, %v1443, %v1508
      %vm1511 = vcmp.eq.f32.partialorder %v1443, 0.0
      %v1512 = vand.u32 %v1443, 2147483648
      %v1513 = vsel %vm1511, %v1512, %v1510
      %v1514 = vrsqrt.pop %v1444
      %v1515 = vmul.f32 %v1444, %v1514
      %vm1516 = vcmp.eq.f32.partialorder %v1444, inf
      %v1517 = vsel %vm1516, %v1444, %v1515
      %vm1518 = vcmp.eq.f32.partialorder %v1444, 0.0
      %v1519 = vand.u32 %v1444, 2147483648
      %v1520 = vsel %vm1518, %v1519, %v1517
      %v1521 = vrsqrt.pop %v1445
      %v1522 = vmul.f32 %v1445, %v1521
      %vm1523 = vcmp.eq.f32.partialorder %v1445, inf
      %v1524 = vsel %vm1523, %v1445, %v1522
      %vm1525 = vcmp.eq.f32.partialorder %v1445, 0.0
      %v1526 = vand.u32 %v1445, 2147483648
      %v1527 = vsel %vm1525, %v1526, %v1524
      %v1528 = vrsqrt.pop %v1446
      %v1529 = vmul.f32 %v1446, %v1528
      %vm1530 = vcmp.eq.f32.partialorder %v1446, inf
      %v1531 = vsel %vm1530, %v1446, %v1529
      %vm1532 = vcmp.eq.f32.partialorder %v1446, 0.0
      %v1533 = vand.u32 %v1446, 2147483648
      %v1534 = vsel %vm1532, %v1533, %v1531
      %v1535 = vrsqrt.pop %v1447
      %v1536 = vmul.f32 %v1447, %v1535
      %vm1537 = vcmp.eq.f32.partialorder %v1447, inf
      %v1538 = vsel %vm1537, %v1447, %v1536
      %vm1539 = vcmp.eq.f32.partialorder %v1447, 0.0
      %v1540 = vand.u32 %v1447, 2147483648
      %v1541 = vsel %vm1539, %v1540, %v1538
      %v1542 = vrsqrt.pop %v1448
      %v1543 = vmul.f32 %v1448, %v1542
      %vm1544 = vcmp.eq.f32.partialorder %v1448, inf
      %v1545 = vsel %vm1544, %v1448, %v1543
      %vm1546 = vcmp.eq.f32.partialorder %v1448, 0.0
      %v1547 = vand.u32 %v1448, 2147483648
      %v1548 = vsel %vm1546, %v1547, %v1545
      %v1549 = vrsqrt.pop %v1449
      %v1550 = vmul.f32 %v1449, %v1549
      %vm1551 = vcmp.eq.f32.partialorder %v1449, inf
      %v1552 = vsel %vm1551, %v1449, %v1550
      %vm1553 = vcmp.eq.f32.partialorder %v1449, 0.0
      %v1554 = vand.u32 %v1449, 2147483648
      %v1555 = vsel %vm1553, %v1554, %v1552
      %v1556 = vrsqrt.pop %v1450
      %v1557 = vmul.f32 %v1450, %v1556
      %vm1558 = vcmp.eq.f32.partialorder %v1450, inf
      %v1559 = vsel %vm1558, %v1450, %v1557
      %vm1560 = vcmp.eq.f32.partialorder %v1450, 0.0
      %v1561 = vand.u32 %v1450, 2147483648
      %v1562 = vsel %vm1560, %v1561, %v1559
      %v1563 = vsel %vm595, %v1457, %v826
      %v1564 = vsel %vm595, %v1464, %v827
      %v1565 = vsel %vm595, %v1471, %v828
      %v1566 = vsel %vm595, %v1478, %v829
      %v1567 = vsel %vm595, %v1485, %v830
      %v1568 = vsel %vm595, %v1492, %v831
      %v1569 = vsel %vm595, %v1499, %v832
      %v1570 = vsel %vm595, %v1506, %v833
      %v1571 = vsel %vm595, %v1513, %v834
      %v1572 = vsel %vm595, %v1520, %v835
      %v1573 = vsel %vm595, %v1527, %v836
      %v1574 = vsel %vm595, %v1534, %v837
      %v1575 = vsel %vm595, %v1541, %v838
      %v1576 = vsel %vm595, %v1548, %v839
      %v1577 = vsel %vm595, %v1555, %v840
      %v1578 = vsel %vm595, %v1562, %v841
      %v1579 = vsel %vm661, %v1323, %v1563
      %v1580 = vsel %vm661, %v1324, %v1564
      %v1581 = vsel %vm661, %v1325, %v1565
      %v1582 = vsel %vm661, %v1326, %v1566
      %v1583 = vsel %vm661, %v1327, %v1567
      %v1584 = vsel %vm661, %v1328, %v1568
      %v1585 = vsel %vm661, %v1329, %v1569
      %v1586 = vsel %vm661, %v1330, %v1570
      %v1587 = vsel %vm661, %v1331, %v1571
      %v1588 = vsel %vm661, %v1332, %v1572
      %v1589 = vsel %vm661, %v1333, %v1573
      %v1590 = vsel %vm661, %v1334, %v1574
      %v1591 = vsel %vm661, %v1335, %v1575
      %v1592 = vsel %vm661, %v1336, %v1576
      %v1593 = vsel %vm661, %v1337, %v1577
      %v1594 = vsel %vm661, %v1338, %v1578
      %v1595 = vsel %vm726, %v1339, %v1579
      %v1596 = vsel %vm726, %v1340, %v1580
      %v1597 = vsel %vm726, %v1341, %v1581
      %v1598 = vsel %vm726, %v1342, %v1582
      %v1599 = vsel %vm726, %v1343, %v1583
      %v1600 = vsel %vm726, %v1344, %v1584
      %v1601 = vsel %vm726, %v1345, %v1585
      %v1602 = vsel %vm726, %v1346, %v1586
      %v1603 = vsel %vm726, %v1347, %v1587
      %v1604 = vsel %vm726, %v1348, %v1588
      %v1605 = vsel %vm726, %v1349, %v1589
      %v1606 = vsel %vm726, %v1350, %v1590
      %v1607 = vsel %vm726, %v1351, %v1591
      %v1608 = vsel %vm726, %v1352, %v1592
      %v1609 = vsel %vm726, %v1353, %v1593
      %v1610 = vsel %vm726, %v1354, %v1594
      %vm1611 = vcmp.eq.s32.totalorder %v577, 3
      %v1612 = vsel %vm1611, %v1355, %v1595
      %v1613 = vsel %vm1611, %v1356, %v1596
      %v1614 = vsel %vm1611, %v1357, %v1597
      %v1615 = vsel %vm1611, %v1358, %v1598
      %v1616 = vsel %vm1611, %v1359, %v1599
      %v1617 = vsel %vm1611, %v1360, %v1600
      %v1618 = vsel %vm1611, %v1361, %v1601
      %v1619 = vsel %vm1611, %v1362, %v1602
      %v1620 = vsel %vm1611, %v1363, %v1603
      %v1621 = vsel %vm1611, %v1364, %v1604
      %v1622 = vsel %vm1611, %v1365, %v1605
      %v1623 = vsel %vm1611, %v1366, %v1606
      %v1624 = vsel %vm1611, %v1367, %v1607
      %v1625 = vsel %vm1611, %v1368, %v1608
      %v1626 = vsel %vm1611, %v1369, %v1609
      %v1627 = vsel %vm1611, %v1370, %v1610
      %vm1628 = vcmp.eq.s32.totalorder %v577, 7
      %v1629 = vsel %vm1628, %v1149, %v1612
      %v1630 = vsel %vm1628, %v1152, %v1613
      %v1631 = vsel %vm1628, %v1155, %v1614
      %v1632 = vsel %vm1628, %v1158, %v1615
      %v1633 = vsel %vm1628, %v1161, %v1616
      %v1634 = vsel %vm1628, %v1164, %v1617
      %v1635 = vsel %vm1628, %v1167, %v1618
      %v1636 = vsel %vm1628, %v1170, %v1619
      %v1637 = vsel %vm1628, %v1173, %v1620
      %v1638 = vsel %vm1628, %v1176, %v1621
      %v1639 = vsel %vm1628, %v1179, %v1622
      %v1640 = vsel %vm1628, %v1182, %v1623
      %v1641 = vsel %vm1628, %v1185, %v1624
      %v1642 = vsel %vm1628, %v1188, %v1625
      %v1643 = vsel %vm1628, %v1191, %v1626
      %v1644 = vsel %vm1628, %v1194, %v1627
      %vm1645 = vcmp.eq.s32.totalorder %v577, 8
      %v1646 = vsel %vm1645, %v1213, %v1629
      %v1647 = vsel %vm1645, %v1216, %v1630
      %v1648 = vsel %vm1645, %v1219, %v1631
      %v1649 = vsel %vm1645, %v1222, %v1632
      %v1650 = vsel %vm1645, %v1225, %v1633
      %v1651 = vsel %vm1645, %v1228, %v1634
      %v1652 = vsel %vm1645, %v1231, %v1635
      %v1653 = vsel %vm1645, %v1234, %v1636
      %v1654 = vsel %vm1645, %v1237, %v1637
      %v1655 = vsel %vm1645, %v1240, %v1638
      %v1656 = vsel %vm1645, %v1243, %v1639
      %v1657 = vsel %vm1645, %v1246, %v1640
      %v1658 = vsel %vm1645, %v1249, %v1641
      %v1659 = vsel %vm1645, %v1252, %v1642
      %v1660 = vsel %vm1645, %v1255, %v1643
      %v1661 = vsel %vm1645, %v1258, %v1644
      %vm1662 = vcmp.eq.s32.totalorder %v577, 9
      %v1663 = vsel %vm1662, %v1277, %v1646
      %v1664 = vsel %vm1662, %v1280, %v1647
      %v1665 = vsel %vm1662, %v1283, %v1648
      %v1666 = vsel %vm1662, %v1286, %v1649
      %v1667 = vsel %vm1662, %v1289, %v1650
      %v1668 = vsel %vm1662, %v1292, %v1651
      %v1669 = vsel %vm1662, %v1295, %v1652
      %v1670 = vsel %vm1662, %v1298, %v1653
      %v1671 = vsel %vm1662, %v1301, %v1654
      %v1672 = vsel %vm1662, %v1304, %v1655
      %v1673 = vsel %vm1662, %v1307, %v1656
      %v1674 = vsel %vm1662, %v1310, %v1657
      %v1675 = vsel %vm1662, %v1313, %v1658
      %v1676 = vsel %vm1662, %v1316, %v1659
      %v1677 = vsel %vm1662, %v1319, %v1660
      %v1678 = vsel %vm1662, %v1322, %v1661
      %v1679 = vsel %vm938, 3.4028235e+38, %v560
      %v1680 = vsel %vm939, 3.4028235e+38, %v561
      %v1681 = vsel %vm940, 3.4028235e+38, %v562
      %v1682 = vsel %vm941, 3.4028235e+38, %v563
      %v1683 = vsel %vm942, 3.4028235e+38, %v564
      %v1684 = vsel %vm943, 3.4028235e+38, %v565
      %v1685 = vsel %vm944, 3.4028235e+38, %v566
      %v1686 = vsel %vm945, 3.4028235e+38, %v567
      %v1687 = vsel %vm946, 3.4028235e+38, %v568
      %v1688 = vsel %vm947, 3.4028235e+38, %v569
      %v1689 = vsel %vm948, 3.4028235e+38, %v570
      %v1690 = vsel %vm949, 3.4028235e+38, %v571
      %v1691 = vsel %vm950, 3.4028235e+38, %v572
      %v1692 = vsel %vm951, 3.4028235e+38, %v573
      %v1693 = vsel %vm952, 3.4028235e+38, %v574
      %v1694 = vsel %vm953, 3.4028235e+38, %v575
      %1695 = vmin.xlane.f32.xlu0 %v1679
      %v1696 = vpop.xlane.xlu0 %1695
      %1697 = vmin.xlane.f32.xlu0 %v1680
      %v1698 = vpop.xlane.xlu0 %1697
      %1699 = vmin.xlane.f32.xlu0 %v1681
      %v1700 = vpop.xlane.xlu0 %1699
      %1701 = vmin.xlane.f32.xlu0 %v1682
      %v1702 = vpop.xlane.xlu0 %1701
      %1703 = vmin.xlane.f32.xlu0 %v1683
      %v1704 = vpop.xlane.xlu0 %1703
      %1705 = vmin.xlane.f32.xlu0 %v1684
      %v1706 = vpop.xlane.xlu0 %1705
      %1707 = vmin.xlane.f32.xlu0 %v1685
      %v1708 = vpop.xlane.xlu0 %1707
      %1709 = vmin.xlane.f32.xlu0 %v1686
      %v1710 = vpop.xlane.xlu0 %1709
      %1711 = vmin.xlane.f32.xlu0 %v1687
      %v1712 = vpop.xlane.xlu0 %1711
      %1713 = vmin.xlane.f32.xlu0 %v1688
      %v1714 = vpop.xlane.xlu0 %1713
      %1715 = vmin.xlane.f32.xlu0 %v1689
      %v1716 = vpop.xlane.xlu0 %1715
      %1717 = vmin.xlane.f32.xlu0 %v1690
      %v1718 = vpop.xlane.xlu0 %1717
      %1719 = vmin.xlane.f32.xlu0 %v1691
      %v1720 = vpop.xlane.xlu0 %1719
      %1721 = vmin.xlane.f32.xlu0 %v1692
      %v1722 = vpop.xlane.xlu0 %1721
      %1723 = vmin.xlane.f32.xlu0 %v1693
      %v1724 = vpop.xlane.xlu0 %1723
      %1725 = vmin.xlane.f32.xlu0 %v1694
      %v1726 = vpop.xlane.xlu0 %1725
      %vm1727 = vcmp.eq.f32.partialorder %v1679, %v1696
      %vm1728 = vcmp.eq.f32.partialorder %v1680, %v1698
      %vm1729 = vcmp.eq.f32.partialorder %v1681, %v1700
      %vm1730 = vcmp.eq.f32.partialorder %v1682, %v1702
      %vm1731 = vcmp.eq.f32.partialorder %v1683, %v1704
      %vm1732 = vcmp.eq.f32.partialorder %v1684, %v1706
      %vm1733 = vcmp.eq.f32.partialorder %v1685, %v1708
      %vm1734 = vcmp.eq.f32.partialorder %v1686, %v1710
      %vm1735 = vcmp.eq.f32.partialorder %v1687, %v1712
      %vm1736 = vcmp.eq.f32.partialorder %v1688, %v1714
      %vm1737 = vcmp.eq.f32.partialorder %v1689, %v1716
      %vm1738 = vcmp.eq.f32.partialorder %v1690, %v1718
      %vm1739 = vcmp.eq.f32.partialorder %v1691, %v1720
      %vm1740 = vcmp.eq.f32.partialorder %v1692, %v1722
      %vm1741 = vcmp.eq.f32.partialorder %v1693, %v1724
      %vm1742 = vcmp.eq.f32.partialorder %v1694, %v1726
      %v1743 = vsel %vm1727, %v578, 128.0
      %v1744 = vsel %vm1728, %v578, 128.0
      %v1745 = vsel %vm1729, %v578, 128.0
      %v1746 = vsel %vm1730, %v578, 128.0
      %v1747 = vsel %vm1731, %v578, 128.0
      %v1748 = vsel %vm1732, %v578, 128.0
      %v1749 = vsel %vm1733, %v578, 128.0
      %v1750 = vsel %vm1734, %v578, 128.0
      %v1751 = vsel %vm1735, %v578, 128.0
      %v1752 = vsel %vm1736, %v578, 128.0
      %v1753 = vsel %vm1737, %v578, 128.0
      %v1754 = vsel %vm1738, %v578, 128.0
      %v1755 = vsel %vm1739, %v578, 128.0
      %v1756 = vsel %vm1740, %v578, 128.0
      %v1757 = vsel %vm1741, %v578, 128.0
      %v1758 = vsel %vm1742, %v578, 128.0
      %1759 = vmin.xlane.f32.xlu0 %v1743
      %v1760 = vpop.xlane.xlu0 %1759
      %1761 = vmin.xlane.f32.xlu0 %v1744
      %v1762 = vpop.xlane.xlu0 %1761
      %1763 = vmin.xlane.f32.xlu0 %v1745
      %v1764 = vpop.xlane.xlu0 %1763
      %1765 = vmin.xlane.f32.xlu0 %v1746
      %v1766 = vpop.xlane.xlu0 %1765
      %1767 = vmin.xlane.f32.xlu0 %v1747
      %v1768 = vpop.xlane.xlu0 %1767
      %1769 = vmin.xlane.f32.xlu0 %v1748
      %v1770 = vpop.xlane.xlu0 %1769
      %1771 = vmin.xlane.f32.xlu0 %v1749
      %v1772 = vpop.xlane.xlu0 %1771
      %1773 = vmin.xlane.f32.xlu0 %v1750
      %v1774 = vpop.xlane.xlu0 %1773
      %1775 = vmin.xlane.f32.xlu0 %v1751
      %v1776 = vpop.xlane.xlu0 %1775
      %1777 = vmin.xlane.f32.xlu0 %v1752
      %v1778 = vpop.xlane.xlu0 %1777
      %1779 = vmin.xlane.f32.xlu0 %v1753
      %v1780 = vpop.xlane.xlu0 %1779
      %1781 = vmin.xlane.f32.xlu0 %v1754
      %v1782 = vpop.xlane.xlu0 %1781
      %1783 = vmin.xlane.f32.xlu0 %v1755
      %v1784 = vpop.xlane.xlu0 %1783
      %1785 = vmin.xlane.f32.xlu0 %v1756
      %v1786 = vpop.xlane.xlu0 %1785
      %1787 = vmin.xlane.f32.xlu0 %v1757
      %v1788 = vpop.xlane.xlu0 %1787
      %1789 = vmin.xlane.f32.xlu0 %v1758
      %v1790 = vpop.xlane.xlu0 %1789
      %vm1791 = vcmp.eq.f32.partialorder %v578, %v1760
      %vm1792 = vcmp.eq.f32.partialorder %v578, %v1762
      %vm1793 = vcmp.eq.f32.partialorder %v578, %v1764
      %vm1794 = vcmp.eq.f32.partialorder %v578, %v1766
      %vm1795 = vcmp.eq.f32.partialorder %v578, %v1768
      %vm1796 = vcmp.eq.f32.partialorder %v578, %v1770
      %vm1797 = vcmp.eq.f32.partialorder %v578, %v1772
      %vm1798 = vcmp.eq.f32.partialorder %v578, %v1774
      %vm1799 = vcmp.eq.f32.partialorder %v578, %v1776
      %vm1800 = vcmp.eq.f32.partialorder %v578, %v1778
      %vm1801 = vcmp.eq.f32.partialorder %v578, %v1780
      %vm1802 = vcmp.eq.f32.partialorder %v578, %v1782
      %vm1803 = vcmp.eq.f32.partialorder %v578, %v1784
      %vm1804 = vcmp.eq.f32.partialorder %v578, %v1786
      %vm1805 = vcmp.eq.f32.partialorder %v578, %v1788
      %vm1806 = vcmp.eq.f32.partialorder %v578, %v1790
      %v1807 = vsel %vm1791, 3.4028235e+38, %v1679
      %v1808 = vsel %vm1792, 3.4028235e+38, %v1680
      %v1809 = vsel %vm1793, 3.4028235e+38, %v1681
      %v1810 = vsel %vm1794, 3.4028235e+38, %v1682
      %v1811 = vsel %vm1795, 3.4028235e+38, %v1683
      %v1812 = vsel %vm1796, 3.4028235e+38, %v1684
      %v1813 = vsel %vm1797, 3.4028235e+38, %v1685
      %v1814 = vsel %vm1798, 3.4028235e+38, %v1686
      %v1815 = vsel %vm1799, 3.4028235e+38, %v1687
      %v1816 = vsel %vm1800, 3.4028235e+38, %v1688
      %v1817 = vsel %vm1801, 3.4028235e+38, %v1689
      %v1818 = vsel %vm1802, 3.4028235e+38, %v1690
      %v1819 = vsel %vm1803, 3.4028235e+38, %v1691
      %v1820 = vsel %vm1804, 3.4028235e+38, %v1692
      %v1821 = vsel %vm1805, 3.4028235e+38, %v1693
      %v1822 = vsel %vm1806, 3.4028235e+38, %v1694
      %1823 = vmin.xlane.f32.xlu0 %v1807
      %v1824 = vpop.xlane.xlu0 %1823
      %1825 = vmin.xlane.f32.xlu0 %v1808
      %v1826 = vpop.xlane.xlu0 %1825
      %1827 = vmin.xlane.f32.xlu0 %v1809
      %v1828 = vpop.xlane.xlu0 %1827
      %1829 = vmin.xlane.f32.xlu0 %v1810
      %v1830 = vpop.xlane.xlu0 %1829
      %1831 = vmin.xlane.f32.xlu0 %v1811
      %v1832 = vpop.xlane.xlu0 %1831
      %1833 = vmin.xlane.f32.xlu0 %v1812
      %v1834 = vpop.xlane.xlu0 %1833
      %1835 = vmin.xlane.f32.xlu0 %v1813
      %v1836 = vpop.xlane.xlu0 %1835
      %1837 = vmin.xlane.f32.xlu0 %v1814
      %v1838 = vpop.xlane.xlu0 %1837
      %1839 = vmin.xlane.f32.xlu0 %v1815
      %v1840 = vpop.xlane.xlu0 %1839
      %1841 = vmin.xlane.f32.xlu0 %v1816
      %v1842 = vpop.xlane.xlu0 %1841
      %1843 = vmin.xlane.f32.xlu0 %v1817
      %v1844 = vpop.xlane.xlu0 %1843
      %1845 = vmin.xlane.f32.xlu0 %v1818
      %v1846 = vpop.xlane.xlu0 %1845
      %1847 = vmin.xlane.f32.xlu0 %v1819
      %v1848 = vpop.xlane.xlu0 %1847
      %1849 = vmin.xlane.f32.xlu0 %v1820
      %v1850 = vpop.xlane.xlu0 %1849
      %1851 = vmin.xlane.f32.xlu0 %v1821
      %v1852 = vpop.xlane.xlu0 %1851
      %1853 = vmin.xlane.f32.xlu0 %v1822
      %v1854 = vpop.xlane.xlu0 %1853
      %vm1855 = vcmp.eq.f32.partialorder %v1807, %v1824
      %vm1856 = vcmp.eq.f32.partialorder %v1808, %v1826
      %vm1857 = vcmp.eq.f32.partialorder %v1809, %v1828
      %vm1858 = vcmp.eq.f32.partialorder %v1810, %v1830
      %vm1859 = vcmp.eq.f32.partialorder %v1811, %v1832
      %vm1860 = vcmp.eq.f32.partialorder %v1812, %v1834
      %vm1861 = vcmp.eq.f32.partialorder %v1813, %v1836
      %vm1862 = vcmp.eq.f32.partialorder %v1814, %v1838
      %vm1863 = vcmp.eq.f32.partialorder %v1815, %v1840
      %vm1864 = vcmp.eq.f32.partialorder %v1816, %v1842
      %vm1865 = vcmp.eq.f32.partialorder %v1817, %v1844
      %vm1866 = vcmp.eq.f32.partialorder %v1818, %v1846
      %vm1867 = vcmp.eq.f32.partialorder %v1819, %v1848
      %vm1868 = vcmp.eq.f32.partialorder %v1820, %v1850
      %vm1869 = vcmp.eq.f32.partialorder %v1821, %v1852
      %vm1870 = vcmp.eq.f32.partialorder %v1822, %v1854
      %v1871 = vsel %vm1855, %v578, 128.0
      %v1872 = vsel %vm1856, %v578, 128.0
      %v1873 = vsel %vm1857, %v578, 128.0
      %v1874 = vsel %vm1858, %v578, 128.0
      %v1875 = vsel %vm1859, %v578, 128.0
      %v1876 = vsel %vm1860, %v578, 128.0
      %v1877 = vsel %vm1861, %v578, 128.0
      %v1878 = vsel %vm1862, %v578, 128.0
      %v1879 = vsel %vm1863, %v578, 128.0
      %v1880 = vsel %vm1864, %v578, 128.0
      %v1881 = vsel %vm1865, %v578, 128.0
      %v1882 = vsel %vm1866, %v578, 128.0
      %v1883 = vsel %vm1867, %v578, 128.0
      %v1884 = vsel %vm1868, %v578, 128.0
      %v1885 = vsel %vm1869, %v578, 128.0
      %v1886 = vsel %vm1870, %v578, 128.0
      %1887 = vmin.xlane.f32.xlu0 %v1871
      %v1888 = vpop.xlane.xlu0 %1887
      %1889 = vmin.xlane.f32.xlu0 %v1872
      %v1890 = vpop.xlane.xlu0 %1889
      %1891 = vmin.xlane.f32.xlu0 %v1873
      %v1892 = vpop.xlane.xlu0 %1891
      %1893 = vmin.xlane.f32.xlu0 %v1874
      %v1894 = vpop.xlane.xlu0 %1893
      %1895 = vmin.xlane.f32.xlu0 %v1875
      %v1896 = vpop.xlane.xlu0 %1895
      %1897 = vmin.xlane.f32.xlu0 %v1876
      %v1898 = vpop.xlane.xlu0 %1897
      %1899 = vmin.xlane.f32.xlu0 %v1877
      %v1900 = vpop.xlane.xlu0 %1899
      %1901 = vmin.xlane.f32.xlu0 %v1878
      %v1902 = vpop.xlane.xlu0 %1901
      %1903 = vmin.xlane.f32.xlu0 %v1879
      %v1904 = vpop.xlane.xlu0 %1903
      %1905 = vmin.xlane.f32.xlu0 %v1880
      %v1906 = vpop.xlane.xlu0 %1905
      %1907 = vmin.xlane.f32.xlu0 %v1881
      %v1908 = vpop.xlane.xlu0 %1907
      %1909 = vmin.xlane.f32.xlu0 %v1882
      %v1910 = vpop.xlane.xlu0 %1909
      %1911 = vmin.xlane.f32.xlu0 %v1883
      %v1912 = vpop.xlane.xlu0 %1911
      %1913 = vmin.xlane.f32.xlu0 %v1884
      %v1914 = vpop.xlane.xlu0 %1913
      %1915 = vmin.xlane.f32.xlu0 %v1885
      %v1916 = vpop.xlane.xlu0 %1915
      %1917 = vmin.xlane.f32.xlu0 %v1886
      %v1918 = vpop.xlane.xlu0 %1917
      %vm1919 = vcmp.eq.f32.partialorder %v578, %v1888
      %vm1920 = vcmp.eq.f32.partialorder %v578, %v1890
      %vm1921 = vcmp.eq.f32.partialorder %v578, %v1892
      %vm1922 = vcmp.eq.f32.partialorder %v578, %v1894
      %vm1923 = vcmp.eq.f32.partialorder %v578, %v1896
      %vm1924 = vcmp.eq.f32.partialorder %v578, %v1898
      %vm1925 = vcmp.eq.f32.partialorder %v578, %v1900
      %vm1926 = vcmp.eq.f32.partialorder %v578, %v1902
      %vm1927 = vcmp.eq.f32.partialorder %v578, %v1904
      %vm1928 = vcmp.eq.f32.partialorder %v578, %v1906
      %vm1929 = vcmp.eq.f32.partialorder %v578, %v1908
      %vm1930 = vcmp.eq.f32.partialorder %v578, %v1910
      %vm1931 = vcmp.eq.f32.partialorder %v578, %v1912
      %vm1932 = vcmp.eq.f32.partialorder %v578, %v1914
      %vm1933 = vcmp.eq.f32.partialorder %v578, %v1916
      %vm1934 = vcmp.eq.f32.partialorder %v578, %v1918
      %v1935 = vsel %vm1919, 1, 0
      %v1936 = vsel %vm1920, 1, 0
      %v1937 = vsel %vm1921, 1, 0
      %v1938 = vsel %vm1922, 1, 0
      %v1939 = vsel %vm1923, 1, 0
      %v1940 = vsel %vm1924, 1, 0
      %v1941 = vsel %vm1925, 1, 0
      %v1942 = vsel %vm1926, 1, 0
      %v1943 = vsel %vm1927, 1, 0
      %v1944 = vsel %vm1928, 1, 0
      %v1945 = vsel %vm1929, 1, 0
      %v1946 = vsel %vm1930, 1, 0
      %v1947 = vsel %vm1931, 1, 0
      %v1948 = vsel %vm1932, 1, 0
      %v1949 = vsel %vm1933, 1, 0
      %v1950 = vsel %vm1934, 1, 0
      %v1951 = vcvt.s32.f32 %v1935
      %v1952 = vcvt.s32.f32 %v1936
      %v1953 = vcvt.s32.f32 %v1937
      %v1954 = vcvt.s32.f32 %v1938
      %v1955 = vcvt.s32.f32 %v1939
      %v1956 = vcvt.s32.f32 %v1940
      %v1957 = vcvt.s32.f32 %v1941
      %v1958 = vcvt.s32.f32 %v1942
      %v1959 = vcvt.s32.f32 %v1943
      %v1960 = vcvt.s32.f32 %v1944
      %v1961 = vcvt.s32.f32 %v1945
      %v1962 = vcvt.s32.f32 %v1946
      %v1963 = vcvt.s32.f32 %v1947
      %v1964 = vcvt.s32.f32 %v1948
      %v1965 = vcvt.s32.f32 %v1949
      %v1966 = vcvt.s32.f32 %v1950
      %1967 = vmatprep.subr.mxu0 0.0
      %1968 = vmatpush1.msra.mxu0 %v245
      %1969 = vmatprep.subr.mxu0 0.0
      %1970 = vmatpush1.msra.mxu0 %v246
      %1971 = vmatprep.subr.mxu0 0.0
      %1972 = vmatpush1.msra.mxu0 %v247
      %1973 = vmatprep.subr.mxu0 0.0
      %1974 = vmatpush1.msra.mxu0 %v248
      %1975 = vmatprep.subr.mxu0 0.0
      %1976 = vmatpush1.msra.mxu0 %v249
      %1977 = vmatprep.subr.mxu0 0.0
      %1978 = vmatpush1.msra.mxu0 %v250
      %1979 = vmatprep.subr.mxu0 0.0
      %1980 = vmatpush1.msra.mxu0 %v251
      %1981 = vmatprep.subr.mxu0 0.0
      %1982 = vmatpush1.msra.mxu0 %v252
      %1983 = vmatprep.subr.mxu0 0.0
      %1984 = vmatpush1.msra.mxu0 %v253
      %1985 = vmatprep.subr.mxu0 0.0
      %1986 = vmatpush1.msra.mxu0 %v254
      %1987 = vmatprep.subr.mxu0 0.0
      %1988 = vmatpush1.msra.mxu0 %v255
      %1989 = vmatprep.subr.mxu0 0.0
      %1990 = vmatpush1.msra.mxu0 %v256
      %1991 = vmatprep.subr.mxu0 0.0
      %1992 = vmatpush1.msra.mxu0 %v257
      %1993 = vmatprep.subr.mxu0 0.0
      %1994 = vmatpush1.msra.mxu0 %v258
      %1995 = vmatprep.subr.mxu0 0.0
      %1996 = vmatpush1.msra.mxu0 %v259
      %1997 = vmatprep.subr.mxu0 0.0
      %1998 = vmatpush1.msra.mxu0 %v260
      %1999 = vmatprep.subr.mxu0 0.0
      %2000 = vmatpush1.msra.mxu0 0.0
      %2001 = vmatprep.subr.mxu0 0.0
      %2002 = vmatpush1.msra.mxu0 0.0
      %2003 = vmatprep.subr.mxu0 0.0
      %2004 = vmatpush1.msra.mxu0 0.0
      %2005 = vmatprep.subr.mxu0 0.0
      %2006 = vmatpush1.msra.mxu0 0.0
      %2007 = vmatprep.subr.mxu0 0.0
      %2008 = vmatpush1.msra.mxu0 0.0
      %2009 = vmatprep.subr.mxu0 0.0
      %2010 = vmatpush1.msra.mxu0 0.0
      %2011 = vmatprep.subr.mxu0 0.0
      %2012 = vmatpush1.msra.mxu0 0.0
      %2013 = vmatprep.subr.mxu0 0.0
      %2014 = vmatpush1.msra.mxu0 0.0
      %2015 = vmatprep.subr.mxu0 0.0
      %2016 = vmatpush1.msra.mxu0 0.0
      %2017 = vmatprep.subr.mxu0 0.0
      %2018 = vmatpush1.msra.mxu0 0.0
      %2019 = vmatprep.subr.mxu0 0.0
      %2020 = vmatpush1.msra.mxu0 0.0
      %2021 = vmatprep.subr.mxu0 0.0
      %2022 = vmatpush1.msra.mxu0 0.0
      %2023 = vmatprep.subr.mxu0 0.0
      %2024 = vmatpush1.msra.mxu0 0.0
      %2025 = vmatprep.subr.mxu0 0.0
      %2026 = vmatpush1.msra.mxu0 0.0
      %2027 = vmatprep.subr.mxu0 0.0
      %2028 = vmatpush1.msra.mxu0 0.0
      %2029 = vmatprep.subr.mxu0 0.0
      %2030 = vmatpush1.msra.mxu0 0.0
      %2031 = vmatprep.mubr.f32.mxu0 0.0
      %2032 = vmatmul.mubr.f32.gmra.mrb[0].mxu0 %v1951
      %v2033 = vpop.f32.mrb[0].mxu0
      %v2034 = vadd.f32 0.0, %v2033
      %v2035 = vpop.f32.mrb[0].mxu0
      %2036 = vmatprep.mubr.f32.mxu0 0.0
      %2037 = vmatmul.mubr.f32.gmra.mrb[0].mxu0 %v1952
      %v2038 = vpop.f32.mrb[0].mxu0
      %v2039 = vadd.f32 0.0, %v2038
      %v2040 = vpop.f32.mrb[0].mxu0
      %2041 = vmatprep.mubr.f32.mxu0 0.0
      %2042 = vmatmul.mubr.f32.gmra.mrb[0].mxu0 %v1953
      %v2043 = vpop.f32.mrb[0].mxu0
      %v2044 = vadd.f32 0.0, %v2043
      %v2045 = vpop.f32.mrb[0].mxu0
      %2046 = vmatprep.mubr.f32.mxu0 0.0
      %2047 = vmatmul.mubr.f32.gmra.mrb[0].mxu0 %v1954
      %v2048 = vpop.f32.mrb[0].mxu0
      %v2049 = vadd.f32 0.0, %v2048
      %v2050 = vpop.f32.mrb[0].mxu0
      %2051 = vmatprep.mubr.f32.mxu0 0.0
      %2052 = vmatmul.mubr.f32.gmra.mrb[0].mxu0 %v1955
      %v2053 = vpop.f32.mrb[0].mxu0
      %v2054 = vadd.f32 0.0, %v2053
      %v2055 = vpop.f32.mrb[0].mxu0
      %2056 = vmatprep.mubr.f32.mxu0 0.0
      %2057 = vmatmul.mubr.f32.gmra.mrb[0].mxu0 %v1956
      %v2058 = vpop.f32.mrb[0].mxu0
      %v2059 = vadd.f32 0.0, %v2058
      %v2060 = vpop.f32.mrb[0].mxu0
      %2061 = vmatprep.mubr.f32.mxu0 0.0
      %2062 = vmatmul.mubr.f32.gmra.mrb[0].mxu0 %v1957
      %v2063 = vpop.f32.mrb[0].mxu0
      %v2064 = vadd.f32 0.0, %v2063
      %v2065 = vpop.f32.mrb[0].mxu0
      %2066 = vmatprep.mubr.f32.mxu0 0.0
      %2067 = vmatmul.mubr.f32.gmra.mrb[0].mxu0 %v1958
      %v2068 = vpop.f32.mrb[0].mxu0
      %v2069 = vadd.f32 0.0, %v2068
      %v2070 = vpop.f32.mrb[0].mxu0
      %2071 = vmatprep.mubr.f32.mxu0 0.0
      %2072 = vmatmul.mubr.f32.gmra.mrb[0].mxu0 %v1959
      %v2073 = vpop.f32.mrb[0].mxu0
      %v2074 = vadd.f32 0.0, %v2073
      %v2075 = vpop.f32.mrb[0].mxu0
      %2076 = vmatprep.mubr.f32.mxu0 0.0
      %2077 = vmatmul.mubr.f32.gmra.mrb[0].mxu0 %v1960
      %v2078 = vpop.f32.mrb[0].mxu0
      %v2079 = vadd.f32 0.0, %v2078
      %v2080 = vpop.f32.mrb[0].mxu0
      %2081 = vmatprep.mubr.f32.mxu0 0.0
      %2082 = vmatmul.mubr.f32.gmra.mrb[0].mxu0 %v1961
      %v2083 = vpop.f32.mrb[0].mxu0
      %v2084 = vadd.f32 0.0, %v2083
      %v2085 = vpop.f32.mrb[0].mxu0
      %2086 = vmatprep.mubr.f32.mxu0 0.0
      %2087 = vmatmul.mubr.f32.gmra.mrb[0].mxu0 %v1962
      %v2088 = vpop.f32.mrb[0].mxu0
      %v2089 = vadd.f32 0.0, %v2088
      %v2090 = vpop.f32.mrb[0].mxu0
      %2091 = vmatprep.mubr.f32.mxu0 0.0
      %2092 = vmatmul.mubr.f32.gmra.mrb[0].mxu0 %v1963
      %v2093 = vpop.f32.mrb[0].mxu0
      %v2094 = vadd.f32 0.0, %v2093
      %v2095 = vpop.f32.mrb[0].mxu0
      %2096 = vmatprep.mubr.f32.mxu0 0.0
      %2097 = vmatmul.mubr.f32.gmra.mrb[0].mxu0 %v1964
      %v2098 = vpop.f32.mrb[0].mxu0
      %v2099 = vadd.f32 0.0, %v2098
      %v2100 = vpop.f32.mrb[0].mxu0
      %2101 = vmatprep.mubr.f32.mxu0 0.0
      %2102 = vmatmul.mubr.f32.gmra.mrb[0].mxu0 %v1965
      %v2103 = vpop.f32.mrb[0].mxu0
      %v2104 = vadd.f32 0.0, %v2103
      %v2105 = vpop.f32.mrb[0].mxu0
      %2106 = vmatprep.mubr.f32.mxu0 0.0
      %2107 = vmatmul.mubr.f32.gmra.mrb[0].mxu0 %v1966
      %v2108 = vpop.f32.mrb[0].mxu0
      %v2109 = vadd.f32 0.0, %v2108
      %v2110 = vpop.f32.mrb[0].mxu0
      %2111 = vdwg.mxu0
      %v2112 = vsel %vm595, %v2034, 0.0
      %v2113 = vsel %vm595, %v2039, 0.0
      %v2114 = vsel %vm595, %v2044, 0.0
      %v2115 = vsel %vm595, %v2049, 0.0
      %v2116 = vsel %vm595, %v2054, 0.0
      %v2117 = vsel %vm595, %v2059, 0.0
      %v2118 = vsel %vm595, %v2064, 0.0
      %v2119 = vsel %vm595, %v2069, 0.0
      %v2120 = vsel %vm595, %v2074, 0.0
      %v2121 = vsel %vm595, %v2079, 0.0
      %v2122 = vsel %vm595, %v2084, 0.0
      %v2123 = vsel %vm595, %v2089, 0.0
      %v2124 = vsel %vm595, %v2094, 0.0
      %v2125 = vsel %vm595, %v2099, 0.0
      %v2126 = vsel %vm595, %v2104, 0.0
      %v2127 = vsel %vm595, %v2109, 0.0
      %v2128 = vsel %vm612, %v2112, 0.0
      %2129 = vadd.xlane.f32.xlu0 %v2128
      %v2130 = vpop.xlane.xlu0 %2129
      %v2131 = vsel %vm612, %v2113, 0.0
      %2132 = vadd.xlane.f32.xlu0 %v2131
      %v2133 = vpop.xlane.xlu0 %2132
      %v2134 = vsel %vm612, %v2114, 0.0
      %2135 = vadd.xlane.f32.xlu0 %v2134
      %v2136 = vpop.xlane.xlu0 %2135
      %v2137 = vsel %vm612, %v2115, 0.0
      %2138 = vadd.xlane.f32.xlu0 %v2137
      %v2139 = vpop.xlane.xlu0 %2138
      %v2140 = vsel %vm612, %v2116, 0.0
      %2141 = vadd.xlane.f32.xlu0 %v2140
      %v2142 = vpop.xlane.xlu0 %2141
      %v2143 = vsel %vm612, %v2117, 0.0
      %2144 = vadd.xlane.f32.xlu0 %v2143
      %v2145 = vpop.xlane.xlu0 %2144
      %v2146 = vsel %vm612, %v2118, 0.0
      %2147 = vadd.xlane.f32.xlu0 %v2146
      %v2148 = vpop.xlane.xlu0 %2147
      %v2149 = vsel %vm612, %v2119, 0.0
      %2150 = vadd.xlane.f32.xlu0 %v2149
      %v2151 = vpop.xlane.xlu0 %2150
      %v2152 = vsel %vm612, %v2120, 0.0
      %2153 = vadd.xlane.f32.xlu0 %v2152
      %v2154 = vpop.xlane.xlu0 %2153
      %v2155 = vsel %vm612, %v2121, 0.0
      %2156 = vadd.xlane.f32.xlu0 %v2155
      %v2157 = vpop.xlane.xlu0 %2156
      %v2158 = vsel %vm612, %v2122, 0.0
      %2159 = vadd.xlane.f32.xlu0 %v2158
      %v2160 = vpop.xlane.xlu0 %2159
      %v2161 = vsel %vm612, %v2123, 0.0
      %2162 = vadd.xlane.f32.xlu0 %v2161
      %v2163 = vpop.xlane.xlu0 %2162
      %v2164 = vsel %vm612, %v2124, 0.0
      %2165 = vadd.xlane.f32.xlu0 %v2164
      %v2166 = vpop.xlane.xlu0 %2165
      %v2167 = vsel %vm612, %v2125, 0.0
      %2168 = vadd.xlane.f32.xlu0 %v2167
      %v2169 = vpop.xlane.xlu0 %2168
      %v2170 = vsel %vm612, %v2126, 0.0
      %2171 = vadd.xlane.f32.xlu0 %v2170
      %v2172 = vpop.xlane.xlu0 %2171
      %v2173 = vsel %vm612, %v2127, 0.0
      %2174 = vadd.xlane.f32.xlu0 %v2173
      %v2175 = vpop.xlane.xlu0 %2174
      %v2176 = vsel %vm661, %v2034, 0.0
      %v2177 = vsel %vm661, %v2039, 0.0
      %v2178 = vsel %vm661, %v2044, 0.0
      %v2179 = vsel %vm661, %v2049, 0.0
      %v2180 = vsel %vm661, %v2054, 0.0
      %v2181 = vsel %vm661, %v2059, 0.0
      %v2182 = vsel %vm661, %v2064, 0.0
      %v2183 = vsel %vm661, %v2069, 0.0
      %v2184 = vsel %vm661, %v2074, 0.0
      %v2185 = vsel %vm661, %v2079, 0.0
      %v2186 = vsel %vm661, %v2084, 0.0
      %v2187 = vsel %vm661, %v2089, 0.0
      %v2188 = vsel %vm661, %v2094, 0.0
      %v2189 = vsel %vm661, %v2099, 0.0
      %v2190 = vsel %vm661, %v2104, 0.0
      %v2191 = vsel %vm661, %v2109, 0.0
      %v2192 = vsel %vm612, %v2176, 0.0
      %2193 = vadd.xlane.f32.xlu0 %v2192
      %v2194 = vpop.xlane.xlu0 %2193
      %v2195 = vsel %vm612, %v2177, 0.0
      %2196 = vadd.xlane.f32.xlu0 %v2195
      %v2197 = vpop.xlane.xlu0 %2196
      %v2198 = vsel %vm612, %v2178, 0.0
      %2199 = vadd.xlane.f32.xlu0 %v2198
      %v2200 = vpop.xlane.xlu0 %2199
      %v2201 = vsel %vm612, %v2179, 0.0
      %2202 = vadd.xlane.f32.xlu0 %v2201
      %v2203 = vpop.xlane.xlu0 %2202
      %v2204 = vsel %vm612, %v2180, 0.0
      %2205 = vadd.xlane.f32.xlu0 %v2204
      %v2206 = vpop.xlane.xlu0 %2205
      %v2207 = vsel %vm612, %v2181, 0.0
      %2208 = vadd.xlane.f32.xlu0 %v2207
      %v2209 = vpop.xlane.xlu0 %2208
      %v2210 = vsel %vm612, %v2182, 0.0
      %2211 = vadd.xlane.f32.xlu0 %v2210
      %v2212 = vpop.xlane.xlu0 %2211
      %v2213 = vsel %vm612, %v2183, 0.0
      %2214 = vadd.xlane.f32.xlu0 %v2213
      %v2215 = vpop.xlane.xlu0 %2214
      %v2216 = vsel %vm612, %v2184, 0.0
      %2217 = vadd.xlane.f32.xlu0 %v2216
      %v2218 = vpop.xlane.xlu0 %2217
      %v2219 = vsel %vm612, %v2185, 0.0
      %2220 = vadd.xlane.f32.xlu0 %v2219
      %v2221 = vpop.xlane.xlu0 %2220
      %v2222 = vsel %vm612, %v2186, 0.0
      %2223 = vadd.xlane.f32.xlu0 %v2222
      %v2224 = vpop.xlane.xlu0 %2223
      %v2225 = vsel %vm612, %v2187, 0.0
      %2226 = vadd.xlane.f32.xlu0 %v2225
      %v2227 = vpop.xlane.xlu0 %2226
      %v2228 = vsel %vm612, %v2188, 0.0
      %2229 = vadd.xlane.f32.xlu0 %v2228
      %v2230 = vpop.xlane.xlu0 %2229
      %v2231 = vsel %vm612, %v2189, 0.0
      %2232 = vadd.xlane.f32.xlu0 %v2231
      %v2233 = vpop.xlane.xlu0 %2232
      %v2234 = vsel %vm612, %v2190, 0.0
      %2235 = vadd.xlane.f32.xlu0 %v2234
      %v2236 = vpop.xlane.xlu0 %2235
      %v2237 = vsel %vm612, %v2191, 0.0
      %2238 = vadd.xlane.f32.xlu0 %v2237
      %v2239 = vpop.xlane.xlu0 %2238
      %v2240 = vsel %vm726, %v2034, 0.0
      %v2241 = vsel %vm726, %v2039, 0.0
      %v2242 = vsel %vm726, %v2044, 0.0
      %v2243 = vsel %vm726, %v2049, 0.0
      %v2244 = vsel %vm726, %v2054, 0.0
      %v2245 = vsel %vm726, %v2059, 0.0
      %v2246 = vsel %vm726, %v2064, 0.0
      %v2247 = vsel %vm726, %v2069, 0.0
      %v2248 = vsel %vm726, %v2074, 0.0
      %v2249 = vsel %vm726, %v2079, 0.0
      %v2250 = vsel %vm726, %v2084, 0.0
      %v2251 = vsel %vm726, %v2089, 0.0
      %v2252 = vsel %vm726, %v2094, 0.0
      %v2253 = vsel %vm726, %v2099, 0.0
      %v2254 = vsel %vm726, %v2104, 0.0
      %v2255 = vsel %vm726, %v2109, 0.0
      %v2256 = vsel %vm612, %v2240, 0.0
      %2257 = vadd.xlane.f32.xlu0 %v2256
      %v2258 = vpop.xlane.xlu0 %2257
      %v2259 = vsel %vm612, %v2241, 0.0
      %2260 = vadd.xlane.f32.xlu0 %v2259
      %v2261 = vpop.xlane.xlu0 %2260
      %v2262 = vsel %vm612, %v2242, 0.0
      %2263 = vadd.xlane.f32.xlu0 %v2262
      %v2264 = vpop.xlane.xlu0 %2263
      %v2265 = vsel %vm612, %v2243, 0.0
      %2266 = vadd.xlane.f32.xlu0 %v2265
      %v2267 = vpop.xlane.xlu0 %2266
      %v2268 = vsel %vm612, %v2244, 0.0
      %2269 = vadd.xlane.f32.xlu0 %v2268
      %v2270 = vpop.xlane.xlu0 %2269
      %v2271 = vsel %vm612, %v2245, 0.0
      %2272 = vadd.xlane.f32.xlu0 %v2271
      %v2273 = vpop.xlane.xlu0 %2272
      %v2274 = vsel %vm612, %v2246, 0.0
      %2275 = vadd.xlane.f32.xlu0 %v2274
      %v2276 = vpop.xlane.xlu0 %2275
      %v2277 = vsel %vm612, %v2247, 0.0
      %2278 = vadd.xlane.f32.xlu0 %v2277
      %v2279 = vpop.xlane.xlu0 %2278
      %v2280 = vsel %vm612, %v2248, 0.0
      %2281 = vadd.xlane.f32.xlu0 %v2280
      %v2282 = vpop.xlane.xlu0 %2281
      %v2283 = vsel %vm612, %v2249, 0.0
      %2284 = vadd.xlane.f32.xlu0 %v2283
      %v2285 = vpop.xlane.xlu0 %2284
      %v2286 = vsel %vm612, %v2250, 0.0
      %2287 = vadd.xlane.f32.xlu0 %v2286
      %v2288 = vpop.xlane.xlu0 %2287
      %v2289 = vsel %vm612, %v2251, 0.0
      %2290 = vadd.xlane.f32.xlu0 %v2289
      %v2291 = vpop.xlane.xlu0 %2290
      %v2292 = vsel %vm612, %v2252, 0.0
      %2293 = vadd.xlane.f32.xlu0 %v2292
      %v2294 = vpop.xlane.xlu0 %2293
      %v2295 = vsel %vm612, %v2253, 0.0
      %2296 = vadd.xlane.f32.xlu0 %v2295
      %v2297 = vpop.xlane.xlu0 %2296
      %v2298 = vsel %vm612, %v2254, 0.0
      %2299 = vadd.xlane.f32.xlu0 %v2298
      %v2300 = vpop.xlane.xlu0 %2299
      %v2301 = vsel %vm612, %v2255, 0.0
      %2302 = vadd.xlane.f32.xlu0 %v2301
      %v2303 = vpop.xlane.xlu0 %2302
      %v2304 = vsub.f32 %v615, %v2130
      %v2305 = vsub.f32 %v618, %v2133
      %v2306 = vsub.f32 %v621, %v2136
      %v2307 = vsub.f32 %v624, %v2139
      %v2308 = vsub.f32 %v627, %v2142
      %v2309 = vsub.f32 %v630, %v2145
      %v2310 = vsub.f32 %v633, %v2148
      %v2311 = vsub.f32 %v636, %v2151
      %v2312 = vsub.f32 %v639, %v2154
      %v2313 = vsub.f32 %v642, %v2157
      %v2314 = vsub.f32 %v645, %v2160
      %v2315 = vsub.f32 %v648, %v2163
      %v2316 = vsub.f32 %v651, %v2166
      %v2317 = vsub.f32 %v654, %v2169
      %v2318 = vsub.f32 %v657, %v2172
      %v2319 = vsub.f32 %v660, %v2175
      %v2320 = vsub.f32 %v680, %v2194
      %v2321 = vsub.f32 %v683, %v2197
      %v2322 = vsub.f32 %v686, %v2200
      %v2323 = vsub.f32 %v689, %v2203
      %v2324 = vsub.f32 %v692, %v2206
      %v2325 = vsub.f32 %v695, %v2209
      %v2326 = vsub.f32 %v698, %v2212
      %v2327 = vsub.f32 %v701, %v2215
      %v2328 = vsub.f32 %v704, %v2218
      %v2329 = vsub.f32 %v707, %v2221
      %v2330 = vsub.f32 %v710, %v2224
      %v2331 = vsub.f32 %v713, %v2227
      %v2332 = vsub.f32 %v716, %v2230
      %v2333 = vsub.f32 %v719, %v2233
      %v2334 = vsub.f32 %v722, %v2236
      %v2335 = vsub.f32 %v725, %v2239
      %v2336 = vsub.f32 %v745, %v2258
      %v2337 = vsub.f32 %v748, %v2261
      %v2338 = vsub.f32 %v751, %v2264
      %v2339 = vsub.f32 %v754, %v2267
      %v2340 = vsub.f32 %v757, %v2270
      %v2341 = vsub.f32 %v760, %v2273
      %v2342 = vsub.f32 %v763, %v2276
      %v2343 = vsub.f32 %v766, %v2279
      %v2344 = vsub.f32 %v769, %v2282
      %v2345 = vsub.f32 %v772, %v2285
      %v2346 = vsub.f32 %v775, %v2288
      %v2347 = vsub.f32 %v778, %v2291
      %v2348 = vsub.f32 %v781, %v2294
      %v2349 = vsub.f32 %v784, %v2297
      %v2350 = vsub.f32 %v787, %v2300
      %v2351 = vsub.f32 %v790, %v2303
      %v2352 = vmul.f32 %v2304, %v2304
      %v2353 = vmul.f32 %v2305, %v2305
      %v2354 = vmul.f32 %v2306, %v2306
      %v2355 = vmul.f32 %v2307, %v2307
      %v2356 = vmul.f32 %v2308, %v2308
      %v2357 = vmul.f32 %v2309, %v2309
      %v2358 = vmul.f32 %v2310, %v2310
      %v2359 = vmul.f32 %v2311, %v2311
      %v2360 = vmul.f32 %v2312, %v2312
      %v2361 = vmul.f32 %v2313, %v2313
      %v2362 = vmul.f32 %v2314, %v2314
      %v2363 = vmul.f32 %v2315, %v2315
      %v2364 = vmul.f32 %v2316, %v2316
      %v2365 = vmul.f32 %v2317, %v2317
      %v2366 = vmul.f32 %v2318, %v2318
      %v2367 = vmul.f32 %v2319, %v2319
      %v2368 = vmul.f32 %v2320, %v2320
      %v2369 = vmul.f32 %v2321, %v2321
      %v2370 = vmul.f32 %v2322, %v2322
      %v2371 = vmul.f32 %v2323, %v2323
      %v2372 = vmul.f32 %v2324, %v2324
      %v2373 = vmul.f32 %v2325, %v2325
      %v2374 = vmul.f32 %v2326, %v2326
      %v2375 = vmul.f32 %v2327, %v2327
      %v2376 = vmul.f32 %v2328, %v2328
      %v2377 = vmul.f32 %v2329, %v2329
      %v2378 = vmul.f32 %v2330, %v2330
      %v2379 = vmul.f32 %v2331, %v2331
      %v2380 = vmul.f32 %v2332, %v2332
      %v2381 = vmul.f32 %v2333, %v2333
      %v2382 = vmul.f32 %v2334, %v2334
      %v2383 = vmul.f32 %v2335, %v2335
      %v2384 = vadd.f32 %v2352, %v2368
      %v2385 = vadd.f32 %v2353, %v2369
      %v2386 = vadd.f32 %v2354, %v2370
      %v2387 = vadd.f32 %v2355, %v2371
      %v2388 = vadd.f32 %v2356, %v2372
      %v2389 = vadd.f32 %v2357, %v2373
      %v2390 = vadd.f32 %v2358, %v2374
      %v2391 = vadd.f32 %v2359, %v2375
      %v2392 = vadd.f32 %v2360, %v2376
      %v2393 = vadd.f32 %v2361, %v2377
      %v2394 = vadd.f32 %v2362, %v2378
      %v2395 = vadd.f32 %v2363, %v2379
      %v2396 = vadd.f32 %v2364, %v2380
      %v2397 = vadd.f32 %v2365, %v2381
      %v2398 = vadd.f32 %v2366, %v2382
      %v2399 = vadd.f32 %v2367, %v2383
      %v2400 = vmul.f32 %v2336, %v2336
      %v2401 = vmul.f32 %v2337, %v2337
      %v2402 = vmul.f32 %v2338, %v2338
      %v2403 = vmul.f32 %v2339, %v2339
      %v2404 = vmul.f32 %v2340, %v2340
      %v2405 = vmul.f32 %v2341, %v2341
      %v2406 = vmul.f32 %v2342, %v2342
      %v2407 = vmul.f32 %v2343, %v2343
      %v2408 = vmul.f32 %v2344, %v2344
      %v2409 = vmul.f32 %v2345, %v2345
      %v2410 = vmul.f32 %v2346, %v2346
      %v2411 = vmul.f32 %v2347, %v2347
      %v2412 = vmul.f32 %v2348, %v2348
      %v2413 = vmul.f32 %v2349, %v2349
      %v2414 = vmul.f32 %v2350, %v2350
      %v2415 = vmul.f32 %v2351, %v2351
      %v2416 = vadd.f32 %v2384, %v2400
      %v2417 = vadd.f32 %v2385, %v2401
      %v2418 = vadd.f32 %v2386, %v2402
      %v2419 = vadd.f32 %v2387, %v2403
      %v2420 = vadd.f32 %v2388, %v2404
      %v2421 = vadd.f32 %v2389, %v2405
      %v2422 = vadd.f32 %v2390, %v2406
      %v2423 = vadd.f32 %v2391, %v2407
      %v2424 = vadd.f32 %v2392, %v2408
      %v2425 = vadd.f32 %v2393, %v2409
      %v2426 = vadd.f32 %v2394, %v2410
      %v2427 = vadd.f32 %v2395, %v2411
      %v2428 = vadd.f32 %v2396, %v2412
      %v2429 = vadd.f32 %v2397, %v2413
      %v2430 = vadd.f32 %v2398, %v2414
      %v2431 = vadd.f32 %v2399, %v2415
      %v2432 = vrsqrt.pop %v2416
      %v2433 = vmul.f32 %v2416, %v2432
      %vm2434 = vcmp.eq.f32.partialorder %v2416, inf
      %v2435 = vsel %vm2434, %v2416, %v2433
      %vm2436 = vcmp.eq.f32.partialorder %v2416, 0.0
      %v2437 = vand.u32 %v2416, 2147483648
      %v2438 = vsel %vm2436, %v2437, %v2435
      %v2439 = vrsqrt.pop %v2417
      %v2440 = vmul.f32 %v2417, %v2439
      %vm2441 = vcmp.eq.f32.partialorder %v2417, inf
      %v2442 = vsel %vm2441, %v2417, %v2440
      %vm2443 = vcmp.eq.f32.partialorder %v2417, 0.0
      %v2444 = vand.u32 %v2417, 2147483648
      %v2445 = vsel %vm2443, %v2444, %v2442
      %v2446 = vrsqrt.pop %v2418
      %v2447 = vmul.f32 %v2418, %v2446
      %vm2448 = vcmp.eq.f32.partialorder %v2418, inf
      %v2449 = vsel %vm2448, %v2418, %v2447
      %vm2450 = vcmp.eq.f32.partialorder %v2418, 0.0
      %v2451 = vand.u32 %v2418, 2147483648
      %v2452 = vsel %vm2450, %v2451, %v2449
      %v2453 = vrsqrt.pop %v2419
      %v2454 = vmul.f32 %v2419, %v2453
      %vm2455 = vcmp.eq.f32.partialorder %v2419, inf
      %v2456 = vsel %vm2455, %v2419, %v2454
      %vm2457 = vcmp.eq.f32.partialorder %v2419, 0.0
      %v2458 = vand.u32 %v2419, 2147483648
      %v2459 = vsel %vm2457, %v2458, %v2456
      %v2460 = vrsqrt.pop %v2420
      %v2461 = vmul.f32 %v2420, %v2460
      %vm2462 = vcmp.eq.f32.partialorder %v2420, inf
      %v2463 = vsel %vm2462, %v2420, %v2461
      %vm2464 = vcmp.eq.f32.partialorder %v2420, 0.0
      %v2465 = vand.u32 %v2420, 2147483648
      %v2466 = vsel %vm2464, %v2465, %v2463
      %v2467 = vrsqrt.pop %v2421
      %v2468 = vmul.f32 %v2421, %v2467
      %vm2469 = vcmp.eq.f32.partialorder %v2421, inf
      %v2470 = vsel %vm2469, %v2421, %v2468
      %vm2471 = vcmp.eq.f32.partialorder %v2421, 0.0
      %v2472 = vand.u32 %v2421, 2147483648
      %v2473 = vsel %vm2471, %v2472, %v2470
      %v2474 = vrsqrt.pop %v2422
      %v2475 = vmul.f32 %v2422, %v2474
      %vm2476 = vcmp.eq.f32.partialorder %v2422, inf
      %v2477 = vsel %vm2476, %v2422, %v2475
      %vm2478 = vcmp.eq.f32.partialorder %v2422, 0.0
      %v2479 = vand.u32 %v2422, 2147483648
      %v2480 = vsel %vm2478, %v2479, %v2477
      %v2481 = vrsqrt.pop %v2423
      %v2482 = vmul.f32 %v2423, %v2481
      %vm2483 = vcmp.eq.f32.partialorder %v2423, inf
      %v2484 = vsel %vm2483, %v2423, %v2482
      %vm2485 = vcmp.eq.f32.partialorder %v2423, 0.0
      %v2486 = vand.u32 %v2423, 2147483648
      %v2487 = vsel %vm2485, %v2486, %v2484
      %v2488 = vrsqrt.pop %v2424
      %v2489 = vmul.f32 %v2424, %v2488
      %vm2490 = vcmp.eq.f32.partialorder %v2424, inf
      %v2491 = vsel %vm2490, %v2424, %v2489
      %vm2492 = vcmp.eq.f32.partialorder %v2424, 0.0
      %v2493 = vand.u32 %v2424, 2147483648
      %v2494 = vsel %vm2492, %v2493, %v2491
      %v2495 = vrsqrt.pop %v2425
      %v2496 = vmul.f32 %v2425, %v2495
      %vm2497 = vcmp.eq.f32.partialorder %v2425, inf
      %v2498 = vsel %vm2497, %v2425, %v2496
      %vm2499 = vcmp.eq.f32.partialorder %v2425, 0.0
      %v2500 = vand.u32 %v2425, 2147483648
      %v2501 = vsel %vm2499, %v2500, %v2498
      %v2502 = vrsqrt.pop %v2426
      %v2503 = vmul.f32 %v2426, %v2502
      %vm2504 = vcmp.eq.f32.partialorder %v2426, inf
      %v2505 = vsel %vm2504, %v2426, %v2503
      %vm2506 = vcmp.eq.f32.partialorder %v2426, 0.0
      %v2507 = vand.u32 %v2426, 2147483648
      %v2508 = vsel %vm2506, %v2507, %v2505
      %v2509 = vrsqrt.pop %v2427
      %v2510 = vmul.f32 %v2427, %v2509
      %vm2511 = vcmp.eq.f32.partialorder %v2427, inf
      %v2512 = vsel %vm2511, %v2427, %v2510
      %vm2513 = vcmp.eq.f32.partialorder %v2427, 0.0
      %v2514 = vand.u32 %v2427, 2147483648
      %v2515 = vsel %vm2513, %v2514, %v2512
      %v2516 = vrsqrt.pop %v2428
      %v2517 = vmul.f32 %v2428, %v2516
      %vm2518 = vcmp.eq.f32.partialorder %v2428, inf
      %v2519 = vsel %vm2518, %v2428, %v2517
      %vm2520 = vcmp.eq.f32.partialorder %v2428, 0.0
      %v2521 = vand.u32 %v2428, 2147483648
      %v2522 = vsel %vm2520, %v2521, %v2519
      %v2523 = vrsqrt.pop %v2429
      %v2524 = vmul.f32 %v2429, %v2523
      %vm2525 = vcmp.eq.f32.partialorder %v2429, inf
      %v2526 = vsel %vm2525, %v2429, %v2524
      %vm2527 = vcmp.eq.f32.partialorder %v2429, 0.0
      %v2528 = vand.u32 %v2429, 2147483648
      %v2529 = vsel %vm2527, %v2528, %v2526
      %v2530 = vrsqrt.pop %v2430
      %v2531 = vmul.f32 %v2430, %v2530
      %vm2532 = vcmp.eq.f32.partialorder %v2430, inf
      %v2533 = vsel %vm2532, %v2430, %v2531
      %vm2534 = vcmp.eq.f32.partialorder %v2430, 0.0
      %v2535 = vand.u32 %v2430, 2147483648
      %v2536 = vsel %vm2534, %v2535, %v2533
      %v2537 = vrsqrt.pop %v2431
      %v2538 = vmul.f32 %v2431, %v2537
      %vm2539 = vcmp.eq.f32.partialorder %v2431, inf
      %v2540 = vsel %vm2539, %v2431, %v2538
      %vm2541 = vcmp.eq.f32.partialorder %v2431, 0.0
      %v2542 = vand.u32 %v2431, 2147483648
      %v2543 = vsel %vm2541, %v2542, %v2540
      %vm2544 = vcmp.eq.s32.totalorder %v577, 10
      %v2545 = vsel %vm2544, %v2438, %v1663
      %v2546 = vsel %vm2544, %v2445, %v1664
      %v2547 = vsel %vm2544, %v2452, %v1665
      %v2548 = vsel %vm2544, %v2459, %v1666
      %v2549 = vsel %vm2544, %v2466, %v1667
      %v2550 = vsel %vm2544, %v2473, %v1668
      %v2551 = vsel %vm2544, %v2480, %v1669
      %v2552 = vsel %vm2544, %v2487, %v1670
      %v2553 = vsel %vm2544, %v2494, %v1671
      %v2554 = vsel %vm2544, %v2501, %v1672
      %v2555 = vsel %vm2544, %v2508, %v1673
      %v2556 = vsel %vm2544, %v2515, %v1674
      %v2557 = vsel %vm2544, %v2522, %v1675
      %v2558 = vsel %vm2544, %v2529, %v1676
      %v2559 = vsel %vm2544, %v2536, %v1677
      %v2560 = vsel %vm2544, %v2543, %v1678
      %vm2561 = vcmp.eq.s32.totalorder %v577, 11
      %v2562 = vsel %vm2561, %v2304, %v2545
      %v2563 = vsel %vm2561, %v2305, %v2546
      %v2564 = vsel %vm2561, %v2306, %v2547
      %v2565 = vsel %vm2561, %v2307, %v2548
      %v2566 = vsel %vm2561, %v2308, %v2549
      %v2567 = vsel %vm2561, %v2309, %v2550
      %v2568 = vsel %vm2561, %v2310, %v2551
      %v2569 = vsel %vm2561, %v2311, %v2552
      %v2570 = vsel %vm2561, %v2312, %v2553
      %v2571 = vsel %vm2561, %v2313, %v2554
      %v2572 = vsel %vm2561, %v2314, %v2555
      %v2573 = vsel %vm2561, %v2315, %v2556
      %v2574 = vsel %vm2561, %v2316, %v2557
      %v2575 = vsel %vm2561, %v2317, %v2558
      %v2576 = vsel %vm2561, %v2318, %v2559
      %v2577 = vsel %vm2561, %v2319, %v2560
      %vm2578 = vcmp.eq.s32.totalorder %v577, 12
      %v2579 = vsel %vm2578, %v2320, %v2562
      %v2580 = vsel %vm2578, %v2321, %v2563
      %v2581 = vsel %vm2578, %v2322, %v2564
      %v2582 = vsel %vm2578, %v2323, %v2565
      %v2583 = vsel %vm2578, %v2324, %v2566
      %v2584 = vsel %vm2578, %v2325, %v2567
      %v2585 = vsel %vm2578, %v2326, %v2568
      %v2586 = vsel %vm2578, %v2327, %v2569
      %v2587 = vsel %vm2578, %v2328, %v2570
      %v2588 = vsel %vm2578, %v2329, %v2571
      %v2589 = vsel %vm2578, %v2330, %v2572
      %v2590 = vsel %vm2578, %v2331, %v2573
      %v2591 = vsel %vm2578, %v2332, %v2574
      %v2592 = vsel %vm2578, %v2333, %v2575
      %v2593 = vsel %vm2578, %v2334, %v2576
      %v2594 = vsel %vm2578, %v2335, %v2577
      %vm2595 = vcmp.eq.s32.totalorder %v577, 13
      %v2596 = vsel %vm2595, %v2336, %v2579
      %v2597 = vsel %vm2595, %v2337, %v2580
      %v2598 = vsel %vm2595, %v2338, %v2581
      %v2599 = vsel %vm2595, %v2339, %v2582
      %v2600 = vsel %vm2595, %v2340, %v2583
      %v2601 = vsel %vm2595, %v2341, %v2584
      %v2602 = vsel %vm2595, %v2342, %v2585
      %v2603 = vsel %vm2595, %v2343, %v2586
      %v2604 = vsel %vm2595, %v2344, %v2587
      %v2605 = vsel %vm2595, %v2345, %v2588
      %v2606 = vsel %vm2595, %v2346, %v2589
      %v2607 = vsel %vm2595, %v2347, %v2590
      %v2608 = vsel %vm2595, %v2348, %v2591
      %v2609 = vsel %vm2595, %v2349, %v2592
      %v2610 = vsel %vm2595, %v2350, %v2593
      %v2611 = vsel %vm2595, %v2351, %v2594
      %vm2612 = vcmp.eq.s32.totalorder %v577, 17
      %v2613 = vsel %vm2612, %v2130, %v2596
      %v2614 = vsel %vm2612, %v2133, %v2597
      %v2615 = vsel %vm2612, %v2136, %v2598
      %v2616 = vsel %vm2612, %v2139, %v2599
      %v2617 = vsel %vm2612, %v2142, %v2600
      %v2618 = vsel %vm2612, %v2145, %v2601
      %v2619 = vsel %vm2612, %v2148, %v2602
      %v2620 = vsel %vm2612, %v2151, %v2603
      %v2621 = vsel %vm2612, %v2154, %v2604
      %v2622 = vsel %vm2612, %v2157, %v2605
      %v2623 = vsel %vm2612, %v2160, %v2606
      %v2624 = vsel %vm2612, %v2163, %v2607
      %v2625 = vsel %vm2612, %v2166, %v2608
      %v2626 = vsel %vm2612, %v2169, %v2609
      %v2627 = vsel %vm2612, %v2172, %v2610
      %v2628 = vsel %vm2612, %v2175, %v2611
      %vm2629 = vcmp.eq.s32.totalorder %v577, 18
      %v2630 = vsel %vm2629, %v2194, %v2613
      %v2631 = vsel %vm2629, %v2197, %v2614
      %v2632 = vsel %vm2629, %v2200, %v2615
      %v2633 = vsel %vm2629, %v2203, %v2616
      %v2634 = vsel %vm2629, %v2206, %v2617
      %v2635 = vsel %vm2629, %v2209, %v2618
      %v2636 = vsel %vm2629, %v2212, %v2619
      %v2637 = vsel %vm2629, %v2215, %v2620
      %v2638 = vsel %vm2629, %v2218, %v2621
      %v2639 = vsel %vm2629, %v2221, %v2622
      %v2640 = vsel %vm2629, %v2224, %v2623
      %v2641 = vsel %vm2629, %v2227, %v2624
      %v2642 = vsel %vm2629, %v2230, %v2625
      %v2643 = vsel %vm2629, %v2233, %v2626
      %v2644 = vsel %vm2629, %v2236, %v2627
      %v2645 = vsel %vm2629, %v2239, %v2628
      %vm2646 = vcmp.eq.s32.totalorder %v577, 19
      %v2647 = vsel %vm2646, %v2258, %v2630
      %v2648 = vsel %vm2646, %v2261, %v2631
      %v2649 = vsel %vm2646, %v2264, %v2632
      %v2650 = vsel %vm2646, %v2267, %v2633
      %v2651 = vsel %vm2646, %v2270, %v2634
      %v2652 = vsel %vm2646, %v2273, %v2635
      %v2653 = vsel %vm2646, %v2276, %v2636
      %v2654 = vsel %vm2646, %v2279, %v2637
      %v2655 = vsel %vm2646, %v2282, %v2638
      %v2656 = vsel %vm2646, %v2285, %v2639
      %v2657 = vsel %vm2646, %v2288, %v2640
      %v2658 = vsel %vm2646, %v2291, %v2641
      %v2659 = vsel %vm2646, %v2294, %v2642
      %v2660 = vsel %vm2646, %v2297, %v2643
      %v2661 = vsel %vm2646, %v2300, %v2644
      %v2662 = vsel %vm2646, %v2303, %v2645
      %v2663 = vsel %vm1919, 3.4028235e+38, %v1807
      %v2664 = vsel %vm1920, 3.4028235e+38, %v1808
      %v2665 = vsel %vm1921, 3.4028235e+38, %v1809
      %v2666 = vsel %vm1922, 3.4028235e+38, %v1810
      %v2667 = vsel %vm1923, 3.4028235e+38, %v1811
      %v2668 = vsel %vm1924, 3.4028235e+38, %v1812
      %v2669 = vsel %vm1925, 3.4028235e+38, %v1813
      %v2670 = vsel %vm1926, 3.4028235e+38, %v1814
      %v2671 = vsel %vm1927, 3.4028235e+38, %v1815
      %v2672 = vsel %vm1928, 3.4028235e+38, %v1816
      %v2673 = vsel %vm1929, 3.4028235e+38, %v1817
      %v2674 = vsel %vm1930, 3.4028235e+38, %v1818
      %v2675 = vsel %vm1931, 3.4028235e+38, %v1819
      %v2676 = vsel %vm1932, 3.4028235e+38, %v1820
      %v2677 = vsel %vm1933, 3.4028235e+38, %v1821
      %v2678 = vsel %vm1934, 3.4028235e+38, %v1822
      %2679 = vmin.xlane.f32.xlu0 %v2663
      %v2680 = vpop.xlane.xlu0 %2679
      %2681 = vmin.xlane.f32.xlu0 %v2664
      %v2682 = vpop.xlane.xlu0 %2681
      %2683 = vmin.xlane.f32.xlu0 %v2665
      %v2684 = vpop.xlane.xlu0 %2683
      %2685 = vmin.xlane.f32.xlu0 %v2666
      %v2686 = vpop.xlane.xlu0 %2685
      %2687 = vmin.xlane.f32.xlu0 %v2667
      %v2688 = vpop.xlane.xlu0 %2687
      %2689 = vmin.xlane.f32.xlu0 %v2668
      %v2690 = vpop.xlane.xlu0 %2689
      %2691 = vmin.xlane.f32.xlu0 %v2669
      %v2692 = vpop.xlane.xlu0 %2691
      %2693 = vmin.xlane.f32.xlu0 %v2670
      %v2694 = vpop.xlane.xlu0 %2693
      %2695 = vmin.xlane.f32.xlu0 %v2671
      %v2696 = vpop.xlane.xlu0 %2695
      %2697 = vmin.xlane.f32.xlu0 %v2672
      %v2698 = vpop.xlane.xlu0 %2697
      %2699 = vmin.xlane.f32.xlu0 %v2673
      %v2700 = vpop.xlane.xlu0 %2699
      %2701 = vmin.xlane.f32.xlu0 %v2674
      %v2702 = vpop.xlane.xlu0 %2701
      %2703 = vmin.xlane.f32.xlu0 %v2675
      %v2704 = vpop.xlane.xlu0 %2703
      %2705 = vmin.xlane.f32.xlu0 %v2676
      %v2706 = vpop.xlane.xlu0 %2705
      %2707 = vmin.xlane.f32.xlu0 %v2677
      %v2708 = vpop.xlane.xlu0 %2707
      %2709 = vmin.xlane.f32.xlu0 %v2678
      %v2710 = vpop.xlane.xlu0 %2709
      %vm2711 = vcmp.eq.f32.partialorder %v2663, %v2680
      %vm2712 = vcmp.eq.f32.partialorder %v2664, %v2682
      %vm2713 = vcmp.eq.f32.partialorder %v2665, %v2684
      %vm2714 = vcmp.eq.f32.partialorder %v2666, %v2686
      %vm2715 = vcmp.eq.f32.partialorder %v2667, %v2688
      %vm2716 = vcmp.eq.f32.partialorder %v2668, %v2690
      %vm2717 = vcmp.eq.f32.partialorder %v2669, %v2692
      %vm2718 = vcmp.eq.f32.partialorder %v2670, %v2694
      %vm2719 = vcmp.eq.f32.partialorder %v2671, %v2696
      %vm2720 = vcmp.eq.f32.partialorder %v2672, %v2698
      %vm2721 = vcmp.eq.f32.partialorder %v2673, %v2700
      %vm2722 = vcmp.eq.f32.partialorder %v2674, %v2702
      %vm2723 = vcmp.eq.f32.partialorder %v2675, %v2704
      %vm2724 = vcmp.eq.f32.partialorder %v2676, %v2706
      %vm2725 = vcmp.eq.f32.partialorder %v2677, %v2708
      %vm2726 = vcmp.eq.f32.partialorder %v2678, %v2710
      %v2727 = vsel %vm2711, %v578, 128.0
      %v2728 = vsel %vm2712, %v578, 128.0
      %v2729 = vsel %vm2713, %v578, 128.0
      %v2730 = vsel %vm2714, %v578, 128.0
      %v2731 = vsel %vm2715, %v578, 128.0
      %v2732 = vsel %vm2716, %v578, 128.0
      %v2733 = vsel %vm2717, %v578, 128.0
      %v2734 = vsel %vm2718, %v578, 128.0
      %v2735 = vsel %vm2719, %v578, 128.0
      %v2736 = vsel %vm2720, %v578, 128.0
      %v2737 = vsel %vm2721, %v578, 128.0
      %v2738 = vsel %vm2722, %v578, 128.0
      %v2739 = vsel %vm2723, %v578, 128.0
      %v2740 = vsel %vm2724, %v578, 128.0
      %v2741 = vsel %vm2725, %v578, 128.0
      %v2742 = vsel %vm2726, %v578, 128.0
      %2743 = vmin.xlane.f32.xlu0 %v2727
      %v2744 = vpop.xlane.xlu0 %2743
      %2745 = vmin.xlane.f32.xlu0 %v2728
      %v2746 = vpop.xlane.xlu0 %2745
      %2747 = vmin.xlane.f32.xlu0 %v2729
      %v2748 = vpop.xlane.xlu0 %2747
      %2749 = vmin.xlane.f32.xlu0 %v2730
      %v2750 = vpop.xlane.xlu0 %2749
      %2751 = vmin.xlane.f32.xlu0 %v2731
      %v2752 = vpop.xlane.xlu0 %2751
      %2753 = vmin.xlane.f32.xlu0 %v2732
      %v2754 = vpop.xlane.xlu0 %2753
      %2755 = vmin.xlane.f32.xlu0 %v2733
      %v2756 = vpop.xlane.xlu0 %2755
      %2757 = vmin.xlane.f32.xlu0 %v2734
      %v2758 = vpop.xlane.xlu0 %2757
      %2759 = vmin.xlane.f32.xlu0 %v2735
      %v2760 = vpop.xlane.xlu0 %2759
      %2761 = vmin.xlane.f32.xlu0 %v2736
      %v2762 = vpop.xlane.xlu0 %2761
      %2763 = vmin.xlane.f32.xlu0 %v2737
      %v2764 = vpop.xlane.xlu0 %2763
      %2765 = vmin.xlane.f32.xlu0 %v2738
      %v2766 = vpop.xlane.xlu0 %2765
      %2767 = vmin.xlane.f32.xlu0 %v2739
      %v2768 = vpop.xlane.xlu0 %2767
      %2769 = vmin.xlane.f32.xlu0 %v2740
      %v2770 = vpop.xlane.xlu0 %2769
      %2771 = vmin.xlane.f32.xlu0 %v2741
      %v2772 = vpop.xlane.xlu0 %2771
      %2773 = vmin.xlane.f32.xlu0 %v2742
      %v2774 = vpop.xlane.xlu0 %2773
      %vm2775 = vcmp.eq.f32.partialorder %v578, %v2744
      %vm2776 = vcmp.eq.f32.partialorder %v578, %v2746
      %vm2777 = vcmp.eq.f32.partialorder %v578, %v2748
      %vm2778 = vcmp.eq.f32.partialorder %v578, %v2750
      %vm2779 = vcmp.eq.f32.partialorder %v578, %v2752
      %vm2780 = vcmp.eq.f32.partialorder %v578, %v2754
      %vm2781 = vcmp.eq.f32.partialorder %v578, %v2756
      %vm2782 = vcmp.eq.f32.partialorder %v578, %v2758
      %vm2783 = vcmp.eq.f32.partialorder %v578, %v2760
      %vm2784 = vcmp.eq.f32.partialorder %v578, %v2762
      %vm2785 = vcmp.eq.f32.partialorder %v578, %v2764
      %vm2786 = vcmp.eq.f32.partialorder %v578, %v2766
      %vm2787 = vcmp.eq.f32.partialorder %v578, %v2768
      %vm2788 = vcmp.eq.f32.partialorder %v578, %v2770
      %vm2789 = vcmp.eq.f32.partialorder %v578, %v2772
      %vm2790 = vcmp.eq.f32.partialorder %v578, %v2774
      %v2791 = vsel %vm2775, 3.4028235e+38, %v2663
      %v2792 = vsel %vm2776, 3.4028235e+38, %v2664
      %v2793 = vsel %vm2777, 3.4028235e+38, %v2665
      %v2794 = vsel %vm2778, 3.4028235e+38, %v2666
      %v2795 = vsel %vm2779, 3.4028235e+38, %v2667
      %v2796 = vsel %vm2780, 3.4028235e+38, %v2668
      %v2797 = vsel %vm2781, 3.4028235e+38, %v2669
      %v2798 = vsel %vm2782, 3.4028235e+38, %v2670
      %v2799 = vsel %vm2783, 3.4028235e+38, %v2671
      %v2800 = vsel %vm2784, 3.4028235e+38, %v2672
      %v2801 = vsel %vm2785, 3.4028235e+38, %v2673
      %v2802 = vsel %vm2786, 3.4028235e+38, %v2674
      %v2803 = vsel %vm2787, 3.4028235e+38, %v2675
      %v2804 = vsel %vm2788, 3.4028235e+38, %v2676
      %v2805 = vsel %vm2789, 3.4028235e+38, %v2677
      %v2806 = vsel %vm2790, 3.4028235e+38, %v2678
      %2807 = vmin.xlane.f32.xlu0 %v2791
      %v2808 = vpop.xlane.xlu0 %2807
      %2809 = vmin.xlane.f32.xlu0 %v2792
      %v2810 = vpop.xlane.xlu0 %2809
      %2811 = vmin.xlane.f32.xlu0 %v2793
      %v2812 = vpop.xlane.xlu0 %2811
      %2813 = vmin.xlane.f32.xlu0 %v2794
      %v2814 = vpop.xlane.xlu0 %2813
      %2815 = vmin.xlane.f32.xlu0 %v2795
      %v2816 = vpop.xlane.xlu0 %2815
      %2817 = vmin.xlane.f32.xlu0 %v2796
      %v2818 = vpop.xlane.xlu0 %2817
      %2819 = vmin.xlane.f32.xlu0 %v2797
      %v2820 = vpop.xlane.xlu0 %2819
      %2821 = vmin.xlane.f32.xlu0 %v2798
      %v2822 = vpop.xlane.xlu0 %2821
      %2823 = vmin.xlane.f32.xlu0 %v2799
      %v2824 = vpop.xlane.xlu0 %2823
      %2825 = vmin.xlane.f32.xlu0 %v2800
      %v2826 = vpop.xlane.xlu0 %2825
      %2827 = vmin.xlane.f32.xlu0 %v2801
      %v2828 = vpop.xlane.xlu0 %2827
      %2829 = vmin.xlane.f32.xlu0 %v2802
      %v2830 = vpop.xlane.xlu0 %2829
      %2831 = vmin.xlane.f32.xlu0 %v2803
      %v2832 = vpop.xlane.xlu0 %2831
      %2833 = vmin.xlane.f32.xlu0 %v2804
      %v2834 = vpop.xlane.xlu0 %2833
      %2835 = vmin.xlane.f32.xlu0 %v2805
      %v2836 = vpop.xlane.xlu0 %2835
      %2837 = vmin.xlane.f32.xlu0 %v2806
      %v2838 = vpop.xlane.xlu0 %2837
      %vm2839 = vcmp.eq.f32.partialorder %v2791, %v2808
      %vm2840 = vcmp.eq.f32.partialorder %v2792, %v2810
      %vm2841 = vcmp.eq.f32.partialorder %v2793, %v2812
      %vm2842 = vcmp.eq.f32.partialorder %v2794, %v2814
      %vm2843 = vcmp.eq.f32.partialorder %v2795, %v2816
      %vm2844 = vcmp.eq.f32.partialorder %v2796, %v2818
      %vm2845 = vcmp.eq.f32.partialorder %v2797, %v2820
      %vm2846 = vcmp.eq.f32.partialorder %v2798, %v2822
      %vm2847 = vcmp.eq.f32.partialorder %v2799, %v2824
      %vm2848 = vcmp.eq.f32.partialorder %v2800, %v2826
      %vm2849 = vcmp.eq.f32.partialorder %v2801, %v2828
      %vm2850 = vcmp.eq.f32.partialorder %v2802, %v2830
      %vm2851 = vcmp.eq.f32.partialorder %v2803, %v2832
      %vm2852 = vcmp.eq.f32.partialorder %v2804, %v2834
      %vm2853 = vcmp.eq.f32.partialorder %v2805, %v2836
      %vm2854 = vcmp.eq.f32.partialorder %v2806, %v2838
      %v2855 = vsel %vm2839, %v578, 128.0
      %v2856 = vsel %vm2840, %v578, 128.0
      %v2857 = vsel %vm2841, %v578, 128.0
      %v2858 = vsel %vm2842, %v578, 128.0
      %v2859 = vsel %vm2843, %v578, 128.0
      %v2860 = vsel %vm2844, %v578, 128.0
      %v2861 = vsel %vm2845, %v578, 128.0
      %v2862 = vsel %vm2846, %v578, 128.0
      %v2863 = vsel %vm2847, %v578, 128.0
      %v2864 = vsel %vm2848, %v578, 128.0
      %v2865 = vsel %vm2849, %v578, 128.0
      %v2866 = vsel %vm2850, %v578, 128.0
      %v2867 = vsel %vm2851, %v578, 128.0
      %v2868 = vsel %vm2852, %v578, 128.0
      %v2869 = vsel %vm2853, %v578, 128.0
      %v2870 = vsel %vm2854, %v578, 128.0
      %2871 = vmin.xlane.f32.xlu0 %v2855
      %v2872 = vpop.xlane.xlu0 %2871
      %2873 = vmin.xlane.f32.xlu0 %v2856
      %v2874 = vpop.xlane.xlu0 %2873
      %2875 = vmin.xlane.f32.xlu0 %v2857
      %v2876 = vpop.xlane.xlu0 %2875
      %2877 = vmin.xlane.f32.xlu0 %v2858
      %v2878 = vpop.xlane.xlu0 %2877
      %2879 = vmin.xlane.f32.xlu0 %v2859
      %v2880 = vpop.xlane.xlu0 %2879
      %2881 = vmin.xlane.f32.xlu0 %v2860
      %v2882 = vpop.xlane.xlu0 %2881
      %2883 = vmin.xlane.f32.xlu0 %v2861
      %v2884 = vpop.xlane.xlu0 %2883
      %2885 = vmin.xlane.f32.xlu0 %v2862
      %v2886 = vpop.xlane.xlu0 %2885
      %2887 = vmin.xlane.f32.xlu0 %v2863
      %v2888 = vpop.xlane.xlu0 %2887
      %2889 = vmin.xlane.f32.xlu0 %v2864
      %v2890 = vpop.xlane.xlu0 %2889
      %2891 = vmin.xlane.f32.xlu0 %v2865
      %v2892 = vpop.xlane.xlu0 %2891
      %2893 = vmin.xlane.f32.xlu0 %v2866
      %v2894 = vpop.xlane.xlu0 %2893
      %2895 = vmin.xlane.f32.xlu0 %v2867
      %v2896 = vpop.xlane.xlu0 %2895
      %2897 = vmin.xlane.f32.xlu0 %v2868
      %v2898 = vpop.xlane.xlu0 %2897
      %2899 = vmin.xlane.f32.xlu0 %v2869
      %v2900 = vpop.xlane.xlu0 %2899
      %2901 = vmin.xlane.f32.xlu0 %v2870
      %v2902 = vpop.xlane.xlu0 %2901
      %vm2903 = vcmp.eq.f32.partialorder %v578, %v2872
      %vm2904 = vcmp.eq.f32.partialorder %v578, %v2874
      %vm2905 = vcmp.eq.f32.partialorder %v578, %v2876
      %vm2906 = vcmp.eq.f32.partialorder %v578, %v2878
      %vm2907 = vcmp.eq.f32.partialorder %v578, %v2880
      %vm2908 = vcmp.eq.f32.partialorder %v578, %v2882
      %vm2909 = vcmp.eq.f32.partialorder %v578, %v2884
      %vm2910 = vcmp.eq.f32.partialorder %v578, %v2886
      %vm2911 = vcmp.eq.f32.partialorder %v578, %v2888
      %vm2912 = vcmp.eq.f32.partialorder %v578, %v2890
      %vm2913 = vcmp.eq.f32.partialorder %v578, %v2892
      %vm2914 = vcmp.eq.f32.partialorder %v578, %v2894
      %vm2915 = vcmp.eq.f32.partialorder %v578, %v2896
      %vm2916 = vcmp.eq.f32.partialorder %v578, %v2898
      %vm2917 = vcmp.eq.f32.partialorder %v578, %v2900
      %vm2918 = vcmp.eq.f32.partialorder %v578, %v2902
      %v2919 = vsel %vm2903, 1, 0
      %v2920 = vsel %vm2904, 1, 0
      %v2921 = vsel %vm2905, 1, 0
      %v2922 = vsel %vm2906, 1, 0
      %v2923 = vsel %vm2907, 1, 0
      %v2924 = vsel %vm2908, 1, 0
      %v2925 = vsel %vm2909, 1, 0
      %v2926 = vsel %vm2910, 1, 0
      %v2927 = vsel %vm2911, 1, 0
      %v2928 = vsel %vm2912, 1, 0
      %v2929 = vsel %vm2913, 1, 0
      %v2930 = vsel %vm2914, 1, 0
      %v2931 = vsel %vm2915, 1, 0
      %v2932 = vsel %vm2916, 1, 0
      %v2933 = vsel %vm2917, 1, 0
      %v2934 = vsel %vm2918, 1, 0
      %v2935 = vcvt.s32.f32 %v2919
      %v2936 = vcvt.s32.f32 %v2920
      %v2937 = vcvt.s32.f32 %v2921
      %v2938 = vcvt.s32.f32 %v2922
      %v2939 = vcvt.s32.f32 %v2923
      %v2940 = vcvt.s32.f32 %v2924
      %v2941 = vcvt.s32.f32 %v2925
      %v2942 = vcvt.s32.f32 %v2926
      %v2943 = vcvt.s32.f32 %v2927
      %v2944 = vcvt.s32.f32 %v2928
      %v2945 = vcvt.s32.f32 %v2929
      %v2946 = vcvt.s32.f32 %v2930
      %v2947 = vcvt.s32.f32 %v2931
      %v2948 = vcvt.s32.f32 %v2932
      %v2949 = vcvt.s32.f32 %v2933
      %v2950 = vcvt.s32.f32 %v2934
      %2951 = vmatprep.subr.mxu0 0.0
      %2952 = vmatpush1.msra.mxu0 %v245
      %2953 = vmatprep.subr.mxu0 0.0
      %2954 = vmatpush1.msra.mxu0 %v246
      %2955 = vmatprep.subr.mxu0 0.0
      %2956 = vmatpush1.msra.mxu0 %v247
      %2957 = vmatprep.subr.mxu0 0.0
      %2958 = vmatpush1.msra.mxu0 %v248
      %2959 = vmatprep.subr.mxu0 0.0
      %2960 = vmatpush1.msra.mxu0 %v249
      %2961 = vmatprep.subr.mxu0 0.0
      %2962 = vmatpush1.msra.mxu0 %v250
      %2963 = vmatprep.subr.mxu0 0.0
      %2964 = vmatpush1.msra.mxu0 %v251
      %2965 = vmatprep.subr.mxu0 0.0
      %2966 = vmatpush1.msra.mxu0 %v252
      %2967 = vmatprep.subr.mxu0 0.0
      %2968 = vmatpush1.msra.mxu0 %v253
      %2969 = vmatprep.subr.mxu0 0.0
      %2970 = vmatpush1.msra.mxu0 %v254
      %2971 = vmatprep.subr.mxu0 0.0
      %2972 = vmatpush1.msra.mxu0 %v255
      %2973 = vmatprep.subr.mxu0 0.0
      %2974 = vmatpush1.msra.mxu0 %v256
      %2975 = vmatprep.subr.mxu0 0.0
      %2976 = vmatpush1.msra.mxu0 %v257
      %2977 = vmatprep.subr.mxu0 0.0
      %2978 = vmatpush1.msra.mxu0 %v258
      %2979 = vmatprep.subr.mxu0 0.0
      %2980 = vmatpush1.msra.mxu0 %v259
      %2981 = vmatprep.subr.mxu0 0.0
      %2982 = vmatpush1.msra.mxu0 %v260
      %2983 = vmatprep.subr.mxu0 0.0
      %2984 = vmatpush1.msra.mxu0 0.0
      %2985 = vmatprep.subr.mxu0 0.0
      %2986 = vmatpush1.msra.mxu0 0.0
      %2987 = vmatprep.subr.mxu0 0.0
      %2988 = vmatpush1.msra.mxu0 0.0
      %2989 = vmatprep.subr.mxu0 0.0
      %2990 = vmatpush1.msra.mxu0 0.0
      %2991 = vmatprep.subr.mxu0 0.0
      %2992 = vmatpush1.msra.mxu0 0.0
      %2993 = vmatprep.subr.mxu0 0.0
      %2994 = vmatpush1.msra.mxu0 0.0
      %2995 = vmatprep.subr.mxu0 0.0
      %2996 = vmatpush1.msra.mxu0 0.0
      %2997 = vmatprep.subr.mxu0 0.0
      %2998 = vmatpush1.msra.mxu0 0.0
      %2999 = vmatprep.subr.mxu0 0.0
      %3000 = vmatpush1.msra.mxu0 0.0
      %3001 = vmatprep.subr.mxu0 0.0
      %3002 = vmatpush1.msra.mxu0 0.0
      %3003 = vmatprep.subr.mxu0 0.0
      %3004 = vmatpush1.msra.mxu0 0.0
      %3005 = vmatprep.subr.mxu0 0.0
      %3006 = vmatpush1.msra.mxu0 0.0
      %3007 = vmatprep.subr.mxu0 0.0
      %3008 = vmatpush1.msra.mxu0 0.0
      %3009 = vmatprep.subr.mxu0 0.0
      %3010 = vmatpush1.msra.mxu0 0.0
      %3011 = vmatprep.subr.mxu0 0.0
      %3012 = vmatpush1.msra.mxu0 0.0
      %3013 = vmatprep.subr.mxu0 0.0
      %3014 = vmatpush1.msra.mxu0 0.0
      %3015 = vmatprep.mubr.f32.mxu0 0.0
      %3016 = vmatmul.mubr.f32.gmra.mrb[0].mxu0 %v2935
      %v3017 = vpop.f32.mrb[0].mxu0
      %v3018 = vadd.f32 0.0, %v3017
      %v3019 = vpop.f32.mrb[0].mxu0
      %3020 = vmatprep.mubr.f32.mxu0 0.0
      %3021 = vmatmul.mubr.f32.gmra.mrb[0].mxu0 %v2936
      %v3022 = vpop.f32.mrb[0].mxu0
      %v3023 = vadd.f32 0.0, %v3022
      %v3024 = vpop.f32.mrb[0].mxu0
      %3025 = vmatprep.mubr.f32.mxu0 0.0
      %3026 = vmatmul.mubr.f32.gmra.mrb[0].mxu0 %v2937
      %v3027 = vpop.f32.mrb[0].mxu0
      %v3028 = vadd.f32 0.0, %v3027
      %v3029 = vpop.f32.mrb[0].mxu0
      %3030 = vmatprep.mubr.f32.mxu0 0.0
      %3031 = vmatmul.mubr.f32.gmra.mrb[0].mxu0 %v2938
      %v3032 = vpop.f32.mrb[0].mxu0
      %v3033 = vadd.f32 0.0, %v3032
      %v3034 = vpop.f32.mrb[0].mxu0
      %3035 = vmatprep.mubr.f32.mxu0 0.0
      %3036 = vmatmul.mubr.f32.gmra.mrb[0].mxu0 %v2939
      %v3037 = vpop.f32.mrb[0].mxu0
      %v3038 = vadd.f32 0.0, %v3037
      %v3039 = vpop.f32.mrb[0].mxu0
      %3040 = vmatprep.mubr.f32.mxu0 0.0
      %3041 = vmatmul.mubr.f32.gmra.mrb[0].mxu0 %v2940
      %v3042 = vpop.f32.mrb[0].mxu0
      %v3043 = vadd.f32 0.0, %v3042
      %v3044 = vpop.f32.mrb[0].mxu0
      %3045 = vmatprep.mubr.f32.mxu0 0.0
      %3046 = vmatmul.mubr.f32.gmra.mrb[0].mxu0 %v2941
      %v3047 = vpop.f32.mrb[0].mxu0
      %v3048 = vadd.f32 0.0, %v3047
      %v3049 = vpop.f32.mrb[0].mxu0
      %3050 = vmatprep.mubr.f32.mxu0 0.0
      %3051 = vmatmul.mubr.f32.gmra.mrb[0].mxu0 %v2942
      %v3052 = vpop.f32.mrb[0].mxu0
      %v3053 = vadd.f32 0.0, %v3052
      %v3054 = vpop.f32.mrb[0].mxu0
      %3055 = vmatprep.mubr.f32.mxu0 0.0
      %3056 = vmatmul.mubr.f32.gmra.mrb[0].mxu0 %v2943
      %v3057 = vpop.f32.mrb[0].mxu0
      %v3058 = vadd.f32 0.0, %v3057
      %v3059 = vpop.f32.mrb[0].mxu0
      %3060 = vmatprep.mubr.f32.mxu0 0.0
      %3061 = vmatmul.mubr.f32.gmra.mrb[0].mxu0 %v2944
      %v3062 = vpop.f32.mrb[0].mxu0
      %v3063 = vadd.f32 0.0, %v3062
      %v3064 = vpop.f32.mrb[0].mxu0
      %3065 = vmatprep.mubr.f32.mxu0 0.0
      %3066 = vmatmul.mubr.f32.gmra.mrb[0].mxu0 %v2945
      %v3067 = vpop.f32.mrb[0].mxu0
      %v3068 = vadd.f32 0.0, %v3067
      %v3069 = vpop.f32.mrb[0].mxu0
      %3070 = vmatprep.mubr.f32.mxu0 0.0
      %3071 = vmatmul.mubr.f32.gmra.mrb[0].mxu0 %v2946
      %v3072 = vpop.f32.mrb[0].mxu0
      %v3073 = vadd.f32 0.0, %v3072
      %v3074 = vpop.f32.mrb[0].mxu0
      %3075 = vmatprep.mubr.f32.mxu0 0.0
      %3076 = vmatmul.mubr.f32.gmra.mrb[0].mxu0 %v2947
      %v3077 = vpop.f32.mrb[0].mxu0
      %v3078 = vadd.f32 0.0, %v3077
      %v3079 = vpop.f32.mrb[0].mxu0
      %3080 = vmatprep.mubr.f32.mxu0 0.0
      %3081 = vmatmul.mubr.f32.gmra.mrb[0].mxu0 %v2948
      %v3082 = vpop.f32.mrb[0].mxu0
      %v3083 = vadd.f32 0.0, %v3082
      %v3084 = vpop.f32.mrb[0].mxu0
      %3085 = vmatprep.mubr.f32.mxu0 0.0
      %3086 = vmatmul.mubr.f32.gmra.mrb[0].mxu0 %v2949
      %v3087 = vpop.f32.mrb[0].mxu0
      %v3088 = vadd.f32 0.0, %v3087
      %v3089 = vpop.f32.mrb[0].mxu0
      %3090 = vmatprep.mubr.f32.mxu0 0.0
      %3091 = vmatmul.mubr.f32.gmra.mrb[0].mxu0 %v2950
      %v3092 = vpop.f32.mrb[0].mxu0
      %v3093 = vadd.f32 0.0, %v3092
      %v3094 = vpop.f32.mrb[0].mxu0
      %3095 = vdwg.mxu0
      %v3096 = vsel %vm595, %v3018, 0.0
      %v3097 = vsel %vm595, %v3023, 0.0
      %v3098 = vsel %vm595, %v3028, 0.0
      %v3099 = vsel %vm595, %v3033, 0.0
      %v3100 = vsel %vm595, %v3038, 0.0
      %v3101 = vsel %vm595, %v3043, 0.0
      %v3102 = vsel %vm595, %v3048, 0.0
      %v3103 = vsel %vm595, %v3053, 0.0
      %v3104 = vsel %vm595, %v3058, 0.0
      %v3105 = vsel %vm595, %v3063, 0.0
      %v3106 = vsel %vm595, %v3068, 0.0
      %v3107 = vsel %vm595, %v3073, 0.0
      %v3108 = vsel %vm595, %v3078, 0.0
      %v3109 = vsel %vm595, %v3083, 0.0
      %v3110 = vsel %vm595, %v3088, 0.0
      %v3111 = vsel %vm595, %v3093, 0.0
      %v3112 = vsel %vm612, %v3096, 0.0
      %3113 = vadd.xlane.f32.xlu0 %v3112
      %v3114 = vpop.xlane.xlu0 %3113
      %v3115 = vsel %vm612, %v3097, 0.0
      %3116 = vadd.xlane.f32.xlu0 %v3115
      %v3117 = vpop.xlane.xlu0 %3116
      %v3118 = vsel %vm612, %v3098, 0.0
      %3119 = vadd.xlane.f32.xlu0 %v3118
      %v3120 = vpop.xlane.xlu0 %3119
      %v3121 = vsel %vm612, %v3099, 0.0
      %3122 = vadd.xlane.f32.xlu0 %v3121
      %v3123 = vpop.xlane.xlu0 %3122
      %v3124 = vsel %vm612, %v3100, 0.0
      %3125 = vadd.xlane.f32.xlu0 %v3124
      %v3126 = vpop.xlane.xlu0 %3125
      %v3127 = vsel %vm612, %v3101, 0.0
      %3128 = vadd.xlane.f32.xlu0 %v3127
      %v3129 = vpop.xlane.xlu0 %3128
      %v3130 = vsel %vm612, %v3102, 0.0
      %3131 = vadd.xlane.f32.xlu0 %v3130
      %v3132 = vpop.xlane.xlu0 %3131
      %v3133 = vsel %vm612, %v3103, 0.0
      %3134 = vadd.xlane.f32.xlu0 %v3133
      %v3135 = vpop.xlane.xlu0 %3134
      %v3136 = vsel %vm612, %v3104, 0.0
      %3137 = vadd.xlane.f32.xlu0 %v3136
      %v3138 = vpop.xlane.xlu0 %3137
      %v3139 = vsel %vm612, %v3105, 0.0
      %3140 = vadd.xlane.f32.xlu0 %v3139
      %v3141 = vpop.xlane.xlu0 %3140
      %v3142 = vsel %vm612, %v3106, 0.0
      %3143 = vadd.xlane.f32.xlu0 %v3142
      %v3144 = vpop.xlane.xlu0 %3143
      %v3145 = vsel %vm612, %v3107, 0.0
      %3146 = vadd.xlane.f32.xlu0 %v3145
      %v3147 = vpop.xlane.xlu0 %3146
      %v3148 = vsel %vm612, %v3108, 0.0
      %3149 = vadd.xlane.f32.xlu0 %v3148
      %v3150 = vpop.xlane.xlu0 %3149
      %v3151 = vsel %vm612, %v3109, 0.0
      %3152 = vadd.xlane.f32.xlu0 %v3151
      %v3153 = vpop.xlane.xlu0 %3152
      %v3154 = vsel %vm612, %v3110, 0.0
      %3155 = vadd.xlane.f32.xlu0 %v3154
      %v3156 = vpop.xlane.xlu0 %3155
      %v3157 = vsel %vm612, %v3111, 0.0
      %3158 = vadd.xlane.f32.xlu0 %v3157
      %v3159 = vpop.xlane.xlu0 %3158
      %v3160 = vsel %vm661, %v3018, 0.0
      %v3161 = vsel %vm661, %v3023, 0.0
      %v3162 = vsel %vm661, %v3028, 0.0
      %v3163 = vsel %vm661, %v3033, 0.0
      %v3164 = vsel %vm661, %v3038, 0.0
      %v3165 = vsel %vm661, %v3043, 0.0
      %v3166 = vsel %vm661, %v3048, 0.0
      %v3167 = vsel %vm661, %v3053, 0.0
      %v3168 = vsel %vm661, %v3058, 0.0
      %v3169 = vsel %vm661, %v3063, 0.0
      %v3170 = vsel %vm661, %v3068, 0.0
      %v3171 = vsel %vm661, %v3073, 0.0
      %v3172 = vsel %vm661, %v3078, 0.0
      %v3173 = vsel %vm661, %v3083, 0.0
      %v3174 = vsel %vm661, %v3088, 0.0
      %v3175 = vsel %vm661, %v3093, 0.0
      %v3176 = vsel %vm612, %v3160, 0.0
      %3177 = vadd.xlane.f32.xlu0 %v3176
      %v3178 = vpop.xlane.xlu0 %3177
      %v3179 = vsel %vm612, %v3161, 0.0
      %3180 = vadd.xlane.f32.xlu0 %v3179
      %v3181 = vpop.xlane.xlu0 %3180
      %v3182 = vsel %vm612, %v3162, 0.0
      %3183 = vadd.xlane.f32.xlu0 %v3182
      %v3184 = vpop.xlane.xlu0 %3183
      %v3185 = vsel %vm612, %v3163, 0.0
      %3186 = vadd.xlane.f32.xlu0 %v3185
      %v3187 = vpop.xlane.xlu0 %3186
      %v3188 = vsel %vm612, %v3164, 0.0
      %3189 = vadd.xlane.f32.xlu0 %v3188
      %v3190 = vpop.xlane.xlu0 %3189
      %v3191 = vsel %vm612, %v3165, 0.0
      %3192 = vadd.xlane.f32.xlu0 %v3191
      %v3193 = vpop.xlane.xlu0 %3192
      %v3194 = vsel %vm612, %v3166, 0.0
      %3195 = vadd.xlane.f32.xlu0 %v3194
      %v3196 = vpop.xlane.xlu0 %3195
      %v3197 = vsel %vm612, %v3167, 0.0
      %3198 = vadd.xlane.f32.xlu0 %v3197
      %v3199 = vpop.xlane.xlu0 %3198
      %v3200 = vsel %vm612, %v3168, 0.0
      %3201 = vadd.xlane.f32.xlu0 %v3200
      %v3202 = vpop.xlane.xlu0 %3201
      %v3203 = vsel %vm612, %v3169, 0.0
      %3204 = vadd.xlane.f32.xlu0 %v3203
      %v3205 = vpop.xlane.xlu0 %3204
      %v3206 = vsel %vm612, %v3170, 0.0
      %3207 = vadd.xlane.f32.xlu0 %v3206
      %v3208 = vpop.xlane.xlu0 %3207
      %v3209 = vsel %vm612, %v3171, 0.0
      %3210 = vadd.xlane.f32.xlu0 %v3209
      %v3211 = vpop.xlane.xlu0 %3210
      %v3212 = vsel %vm612, %v3172, 0.0
      %3213 = vadd.xlane.f32.xlu0 %v3212
      %v3214 = vpop.xlane.xlu0 %3213
      %v3215 = vsel %vm612, %v3173, 0.0
      %3216 = vadd.xlane.f32.xlu0 %v3215
      %v3217 = vpop.xlane.xlu0 %3216
      %v3218 = vsel %vm612, %v3174, 0.0
      %3219 = vadd.xlane.f32.xlu0 %v3218
      %v3220 = vpop.xlane.xlu0 %3219
      %v3221 = vsel %vm612, %v3175, 0.0
      %3222 = vadd.xlane.f32.xlu0 %v3221
      %v3223 = vpop.xlane.xlu0 %3222
      %v3224 = vsel %vm726, %v3018, 0.0
      %v3225 = vsel %vm726, %v3023, 0.0
      %v3226 = vsel %vm726, %v3028, 0.0
      %v3227 = vsel %vm726, %v3033, 0.0
      %v3228 = vsel %vm726, %v3038, 0.0
      %v3229 = vsel %vm726, %v3043, 0.0
      %v3230 = vsel %vm726, %v3048, 0.0
      %v3231 = vsel %vm726, %v3053, 0.0
      %v3232 = vsel %vm726, %v3058, 0.0
      %v3233 = vsel %vm726, %v3063, 0.0
      %v3234 = vsel %vm726, %v3068, 0.0
      %v3235 = vsel %vm726, %v3073, 0.0
      %v3236 = vsel %vm726, %v3078, 0.0
      %v3237 = vsel %vm726, %v3083, 0.0
      %v3238 = vsel %vm726, %v3088, 0.0
      %v3239 = vsel %vm726, %v3093, 0.0
      %v3240 = vsel %vm612, %v3224, 0.0
      %3241 = vadd.xlane.f32.xlu0 %v3240
      %v3242 = vpop.xlane.xlu0 %3241
      %v3243 = vsel %vm612, %v3225, 0.0
      %3244 = vadd.xlane.f32.xlu0 %v3243
      %v3245 = vpop.xlane.xlu0 %3244
      %v3246 = vsel %vm612, %v3226, 0.0
      %3247 = vadd.xlane.f32.xlu0 %v3246
      %v3248 = vpop.xlane.xlu0 %3247
      %v3249 = vsel %vm612, %v3227, 0.0
      %3250 = vadd.xlane.f32.xlu0 %v3249
      %v3251 = vpop.xlane.xlu0 %3250
      %v3252 = vsel %vm612, %v3228, 0.0
      %3253 = vadd.xlane.f32.xlu0 %v3252
      %v3254 = vpop.xlane.xlu0 %3253
      %v3255 = vsel %vm612, %v3229, 0.0
      %3256 = vadd.xlane.f32.xlu0 %v3255
      %v3257 = vpop.xlane.xlu0 %3256
      %v3258 = vsel %vm612, %v3230, 0.0
      %3259 = vadd.xlane.f32.xlu0 %v3258
      %v3260 = vpop.xlane.xlu0 %3259
      %v3261 = vsel %vm612, %v3231, 0.0
      %3262 = vadd.xlane.f32.xlu0 %v3261
      %v3263 = vpop.xlane.xlu0 %3262
      %v3264 = vsel %vm612, %v3232, 0.0
      %3265 = vadd.xlane.f32.xlu0 %v3264
      %v3266 = vpop.xlane.xlu0 %3265
      %v3267 = vsel %vm612, %v3233, 0.0
      %3268 = vadd.xlane.f32.xlu0 %v3267
      %v3269 = vpop.xlane.xlu0 %3268
      %v3270 = vsel %vm612, %v3234, 0.0
      %3271 = vadd.xlane.f32.xlu0 %v3270
      %v3272 = vpop.xlane.xlu0 %3271
      %v3273 = vsel %vm612, %v3235, 0.0
      %3274 = vadd.xlane.f32.xlu0 %v3273
      %v3275 = vpop.xlane.xlu0 %3274
      %v3276 = vsel %vm612, %v3236, 0.0
      %3277 = vadd.xlane.f32.xlu0 %v3276
      %v3278 = vpop.xlane.xlu0 %3277
      %v3279 = vsel %vm612, %v3237, 0.0
      %3280 = vadd.xlane.f32.xlu0 %v3279
      %v3281 = vpop.xlane.xlu0 %3280
      %v3282 = vsel %vm612, %v3238, 0.0
      %3283 = vadd.xlane.f32.xlu0 %v3282
      %v3284 = vpop.xlane.xlu0 %3283
      %v3285 = vsel %vm612, %v3239, 0.0
      %3286 = vadd.xlane.f32.xlu0 %v3285
      %v3287 = vpop.xlane.xlu0 %3286
      %v3288 = vsub.f32 %v615, %v3114
      %v3289 = vsub.f32 %v618, %v3117
      %v3290 = vsub.f32 %v621, %v3120
      %v3291 = vsub.f32 %v624, %v3123
      %v3292 = vsub.f32 %v627, %v3126
      %v3293 = vsub.f32 %v630, %v3129
      %v3294 = vsub.f32 %v633, %v3132
      %v3295 = vsub.f32 %v636, %v3135
      %v3296 = vsub.f32 %v639, %v3138
      %v3297 = vsub.f32 %v642, %v3141
      %v3298 = vsub.f32 %v645, %v3144
      %v3299 = vsub.f32 %v648, %v3147
      %v3300 = vsub.f32 %v651, %v3150
      %v3301 = vsub.f32 %v654, %v3153
      %v3302 = vsub.f32 %v657, %v3156
      %v3303 = vsub.f32 %v660, %v3159
      %v3304 = vsub.f32 %v680, %v3178
      %v3305 = vsub.f32 %v683, %v3181
      %v3306 = vsub.f32 %v686, %v3184
      %v3307 = vsub.f32 %v689, %v3187
      %v3308 = vsub.f32 %v692, %v3190
      %v3309 = vsub.f32 %v695, %v3193
      %v3310 = vsub.f32 %v698, %v3196
      %v3311 = vsub.f32 %v701, %v3199
      %v3312 = vsub.f32 %v704, %v3202
      %v3313 = vsub.f32 %v707, %v3205
      %v3314 = vsub.f32 %v710, %v3208
      %v3315 = vsub.f32 %v713, %v3211
      %v3316 = vsub.f32 %v716, %v3214
      %v3317 = vsub.f32 %v719, %v3217
      %v3318 = vsub.f32 %v722, %v3220
      %v3319 = vsub.f32 %v725, %v3223
      %v3320 = vsub.f32 %v745, %v3242
      %v3321 = vsub.f32 %v748, %v3245
      %v3322 = vsub.f32 %v751, %v3248
      %v3323 = vsub.f32 %v754, %v3251
      %v3324 = vsub.f32 %v757, %v3254
      %v3325 = vsub.f32 %v760, %v3257
      %v3326 = vsub.f32 %v763, %v3260
      %v3327 = vsub.f32 %v766, %v3263
      %v3328 = vsub.f32 %v769, %v3266
      %v3329 = vsub.f32 %v772, %v3269
      %v3330 = vsub.f32 %v775, %v3272
      %v3331 = vsub.f32 %v778, %v3275
      %v3332 = vsub.f32 %v781, %v3278
      %v3333 = vsub.f32 %v784, %v3281
      %v3334 = vsub.f32 %v787, %v3284
      %v3335 = vsub.f32 %v790, %v3287
      %v3336 = vmul.f32 %v3288, %v3288
      %v3337 = vmul.f32 %v3289, %v3289
      %v3338 = vmul.f32 %v3290, %v3290
      %v3339 = vmul.f32 %v3291, %v3291
      %v3340 = vmul.f32 %v3292, %v3292
      %v3341 = vmul.f32 %v3293, %v3293
      %v3342 = vmul.f32 %v3294, %v3294
      %v3343 = vmul.f32 %v3295, %v3295
      %v3344 = vmul.f32 %v3296, %v3296
      %v3345 = vmul.f32 %v3297, %v3297
      %v3346 = vmul.f32 %v3298, %v3298
      %v3347 = vmul.f32 %v3299, %v3299
      %v3348 = vmul.f32 %v3300, %v3300
      %v3349 = vmul.f32 %v3301, %v3301
      %v3350 = vmul.f32 %v3302, %v3302
      %v3351 = vmul.f32 %v3303, %v3303
      %v3352 = vmul.f32 %v3304, %v3304
      %v3353 = vmul.f32 %v3305, %v3305
      %v3354 = vmul.f32 %v3306, %v3306
      %v3355 = vmul.f32 %v3307, %v3307
      %v3356 = vmul.f32 %v3308, %v3308
      %v3357 = vmul.f32 %v3309, %v3309
      %v3358 = vmul.f32 %v3310, %v3310
      %v3359 = vmul.f32 %v3311, %v3311
      %v3360 = vmul.f32 %v3312, %v3312
      %v3361 = vmul.f32 %v3313, %v3313
      %v3362 = vmul.f32 %v3314, %v3314
      %v3363 = vmul.f32 %v3315, %v3315
      %v3364 = vmul.f32 %v3316, %v3316
      %v3365 = vmul.f32 %v3317, %v3317
      %v3366 = vmul.f32 %v3318, %v3318
      %v3367 = vmul.f32 %v3319, %v3319
      %v3368 = vadd.f32 %v3336, %v3352
      %v3369 = vadd.f32 %v3337, %v3353
      %v3370 = vadd.f32 %v3338, %v3354
      %v3371 = vadd.f32 %v3339, %v3355
      %v3372 = vadd.f32 %v3340, %v3356
      %v3373 = vadd.f32 %v3341, %v3357
      %v3374 = vadd.f32 %v3342, %v3358
      %v3375 = vadd.f32 %v3343, %v3359
      %v3376 = vadd.f32 %v3344, %v3360
      %v3377 = vadd.f32 %v3345, %v3361
      %v3378 = vadd.f32 %v3346, %v3362
      %v3379 = vadd.f32 %v3347, %v3363
      %v3380 = vadd.f32 %v3348, %v3364
      %v3381 = vadd.f32 %v3349, %v3365
      %v3382 = vadd.f32 %v3350, %v3366
      %v3383 = vadd.f32 %v3351, %v3367
      %v3384 = vmul.f32 %v3320, %v3320
      %v3385 = vmul.f32 %v3321, %v3321
      %v3386 = vmul.f32 %v3322, %v3322
      %v3387 = vmul.f32 %v3323, %v3323
      %v3388 = vmul.f32 %v3324, %v3324
      %v3389 = vmul.f32 %v3325, %v3325
      %v3390 = vmul.f32 %v3326, %v3326
      %v3391 = vmul.f32 %v3327, %v3327
      %v3392 = vmul.f32 %v3328, %v3328
      %v3393 = vmul.f32 %v3329, %v3329
      %v3394 = vmul.f32 %v3330, %v3330
      %v3395 = vmul.f32 %v3331, %v3331
      %v3396 = vmul.f32 %v3332, %v3332
      %v3397 = vmul.f32 %v3333, %v3333
      %v3398 = vmul.f32 %v3334, %v3334
      %v3399 = vmul.f32 %v3335, %v3335
      %v3400 = vadd.f32 %v3368, %v3384
      %v3401 = vadd.f32 %v3369, %v3385
      %v3402 = vadd.f32 %v3370, %v3386
      %v3403 = vadd.f32 %v3371, %v3387
      %v3404 = vadd.f32 %v3372, %v3388
      %v3405 = vadd.f32 %v3373, %v3389
      %v3406 = vadd.f32 %v3374, %v3390
      %v3407 = vadd.f32 %v3375, %v3391
      %v3408 = vadd.f32 %v3376, %v3392
      %v3409 = vadd.f32 %v3377, %v3393
      %v3410 = vadd.f32 %v3378, %v3394
      %v3411 = vadd.f32 %v3379, %v3395
      %v3412 = vadd.f32 %v3380, %v3396
      %v3413 = vadd.f32 %v3381, %v3397
      %v3414 = vadd.f32 %v3382, %v3398
      %v3415 = vadd.f32 %v3383, %v3399
      %v3416 = vrsqrt.pop %v3400
      %v3417 = vmul.f32 %v3400, %v3416
      %vm3418 = vcmp.eq.f32.partialorder %v3400, inf
      %v3419 = vsel %vm3418, %v3400, %v3417
      %vm3420 = vcmp.eq.f32.partialorder %v3400, 0.0
      %v3421 = vand.u32 %v3400, 2147483648
      %v3422 = vsel %vm3420, %v3421, %v3419
      %v3423 = vrsqrt.pop %v3401
      %v3424 = vmul.f32 %v3401, %v3423
      %vm3425 = vcmp.eq.f32.partialorder %v3401, inf
      %v3426 = vsel %vm3425, %v3401, %v3424
      %vm3427 = vcmp.eq.f32.partialorder %v3401, 0.0
      %v3428 = vand.u32 %v3401, 2147483648
      %v3429 = vsel %vm3427, %v3428, %v3426
      %v3430 = vrsqrt.pop %v3402
      %v3431 = vmul.f32 %v3402, %v3430
      %vm3432 = vcmp.eq.f32.partialorder %v3402, inf
      %v3433 = vsel %vm3432, %v3402, %v3431
      %vm3434 = vcmp.eq.f32.partialorder %v3402, 0.0
      %v3435 = vand.u32 %v3402, 2147483648
      %v3436 = vsel %vm3434, %v3435, %v3433
      %v3437 = vrsqrt.pop %v3403
      %v3438 = vmul.f32 %v3403, %v3437
      %vm3439 = vcmp.eq.f32.partialorder %v3403, inf
      %v3440 = vsel %vm3439, %v3403, %v3438
      %vm3441 = vcmp.eq.f32.partialorder %v3403, 0.0
      %v3442 = vand.u32 %v3403, 2147483648
      %v3443 = vsel %vm3441, %v3442, %v3440
      %v3444 = vrsqrt.pop %v3404
      %v3445 = vmul.f32 %v3404, %v3444
      %vm3446 = vcmp.eq.f32.partialorder %v3404, inf
      %v3447 = vsel %vm3446, %v3404, %v3445
      %vm3448 = vcmp.eq.f32.partialorder %v3404, 0.0
      %v3449 = vand.u32 %v3404, 2147483648
      %v3450 = vsel %vm3448, %v3449, %v3447
      %v3451 = vrsqrt.pop %v3405
      %v3452 = vmul.f32 %v3405, %v3451
      %vm3453 = vcmp.eq.f32.partialorder %v3405, inf
      %v3454 = vsel %vm3453, %v3405, %v3452
      %vm3455 = vcmp.eq.f32.partialorder %v3405, 0.0
      %v3456 = vand.u32 %v3405, 2147483648
      %v3457 = vsel %vm3455, %v3456, %v3454
      %v3458 = vrsqrt.pop %v3406
      %v3459 = vmul.f32 %v3406, %v3458
      %vm3460 = vcmp.eq.f32.partialorder %v3406, inf
      %v3461 = vsel %vm3460, %v3406, %v3459
      %vm3462 = vcmp.eq.f32.partialorder %v3406, 0.0
      %v3463 = vand.u32 %v3406, 2147483648
      %v3464 = vsel %vm3462, %v3463, %v3461
      %v3465 = vrsqrt.pop %v3407
      %v3466 = vmul.f32 %v3407, %v3465
      %vm3467 = vcmp.eq.f32.partialorder %v3407, inf
      %v3468 = vsel %vm3467, %v3407, %v3466
      %vm3469 = vcmp.eq.f32.partialorder %v3407, 0.0
      %v3470 = vand.u32 %v3407, 2147483648
      %v3471 = vsel %vm3469, %v3470, %v3468
      %v3472 = vrsqrt.pop %v3408
      %v3473 = vmul.f32 %v3408, %v3472
      %vm3474 = vcmp.eq.f32.partialorder %v3408, inf
      %v3475 = vsel %vm3474, %v3408, %v3473
      %vm3476 = vcmp.eq.f32.partialorder %v3408, 0.0
      %v3477 = vand.u32 %v3408, 2147483648
      %v3478 = vsel %vm3476, %v3477, %v3475
      %v3479 = vrsqrt.pop %v3409
      %v3480 = vmul.f32 %v3409, %v3479
      %vm3481 = vcmp.eq.f32.partialorder %v3409, inf
      %v3482 = vsel %vm3481, %v3409, %v3480
      %vm3483 = vcmp.eq.f32.partialorder %v3409, 0.0
      %v3484 = vand.u32 %v3409, 2147483648
      %v3485 = vsel %vm3483, %v3484, %v3482
      %v3486 = vrsqrt.pop %v3410
      %v3487 = vmul.f32 %v3410, %v3486
      %vm3488 = vcmp.eq.f32.partialorder %v3410, inf
      %v3489 = vsel %vm3488, %v3410, %v3487
      %vm3490 = vcmp.eq.f32.partialorder %v3410, 0.0
      %v3491 = vand.u32 %v3410, 2147483648
      %v3492 = vsel %vm3490, %v3491, %v3489
      %v3493 = vrsqrt.pop %v3411
      %v3494 = vmul.f32 %v3411, %v3493
      %vm3495 = vcmp.eq.f32.partialorder %v3411, inf
      %v3496 = vsel %vm3495, %v3411, %v3494
      %vm3497 = vcmp.eq.f32.partialorder %v3411, 0.0
      %v3498 = vand.u32 %v3411, 2147483648
      %v3499 = vsel %vm3497, %v3498, %v3496
      %v3500 = vrsqrt.pop %v3412
      %v3501 = vmul.f32 %v3412, %v3500
      %vm3502 = vcmp.eq.f32.partialorder %v3412, inf
      %v3503 = vsel %vm3502, %v3412, %v3501
      %vm3504 = vcmp.eq.f32.partialorder %v3412, 0.0
      %v3505 = vand.u32 %v3412, 2147483648
      %v3506 = vsel %vm3504, %v3505, %v3503
      %v3507 = vrsqrt.pop %v3413
      %v3508 = vmul.f32 %v3413, %v3507
      %vm3509 = vcmp.eq.f32.partialorder %v3413, inf
      %v3510 = vsel %vm3509, %v3413, %v3508
      %vm3511 = vcmp.eq.f32.partialorder %v3413, 0.0
      %v3512 = vand.u32 %v3413, 2147483648
      %v3513 = vsel %vm3511, %v3512, %v3510
      %v3514 = vrsqrt.pop %v3414
      %v3515 = vmul.f32 %v3414, %v3514
      %vm3516 = vcmp.eq.f32.partialorder %v3414, inf
      %v3517 = vsel %vm3516, %v3414, %v3515
      %vm3518 = vcmp.eq.f32.partialorder %v3414, 0.0
      %v3519 = vand.u32 %v3414, 2147483648
      %v3520 = vsel %vm3518, %v3519, %v3517
      %v3521 = vrsqrt.pop %v3415
      %v3522 = vmul.f32 %v3415, %v3521
      %vm3523 = vcmp.eq.f32.partialorder %v3415, inf
      %v3524 = vsel %vm3523, %v3415, %v3522
      %vm3525 = vcmp.eq.f32.partialorder %v3415, 0.0
      %v3526 = vand.u32 %v3415, 2147483648
      %v3527 = vsel %vm3525, %v3526, %v3524
      %vm3528 = vcmp.eq.s32.totalorder %v577, 20
      %v3529 = vsel %vm3528, %v3422, %v2647
      %v3530 = vsel %vm3528, %v3429, %v2648
      %v3531 = vsel %vm3528, %v3436, %v2649
      %v3532 = vsel %vm3528, %v3443, %v2650
      %v3533 = vsel %vm3528, %v3450, %v2651
      %v3534 = vsel %vm3528, %v3457, %v2652
      %v3535 = vsel %vm3528, %v3464, %v2653
      %v3536 = vsel %vm3528, %v3471, %v2654
      %v3537 = vsel %vm3528, %v3478, %v2655
      %v3538 = vsel %vm3528, %v3485, %v2656
      %v3539 = vsel %vm3528, %v3492, %v2657
      %v3540 = vsel %vm3528, %v3499, %v2658
      %v3541 = vsel %vm3528, %v3506, %v2659
      %v3542 = vsel %vm3528, %v3513, %v2660
      %v3543 = vsel %vm3528, %v3520, %v2661
      %v3544 = vsel %vm3528, %v3527, %v2662
      %vm3545 = vcmp.eq.s32.totalorder %v577, 21
      %v3546 = vsel %vm3545, %v3288, %v3529
      %v3547 = vsel %vm3545, %v3289, %v3530
      %v3548 = vsel %vm3545, %v3290, %v3531
      %v3549 = vsel %vm3545, %v3291, %v3532
      %v3550 = vsel %vm3545, %v3292, %v3533
      %v3551 = vsel %vm3545, %v3293, %v3534
      %v3552 = vsel %vm3545, %v3294, %v3535
      %v3553 = vsel %vm3545, %v3295, %v3536
      %v3554 = vsel %vm3545, %v3296, %v3537
      %v3555 = vsel %vm3545, %v3297, %v3538
      %v3556 = vsel %vm3545, %v3298, %v3539
      %v3557 = vsel %vm3545, %v3299, %v3540
      %v3558 = vsel %vm3545, %v3300, %v3541
      %v3559 = vsel %vm3545, %v3301, %v3542
      %v3560 = vsel %vm3545, %v3302, %v3543
      %v3561 = vsel %vm3545, %v3303, %v3544
      %vm3562 = vcmp.eq.s32.totalorder %v577, 22
      %v3563 = vsel %vm3562, %v3304, %v3546
      %v3564 = vsel %vm3562, %v3305, %v3547
      %v3565 = vsel %vm3562, %v3306, %v3548
      %v3566 = vsel %vm3562, %v3307, %v3549
      %v3567 = vsel %vm3562, %v3308, %v3550
      %v3568 = vsel %vm3562, %v3309, %v3551
      %v3569 = vsel %vm3562, %v3310, %v3552
      %v3570 = vsel %vm3562, %v3311, %v3553
      %v3571 = vsel %vm3562, %v3312, %v3554
      %v3572 = vsel %vm3562, %v3313, %v3555
      %v3573 = vsel %vm3562, %v3314, %v3556
      %v3574 = vsel %vm3562, %v3315, %v3557
      %v3575 = vsel %vm3562, %v3316, %v3558
      %v3576 = vsel %vm3562, %v3317, %v3559
      %v3577 = vsel %vm3562, %v3318, %v3560
      %v3578 = vsel %vm3562, %v3319, %v3561
      %vm3579 = vcmp.eq.s32.totalorder %v577, 23
      %v3580 = vsel %vm3579, %v3320, %v3563
      %v3581 = vsel %vm3579, %v3321, %v3564
      %v3582 = vsel %vm3579, %v3322, %v3565
      %v3583 = vsel %vm3579, %v3323, %v3566
      %v3584 = vsel %vm3579, %v3324, %v3567
      %v3585 = vsel %vm3579, %v3325, %v3568
      %v3586 = vsel %vm3579, %v3326, %v3569
      %v3587 = vsel %vm3579, %v3327, %v3570
      %v3588 = vsel %vm3579, %v3328, %v3571
      %v3589 = vsel %vm3579, %v3329, %v3572
      %v3590 = vsel %vm3579, %v3330, %v3573
      %v3591 = vsel %vm3579, %v3331, %v3574
      %v3592 = vsel %vm3579, %v3332, %v3575
      %v3593 = vsel %vm3579, %v3333, %v3576
      %v3594 = vsel %vm3579, %v3334, %v3577
      %v3595 = vsel %vm3579, %v3335, %v3578
      %vm3596 = vcmp.eq.s32.totalorder %v577, 27
      %v3597 = vsel %vm3596, %v3114, %v3580
      %v3598 = vsel %vm3596, %v3117, %v3581
      %v3599 = vsel %vm3596, %v3120, %v3582
      %v3600 = vsel %vm3596, %v3123, %v3583
      %v3601 = vsel %vm3596, %v3126, %v3584
      %v3602 = vsel %vm3596, %v3129, %v3585
      %v3603 = vsel %vm3596, %v3132, %v3586
      %v3604 = vsel %vm3596, %v3135, %v3587
      %v3605 = vsel %vm3596, %v3138, %v3588
      %v3606 = vsel %vm3596, %v3141, %v3589
      %v3607 = vsel %vm3596, %v3144, %v3590
      %v3608 = vsel %vm3596, %v3147, %v3591
      %v3609 = vsel %vm3596, %v3150, %v3592
      %v3610 = vsel %vm3596, %v3153, %v3593
      %v3611 = vsel %vm3596, %v3156, %v3594
      %v3612 = vsel %vm3596, %v3159, %v3595
      %vm3613 = vcmp.eq.s32.totalorder %v577, 28
      %v3614 = vsel %vm3613, %v3178, %v3597
      %v3615 = vsel %vm3613, %v3181, %v3598
      %v3616 = vsel %vm3613, %v3184, %v3599
      %v3617 = vsel %vm3613, %v3187, %v3600
      %v3618 = vsel %vm3613, %v3190, %v3601
      %v3619 = vsel %vm3613, %v3193, %v3602
      %v3620 = vsel %vm3613, %v3196, %v3603
      %v3621 = vsel %vm3613, %v3199, %v3604
      %v3622 = vsel %vm3613, %v3202, %v3605
      %v3623 = vsel %vm3613, %v3205, %v3606
      %v3624 = vsel %vm3613, %v3208, %v3607
      %v3625 = vsel %vm3613, %v3211, %v3608
      %v3626 = vsel %vm3613, %v3214, %v3609
      %v3627 = vsel %vm3613, %v3217, %v3610
      %v3628 = vsel %vm3613, %v3220, %v3611
      %v3629 = vsel %vm3613, %v3223, %v3612
      %vm3630 = vcmp.eq.s32.totalorder %v577, 29
      %v3631 = vsel %vm3630, %v3242, %v3614
      %v3632 = vsel %vm3630, %v3245, %v3615
      %v3633 = vsel %vm3630, %v3248, %v3616
      %v3634 = vsel %vm3630, %v3251, %v3617
      %v3635 = vsel %vm3630, %v3254, %v3618
      %v3636 = vsel %vm3630, %v3257, %v3619
      %v3637 = vsel %vm3630, %v3260, %v3620
      %v3638 = vsel %vm3630, %v3263, %v3621
      %v3639 = vsel %vm3630, %v3266, %v3622
      %v3640 = vsel %vm3630, %v3269, %v3623
      %v3641 = vsel %vm3630, %v3272, %v3624
      %v3642 = vsel %vm3630, %v3275, %v3625
      %v3643 = vsel %vm3630, %v3278, %v3626
      %v3644 = vsel %vm3630, %v3281, %v3627
      %v3645 = vsel %vm3630, %v3284, %v3628
      %v3646 = vsel %vm3630, %v3287, %v3629
      %v3647 = vsel %vm2903, 3.4028235e+38, %v2791
      %v3648 = vsel %vm2904, 3.4028235e+38, %v2792
      %v3649 = vsel %vm2905, 3.4028235e+38, %v2793
      %v3650 = vsel %vm2906, 3.4028235e+38, %v2794
      %v3651 = vsel %vm2907, 3.4028235e+38, %v2795
      %v3652 = vsel %vm2908, 3.4028235e+38, %v2796
      %v3653 = vsel %vm2909, 3.4028235e+38, %v2797
      %v3654 = vsel %vm2910, 3.4028235e+38, %v2798
      %v3655 = vsel %vm2911, 3.4028235e+38, %v2799
      %v3656 = vsel %vm2912, 3.4028235e+38, %v2800
      %v3657 = vsel %vm2913, 3.4028235e+38, %v2801
      %v3658 = vsel %vm2914, 3.4028235e+38, %v2802
      %v3659 = vsel %vm2915, 3.4028235e+38, %v2803
      %v3660 = vsel %vm2916, 3.4028235e+38, %v2804
      %v3661 = vsel %vm2917, 3.4028235e+38, %v2805
      %v3662 = vsel %vm2918, 3.4028235e+38, %v2806
      %3663 = vmin.xlane.f32.xlu0 %v3647
      %v3664 = vpop.xlane.xlu0 %3663
      %3665 = vmin.xlane.f32.xlu0 %v3648
      %v3666 = vpop.xlane.xlu0 %3665
      %3667 = vmin.xlane.f32.xlu0 %v3649
      %v3668 = vpop.xlane.xlu0 %3667
      %3669 = vmin.xlane.f32.xlu0 %v3650
      %v3670 = vpop.xlane.xlu0 %3669
      %3671 = vmin.xlane.f32.xlu0 %v3651
      %v3672 = vpop.xlane.xlu0 %3671
      %3673 = vmin.xlane.f32.xlu0 %v3652
      %v3674 = vpop.xlane.xlu0 %3673
      %3675 = vmin.xlane.f32.xlu0 %v3653
      %v3676 = vpop.xlane.xlu0 %3675
      %3677 = vmin.xlane.f32.xlu0 %v3654
      %v3678 = vpop.xlane.xlu0 %3677
      %3679 = vmin.xlane.f32.xlu0 %v3655
      %v3680 = vpop.xlane.xlu0 %3679
      %3681 = vmin.xlane.f32.xlu0 %v3656
      %v3682 = vpop.xlane.xlu0 %3681
      %3683 = vmin.xlane.f32.xlu0 %v3657
      %v3684 = vpop.xlane.xlu0 %3683
      %3685 = vmin.xlane.f32.xlu0 %v3658
      %v3686 = vpop.xlane.xlu0 %3685
      %3687 = vmin.xlane.f32.xlu0 %v3659
      %v3688 = vpop.xlane.xlu0 %3687
      %3689 = vmin.xlane.f32.xlu0 %v3660
      %v3690 = vpop.xlane.xlu0 %3689
      %3691 = vmin.xlane.f32.xlu0 %v3661
      %v3692 = vpop.xlane.xlu0 %3691
      %3693 = vmin.xlane.f32.xlu0 %v3662
      %v3694 = vpop.xlane.xlu0 %3693
      %vm3695 = vcmp.eq.f32.partialorder %v3647, %v3664
      %vm3696 = vcmp.eq.f32.partialorder %v3648, %v3666
      %vm3697 = vcmp.eq.f32.partialorder %v3649, %v3668
      %vm3698 = vcmp.eq.f32.partialorder %v3650, %v3670
      %vm3699 = vcmp.eq.f32.partialorder %v3651, %v3672
      %vm3700 = vcmp.eq.f32.partialorder %v3652, %v3674
      %vm3701 = vcmp.eq.f32.partialorder %v3653, %v3676
      %vm3702 = vcmp.eq.f32.partialorder %v3654, %v3678
      %vm3703 = vcmp.eq.f32.partialorder %v3655, %v3680
      %vm3704 = vcmp.eq.f32.partialorder %v3656, %v3682
      %vm3705 = vcmp.eq.f32.partialorder %v3657, %v3684
      %vm3706 = vcmp.eq.f32.partialorder %v3658, %v3686
      %vm3707 = vcmp.eq.f32.partialorder %v3659, %v3688
      %vm3708 = vcmp.eq.f32.partialorder %v3660, %v3690
      %vm3709 = vcmp.eq.f32.partialorder %v3661, %v3692
      %vm3710 = vcmp.eq.f32.partialorder %v3662, %v3694
      %v3711 = vsel %vm3695, %v578, 128.0
      %v3712 = vsel %vm3696, %v578, 128.0
      %v3713 = vsel %vm3697, %v578, 128.0
      %v3714 = vsel %vm3698, %v578, 128.0
      %v3715 = vsel %vm3699, %v578, 128.0
      %v3716 = vsel %vm3700, %v578, 128.0
      %v3717 = vsel %vm3701, %v578, 128.0
      %v3718 = vsel %vm3702, %v578, 128.0
      %v3719 = vsel %vm3703, %v578, 128.0
      %v3720 = vsel %vm3704, %v578, 128.0
      %v3721 = vsel %vm3705, %v578, 128.0
      %v3722 = vsel %vm3706, %v578, 128.0
      %v3723 = vsel %vm3707, %v578, 128.0
      %v3724 = vsel %vm3708, %v578, 128.0
      %v3725 = vsel %vm3709, %v578, 128.0
      %v3726 = vsel %vm3710, %v578, 128.0
      %3727 = vmin.xlane.f32.xlu0 %v3711
      %v3728 = vpop.xlane.xlu0 %3727
      %3729 = vmin.xlane.f32.xlu0 %v3712
      %v3730 = vpop.xlane.xlu0 %3729
      %3731 = vmin.xlane.f32.xlu0 %v3713
      %v3732 = vpop.xlane.xlu0 %3731
      %3733 = vmin.xlane.f32.xlu0 %v3714
      %v3734 = vpop.xlane.xlu0 %3733
      %3735 = vmin.xlane.f32.xlu0 %v3715
      %v3736 = vpop.xlane.xlu0 %3735
      %3737 = vmin.xlane.f32.xlu0 %v3716
      %v3738 = vpop.xlane.xlu0 %3737
      %3739 = vmin.xlane.f32.xlu0 %v3717
      %v3740 = vpop.xlane.xlu0 %3739
      %3741 = vmin.xlane.f32.xlu0 %v3718
      %v3742 = vpop.xlane.xlu0 %3741
      %3743 = vmin.xlane.f32.xlu0 %v3719
      %v3744 = vpop.xlane.xlu0 %3743
      %3745 = vmin.xlane.f32.xlu0 %v3720
      %v3746 = vpop.xlane.xlu0 %3745
      %3747 = vmin.xlane.f32.xlu0 %v3721
      %v3748 = vpop.xlane.xlu0 %3747
      %3749 = vmin.xlane.f32.xlu0 %v3722
      %v3750 = vpop.xlane.xlu0 %3749
      %3751 = vmin.xlane.f32.xlu0 %v3723
      %v3752 = vpop.xlane.xlu0 %3751
      %3753 = vmin.xlane.f32.xlu0 %v3724
      %v3754 = vpop.xlane.xlu0 %3753
      %3755 = vmin.xlane.f32.xlu0 %v3725
      %v3756 = vpop.xlane.xlu0 %3755
      %3757 = vmin.xlane.f32.xlu0 %v3726
      %v3758 = vpop.xlane.xlu0 %3757
      %vm3759 = vcmp.eq.f32.partialorder %v578, %v3728
      %vm3760 = vcmp.eq.f32.partialorder %v578, %v3730
      %vm3761 = vcmp.eq.f32.partialorder %v578, %v3732
      %vm3762 = vcmp.eq.f32.partialorder %v578, %v3734
      %vm3763 = vcmp.eq.f32.partialorder %v578, %v3736
      %vm3764 = vcmp.eq.f32.partialorder %v578, %v3738
      %vm3765 = vcmp.eq.f32.partialorder %v578, %v3740
      %vm3766 = vcmp.eq.f32.partialorder %v578, %v3742
      %vm3767 = vcmp.eq.f32.partialorder %v578, %v3744
      %vm3768 = vcmp.eq.f32.partialorder %v578, %v3746
      %vm3769 = vcmp.eq.f32.partialorder %v578, %v3748
      %vm3770 = vcmp.eq.f32.partialorder %v578, %v3750
      %vm3771 = vcmp.eq.f32.partialorder %v578, %v3752
      %vm3772 = vcmp.eq.f32.partialorder %v578, %v3754
      %vm3773 = vcmp.eq.f32.partialorder %v578, %v3756
      %vm3774 = vcmp.eq.f32.partialorder %v578, %v3758
      %v3775 = vsel %vm3759, 3.4028235e+38, %v3647
      %v3776 = vsel %vm3760, 3.4028235e+38, %v3648
      %v3777 = vsel %vm3761, 3.4028235e+38, %v3649
      %v3778 = vsel %vm3762, 3.4028235e+38, %v3650
      %v3779 = vsel %vm3763, 3.4028235e+38, %v3651
      %v3780 = vsel %vm3764, 3.4028235e+38, %v3652
      %v3781 = vsel %vm3765, 3.4028235e+38, %v3653
      %v3782 = vsel %vm3766, 3.4028235e+38, %v3654
      %v3783 = vsel %vm3767, 3.4028235e+38, %v3655
      %v3784 = vsel %vm3768, 3.4028235e+38, %v3656
      %v3785 = vsel %vm3769, 3.4028235e+38, %v3657
      %v3786 = vsel %vm3770, 3.4028235e+38, %v3658
      %v3787 = vsel %vm3771, 3.4028235e+38, %v3659
      %v3788 = vsel %vm3772, 3.4028235e+38, %v3660
      %v3789 = vsel %vm3773, 3.4028235e+38, %v3661
      %v3790 = vsel %vm3774, 3.4028235e+38, %v3662
      %3791 = vmin.xlane.f32.xlu0 %v3775
      %v3792 = vpop.xlane.xlu0 %3791
      %3793 = vmin.xlane.f32.xlu0 %v3776
      %v3794 = vpop.xlane.xlu0 %3793
      %3795 = vmin.xlane.f32.xlu0 %v3777
      %v3796 = vpop.xlane.xlu0 %3795
      %3797 = vmin.xlane.f32.xlu0 %v3778
      %v3798 = vpop.xlane.xlu0 %3797
      %3799 = vmin.xlane.f32.xlu0 %v3779
      %v3800 = vpop.xlane.xlu0 %3799
      %3801 = vmin.xlane.f32.xlu0 %v3780
      %v3802 = vpop.xlane.xlu0 %3801
      %3803 = vmin.xlane.f32.xlu0 %v3781
      %v3804 = vpop.xlane.xlu0 %3803
      %3805 = vmin.xlane.f32.xlu0 %v3782
      %v3806 = vpop.xlane.xlu0 %3805
      %3807 = vmin.xlane.f32.xlu0 %v3783
      %v3808 = vpop.xlane.xlu0 %3807
      %3809 = vmin.xlane.f32.xlu0 %v3784
      %v3810 = vpop.xlane.xlu0 %3809
      %3811 = vmin.xlane.f32.xlu0 %v3785
      %v3812 = vpop.xlane.xlu0 %3811
      %3813 = vmin.xlane.f32.xlu0 %v3786
      %v3814 = vpop.xlane.xlu0 %3813
      %3815 = vmin.xlane.f32.xlu0 %v3787
      %v3816 = vpop.xlane.xlu0 %3815
      %3817 = vmin.xlane.f32.xlu0 %v3788
      %v3818 = vpop.xlane.xlu0 %3817
      %3819 = vmin.xlane.f32.xlu0 %v3789
      %v3820 = vpop.xlane.xlu0 %3819
      %3821 = vmin.xlane.f32.xlu0 %v3790
      %v3822 = vpop.xlane.xlu0 %3821
      %vm3823 = vcmp.eq.f32.partialorder %v3775, %v3792
      %vm3824 = vcmp.eq.f32.partialorder %v3776, %v3794
      %vm3825 = vcmp.eq.f32.partialorder %v3777, %v3796
      %vm3826 = vcmp.eq.f32.partialorder %v3778, %v3798
      %vm3827 = vcmp.eq.f32.partialorder %v3779, %v3800
      %vm3828 = vcmp.eq.f32.partialorder %v3780, %v3802
      %vm3829 = vcmp.eq.f32.partialorder %v3781, %v3804
      %vm3830 = vcmp.eq.f32.partialorder %v3782, %v3806
      %vm3831 = vcmp.eq.f32.partialorder %v3783, %v3808
      %vm3832 = vcmp.eq.f32.partialorder %v3784, %v3810
      %vm3833 = vcmp.eq.f32.partialorder %v3785, %v3812
      %vm3834 = vcmp.eq.f32.partialorder %v3786, %v3814
      %vm3835 = vcmp.eq.f32.partialorder %v3787, %v3816
      %vm3836 = vcmp.eq.f32.partialorder %v3788, %v3818
      %vm3837 = vcmp.eq.f32.partialorder %v3789, %v3820
      %vm3838 = vcmp.eq.f32.partialorder %v3790, %v3822
      %v3839 = vsel %vm3823, %v578, 128.0
      %v3840 = vsel %vm3824, %v578, 128.0
      %v3841 = vsel %vm3825, %v578, 128.0
      %v3842 = vsel %vm3826, %v578, 128.0
      %v3843 = vsel %vm3827, %v578, 128.0
      %v3844 = vsel %vm3828, %v578, 128.0
      %v3845 = vsel %vm3829, %v578, 128.0
      %v3846 = vsel %vm3830, %v578, 128.0
      %v3847 = vsel %vm3831, %v578, 128.0
      %v3848 = vsel %vm3832, %v578, 128.0
      %v3849 = vsel %vm3833, %v578, 128.0
      %v3850 = vsel %vm3834, %v578, 128.0
      %v3851 = vsel %vm3835, %v578, 128.0
      %v3852 = vsel %vm3836, %v578, 128.0
      %v3853 = vsel %vm3837, %v578, 128.0
      %v3854 = vsel %vm3838, %v578, 128.0
      %3855 = vmin.xlane.f32.xlu0 %v3839
      %v3856 = vpop.xlane.xlu0 %3855
      %3857 = vmin.xlane.f32.xlu0 %v3840
      %v3858 = vpop.xlane.xlu0 %3857
      %3859 = vmin.xlane.f32.xlu0 %v3841
      %v3860 = vpop.xlane.xlu0 %3859
      %3861 = vmin.xlane.f32.xlu0 %v3842
      %v3862 = vpop.xlane.xlu0 %3861
      %3863 = vmin.xlane.f32.xlu0 %v3843
      %v3864 = vpop.xlane.xlu0 %3863
      %3865 = vmin.xlane.f32.xlu0 %v3844
      %v3866 = vpop.xlane.xlu0 %3865
      %3867 = vmin.xlane.f32.xlu0 %v3845
      %v3868 = vpop.xlane.xlu0 %3867
      %3869 = vmin.xlane.f32.xlu0 %v3846
      %v3870 = vpop.xlane.xlu0 %3869
      %3871 = vmin.xlane.f32.xlu0 %v3847
      %v3872 = vpop.xlane.xlu0 %3871
      %3873 = vmin.xlane.f32.xlu0 %v3848
      %v3874 = vpop.xlane.xlu0 %3873
      %3875 = vmin.xlane.f32.xlu0 %v3849
      %v3876 = vpop.xlane.xlu0 %3875
      %3877 = vmin.xlane.f32.xlu0 %v3850
      %v3878 = vpop.xlane.xlu0 %3877
      %3879 = vmin.xlane.f32.xlu0 %v3851
      %v3880 = vpop.xlane.xlu0 %3879
      %3881 = vmin.xlane.f32.xlu0 %v3852
      %v3882 = vpop.xlane.xlu0 %3881
      %3883 = vmin.xlane.f32.xlu0 %v3853
      %v3884 = vpop.xlane.xlu0 %3883
      %3885 = vmin.xlane.f32.xlu0 %v3854
      %v3886 = vpop.xlane.xlu0 %3885
      %vm3887 = vcmp.eq.f32.partialorder %v578, %v3856
      %vm3888 = vcmp.eq.f32.partialorder %v578, %v3858
      %vm3889 = vcmp.eq.f32.partialorder %v578, %v3860
      %vm3890 = vcmp.eq.f32.partialorder %v578, %v3862
      %vm3891 = vcmp.eq.f32.partialorder %v578, %v3864
      %vm3892 = vcmp.eq.f32.partialorder %v578, %v3866
      %vm3893 = vcmp.eq.f32.partialorder %v578, %v3868
      %vm3894 = vcmp.eq.f32.partialorder %v578, %v3870
      %vm3895 = vcmp.eq.f32.partialorder %v578, %v3872
      %vm3896 = vcmp.eq.f32.partialorder %v578, %v3874
      %vm3897 = vcmp.eq.f32.partialorder %v578, %v3876
      %vm3898 = vcmp.eq.f32.partialorder %v578, %v3878
      %vm3899 = vcmp.eq.f32.partialorder %v578, %v3880
      %vm3900 = vcmp.eq.f32.partialorder %v578, %v3882
      %vm3901 = vcmp.eq.f32.partialorder %v578, %v3884
      %vm3902 = vcmp.eq.f32.partialorder %v578, %v3886
      %v3903 = vsel %vm3887, 1, 0
      %v3904 = vsel %vm3888, 1, 0
      %v3905 = vsel %vm3889, 1, 0
      %v3906 = vsel %vm3890, 1, 0
      %v3907 = vsel %vm3891, 1, 0
      %v3908 = vsel %vm3892, 1, 0
      %v3909 = vsel %vm3893, 1, 0
      %v3910 = vsel %vm3894, 1, 0
      %v3911 = vsel %vm3895, 1, 0
      %v3912 = vsel %vm3896, 1, 0
      %v3913 = vsel %vm3897, 1, 0
      %v3914 = vsel %vm3898, 1, 0
      %v3915 = vsel %vm3899, 1, 0
      %v3916 = vsel %vm3900, 1, 0
      %v3917 = vsel %vm3901, 1, 0
      %v3918 = vsel %vm3902, 1, 0
      %v3919 = vcvt.s32.f32 %v3903
      %v3920 = vcvt.s32.f32 %v3904
      %v3921 = vcvt.s32.f32 %v3905
      %v3922 = vcvt.s32.f32 %v3906
      %v3923 = vcvt.s32.f32 %v3907
      %v3924 = vcvt.s32.f32 %v3908
      %v3925 = vcvt.s32.f32 %v3909
      %v3926 = vcvt.s32.f32 %v3910
      %v3927 = vcvt.s32.f32 %v3911
      %v3928 = vcvt.s32.f32 %v3912
      %v3929 = vcvt.s32.f32 %v3913
      %v3930 = vcvt.s32.f32 %v3914
      %v3931 = vcvt.s32.f32 %v3915
      %v3932 = vcvt.s32.f32 %v3916
      %v3933 = vcvt.s32.f32 %v3917
      %v3934 = vcvt.s32.f32 %v3918
      %3935 = vmatprep.subr.mxu0 0.0
      %3936 = vmatpush1.msra.mxu0 %v245
      %3937 = vmatprep.subr.mxu0 0.0
      %3938 = vmatpush1.msra.mxu0 %v246
      %3939 = vmatprep.subr.mxu0 0.0
      %3940 = vmatpush1.msra.mxu0 %v247
      %3941 = vmatprep.subr.mxu0 0.0
      %3942 = vmatpush1.msra.mxu0 %v248
      %3943 = vmatprep.subr.mxu0 0.0
      %3944 = vmatpush1.msra.mxu0 %v249
      %3945 = vmatprep.subr.mxu0 0.0
      %3946 = vmatpush1.msra.mxu0 %v250
      %3947 = vmatprep.subr.mxu0 0.0
      %3948 = vmatpush1.msra.mxu0 %v251
      %3949 = vmatprep.subr.mxu0 0.0
      %3950 = vmatpush1.msra.mxu0 %v252
      %3951 = vmatprep.subr.mxu0 0.0
      %3952 = vmatpush1.msra.mxu0 %v253
      %3953 = vmatprep.subr.mxu0 0.0
      %3954 = vmatpush1.msra.mxu0 %v254
      %3955 = vmatprep.subr.mxu0 0.0
      %3956 = vmatpush1.msra.mxu0 %v255
      %3957 = vmatprep.subr.mxu0 0.0
      %3958 = vmatpush1.msra.mxu0 %v256
      %3959 = vmatprep.subr.mxu0 0.0
      %3960 = vmatpush1.msra.mxu0 %v257
      %3961 = vmatprep.subr.mxu0 0.0
      %3962 = vmatpush1.msra.mxu0 %v258
      %3963 = vmatprep.subr.mxu0 0.0
      %3964 = vmatpush1.msra.mxu0 %v259
      %3965 = vmatprep.subr.mxu0 0.0
      %3966 = vmatpush1.msra.mxu0 %v260
      %3967 = vmatprep.subr.mxu0 0.0
      %3968 = vmatpush1.msra.mxu0 0.0
      %3969 = vmatprep.subr.mxu0 0.0
      %3970 = vmatpush1.msra.mxu0 0.0
      %3971 = vmatprep.subr.mxu0 0.0
      %3972 = vmatpush1.msra.mxu0 0.0
      %3973 = vmatprep.subr.mxu0 0.0
      %3974 = vmatpush1.msra.mxu0 0.0
      %3975 = vmatprep.subr.mxu0 0.0
      %3976 = vmatpush1.msra.mxu0 0.0
      %3977 = vmatprep.subr.mxu0 0.0
      %3978 = vmatpush1.msra.mxu0 0.0
      %3979 = vmatprep.subr.mxu0 0.0
      %3980 = vmatpush1.msra.mxu0 0.0
      %3981 = vmatprep.subr.mxu0 0.0
      %3982 = vmatpush1.msra.mxu0 0.0
      %3983 = vmatprep.subr.mxu0 0.0
      %3984 = vmatpush1.msra.mxu0 0.0
      %3985 = vmatprep.subr.mxu0 0.0
      %3986 = vmatpush1.msra.mxu0 0.0
      %3987 = vmatprep.subr.mxu0 0.0
      %3988 = vmatpush1.msra.mxu0 0.0
      %3989 = vmatprep.subr.mxu0 0.0
      %3990 = vmatpush1.msra.mxu0 0.0
      %3991 = vmatprep.subr.mxu0 0.0
      %3992 = vmatpush1.msra.mxu0 0.0
      %3993 = vmatprep.subr.mxu0 0.0
      %3994 = vmatpush1.msra.mxu0 0.0
      %3995 = vmatprep.subr.mxu0 0.0
      %3996 = vmatpush1.msra.mxu0 0.0
      %3997 = vmatprep.subr.mxu0 0.0
      %3998 = vmatpush1.msra.mxu0 0.0
      %3999 = vmatprep.mubr.f32.mxu0 0.0
      %4000 = vmatmul.mubr.f32.gmra.mrb[0].mxu0 %v3919
      %v4001 = vpop.f32.mrb[0].mxu0
      %v4002 = vadd.f32 0.0, %v4001
      %v4003 = vpop.f32.mrb[0].mxu0
      %4004 = vmatprep.mubr.f32.mxu0 0.0
      %4005 = vmatmul.mubr.f32.gmra.mrb[0].mxu0 %v3920
      %v4006 = vpop.f32.mrb[0].mxu0
      %v4007 = vadd.f32 0.0, %v4006
      %v4008 = vpop.f32.mrb[0].mxu0
      %4009 = vmatprep.mubr.f32.mxu0 0.0
      %4010 = vmatmul.mubr.f32.gmra.mrb[0].mxu0 %v3921
      %v4011 = vpop.f32.mrb[0].mxu0
      %v4012 = vadd.f32 0.0, %v4011
      %v4013 = vpop.f32.mrb[0].mxu0
      %4014 = vmatprep.mubr.f32.mxu0 0.0
      %4015 = vmatmul.mubr.f32.gmra.mrb[0].mxu0 %v3922
      %v4016 = vpop.f32.mrb[0].mxu0
      %v4017 = vadd.f32 0.0, %v4016
      %v4018 = vpop.f32.mrb[0].mxu0
      %4019 = vmatprep.mubr.f32.mxu0 0.0
      %4020 = vmatmul.mubr.f32.gmra.mrb[0].mxu0 %v3923
      %v4021 = vpop.f32.mrb[0].mxu0
      %v4022 = vadd.f32 0.0, %v4021
      %v4023 = vpop.f32.mrb[0].mxu0
      %4024 = vmatprep.mubr.f32.mxu0 0.0
      %4025 = vmatmul.mubr.f32.gmra.mrb[0].mxu0 %v3924
      %v4026 = vpop.f32.mrb[0].mxu0
      %v4027 = vadd.f32 0.0, %v4026
      %v4028 = vpop.f32.mrb[0].mxu0
      %4029 = vmatprep.mubr.f32.mxu0 0.0
      %4030 = vmatmul.mubr.f32.gmra.mrb[0].mxu0 %v3925
      %v4031 = vpop.f32.mrb[0].mxu0
      %v4032 = vadd.f32 0.0, %v4031
      %v4033 = vpop.f32.mrb[0].mxu0
      %4034 = vmatprep.mubr.f32.mxu0 0.0
      %4035 = vmatmul.mubr.f32.gmra.mrb[0].mxu0 %v3926
      %v4036 = vpop.f32.mrb[0].mxu0
      %v4037 = vadd.f32 0.0, %v4036
      %v4038 = vpop.f32.mrb[0].mxu0
      %4039 = vmatprep.mubr.f32.mxu0 0.0
      %4040 = vmatmul.mubr.f32.gmra.mrb[0].mxu0 %v3927
      %v4041 = vpop.f32.mrb[0].mxu0
      %v4042 = vadd.f32 0.0, %v4041
      %v4043 = vpop.f32.mrb[0].mxu0
      %4044 = vmatprep.mubr.f32.mxu0 0.0
      %4045 = vmatmul.mubr.f32.gmra.mrb[0].mxu0 %v3928
      %v4046 = vpop.f32.mrb[0].mxu0
      %v4047 = vadd.f32 0.0, %v4046
      %v4048 = vpop.f32.mrb[0].mxu0
      %4049 = vmatprep.mubr.f32.mxu0 0.0
      %4050 = vmatmul.mubr.f32.gmra.mrb[0].mxu0 %v3929
      %v4051 = vpop.f32.mrb[0].mxu0
      %v4052 = vadd.f32 0.0, %v4051
      %v4053 = vpop.f32.mrb[0].mxu0
      %4054 = vmatprep.mubr.f32.mxu0 0.0
      %4055 = vmatmul.mubr.f32.gmra.mrb[0].mxu0 %v3930
      %v4056 = vpop.f32.mrb[0].mxu0
      %v4057 = vadd.f32 0.0, %v4056
      %v4058 = vpop.f32.mrb[0].mxu0
      %4059 = vmatprep.mubr.f32.mxu0 0.0
      %4060 = vmatmul.mubr.f32.gmra.mrb[0].mxu0 %v3931
      %v4061 = vpop.f32.mrb[0].mxu0
      %v4062 = vadd.f32 0.0, %v4061
      %v4063 = vpop.f32.mrb[0].mxu0
      %4064 = vmatprep.mubr.f32.mxu0 0.0
      %4065 = vmatmul.mubr.f32.gmra.mrb[0].mxu0 %v3932
      %v4066 = vpop.f32.mrb[0].mxu0
      %v4067 = vadd.f32 0.0, %v4066
      %v4068 = vpop.f32.mrb[0].mxu0
      %4069 = vmatprep.mubr.f32.mxu0 0.0
      %4070 = vmatmul.mubr.f32.gmra.mrb[0].mxu0 %v3933
      %v4071 = vpop.f32.mrb[0].mxu0
      %v4072 = vadd.f32 0.0, %v4071
      %v4073 = vpop.f32.mrb[0].mxu0
      %4074 = vmatprep.mubr.f32.mxu0 0.0
      %4075 = vmatmul.mubr.f32.gmra.mrb[0].mxu0 %v3934
      %v4076 = vpop.f32.mrb[0].mxu0
      %v4077 = vadd.f32 0.0, %v4076
      %v4078 = vpop.f32.mrb[0].mxu0
      %4079 = vdwg.mxu0
      %v4080 = vsel %vm595, %v4002, 0.0
      %v4081 = vsel %vm595, %v4007, 0.0
      %v4082 = vsel %vm595, %v4012, 0.0
      %v4083 = vsel %vm595, %v4017, 0.0
      %v4084 = vsel %vm595, %v4022, 0.0
      %v4085 = vsel %vm595, %v4027, 0.0
      %v4086 = vsel %vm595, %v4032, 0.0
      %v4087 = vsel %vm595, %v4037, 0.0
      %v4088 = vsel %vm595, %v4042, 0.0
      %v4089 = vsel %vm595, %v4047, 0.0
      %v4090 = vsel %vm595, %v4052, 0.0
      %v4091 = vsel %vm595, %v4057, 0.0
      %v4092 = vsel %vm595, %v4062, 0.0
      %v4093 = vsel %vm595, %v4067, 0.0
      %v4094 = vsel %vm595, %v4072, 0.0
      %v4095 = vsel %vm595, %v4077, 0.0
      %v4096 = vsel %vm612, %v4080, 0.0
      %4097 = vadd.xlane.f32.xlu0 %v4096
      %v4098 = vpop.xlane.xlu0 %4097
      %v4099 = vsel %vm612, %v4081, 0.0
      %4100 = vadd.xlane.f32.xlu0 %v4099
      %v4101 = vpop.xlane.xlu0 %4100
      %v4102 = vsel %vm612, %v4082, 0.0
      %4103 = vadd.xlane.f32.xlu0 %v4102
      %v4104 = vpop.xlane.xlu0 %4103
      %v4105 = vsel %vm612, %v4083, 0.0
      %4106 = vadd.xlane.f32.xlu0 %v4105
      %v4107 = vpop.xlane.xlu0 %4106
      %v4108 = vsel %vm612, %v4084, 0.0
      %4109 = vadd.xlane.f32.xlu0 %v4108
      %v4110 = vpop.xlane.xlu0 %4109
      %v4111 = vsel %vm612, %v4085, 0.0
      %4112 = vadd.xlane.f32.xlu0 %v4111
      %v4113 = vpop.xlane.xlu0 %4112
      %v4114 = vsel %vm612, %v4086, 0.0
      %4115 = vadd.xlane.f32.xlu0 %v4114
      %v4116 = vpop.xlane.xlu0 %4115
      %v4117 = vsel %vm612, %v4087, 0.0
      %4118 = vadd.xlane.f32.xlu0 %v4117
      %v4119 = vpop.xlane.xlu0 %4118
      %v4120 = vsel %vm612, %v4088, 0.0
      %4121 = vadd.xlane.f32.xlu0 %v4120
      %v4122 = vpop.xlane.xlu0 %4121
      %v4123 = vsel %vm612, %v4089, 0.0
      %4124 = vadd.xlane.f32.xlu0 %v4123
      %v4125 = vpop.xlane.xlu0 %4124
      %v4126 = vsel %vm612, %v4090, 0.0
      %4127 = vadd.xlane.f32.xlu0 %v4126
      %v4128 = vpop.xlane.xlu0 %4127
      %v4129 = vsel %vm612, %v4091, 0.0
      %4130 = vadd.xlane.f32.xlu0 %v4129
      %v4131 = vpop.xlane.xlu0 %4130
      %v4132 = vsel %vm612, %v4092, 0.0
      %4133 = vadd.xlane.f32.xlu0 %v4132
      %v4134 = vpop.xlane.xlu0 %4133
      %v4135 = vsel %vm612, %v4093, 0.0
      %4136 = vadd.xlane.f32.xlu0 %v4135
      %v4137 = vpop.xlane.xlu0 %4136
      %v4138 = vsel %vm612, %v4094, 0.0
      %4139 = vadd.xlane.f32.xlu0 %v4138
      %v4140 = vpop.xlane.xlu0 %4139
      %v4141 = vsel %vm612, %v4095, 0.0
      %4142 = vadd.xlane.f32.xlu0 %v4141
      %v4143 = vpop.xlane.xlu0 %4142
      %v4144 = vsel %vm661, %v4002, 0.0
      %v4145 = vsel %vm661, %v4007, 0.0
      %v4146 = vsel %vm661, %v4012, 0.0
      %v4147 = vsel %vm661, %v4017, 0.0
      %v4148 = vsel %vm661, %v4022, 0.0
      %v4149 = vsel %vm661, %v4027, 0.0
      %v4150 = vsel %vm661, %v4032, 0.0
      %v4151 = vsel %vm661, %v4037, 0.0
      %v4152 = vsel %vm661, %v4042, 0.0
      %v4153 = vsel %vm661, %v4047, 0.0
      %v4154 = vsel %vm661, %v4052, 0.0
      %v4155 = vsel %vm661, %v4057, 0.0
      %v4156 = vsel %vm661, %v4062, 0.0
      %v4157 = vsel %vm661, %v4067, 0.0
      %v4158 = vsel %vm661, %v4072, 0.0
      %v4159 = vsel %vm661, %v4077, 0.0
      %v4160 = vsel %vm612, %v4144, 0.0
      %4161 = vadd.xlane.f32.xlu0 %v4160
      %v4162 = vpop.xlane.xlu0 %4161
      %v4163 = vsel %vm612, %v4145, 0.0
      %4164 = vadd.xlane.f32.xlu0 %v4163
      %v4165 = vpop.xlane.xlu0 %4164
      %v4166 = vsel %vm612, %v4146, 0.0
      %4167 = vadd.xlane.f32.xlu0 %v4166
      %v4168 = vpop.xlane.xlu0 %4167
      %v4169 = vsel %vm612, %v4147, 0.0
      %4170 = vadd.xlane.f32.xlu0 %v4169
      %v4171 = vpop.xlane.xlu0 %4170
      %v4172 = vsel %vm612, %v4148, 0.0
      %4173 = vadd.xlane.f32.xlu0 %v4172
      %v4174 = vpop.xlane.xlu0 %4173
      %v4175 = vsel %vm612, %v4149, 0.0
      %4176 = vadd.xlane.f32.xlu0 %v4175
      %v4177 = vpop.xlane.xlu0 %4176
      %v4178 = vsel %vm612, %v4150, 0.0
      %4179 = vadd.xlane.f32.xlu0 %v4178
      %v4180 = vpop.xlane.xlu0 %4179
      %v4181 = vsel %vm612, %v4151, 0.0
      %4182 = vadd.xlane.f32.xlu0 %v4181
      %v4183 = vpop.xlane.xlu0 %4182
      %v4184 = vsel %vm612, %v4152, 0.0
      %4185 = vadd.xlane.f32.xlu0 %v4184
      %v4186 = vpop.xlane.xlu0 %4185
      %v4187 = vsel %vm612, %v4153, 0.0
      %4188 = vadd.xlane.f32.xlu0 %v4187
      %v4189 = vpop.xlane.xlu0 %4188
      %v4190 = vsel %vm612, %v4154, 0.0
      %4191 = vadd.xlane.f32.xlu0 %v4190
      %v4192 = vpop.xlane.xlu0 %4191
      %v4193 = vsel %vm612, %v4155, 0.0
      %4194 = vadd.xlane.f32.xlu0 %v4193
      %v4195 = vpop.xlane.xlu0 %4194
      %v4196 = vsel %vm612, %v4156, 0.0
      %4197 = vadd.xlane.f32.xlu0 %v4196
      %v4198 = vpop.xlane.xlu0 %4197
      %v4199 = vsel %vm612, %v4157, 0.0
      %4200 = vadd.xlane.f32.xlu0 %v4199
      %v4201 = vpop.xlane.xlu0 %4200
      %v4202 = vsel %vm612, %v4158, 0.0
      %4203 = vadd.xlane.f32.xlu0 %v4202
      %v4204 = vpop.xlane.xlu0 %4203
      %v4205 = vsel %vm612, %v4159, 0.0
      %4206 = vadd.xlane.f32.xlu0 %v4205
      %v4207 = vpop.xlane.xlu0 %4206
      %v4208 = vsel %vm726, %v4002, 0.0
      %v4209 = vsel %vm726, %v4007, 0.0
      %v4210 = vsel %vm726, %v4012, 0.0
      %v4211 = vsel %vm726, %v4017, 0.0
      %v4212 = vsel %vm726, %v4022, 0.0
      %v4213 = vsel %vm726, %v4027, 0.0
      %v4214 = vsel %vm726, %v4032, 0.0
      %v4215 = vsel %vm726, %v4037, 0.0
      %v4216 = vsel %vm726, %v4042, 0.0
      %v4217 = vsel %vm726, %v4047, 0.0
      %v4218 = vsel %vm726, %v4052, 0.0
      %v4219 = vsel %vm726, %v4057, 0.0
      %v4220 = vsel %vm726, %v4062, 0.0
      %v4221 = vsel %vm726, %v4067, 0.0
      %v4222 = vsel %vm726, %v4072, 0.0
      %v4223 = vsel %vm726, %v4077, 0.0
      %v4224 = vsel %vm612, %v4208, 0.0
      %4225 = vadd.xlane.f32.xlu0 %v4224
      %v4226 = vpop.xlane.xlu0 %4225
      %v4227 = vsel %vm612, %v4209, 0.0
      %4228 = vadd.xlane.f32.xlu0 %v4227
      %v4229 = vpop.xlane.xlu0 %4228
      %v4230 = vsel %vm612, %v4210, 0.0
      %4231 = vadd.xlane.f32.xlu0 %v4230
      %v4232 = vpop.xlane.xlu0 %4231
      %v4233 = vsel %vm612, %v4211, 0.0
      %4234 = vadd.xlane.f32.xlu0 %v4233
      %v4235 = vpop.xlane.xlu0 %4234
      %v4236 = vsel %vm612, %v4212, 0.0
      %4237 = vadd.xlane.f32.xlu0 %v4236
      %v4238 = vpop.xlane.xlu0 %4237
      %v4239 = vsel %vm612, %v4213, 0.0
      %4240 = vadd.xlane.f32.xlu0 %v4239
      %v4241 = vpop.xlane.xlu0 %4240
      %v4242 = vsel %vm612, %v4214, 0.0
      %4243 = vadd.xlane.f32.xlu0 %v4242
      %v4244 = vpop.xlane.xlu0 %4243
      %v4245 = vsel %vm612, %v4215, 0.0
      %4246 = vadd.xlane.f32.xlu0 %v4245
      %v4247 = vpop.xlane.xlu0 %4246
      %v4248 = vsel %vm612, %v4216, 0.0
      %4249 = vadd.xlane.f32.xlu0 %v4248
      %v4250 = vpop.xlane.xlu0 %4249
      %v4251 = vsel %vm612, %v4217, 0.0
      %4252 = vadd.xlane.f32.xlu0 %v4251
      %v4253 = vpop.xlane.xlu0 %4252
      %v4254 = vsel %vm612, %v4218, 0.0
      %4255 = vadd.xlane.f32.xlu0 %v4254
      %v4256 = vpop.xlane.xlu0 %4255
      %v4257 = vsel %vm612, %v4219, 0.0
      %4258 = vadd.xlane.f32.xlu0 %v4257
      %v4259 = vpop.xlane.xlu0 %4258
      %v4260 = vsel %vm612, %v4220, 0.0
      %4261 = vadd.xlane.f32.xlu0 %v4260
      %v4262 = vpop.xlane.xlu0 %4261
      %v4263 = vsel %vm612, %v4221, 0.0
      %4264 = vadd.xlane.f32.xlu0 %v4263
      %v4265 = vpop.xlane.xlu0 %4264
      %v4266 = vsel %vm612, %v4222, 0.0
      %4267 = vadd.xlane.f32.xlu0 %v4266
      %v4268 = vpop.xlane.xlu0 %4267
      %v4269 = vsel %vm612, %v4223, 0.0
      %4270 = vadd.xlane.f32.xlu0 %v4269
      %v4271 = vpop.xlane.xlu0 %4270
      %v4272 = vsub.f32 %v615, %v4098
      %v4273 = vsub.f32 %v618, %v4101
      %v4274 = vsub.f32 %v621, %v4104
      %v4275 = vsub.f32 %v624, %v4107
      %v4276 = vsub.f32 %v627, %v4110
      %v4277 = vsub.f32 %v630, %v4113
      %v4278 = vsub.f32 %v633, %v4116
      %v4279 = vsub.f32 %v636, %v4119
      %v4280 = vsub.f32 %v639, %v4122
      %v4281 = vsub.f32 %v642, %v4125
      %v4282 = vsub.f32 %v645, %v4128
      %v4283 = vsub.f32 %v648, %v4131
      %v4284 = vsub.f32 %v651, %v4134
      %v4285 = vsub.f32 %v654, %v4137
      %v4286 = vsub.f32 %v657, %v4140
      %v4287 = vsub.f32 %v660, %v4143
      %v4288 = vsub.f32 %v680, %v4162
      %v4289 = vsub.f32 %v683, %v4165
      %v4290 = vsub.f32 %v686, %v4168
      %v4291 = vsub.f32 %v689, %v4171
      %v4292 = vsub.f32 %v692, %v4174
      %v4293 = vsub.f32 %v695, %v4177
      %v4294 = vsub.f32 %v698, %v4180
      %v4295 = vsub.f32 %v701, %v4183
      %v4296 = vsub.f32 %v704, %v4186
      %v4297 = vsub.f32 %v707, %v4189
      %v4298 = vsub.f32 %v710, %v4192
      %v4299 = vsub.f32 %v713, %v4195
      %v4300 = vsub.f32 %v716, %v4198
      %v4301 = vsub.f32 %v719, %v4201
      %v4302 = vsub.f32 %v722, %v4204
      %v4303 = vsub.f32 %v725, %v4207
      %v4304 = vsub.f32 %v745, %v4226
      %v4305 = vsub.f32 %v748, %v4229
      %v4306 = vsub.f32 %v751, %v4232
      %v4307 = vsub.f32 %v754, %v4235
      %v4308 = vsub.f32 %v757, %v4238
      %v4309 = vsub.f32 %v760, %v4241
      %v4310 = vsub.f32 %v763, %v4244
      %v4311 = vsub.f32 %v766, %v4247
      %v4312 = vsub.f32 %v769, %v4250
      %v4313 = vsub.f32 %v772, %v4253
      %v4314 = vsub.f32 %v775, %v4256
      %v4315 = vsub.f32 %v778, %v4259
      %v4316 = vsub.f32 %v781, %v4262
      %v4317 = vsub.f32 %v784, %v4265
      %v4318 = vsub.f32 %v787, %v4268
      %v4319 = vsub.f32 %v790, %v4271
      %v4320 = vmul.f32 %v4272, %v4272
      %v4321 = vmul.f32 %v4273, %v4273
      %v4322 = vmul.f32 %v4274, %v4274
      %v4323 = vmul.f32 %v4275, %v4275
      %v4324 = vmul.f32 %v4276, %v4276
      %v4325 = vmul.f32 %v4277, %v4277
      %v4326 = vmul.f32 %v4278, %v4278
      %v4327 = vmul.f32 %v4279, %v4279
      %v4328 = vmul.f32 %v4280, %v4280
      %v4329 = vmul.f32 %v4281, %v4281
      %v4330 = vmul.f32 %v4282, %v4282
      %v4331 = vmul.f32 %v4283, %v4283
      %v4332 = vmul.f32 %v4284, %v4284
      %v4333 = vmul.f32 %v4285, %v4285
      %v4334 = vmul.f32 %v4286, %v4286
      %v4335 = vmul.f32 %v4287, %v4287
      %v4336 = vmul.f32 %v4288, %v4288
      %v4337 = vmul.f32 %v4289, %v4289
      %v4338 = vmul.f32 %v4290, %v4290
      %v4339 = vmul.f32 %v4291, %v4291
      %v4340 = vmul.f32 %v4292, %v4292
      %v4341 = vmul.f32 %v4293, %v4293
      %v4342 = vmul.f32 %v4294, %v4294
      %v4343 = vmul.f32 %v4295, %v4295
      %v4344 = vmul.f32 %v4296, %v4296
      %v4345 = vmul.f32 %v4297, %v4297
      %v4346 = vmul.f32 %v4298, %v4298
      %v4347 = vmul.f32 %v4299, %v4299
      %v4348 = vmul.f32 %v4300, %v4300
      %v4349 = vmul.f32 %v4301, %v4301
      %v4350 = vmul.f32 %v4302, %v4302
      %v4351 = vmul.f32 %v4303, %v4303
      %v4352 = vadd.f32 %v4320, %v4336
      %v4353 = vadd.f32 %v4321, %v4337
      %v4354 = vadd.f32 %v4322, %v4338
      %v4355 = vadd.f32 %v4323, %v4339
      %v4356 = vadd.f32 %v4324, %v4340
      %v4357 = vadd.f32 %v4325, %v4341
      %v4358 = vadd.f32 %v4326, %v4342
      %v4359 = vadd.f32 %v4327, %v4343
      %v4360 = vadd.f32 %v4328, %v4344
      %v4361 = vadd.f32 %v4329, %v4345
      %v4362 = vadd.f32 %v4330, %v4346
      %v4363 = vadd.f32 %v4331, %v4347
      %v4364 = vadd.f32 %v4332, %v4348
      %v4365 = vadd.f32 %v4333, %v4349
      %v4366 = vadd.f32 %v4334, %v4350
      %v4367 = vadd.f32 %v4335, %v4351
      %v4368 = vmul.f32 %v4304, %v4304
      %v4369 = vmul.f32 %v4305, %v4305
      %v4370 = vmul.f32 %v4306, %v4306
      %v4371 = vmul.f32 %v4307, %v4307
      %v4372 = vmul.f32 %v4308, %v4308
      %v4373 = vmul.f32 %v4309, %v4309
      %v4374 = vmul.f32 %v4310, %v4310
      %v4375 = vmul.f32 %v4311, %v4311
      %v4376 = vmul.f32 %v4312, %v4312
      %v4377 = vmul.f32 %v4313, %v4313
      %v4378 = vmul.f32 %v4314, %v4314
      %v4379 = vmul.f32 %v4315, %v4315
      %v4380 = vmul.f32 %v4316, %v4316
      %v4381 = vmul.f32 %v4317, %v4317
      %v4382 = vmul.f32 %v4318, %v4318
      %v4383 = vmul.f32 %v4319, %v4319
      %v4384 = vadd.f32 %v4352, %v4368
      %v4385 = vadd.f32 %v4353, %v4369
      %v4386 = vadd.f32 %v4354, %v4370
      %v4387 = vadd.f32 %v4355, %v4371
      %v4388 = vadd.f32 %v4356, %v4372
      %v4389 = vadd.f32 %v4357, %v4373
      %v4390 = vadd.f32 %v4358, %v4374
      %v4391 = vadd.f32 %v4359, %v4375
      %v4392 = vadd.f32 %v4360, %v4376
      %v4393 = vadd.f32 %v4361, %v4377
      %v4394 = vadd.f32 %v4362, %v4378
      %v4395 = vadd.f32 %v4363, %v4379
      %v4396 = vadd.f32 %v4364, %v4380
      %v4397 = vadd.f32 %v4365, %v4381
      %v4398 = vadd.f32 %v4366, %v4382
      %v4399 = vadd.f32 %v4367, %v4383
      %v4400 = vrsqrt.pop %v4384
      %v4401 = vmul.f32 %v4384, %v4400
      %vm4402 = vcmp.eq.f32.partialorder %v4384, inf
      %v4403 = vsel %vm4402, %v4384, %v4401
      %vm4404 = vcmp.eq.f32.partialorder %v4384, 0.0
      %v4405 = vand.u32 %v4384, 2147483648
      %v4406 = vsel %vm4404, %v4405, %v4403
      %v4407 = vrsqrt.pop %v4385
      %v4408 = vmul.f32 %v4385, %v4407
      %vm4409 = vcmp.eq.f32.partialorder %v4385, inf
      %v4410 = vsel %vm4409, %v4385, %v4408
      %vm4411 = vcmp.eq.f32.partialorder %v4385, 0.0
      %v4412 = vand.u32 %v4385, 2147483648
      %v4413 = vsel %vm4411, %v4412, %v4410
      %v4414 = vrsqrt.pop %v4386
      %v4415 = vmul.f32 %v4386, %v4414
      %vm4416 = vcmp.eq.f32.partialorder %v4386, inf
      %v4417 = vsel %vm4416, %v4386, %v4415
      %vm4418 = vcmp.eq.f32.partialorder %v4386, 0.0
      %v4419 = vand.u32 %v4386, 2147483648
      %v4420 = vsel %vm4418, %v4419, %v4417
      %v4421 = vrsqrt.pop %v4387
      %v4422 = vmul.f32 %v4387, %v4421
      %vm4423 = vcmp.eq.f32.partialorder %v4387, inf
      %v4424 = vsel %vm4423, %v4387, %v4422
      %vm4425 = vcmp.eq.f32.partialorder %v4387, 0.0
      %v4426 = vand.u32 %v4387, 2147483648
      %v4427 = vsel %vm4425, %v4426, %v4424
      %v4428 = vrsqrt.pop %v4388
      %v4429 = vmul.f32 %v4388, %v4428
      %vm4430 = vcmp.eq.f32.partialorder %v4388, inf
      %v4431 = vsel %vm4430, %v4388, %v4429
      %vm4432 = vcmp.eq.f32.partialorder %v4388, 0.0
      %v4433 = vand.u32 %v4388, 2147483648
      %v4434 = vsel %vm4432, %v4433, %v4431
      %v4435 = vrsqrt.pop %v4389
      %v4436 = vmul.f32 %v4389, %v4435
      %vm4437 = vcmp.eq.f32.partialorder %v4389, inf
      %v4438 = vsel %vm4437, %v4389, %v4436
      %vm4439 = vcmp.eq.f32.partialorder %v4389, 0.0
      %v4440 = vand.u32 %v4389, 2147483648
      %v4441 = vsel %vm4439, %v4440, %v4438
      %v4442 = vrsqrt.pop %v4390
      %v4443 = vmul.f32 %v4390, %v4442
      %vm4444 = vcmp.eq.f32.partialorder %v4390, inf
      %v4445 = vsel %vm4444, %v4390, %v4443
      %vm4446 = vcmp.eq.f32.partialorder %v4390, 0.0
      %v4447 = vand.u32 %v4390, 2147483648
      %v4448 = vsel %vm4446, %v4447, %v4445
      %v4449 = vrsqrt.pop %v4391
      %v4450 = vmul.f32 %v4391, %v4449
      %vm4451 = vcmp.eq.f32.partialorder %v4391, inf
      %v4452 = vsel %vm4451, %v4391, %v4450
      %vm4453 = vcmp.eq.f32.partialorder %v4391, 0.0
      %v4454 = vand.u32 %v4391, 2147483648
      %v4455 = vsel %vm4453, %v4454, %v4452
      %v4456 = vrsqrt.pop %v4392
      %v4457 = vmul.f32 %v4392, %v4456
      %vm4458 = vcmp.eq.f32.partialorder %v4392, inf
      %v4459 = vsel %vm4458, %v4392, %v4457
      %vm4460 = vcmp.eq.f32.partialorder %v4392, 0.0
      %v4461 = vand.u32 %v4392, 2147483648
      %v4462 = vsel %vm4460, %v4461, %v4459
      %v4463 = vrsqrt.pop %v4393
      %v4464 = vmul.f32 %v4393, %v4463
      %vm4465 = vcmp.eq.f32.partialorder %v4393, inf
      %v4466 = vsel %vm4465, %v4393, %v4464
      %vm4467 = vcmp.eq.f32.partialorder %v4393, 0.0
      %v4468 = vand.u32 %v4393, 2147483648
      %v4469 = vsel %vm4467, %v4468, %v4466
      %v4470 = vrsqrt.pop %v4394
      %v4471 = vmul.f32 %v4394, %v4470
      %vm4472 = vcmp.eq.f32.partialorder %v4394, inf
      %v4473 = vsel %vm4472, %v4394, %v4471
      %vm4474 = vcmp.eq.f32.partialorder %v4394, 0.0
      %v4475 = vand.u32 %v4394, 2147483648
      %v4476 = vsel %vm4474, %v4475, %v4473
      %v4477 = vrsqrt.pop %v4395
      %v4478 = vmul.f32 %v4395, %v4477
      %vm4479 = vcmp.eq.f32.partialorder %v4395, inf
      %v4480 = vsel %vm4479, %v4395, %v4478
      %vm4481 = vcmp.eq.f32.partialorder %v4395, 0.0
      %v4482 = vand.u32 %v4395, 2147483648
      %v4483 = vsel %vm4481, %v4482, %v4480
      %v4484 = vrsqrt.pop %v4396
      %v4485 = vmul.f32 %v4396, %v4484
      %vm4486 = vcmp.eq.f32.partialorder %v4396, inf
      %v4487 = vsel %vm4486, %v4396, %v4485
      %vm4488 = vcmp.eq.f32.partialorder %v4396, 0.0
      %v4489 = vand.u32 %v4396, 2147483648
      %v4490 = vsel %vm4488, %v4489, %v4487
      %v4491 = vrsqrt.pop %v4397
      %v4492 = vmul.f32 %v4397, %v4491
      %vm4493 = vcmp.eq.f32.partialorder %v4397, inf
      %v4494 = vsel %vm4493, %v4397, %v4492
      %vm4495 = vcmp.eq.f32.partialorder %v4397, 0.0
      %v4496 = vand.u32 %v4397, 2147483648
      %v4497 = vsel %vm4495, %v4496, %v4494
      %v4498 = vrsqrt.pop %v4398
      %v4499 = vmul.f32 %v4398, %v4498
      %vm4500 = vcmp.eq.f32.partialorder %v4398, inf
      %v4501 = vsel %vm4500, %v4398, %v4499
      %vm4502 = vcmp.eq.f32.partialorder %v4398, 0.0
      %v4503 = vand.u32 %v4398, 2147483648
      %v4504 = vsel %vm4502, %v4503, %v4501
      %v4505 = vrsqrt.pop %v4399
      %v4506 = vmul.f32 %v4399, %v4505
      %vm4507 = vcmp.eq.f32.partialorder %v4399, inf
      %v4508 = vsel %vm4507, %v4399, %v4506
      %vm4509 = vcmp.eq.f32.partialorder %v4399, 0.0
      %v4510 = vand.u32 %v4399, 2147483648
      %v4511 = vsel %vm4509, %v4510, %v4508
      %vm4512 = vcmp.eq.s32.totalorder %v577, 30
      %v4513 = vsel %vm4512, %v4406, %v3631
      %v4514 = vsel %vm4512, %v4413, %v3632
      %v4515 = vsel %vm4512, %v4420, %v3633
      %v4516 = vsel %vm4512, %v4427, %v3634
      %v4517 = vsel %vm4512, %v4434, %v3635
      %v4518 = vsel %vm4512, %v4441, %v3636
      %v4519 = vsel %vm4512, %v4448, %v3637
      %v4520 = vsel %vm4512, %v4455, %v3638
      %v4521 = vsel %vm4512, %v4462, %v3639
      %v4522 = vsel %vm4512, %v4469, %v3640
      %v4523 = vsel %vm4512, %v4476, %v3641
      %v4524 = vsel %vm4512, %v4483, %v3642
      %v4525 = vsel %vm4512, %v4490, %v3643
      %v4526 = vsel %vm4512, %v4497, %v3644
      %v4527 = vsel %vm4512, %v4504, %v3645
      %v4528 = vsel %vm4512, %v4511, %v3646
      %vm4529 = vcmp.eq.s32.totalorder %v577, 31
      %v4530 = vsel %vm4529, %v4272, %v4513
      %v4531 = vsel %vm4529, %v4273, %v4514
      %v4532 = vsel %vm4529, %v4274, %v4515
      %v4533 = vsel %vm4529, %v4275, %v4516
      %v4534 = vsel %vm4529, %v4276, %v4517
      %v4535 = vsel %vm4529, %v4277, %v4518
      %v4536 = vsel %vm4529, %v4278, %v4519
      %v4537 = vsel %vm4529, %v4279, %v4520
      %v4538 = vsel %vm4529, %v4280, %v4521
      %v4539 = vsel %vm4529, %v4281, %v4522
      %v4540 = vsel %vm4529, %v4282, %v4523
      %v4541 = vsel %vm4529, %v4283, %v4524
      %v4542 = vsel %vm4529, %v4284, %v4525
      %v4543 = vsel %vm4529, %v4285, %v4526
      %v4544 = vsel %vm4529, %v4286, %v4527
      %v4545 = vsel %vm4529, %v4287, %v4528
      %vm4546 = vcmp.eq.s32.totalorder %v577, 32
      %v4547 = vsel %vm4546, %v4288, %v4530
      %v4548 = vsel %vm4546, %v4289, %v4531
      %v4549 = vsel %vm4546, %v4290, %v4532
      %v4550 = vsel %vm4546, %v4291, %v4533
      %v4551 = vsel %vm4546, %v4292, %v4534
      %v4552 = vsel %vm4546, %v4293, %v4535
      %v4553 = vsel %vm4546, %v4294, %v4536
      %v4554 = vsel %vm4546, %v4295, %v4537
      %v4555 = vsel %vm4546, %v4296, %v4538
      %v4556 = vsel %vm4546, %v4297, %v4539
      %v4557 = vsel %vm4546, %v4298, %v4540
      %v4558 = vsel %vm4546, %v4299, %v4541
      %v4559 = vsel %vm4546, %v4300, %v4542
      %v4560 = vsel %vm4546, %v4301, %v4543
      %v4561 = vsel %vm4546, %v4302, %v4544
      %v4562 = vsel %vm4546, %v4303, %v4545
      %vm4563 = vcmp.eq.s32.totalorder %v577, 33
      %v4564 = vsel %vm4563, %v4304, %v4547
      %v4565 = vsel %vm4563, %v4305, %v4548
      %v4566 = vsel %vm4563, %v4306, %v4549
      %v4567 = vsel %vm4563, %v4307, %v4550
      %v4568 = vsel %vm4563, %v4308, %v4551
      %v4569 = vsel %vm4563, %v4309, %v4552
      %v4570 = vsel %vm4563, %v4310, %v4553
      %v4571 = vsel %vm4563, %v4311, %v4554
      %v4572 = vsel %vm4563, %v4312, %v4555
      %v4573 = vsel %vm4563, %v4313, %v4556
      %v4574 = vsel %vm4563, %v4314, %v4557
      %v4575 = vsel %vm4563, %v4315, %v4558
      %v4576 = vsel %vm4563, %v4316, %v4559
      %v4577 = vsel %vm4563, %v4317, %v4560
      %v4578 = vsel %vm4563, %v4318, %v4561
      %v4579 = vsel %vm4563, %v4319, %v4562
      %vm4580 = vcmp.eq.s32.totalorder %v577, 37
      %v4581 = vsel %vm4580, %v4098, %v4564
      %v4582 = vsel %vm4580, %v4101, %v4565
      %v4583 = vsel %vm4580, %v4104, %v4566
      %v4584 = vsel %vm4580, %v4107, %v4567
      %v4585 = vsel %vm4580, %v4110, %v4568
      %v4586 = vsel %vm4580, %v4113, %v4569
      %v4587 = vsel %vm4580, %v4116, %v4570
      %v4588 = vsel %vm4580, %v4119, %v4571
      %v4589 = vsel %vm4580, %v4122, %v4572
      %v4590 = vsel %vm4580, %v4125, %v4573
      %v4591 = vsel %vm4580, %v4128, %v4574
      %v4592 = vsel %vm4580, %v4131, %v4575
      %v4593 = vsel %vm4580, %v4134, %v4576
      %v4594 = vsel %vm4580, %v4137, %v4577
      %v4595 = vsel %vm4580, %v4140, %v4578
      %v4596 = vsel %vm4580, %v4143, %v4579
      %vm4597 = vcmp.eq.s32.totalorder %v577, 38
      %v4598 = vsel %vm4597, %v4162, %v4581
      %v4599 = vsel %vm4597, %v4165, %v4582
      %v4600 = vsel %vm4597, %v4168, %v4583
      %v4601 = vsel %vm4597, %v4171, %v4584
      %v4602 = vsel %vm4597, %v4174, %v4585
      %v4603 = vsel %vm4597, %v4177, %v4586
      %v4604 = vsel %vm4597, %v4180, %v4587
      %v4605 = vsel %vm4597, %v4183, %v4588
      %v4606 = vsel %vm4597, %v4186, %v4589
      %v4607 = vsel %vm4597, %v4189, %v4590
      %v4608 = vsel %vm4597, %v4192, %v4591
      %v4609 = vsel %vm4597, %v4195, %v4592
      %v4610 = vsel %vm4597, %v4198, %v4593
      %v4611 = vsel %vm4597, %v4201, %v4594
      %v4612 = vsel %vm4597, %v4204, %v4595
      %v4613 = vsel %vm4597, %v4207, %v4596
      %vm4614 = vcmp.eq.s32.totalorder %v577, 39
      %v4615 = vsel %vm4614, %v4226, %v4598
      %v4616 = vsel %vm4614, %v4229, %v4599
      %v4617 = vsel %vm4614, %v4232, %v4600
      %v4618 = vsel %vm4614, %v4235, %v4601
      %v4619 = vsel %vm4614, %v4238, %v4602
      %v4620 = vsel %vm4614, %v4241, %v4603
      %v4621 = vsel %vm4614, %v4244, %v4604
      %v4622 = vsel %vm4614, %v4247, %v4605
      %v4623 = vsel %vm4614, %v4250, %v4606
      %v4624 = vsel %vm4614, %v4253, %v4607
      %v4625 = vsel %vm4614, %v4256, %v4608
      %v4626 = vsel %vm4614, %v4259, %v4609
      %v4627 = vsel %vm4614, %v4262, %v4610
      %v4628 = vsel %vm4614, %v4265, %v4611
      %v4629 = vsel %vm4614, %v4268, %v4612
      %v4630 = vsel %vm4614, %v4271, %v4613
      %v4631 = vsel %vm3887, 3.4028235e+38, %v3775
      %v4632 = vsel %vm3888, 3.4028235e+38, %v3776
      %v4633 = vsel %vm3889, 3.4028235e+38, %v3777
      %v4634 = vsel %vm3890, 3.4028235e+38, %v3778
      %v4635 = vsel %vm3891, 3.4028235e+38, %v3779
      %v4636 = vsel %vm3892, 3.4028235e+38, %v3780
      %v4637 = vsel %vm3893, 3.4028235e+38, %v3781
      %v4638 = vsel %vm3894, 3.4028235e+38, %v3782
      %v4639 = vsel %vm3895, 3.4028235e+38, %v3783
      %v4640 = vsel %vm3896, 3.4028235e+38, %v3784
      %v4641 = vsel %vm3897, 3.4028235e+38, %v3785
      %v4642 = vsel %vm3898, 3.4028235e+38, %v3786
      %v4643 = vsel %vm3899, 3.4028235e+38, %v3787
      %v4644 = vsel %vm3900, 3.4028235e+38, %v3788
      %v4645 = vsel %vm3901, 3.4028235e+38, %v3789
      %v4646 = vsel %vm3902, 3.4028235e+38, %v3790
      %4647 = vmin.xlane.f32.xlu0 %v4631
      %v4648 = vpop.xlane.xlu0 %4647
      %4649 = vmin.xlane.f32.xlu0 %v4632
      %v4650 = vpop.xlane.xlu0 %4649
      %4651 = vmin.xlane.f32.xlu0 %v4633
      %v4652 = vpop.xlane.xlu0 %4651
      %4653 = vmin.xlane.f32.xlu0 %v4634
      %v4654 = vpop.xlane.xlu0 %4653
      %4655 = vmin.xlane.f32.xlu0 %v4635
      %v4656 = vpop.xlane.xlu0 %4655
      %4657 = vmin.xlane.f32.xlu0 %v4636
      %v4658 = vpop.xlane.xlu0 %4657
      %4659 = vmin.xlane.f32.xlu0 %v4637
      %v4660 = vpop.xlane.xlu0 %4659
      %4661 = vmin.xlane.f32.xlu0 %v4638
      %v4662 = vpop.xlane.xlu0 %4661
      %4663 = vmin.xlane.f32.xlu0 %v4639
      %v4664 = vpop.xlane.xlu0 %4663
      %4665 = vmin.xlane.f32.xlu0 %v4640
      %v4666 = vpop.xlane.xlu0 %4665
      %4667 = vmin.xlane.f32.xlu0 %v4641
      %v4668 = vpop.xlane.xlu0 %4667
      %4669 = vmin.xlane.f32.xlu0 %v4642
      %v4670 = vpop.xlane.xlu0 %4669
      %4671 = vmin.xlane.f32.xlu0 %v4643
      %v4672 = vpop.xlane.xlu0 %4671
      %4673 = vmin.xlane.f32.xlu0 %v4644
      %v4674 = vpop.xlane.xlu0 %4673
      %4675 = vmin.xlane.f32.xlu0 %v4645
      %v4676 = vpop.xlane.xlu0 %4675
      %4677 = vmin.xlane.f32.xlu0 %v4646
      %v4678 = vpop.xlane.xlu0 %4677
      %vm4679 = vcmp.eq.f32.partialorder %v4631, %v4648
      %vm4680 = vcmp.eq.f32.partialorder %v4632, %v4650
      %vm4681 = vcmp.eq.f32.partialorder %v4633, %v4652
      %vm4682 = vcmp.eq.f32.partialorder %v4634, %v4654
      %vm4683 = vcmp.eq.f32.partialorder %v4635, %v4656
      %vm4684 = vcmp.eq.f32.partialorder %v4636, %v4658
      %vm4685 = vcmp.eq.f32.partialorder %v4637, %v4660
      %vm4686 = vcmp.eq.f32.partialorder %v4638, %v4662
      %vm4687 = vcmp.eq.f32.partialorder %v4639, %v4664
      %vm4688 = vcmp.eq.f32.partialorder %v4640, %v4666
      %vm4689 = vcmp.eq.f32.partialorder %v4641, %v4668
      %vm4690 = vcmp.eq.f32.partialorder %v4642, %v4670
      %vm4691 = vcmp.eq.f32.partialorder %v4643, %v4672
      %vm4692 = vcmp.eq.f32.partialorder %v4644, %v4674
      %vm4693 = vcmp.eq.f32.partialorder %v4645, %v4676
      %vm4694 = vcmp.eq.f32.partialorder %v4646, %v4678
      %v4695 = vsel %vm4679, %v578, 128.0
      %v4696 = vsel %vm4680, %v578, 128.0
      %v4697 = vsel %vm4681, %v578, 128.0
      %v4698 = vsel %vm4682, %v578, 128.0
      %v4699 = vsel %vm4683, %v578, 128.0
      %v4700 = vsel %vm4684, %v578, 128.0
      %v4701 = vsel %vm4685, %v578, 128.0
      %v4702 = vsel %vm4686, %v578, 128.0
      %v4703 = vsel %vm4687, %v578, 128.0
      %v4704 = vsel %vm4688, %v578, 128.0
      %v4705 = vsel %vm4689, %v578, 128.0
      %v4706 = vsel %vm4690, %v578, 128.0
      %v4707 = vsel %vm4691, %v578, 128.0
      %v4708 = vsel %vm4692, %v578, 128.0
      %v4709 = vsel %vm4693, %v578, 128.0
      %v4710 = vsel %vm4694, %v578, 128.0
      %4711 = vmin.xlane.f32.xlu0 %v4695
      %v4712 = vpop.xlane.xlu0 %4711
      %4713 = vmin.xlane.f32.xlu0 %v4696
      %v4714 = vpop.xlane.xlu0 %4713
      %4715 = vmin.xlane.f32.xlu0 %v4697
      %v4716 = vpop.xlane.xlu0 %4715
      %4717 = vmin.xlane.f32.xlu0 %v4698
      %v4718 = vpop.xlane.xlu0 %4717
      %4719 = vmin.xlane.f32.xlu0 %v4699
      %v4720 = vpop.xlane.xlu0 %4719
      %4721 = vmin.xlane.f32.xlu0 %v4700
      %v4722 = vpop.xlane.xlu0 %4721
      %4723 = vmin.xlane.f32.xlu0 %v4701
      %v4724 = vpop.xlane.xlu0 %4723
      %4725 = vmin.xlane.f32.xlu0 %v4702
      %v4726 = vpop.xlane.xlu0 %4725
      %4727 = vmin.xlane.f32.xlu0 %v4703
      %v4728 = vpop.xlane.xlu0 %4727
      %4729 = vmin.xlane.f32.xlu0 %v4704
      %v4730 = vpop.xlane.xlu0 %4729
      %4731 = vmin.xlane.f32.xlu0 %v4705
      %v4732 = vpop.xlane.xlu0 %4731
      %4733 = vmin.xlane.f32.xlu0 %v4706
      %v4734 = vpop.xlane.xlu0 %4733
      %4735 = vmin.xlane.f32.xlu0 %v4707
      %v4736 = vpop.xlane.xlu0 %4735
      %4737 = vmin.xlane.f32.xlu0 %v4708
      %v4738 = vpop.xlane.xlu0 %4737
      %4739 = vmin.xlane.f32.xlu0 %v4709
      %v4740 = vpop.xlane.xlu0 %4739
      %4741 = vmin.xlane.f32.xlu0 %v4710
      %v4742 = vpop.xlane.xlu0 %4741
      %vm4743 = vcmp.eq.f32.partialorder %v578, %v4712
      %vm4744 = vcmp.eq.f32.partialorder %v578, %v4714
      %vm4745 = vcmp.eq.f32.partialorder %v578, %v4716
      %vm4746 = vcmp.eq.f32.partialorder %v578, %v4718
      %vm4747 = vcmp.eq.f32.partialorder %v578, %v4720
      %vm4748 = vcmp.eq.f32.partialorder %v578, %v4722
      %vm4749 = vcmp.eq.f32.partialorder %v578, %v4724
      %vm4750 = vcmp.eq.f32.partialorder %v578, %v4726
      %vm4751 = vcmp.eq.f32.partialorder %v578, %v4728
      %vm4752 = vcmp.eq.f32.partialorder %v578, %v4730
      %vm4753 = vcmp.eq.f32.partialorder %v578, %v4732
      %vm4754 = vcmp.eq.f32.partialorder %v578, %v4734
      %vm4755 = vcmp.eq.f32.partialorder %v578, %v4736
      %vm4756 = vcmp.eq.f32.partialorder %v578, %v4738
      %vm4757 = vcmp.eq.f32.partialorder %v578, %v4740
      %vm4758 = vcmp.eq.f32.partialorder %v578, %v4742
      %v4759 = vsel %vm4743, 3.4028235e+38, %v4631
      %v4760 = vsel %vm4744, 3.4028235e+38, %v4632
      %v4761 = vsel %vm4745, 3.4028235e+38, %v4633
      %v4762 = vsel %vm4746, 3.4028235e+38, %v4634
      %v4763 = vsel %vm4747, 3.4028235e+38, %v4635
      %v4764 = vsel %vm4748, 3.4028235e+38, %v4636
      %v4765 = vsel %vm4749, 3.4028235e+38, %v4637
      %v4766 = vsel %vm4750, 3.4028235e+38, %v4638
      %v4767 = vsel %vm4751, 3.4028235e+38, %v4639
      %v4768 = vsel %vm4752, 3.4028235e+38, %v4640
      %v4769 = vsel %vm4753, 3.4028235e+38, %v4641
      %v4770 = vsel %vm4754, 3.4028235e+38, %v4642
      %v4771 = vsel %vm4755, 3.4028235e+38, %v4643
      %v4772 = vsel %vm4756, 3.4028235e+38, %v4644
      %v4773 = vsel %vm4757, 3.4028235e+38, %v4645
      %v4774 = vsel %vm4758, 3.4028235e+38, %v4646
      %4775 = vmin.xlane.f32.xlu0 %v4759
      %v4776 = vpop.xlane.xlu0 %4775
      %4777 = vmin.xlane.f32.xlu0 %v4760
      %v4778 = vpop.xlane.xlu0 %4777
      %4779 = vmin.xlane.f32.xlu0 %v4761
      %v4780 = vpop.xlane.xlu0 %4779
      %4781 = vmin.xlane.f32.xlu0 %v4762
      %v4782 = vpop.xlane.xlu0 %4781
      %4783 = vmin.xlane.f32.xlu0 %v4763
      %v4784 = vpop.xlane.xlu0 %4783
      %4785 = vmin.xlane.f32.xlu0 %v4764
      %v4786 = vpop.xlane.xlu0 %4785
      %4787 = vmin.xlane.f32.xlu0 %v4765
      %v4788 = vpop.xlane.xlu0 %4787
      %4789 = vmin.xlane.f32.xlu0 %v4766
      %v4790 = vpop.xlane.xlu0 %4789
      %4791 = vmin.xlane.f32.xlu0 %v4767
      %v4792 = vpop.xlane.xlu0 %4791
      %4793 = vmin.xlane.f32.xlu0 %v4768
      %v4794 = vpop.xlane.xlu0 %4793
      %4795 = vmin.xlane.f32.xlu0 %v4769
      %v4796 = vpop.xlane.xlu0 %4795
      %4797 = vmin.xlane.f32.xlu0 %v4770
      %v4798 = vpop.xlane.xlu0 %4797
      %4799 = vmin.xlane.f32.xlu0 %v4771
      %v4800 = vpop.xlane.xlu0 %4799
      %4801 = vmin.xlane.f32.xlu0 %v4772
      %v4802 = vpop.xlane.xlu0 %4801
      %4803 = vmin.xlane.f32.xlu0 %v4773
      %v4804 = vpop.xlane.xlu0 %4803
      %4805 = vmin.xlane.f32.xlu0 %v4774
      %v4806 = vpop.xlane.xlu0 %4805
      %vm4807 = vcmp.eq.f32.partialorder %v4759, %v4776
      %vm4808 = vcmp.eq.f32.partialorder %v4760, %v4778
      %vm4809 = vcmp.eq.f32.partialorder %v4761, %v4780
      %vm4810 = vcmp.eq.f32.partialorder %v4762, %v4782
      %vm4811 = vcmp.eq.f32.partialorder %v4763, %v4784
      %vm4812 = vcmp.eq.f32.partialorder %v4764, %v4786
      %vm4813 = vcmp.eq.f32.partialorder %v4765, %v4788
      %vm4814 = vcmp.eq.f32.partialorder %v4766, %v4790
      %vm4815 = vcmp.eq.f32.partialorder %v4767, %v4792
      %vm4816 = vcmp.eq.f32.partialorder %v4768, %v4794
      %vm4817 = vcmp.eq.f32.partialorder %v4769, %v4796
      %vm4818 = vcmp.eq.f32.partialorder %v4770, %v4798
      %vm4819 = vcmp.eq.f32.partialorder %v4771, %v4800
      %vm4820 = vcmp.eq.f32.partialorder %v4772, %v4802
      %vm4821 = vcmp.eq.f32.partialorder %v4773, %v4804
      %vm4822 = vcmp.eq.f32.partialorder %v4774, %v4806
      %v4823 = vsel %vm4807, %v578, 128.0
      %v4824 = vsel %vm4808, %v578, 128.0
      %v4825 = vsel %vm4809, %v578, 128.0
      %v4826 = vsel %vm4810, %v578, 128.0
      %v4827 = vsel %vm4811, %v578, 128.0
      %v4828 = vsel %vm4812, %v578, 128.0
      %v4829 = vsel %vm4813, %v578, 128.0
      %v4830 = vsel %vm4814, %v578, 128.0
      %v4831 = vsel %vm4815, %v578, 128.0
      %v4832 = vsel %vm4816, %v578, 128.0
      %v4833 = vsel %vm4817, %v578, 128.0
      %v4834 = vsel %vm4818, %v578, 128.0
      %v4835 = vsel %vm4819, %v578, 128.0
      %v4836 = vsel %vm4820, %v578, 128.0
      %v4837 = vsel %vm4821, %v578, 128.0
      %v4838 = vsel %vm4822, %v578, 128.0
      %4839 = vmin.xlane.f32.xlu0 %v4823
      %v4840 = vpop.xlane.xlu0 %4839
      %4841 = vmin.xlane.f32.xlu0 %v4824
      %v4842 = vpop.xlane.xlu0 %4841
      %4843 = vmin.xlane.f32.xlu0 %v4825
      %v4844 = vpop.xlane.xlu0 %4843
      %4845 = vmin.xlane.f32.xlu0 %v4826
      %v4846 = vpop.xlane.xlu0 %4845
      %4847 = vmin.xlane.f32.xlu0 %v4827
      %v4848 = vpop.xlane.xlu0 %4847
      %4849 = vmin.xlane.f32.xlu0 %v4828
      %v4850 = vpop.xlane.xlu0 %4849
      %4851 = vmin.xlane.f32.xlu0 %v4829
      %v4852 = vpop.xlane.xlu0 %4851
      %4853 = vmin.xlane.f32.xlu0 %v4830
      %v4854 = vpop.xlane.xlu0 %4853
      %4855 = vmin.xlane.f32.xlu0 %v4831
      %v4856 = vpop.xlane.xlu0 %4855
      %4857 = vmin.xlane.f32.xlu0 %v4832
      %v4858 = vpop.xlane.xlu0 %4857
      %4859 = vmin.xlane.f32.xlu0 %v4833
      %v4860 = vpop.xlane.xlu0 %4859
      %4861 = vmin.xlane.f32.xlu0 %v4834
      %v4862 = vpop.xlane.xlu0 %4861
      %4863 = vmin.xlane.f32.xlu0 %v4835
      %v4864 = vpop.xlane.xlu0 %4863
      %4865 = vmin.xlane.f32.xlu0 %v4836
      %v4866 = vpop.xlane.xlu0 %4865
      %4867 = vmin.xlane.f32.xlu0 %v4837
      %v4868 = vpop.xlane.xlu0 %4867
      %4869 = vmin.xlane.f32.xlu0 %v4838
      %v4870 = vpop.xlane.xlu0 %4869
      %vm4871 = vcmp.eq.f32.partialorder %v578, %v4840
      %vm4872 = vcmp.eq.f32.partialorder %v578, %v4842
      %vm4873 = vcmp.eq.f32.partialorder %v578, %v4844
      %vm4874 = vcmp.eq.f32.partialorder %v578, %v4846
      %vm4875 = vcmp.eq.f32.partialorder %v578, %v4848
      %vm4876 = vcmp.eq.f32.partialorder %v578, %v4850
      %vm4877 = vcmp.eq.f32.partialorder %v578, %v4852
      %vm4878 = vcmp.eq.f32.partialorder %v578, %v4854
      %vm4879 = vcmp.eq.f32.partialorder %v578, %v4856
      %vm4880 = vcmp.eq.f32.partialorder %v578, %v4858
      %vm4881 = vcmp.eq.f32.partialorder %v578, %v4860
      %vm4882 = vcmp.eq.f32.partialorder %v578, %v4862
      %vm4883 = vcmp.eq.f32.partialorder %v578, %v4864
      %vm4884 = vcmp.eq.f32.partialorder %v578, %v4866
      %vm4885 = vcmp.eq.f32.partialorder %v578, %v4868
      %vm4886 = vcmp.eq.f32.partialorder %v578, %v4870
      %v4887 = vsel %vm4871, 1, 0
      %v4888 = vsel %vm4872, 1, 0
      %v4889 = vsel %vm4873, 1, 0
      %v4890 = vsel %vm4874, 1, 0
      %v4891 = vsel %vm4875, 1, 0
      %v4892 = vsel %vm4876, 1, 0
      %v4893 = vsel %vm4877, 1, 0
      %v4894 = vsel %vm4878, 1, 0
      %v4895 = vsel %vm4879, 1, 0
      %v4896 = vsel %vm4880, 1, 0
      %v4897 = vsel %vm4881, 1, 0
      %v4898 = vsel %vm4882, 1, 0
      %v4899 = vsel %vm4883, 1, 0
      %v4900 = vsel %vm4884, 1, 0
      %v4901 = vsel %vm4885, 1, 0
      %v4902 = vsel %vm4886, 1, 0
      %v4903 = vcvt.s32.f32 %v4887
      %v4904 = vcvt.s32.f32 %v4888
      %v4905 = vcvt.s32.f32 %v4889
      %v4906 = vcvt.s32.f32 %v4890
      %v4907 = vcvt.s32.f32 %v4891
      %v4908 = vcvt.s32.f32 %v4892
      %v4909 = vcvt.s32.f32 %v4893
      %v4910 = vcvt.s32.f32 %v4894
      %v4911 = vcvt.s32.f32 %v4895
      %v4912 = vcvt.s32.f32 %v4896
      %v4913 = vcvt.s32.f32 %v4897
      %v4914 = vcvt.s32.f32 %v4898
      %v4915 = vcvt.s32.f32 %v4899
      %v4916 = vcvt.s32.f32 %v4900
      %v4917 = vcvt.s32.f32 %v4901
      %v4918 = vcvt.s32.f32 %v4902
      %4919 = vmatprep.subr.mxu0 0.0
      %4920 = vmatpush1.msra.mxu0 %v245
      %4921 = vmatprep.subr.mxu0 0.0
      %4922 = vmatpush1.msra.mxu0 %v246
      %4923 = vmatprep.subr.mxu0 0.0
      %4924 = vmatpush1.msra.mxu0 %v247
      %4925 = vmatprep.subr.mxu0 0.0
      %4926 = vmatpush1.msra.mxu0 %v248
      %4927 = vmatprep.subr.mxu0 0.0
      %4928 = vmatpush1.msra.mxu0 %v249
      %4929 = vmatprep.subr.mxu0 0.0
      %4930 = vmatpush1.msra.mxu0 %v250
      %4931 = vmatprep.subr.mxu0 0.0
      %4932 = vmatpush1.msra.mxu0 %v251
      %4933 = vmatprep.subr.mxu0 0.0
      %4934 = vmatpush1.msra.mxu0 %v252
      %4935 = vmatprep.subr.mxu0 0.0
      %4936 = vmatpush1.msra.mxu0 %v253
      %4937 = vmatprep.subr.mxu0 0.0
      %4938 = vmatpush1.msra.mxu0 %v254
      %4939 = vmatprep.subr.mxu0 0.0
      %4940 = vmatpush1.msra.mxu0 %v255
      %4941 = vmatprep.subr.mxu0 0.0
      %4942 = vmatpush1.msra.mxu0 %v256
      %4943 = vmatprep.subr.mxu0 0.0
      %4944 = vmatpush1.msra.mxu0 %v257
      %4945 = vmatprep.subr.mxu0 0.0
      %4946 = vmatpush1.msra.mxu0 %v258
      %4947 = vmatprep.subr.mxu0 0.0
      %4948 = vmatpush1.msra.mxu0 %v259
      %4949 = vmatprep.subr.mxu0 0.0
      %4950 = vmatpush1.msra.mxu0 %v260
      %4951 = vmatprep.subr.mxu0 0.0
      %4952 = vmatpush1.msra.mxu0 0.0
      %4953 = vmatprep.subr.mxu0 0.0
      %4954 = vmatpush1.msra.mxu0 0.0
      %4955 = vmatprep.subr.mxu0 0.0
      %4956 = vmatpush1.msra.mxu0 0.0
      %4957 = vmatprep.subr.mxu0 0.0
      %4958 = vmatpush1.msra.mxu0 0.0
      %4959 = vmatprep.subr.mxu0 0.0
      %4960 = vmatpush1.msra.mxu0 0.0
      %4961 = vmatprep.subr.mxu0 0.0
      %4962 = vmatpush1.msra.mxu0 0.0
      %4963 = vmatprep.subr.mxu0 0.0
      %4964 = vmatpush1.msra.mxu0 0.0
      %4965 = vmatprep.subr.mxu0 0.0
      %4966 = vmatpush1.msra.mxu0 0.0
      %4967 = vmatprep.subr.mxu0 0.0
      %4968 = vmatpush1.msra.mxu0 0.0
      %4969 = vmatprep.subr.mxu0 0.0
      %4970 = vmatpush1.msra.mxu0 0.0
      %4971 = vmatprep.subr.mxu0 0.0
      %4972 = vmatpush1.msra.mxu0 0.0
      %4973 = vmatprep.subr.mxu0 0.0
      %4974 = vmatpush1.msra.mxu0 0.0
      %4975 = vmatprep.subr.mxu0 0.0
      %4976 = vmatpush1.msra.mxu0 0.0
      %4977 = vmatprep.subr.mxu0 0.0
      %4978 = vmatpush1.msra.mxu0 0.0
      %4979 = vmatprep.subr.mxu0 0.0
      %4980 = vmatpush1.msra.mxu0 0.0
      %4981 = vmatprep.subr.mxu0 0.0
      %4982 = vmatpush1.msra.mxu0 0.0
      %4983 = vmatprep.mubr.f32.mxu0 0.0
      %4984 = vmatmul.mubr.f32.gmra.mrb[0].mxu0 %v4903
      %v4985 = vpop.f32.mrb[0].mxu0
      %v4986 = vadd.f32 0.0, %v4985
      %v4987 = vpop.f32.mrb[0].mxu0
      %4988 = vmatprep.mubr.f32.mxu0 0.0
      %4989 = vmatmul.mubr.f32.gmra.mrb[0].mxu0 %v4904
      %v4990 = vpop.f32.mrb[0].mxu0
      %v4991 = vadd.f32 0.0, %v4990
      %v4992 = vpop.f32.mrb[0].mxu0
      %4993 = vmatprep.mubr.f32.mxu0 0.0
      %4994 = vmatmul.mubr.f32.gmra.mrb[0].mxu0 %v4905
      %v4995 = vpop.f32.mrb[0].mxu0
      %v4996 = vadd.f32 0.0, %v4995
      %v4997 = vpop.f32.mrb[0].mxu0
      %4998 = vmatprep.mubr.f32.mxu0 0.0
      %4999 = vmatmul.mubr.f32.gmra.mrb[0].mxu0 %v4906
      %v5000 = vpop.f32.mrb[0].mxu0
      %v5001 = vadd.f32 0.0, %v5000
      %v5002 = vpop.f32.mrb[0].mxu0
      %5003 = vmatprep.mubr.f32.mxu0 0.0
      %5004 = vmatmul.mubr.f32.gmra.mrb[0].mxu0 %v4907
      %v5005 = vpop.f32.mrb[0].mxu0
      %v5006 = vadd.f32 0.0, %v5005
      %v5007 = vpop.f32.mrb[0].mxu0
      %5008 = vmatprep.mubr.f32.mxu0 0.0
      %5009 = vmatmul.mubr.f32.gmra.mrb[0].mxu0 %v4908
      %v5010 = vpop.f32.mrb[0].mxu0
      %v5011 = vadd.f32 0.0, %v5010
      %v5012 = vpop.f32.mrb[0].mxu0
      %5013 = vmatprep.mubr.f32.mxu0 0.0
      %5014 = vmatmul.mubr.f32.gmra.mrb[0].mxu0 %v4909
      %v5015 = vpop.f32.mrb[0].mxu0
      %v5016 = vadd.f32 0.0, %v5015
      %v5017 = vpop.f32.mrb[0].mxu0
      %5018 = vmatprep.mubr.f32.mxu0 0.0
      %5019 = vmatmul.mubr.f32.gmra.mrb[0].mxu0 %v4910
      %v5020 = vpop.f32.mrb[0].mxu0
      %v5021 = vadd.f32 0.0, %v5020
      %v5022 = vpop.f32.mrb[0].mxu0
      %5023 = vmatprep.mubr.f32.mxu0 0.0
      %5024 = vmatmul.mubr.f32.gmra.mrb[0].mxu0 %v4911
      %v5025 = vpop.f32.mrb[0].mxu0
      %v5026 = vadd.f32 0.0, %v5025
      %v5027 = vpop.f32.mrb[0].mxu0
      %5028 = vmatprep.mubr.f32.mxu0 0.0
      %5029 = vmatmul.mubr.f32.gmra.mrb[0].mxu0 %v4912
      %v5030 = vpop.f32.mrb[0].mxu0
      %v5031 = vadd.f32 0.0, %v5030
      %v5032 = vpop.f32.mrb[0].mxu0
      %5033 = vmatprep.mubr.f32.mxu0 0.0
      %5034 = vmatmul.mubr.f32.gmra.mrb[0].mxu0 %v4913
      %v5035 = vpop.f32.mrb[0].mxu0
      %v5036 = vadd.f32 0.0, %v5035
      %v5037 = vpop.f32.mrb[0].mxu0
      %5038 = vmatprep.mubr.f32.mxu0 0.0
      %5039 = vmatmul.mubr.f32.gmra.mrb[0].mxu0 %v4914
      %v5040 = vpop.f32.mrb[0].mxu0
      %v5041 = vadd.f32 0.0, %v5040
      %v5042 = vpop.f32.mrb[0].mxu0
      %5043 = vmatprep.mubr.f32.mxu0 0.0
      %5044 = vmatmul.mubr.f32.gmra.mrb[0].mxu0 %v4915
      %v5045 = vpop.f32.mrb[0].mxu0
      %v5046 = vadd.f32 0.0, %v5045
      %v5047 = vpop.f32.mrb[0].mxu0
      %5048 = vmatprep.mubr.f32.mxu0 0.0
      %5049 = vmatmul.mubr.f32.gmra.mrb[0].mxu0 %v4916
      %v5050 = vpop.f32.mrb[0].mxu0
      %v5051 = vadd.f32 0.0, %v5050
      %v5052 = vpop.f32.mrb[0].mxu0
      %5053 = vmatprep.mubr.f32.mxu0 0.0
      %5054 = vmatmul.mubr.f32.gmra.mrb[0].mxu0 %v4917
      %v5055 = vpop.f32.mrb[0].mxu0
      %v5056 = vadd.f32 0.0, %v5055
      %v5057 = vpop.f32.mrb[0].mxu0
      %5058 = vmatprep.mubr.f32.mxu0 0.0
      %5059 = vmatmul.mubr.f32.gmra.mrb[0].mxu0 %v4918
      %v5060 = vpop.f32.mrb[0].mxu0
      %v5061 = vadd.f32 0.0, %v5060
      %v5062 = vpop.f32.mrb[0].mxu0
      %5063 = vdwg.mxu0
      %v5064 = vsel %vm595, %v4986, 0.0
      %v5065 = vsel %vm595, %v4991, 0.0
      %v5066 = vsel %vm595, %v4996, 0.0
      %v5067 = vsel %vm595, %v5001, 0.0
      %v5068 = vsel %vm595, %v5006, 0.0
      %v5069 = vsel %vm595, %v5011, 0.0
      %v5070 = vsel %vm595, %v5016, 0.0
      %v5071 = vsel %vm595, %v5021, 0.0
      %v5072 = vsel %vm595, %v5026, 0.0
      %v5073 = vsel %vm595, %v5031, 0.0
      %v5074 = vsel %vm595, %v5036, 0.0
      %v5075 = vsel %vm595, %v5041, 0.0
      %v5076 = vsel %vm595, %v5046, 0.0
      %v5077 = vsel %vm595, %v5051, 0.0
      %v5078 = vsel %vm595, %v5056, 0.0
      %v5079 = vsel %vm595, %v5061, 0.0
      %v5080 = vsel %vm612, %v5064, 0.0
      %5081 = vadd.xlane.f32.xlu0 %v5080
      %v5082 = vpop.xlane.xlu0 %5081
      %v5083 = vsel %vm612, %v5065, 0.0
      %5084 = vadd.xlane.f32.xlu0 %v5083
      %v5085 = vpop.xlane.xlu0 %5084
      %v5086 = vsel %vm612, %v5066, 0.0
      %5087 = vadd.xlane.f32.xlu0 %v5086
      %v5088 = vpop.xlane.xlu0 %5087
      %v5089 = vsel %vm612, %v5067, 0.0
      %5090 = vadd.xlane.f32.xlu0 %v5089
      %v5091 = vpop.xlane.xlu0 %5090
      %v5092 = vsel %vm612, %v5068, 0.0
      %5093 = vadd.xlane.f32.xlu0 %v5092
      %v5094 = vpop.xlane.xlu0 %5093
      %v5095 = vsel %vm612, %v5069, 0.0
      %5096 = vadd.xlane.f32.xlu0 %v5095
      %v5097 = vpop.xlane.xlu0 %5096
      %v5098 = vsel %vm612, %v5070, 0.0
      %5099 = vadd.xlane.f32.xlu0 %v5098
      %v5100 = vpop.xlane.xlu0 %5099
      %v5101 = vsel %vm612, %v5071, 0.0
      %5102 = vadd.xlane.f32.xlu0 %v5101
      %v5103 = vpop.xlane.xlu0 %5102
      %v5104 = vsel %vm612, %v5072, 0.0
      %5105 = vadd.xlane.f32.xlu0 %v5104
      %v5106 = vpop.xlane.xlu0 %5105
      %v5107 = vsel %vm612, %v5073, 0.0
      %5108 = vadd.xlane.f32.xlu0 %v5107
      %v5109 = vpop.xlane.xlu0 %5108
      %v5110 = vsel %vm612, %v5074, 0.0
      %5111 = vadd.xlane.f32.xlu0 %v5110
      %v5112 = vpop.xlane.xlu0 %5111
      %v5113 = vsel %vm612, %v5075, 0.0
      %5114 = vadd.xlane.f32.xlu0 %v5113
      %v5115 = vpop.xlane.xlu0 %5114
      %v5116 = vsel %vm612, %v5076, 0.0
      %5117 = vadd.xlane.f32.xlu0 %v5116
      %v5118 = vpop.xlane.xlu0 %5117
      %v5119 = vsel %vm612, %v5077, 0.0
      %5120 = vadd.xlane.f32.xlu0 %v5119
      %v5121 = vpop.xlane.xlu0 %5120
      %v5122 = vsel %vm612, %v5078, 0.0
      %5123 = vadd.xlane.f32.xlu0 %v5122
      %v5124 = vpop.xlane.xlu0 %5123
      %v5125 = vsel %vm612, %v5079, 0.0
      %5126 = vadd.xlane.f32.xlu0 %v5125
      %v5127 = vpop.xlane.xlu0 %5126
      %v5128 = vsel %vm661, %v4986, 0.0
      %v5129 = vsel %vm661, %v4991, 0.0
      %v5130 = vsel %vm661, %v4996, 0.0
      %v5131 = vsel %vm661, %v5001, 0.0
      %v5132 = vsel %vm661, %v5006, 0.0
      %v5133 = vsel %vm661, %v5011, 0.0
      %v5134 = vsel %vm661, %v5016, 0.0
      %v5135 = vsel %vm661, %v5021, 0.0
      %v5136 = vsel %vm661, %v5026, 0.0
      %v5137 = vsel %vm661, %v5031, 0.0
      %v5138 = vsel %vm661, %v5036, 0.0
      %v5139 = vsel %vm661, %v5041, 0.0
      %v5140 = vsel %vm661, %v5046, 0.0
      %v5141 = vsel %vm661, %v5051, 0.0
      %v5142 = vsel %vm661, %v5056, 0.0
      %v5143 = vsel %vm661, %v5061, 0.0
      %v5144 = vsel %vm612, %v5128, 0.0
      %5145 = vadd.xlane.f32.xlu0 %v5144
      %v5146 = vpop.xlane.xlu0 %5145
      %v5147 = vsel %vm612, %v5129, 0.0
      %5148 = vadd.xlane.f32.xlu0 %v5147
      %v5149 = vpop.xlane.xlu0 %5148
      %v5150 = vsel %vm612, %v5130, 0.0
      %5151 = vadd.xlane.f32.xlu0 %v5150
      %v5152 = vpop.xlane.xlu0 %5151
      %v5153 = vsel %vm612, %v5131, 0.0
      %5154 = vadd.xlane.f32.xlu0 %v5153
      %v5155 = vpop.xlane.xlu0 %5154
      %v5156 = vsel %vm612, %v5132, 0.0
      %5157 = vadd.xlane.f32.xlu0 %v5156
      %v5158 = vpop.xlane.xlu0 %5157
      %v5159 = vsel %vm612, %v5133, 0.0
      %5160 = vadd.xlane.f32.xlu0 %v5159
      %v5161 = vpop.xlane.xlu0 %5160
      %v5162 = vsel %vm612, %v5134, 0.0
      %5163 = vadd.xlane.f32.xlu0 %v5162
      %v5164 = vpop.xlane.xlu0 %5163
      %v5165 = vsel %vm612, %v5135, 0.0
      %5166 = vadd.xlane.f32.xlu0 %v5165
      %v5167 = vpop.xlane.xlu0 %5166
      %v5168 = vsel %vm612, %v5136, 0.0
      %5169 = vadd.xlane.f32.xlu0 %v5168
      %v5170 = vpop.xlane.xlu0 %5169
      %v5171 = vsel %vm612, %v5137, 0.0
      %5172 = vadd.xlane.f32.xlu0 %v5171
      %v5173 = vpop.xlane.xlu0 %5172
      %v5174 = vsel %vm612, %v5138, 0.0
      %5175 = vadd.xlane.f32.xlu0 %v5174
      %v5176 = vpop.xlane.xlu0 %5175
      %v5177 = vsel %vm612, %v5139, 0.0
      %5178 = vadd.xlane.f32.xlu0 %v5177
      %v5179 = vpop.xlane.xlu0 %5178
      %v5180 = vsel %vm612, %v5140, 0.0
      %5181 = vadd.xlane.f32.xlu0 %v5180
      %v5182 = vpop.xlane.xlu0 %5181
      %v5183 = vsel %vm612, %v5141, 0.0
      %5184 = vadd.xlane.f32.xlu0 %v5183
      %v5185 = vpop.xlane.xlu0 %5184
      %v5186 = vsel %vm612, %v5142, 0.0
      %5187 = vadd.xlane.f32.xlu0 %v5186
      %v5188 = vpop.xlane.xlu0 %5187
      %v5189 = vsel %vm612, %v5143, 0.0
      %5190 = vadd.xlane.f32.xlu0 %v5189
      %v5191 = vpop.xlane.xlu0 %5190
      %v5192 = vsel %vm726, %v4986, 0.0
      %v5193 = vsel %vm726, %v4991, 0.0
      %v5194 = vsel %vm726, %v4996, 0.0
      %v5195 = vsel %vm726, %v5001, 0.0
      %v5196 = vsel %vm726, %v5006, 0.0
      %v5197 = vsel %vm726, %v5011, 0.0
      %v5198 = vsel %vm726, %v5016, 0.0
      %v5199 = vsel %vm726, %v5021, 0.0
      %v5200 = vsel %vm726, %v5026, 0.0
      %v5201 = vsel %vm726, %v5031, 0.0
      %v5202 = vsel %vm726, %v5036, 0.0
      %v5203 = vsel %vm726, %v5041, 0.0
      %v5204 = vsel %vm726, %v5046, 0.0
      %v5205 = vsel %vm726, %v5051, 0.0
      %v5206 = vsel %vm726, %v5056, 0.0
      %v5207 = vsel %vm726, %v5061, 0.0
      %v5208 = vsel %vm612, %v5192, 0.0
      %5209 = vadd.xlane.f32.xlu0 %v5208
      %v5210 = vpop.xlane.xlu0 %5209
      %v5211 = vsel %vm612, %v5193, 0.0
      %5212 = vadd.xlane.f32.xlu0 %v5211
      %v5213 = vpop.xlane.xlu0 %5212
      %v5214 = vsel %vm612, %v5194, 0.0
      %5215 = vadd.xlane.f32.xlu0 %v5214
      %v5216 = vpop.xlane.xlu0 %5215
      %v5217 = vsel %vm612, %v5195, 0.0
      %5218 = vadd.xlane.f32.xlu0 %v5217
      %v5219 = vpop.xlane.xlu0 %5218
      %v5220 = vsel %vm612, %v5196, 0.0
      %5221 = vadd.xlane.f32.xlu0 %v5220
      %v5222 = vpop.xlane.xlu0 %5221
      %v5223 = vsel %vm612, %v5197, 0.0
      %5224 = vadd.xlane.f32.xlu0 %v5223
      %v5225 = vpop.xlane.xlu0 %5224
      %v5226 = vsel %vm612, %v5198, 0.0
      %5227 = vadd.xlane.f32.xlu0 %v5226
      %v5228 = vpop.xlane.xlu0 %5227
      %v5229 = vsel %vm612, %v5199, 0.0
      %5230 = vadd.xlane.f32.xlu0 %v5229
      %v5231 = vpop.xlane.xlu0 %5230
      %v5232 = vsel %vm612, %v5200, 0.0
      %5233 = vadd.xlane.f32.xlu0 %v5232
      %v5234 = vpop.xlane.xlu0 %5233
      %v5235 = vsel %vm612, %v5201, 0.0
      %5236 = vadd.xlane.f32.xlu0 %v5235
      %v5237 = vpop.xlane.xlu0 %5236
      %v5238 = vsel %vm612, %v5202, 0.0
      %5239 = vadd.xlane.f32.xlu0 %v5238
      %v5240 = vpop.xlane.xlu0 %5239
      %v5241 = vsel %vm612, %v5203, 0.0
      %5242 = vadd.xlane.f32.xlu0 %v5241
      %v5243 = vpop.xlane.xlu0 %5242
      %v5244 = vsel %vm612, %v5204, 0.0
      %5245 = vadd.xlane.f32.xlu0 %v5244
      %v5246 = vpop.xlane.xlu0 %5245
      %v5247 = vsel %vm612, %v5205, 0.0
      %5248 = vadd.xlane.f32.xlu0 %v5247
      %v5249 = vpop.xlane.xlu0 %5248
      %v5250 = vsel %vm612, %v5206, 0.0
      %5251 = vadd.xlane.f32.xlu0 %v5250
      %v5252 = vpop.xlane.xlu0 %5251
      %v5253 = vsel %vm612, %v5207, 0.0
      %5254 = vadd.xlane.f32.xlu0 %v5253
      %v5255 = vpop.xlane.xlu0 %5254
      %v5256 = vsub.f32 %v615, %v5082
      %v5257 = vsub.f32 %v618, %v5085
      %v5258 = vsub.f32 %v621, %v5088
      %v5259 = vsub.f32 %v624, %v5091
      %v5260 = vsub.f32 %v627, %v5094
      %v5261 = vsub.f32 %v630, %v5097
      %v5262 = vsub.f32 %v633, %v5100
      %v5263 = vsub.f32 %v636, %v5103
      %v5264 = vsub.f32 %v639, %v5106
      %v5265 = vsub.f32 %v642, %v5109
      %v5266 = vsub.f32 %v645, %v5112
      %v5267 = vsub.f32 %v648, %v5115
      %v5268 = vsub.f32 %v651, %v5118
      %v5269 = vsub.f32 %v654, %v5121
      %v5270 = vsub.f32 %v657, %v5124
      %v5271 = vsub.f32 %v660, %v5127
      %v5272 = vsub.f32 %v680, %v5146
      %v5273 = vsub.f32 %v683, %v5149
      %v5274 = vsub.f32 %v686, %v5152
      %v5275 = vsub.f32 %v689, %v5155
      %v5276 = vsub.f32 %v692, %v5158
      %v5277 = vsub.f32 %v695, %v5161
      %v5278 = vsub.f32 %v698, %v5164
      %v5279 = vsub.f32 %v701, %v5167
      %v5280 = vsub.f32 %v704, %v5170
      %v5281 = vsub.f32 %v707, %v5173
      %v5282 = vsub.f32 %v710, %v5176
      %v5283 = vsub.f32 %v713, %v5179
      %v5284 = vsub.f32 %v716, %v5182
      %v5285 = vsub.f32 %v719, %v5185
      %v5286 = vsub.f32 %v722, %v5188
      %v5287 = vsub.f32 %v725, %v5191
      %v5288 = vsub.f32 %v745, %v5210
      %v5289 = vsub.f32 %v748, %v5213
      %v5290 = vsub.f32 %v751, %v5216
      %v5291 = vsub.f32 %v754, %v5219
      %v5292 = vsub.f32 %v757, %v5222
      %v5293 = vsub.f32 %v760, %v5225
      %v5294 = vsub.f32 %v763, %v5228
      %v5295 = vsub.f32 %v766, %v5231
      %v5296 = vsub.f32 %v769, %v5234
      %v5297 = vsub.f32 %v772, %v5237
      %v5298 = vsub.f32 %v775, %v5240
      %v5299 = vsub.f32 %v778, %v5243
      %v5300 = vsub.f32 %v781, %v5246
      %v5301 = vsub.f32 %v784, %v5249
      %v5302 = vsub.f32 %v787, %v5252
      %v5303 = vsub.f32 %v790, %v5255
      %v5304 = vmul.f32 %v5256, %v5256
      %v5305 = vmul.f32 %v5257, %v5257
      %v5306 = vmul.f32 %v5258, %v5258
      %v5307 = vmul.f32 %v5259, %v5259
      %v5308 = vmul.f32 %v5260, %v5260
      %v5309 = vmul.f32 %v5261, %v5261
      %v5310 = vmul.f32 %v5262, %v5262
      %v5311 = vmul.f32 %v5263, %v5263
      %v5312 = vmul.f32 %v5264, %v5264
      %v5313 = vmul.f32 %v5265, %v5265
      %v5314 = vmul.f32 %v5266, %v5266
      %v5315 = vmul.f32 %v5267, %v5267
      %v5316 = vmul.f32 %v5268, %v5268
      %v5317 = vmul.f32 %v5269, %v5269
      %v5318 = vmul.f32 %v5270, %v5270
      %v5319 = vmul.f32 %v5271, %v5271
      %v5320 = vmul.f32 %v5272, %v5272
      %v5321 = vmul.f32 %v5273, %v5273
      %v5322 = vmul.f32 %v5274, %v5274
      %v5323 = vmul.f32 %v5275, %v5275
      %v5324 = vmul.f32 %v5276, %v5276
      %v5325 = vmul.f32 %v5277, %v5277
      %v5326 = vmul.f32 %v5278, %v5278
      %v5327 = vmul.f32 %v5279, %v5279
      %v5328 = vmul.f32 %v5280, %v5280
      %v5329 = vmul.f32 %v5281, %v5281
      %v5330 = vmul.f32 %v5282, %v5282
      %v5331 = vmul.f32 %v5283, %v5283
      %v5332 = vmul.f32 %v5284, %v5284
      %v5333 = vmul.f32 %v5285, %v5285
      %v5334 = vmul.f32 %v5286, %v5286
      %v5335 = vmul.f32 %v5287, %v5287
      %v5336 = vadd.f32 %v5304, %v5320
      %v5337 = vadd.f32 %v5305, %v5321
      %v5338 = vadd.f32 %v5306, %v5322
      %v5339 = vadd.f32 %v5307, %v5323
      %v5340 = vadd.f32 %v5308, %v5324
      %v5341 = vadd.f32 %v5309, %v5325
      %v5342 = vadd.f32 %v5310, %v5326
      %v5343 = vadd.f32 %v5311, %v5327
      %v5344 = vadd.f32 %v5312, %v5328
      %v5345 = vadd.f32 %v5313, %v5329
      %v5346 = vadd.f32 %v5314, %v5330
      %v5347 = vadd.f32 %v5315, %v5331
      %v5348 = vadd.f32 %v5316, %v5332
      %v5349 = vadd.f32 %v5317, %v5333
      %v5350 = vadd.f32 %v5318, %v5334
      %v5351 = vadd.f32 %v5319, %v5335
      %v5352 = vmul.f32 %v5288, %v5288
      %v5353 = vmul.f32 %v5289, %v5289
      %v5354 = vmul.f32 %v5290, %v5290
      %v5355 = vmul.f32 %v5291, %v5291
      %v5356 = vmul.f32 %v5292, %v5292
      %v5357 = vmul.f32 %v5293, %v5293
      %v5358 = vmul.f32 %v5294, %v5294
      %v5359 = vmul.f32 %v5295, %v5295
      %v5360 = vmul.f32 %v5296, %v5296
      %v5361 = vmul.f32 %v5297, %v5297
      %v5362 = vmul.f32 %v5298, %v5298
      %v5363 = vmul.f32 %v5299, %v5299
      %v5364 = vmul.f32 %v5300, %v5300
      %v5365 = vmul.f32 %v5301, %v5301
      %v5366 = vmul.f32 %v5302, %v5302
      %v5367 = vmul.f32 %v5303, %v5303
      %v5368 = vadd.f32 %v5336, %v5352
      %v5369 = vadd.f32 %v5337, %v5353
      %v5370 = vadd.f32 %v5338, %v5354
      %v5371 = vadd.f32 %v5339, %v5355
      %v5372 = vadd.f32 %v5340, %v5356
      %v5373 = vadd.f32 %v5341, %v5357
      %v5374 = vadd.f32 %v5342, %v5358
      %v5375 = vadd.f32 %v5343, %v5359
      %v5376 = vadd.f32 %v5344, %v5360
      %v5377 = vadd.f32 %v5345, %v5361
      %v5378 = vadd.f32 %v5346, %v5362
      %v5379 = vadd.f32 %v5347, %v5363
      %v5380 = vadd.f32 %v5348, %v5364
      %v5381 = vadd.f32 %v5349, %v5365
      %v5382 = vadd.f32 %v5350, %v5366
      %v5383 = vadd.f32 %v5351, %v5367
      %v5384 = vrsqrt.pop %v5368
      %v5385 = vmul.f32 %v5368, %v5384
      %vm5386 = vcmp.eq.f32.partialorder %v5368, inf
      %v5387 = vsel %vm5386, %v5368, %v5385
      %vm5388 = vcmp.eq.f32.partialorder %v5368, 0.0
      %v5389 = vand.u32 %v5368, 2147483648
      %v5390 = vsel %vm5388, %v5389, %v5387
      %v5391 = vrsqrt.pop %v5369
      %v5392 = vmul.f32 %v5369, %v5391
      %vm5393 = vcmp.eq.f32.partialorder %v5369, inf
      %v5394 = vsel %vm5393, %v5369, %v5392
      %vm5395 = vcmp.eq.f32.partialorder %v5369, 0.0
      %v5396 = vand.u32 %v5369, 2147483648
      %v5397 = vsel %vm5395, %v5396, %v5394
      %v5398 = vrsqrt.pop %v5370
      %v5399 = vmul.f32 %v5370, %v5398
      %vm5400 = vcmp.eq.f32.partialorder %v5370, inf
      %v5401 = vsel %vm5400, %v5370, %v5399
      %vm5402 = vcmp.eq.f32.partialorder %v5370, 0.0
      %v5403 = vand.u32 %v5370, 2147483648
      %v5404 = vsel %vm5402, %v5403, %v5401
      %v5405 = vrsqrt.pop %v5371
      %v5406 = vmul.f32 %v5371, %v5405
      %vm5407 = vcmp.eq.f32.partialorder %v5371, inf
      %v5408 = vsel %vm5407, %v5371, %v5406
      %vm5409 = vcmp.eq.f32.partialorder %v5371, 0.0
      %v5410 = vand.u32 %v5371, 2147483648
      %v5411 = vsel %vm5409, %v5410, %v5408
      %v5412 = vrsqrt.pop %v5372
      %v5413 = vmul.f32 %v5372, %v5412
      %vm5414 = vcmp.eq.f32.partialorder %v5372, inf
      %v5415 = vsel %vm5414, %v5372, %v5413
      %vm5416 = vcmp.eq.f32.partialorder %v5372, 0.0
      %v5417 = vand.u32 %v5372, 2147483648
      %v5418 = vsel %vm5416, %v5417, %v5415
      %v5419 = vrsqrt.pop %v5373
      %v5420 = vmul.f32 %v5373, %v5419
      %vm5421 = vcmp.eq.f32.partialorder %v5373, inf
      %v5422 = vsel %vm5421, %v5373, %v5420
      %vm5423 = vcmp.eq.f32.partialorder %v5373, 0.0
      %v5424 = vand.u32 %v5373, 2147483648
      %v5425 = vsel %vm5423, %v5424, %v5422
      %v5426 = vrsqrt.pop %v5374
      %v5427 = vmul.f32 %v5374, %v5426
      %vm5428 = vcmp.eq.f32.partialorder %v5374, inf
      %v5429 = vsel %vm5428, %v5374, %v5427
      %vm5430 = vcmp.eq.f32.partialorder %v5374, 0.0
      %v5431 = vand.u32 %v5374, 2147483648
      %v5432 = vsel %vm5430, %v5431, %v5429
      %v5433 = vrsqrt.pop %v5375
      %v5434 = vmul.f32 %v5375, %v5433
      %vm5435 = vcmp.eq.f32.partialorder %v5375, inf
      %v5436 = vsel %vm5435, %v5375, %v5434
      %vm5437 = vcmp.eq.f32.partialorder %v5375, 0.0
      %v5438 = vand.u32 %v5375, 2147483648
      %v5439 = vsel %vm5437, %v5438, %v5436
      %v5440 = vrsqrt.pop %v5376
      %v5441 = vmul.f32 %v5376, %v5440
      %vm5442 = vcmp.eq.f32.partialorder %v5376, inf
      %v5443 = vsel %vm5442, %v5376, %v5441
      %vm5444 = vcmp.eq.f32.partialorder %v5376, 0.0
      %v5445 = vand.u32 %v5376, 2147483648
      %v5446 = vsel %vm5444, %v5445, %v5443
      %v5447 = vrsqrt.pop %v5377
      %v5448 = vmul.f32 %v5377, %v5447
      %vm5449 = vcmp.eq.f32.partialorder %v5377, inf
      %v5450 = vsel %vm5449, %v5377, %v5448
      %vm5451 = vcmp.eq.f32.partialorder %v5377, 0.0
      %v5452 = vand.u32 %v5377, 2147483648
      %v5453 = vsel %vm5451, %v5452, %v5450
      %v5454 = vrsqrt.pop %v5378
      %v5455 = vmul.f32 %v5378, %v5454
      %vm5456 = vcmp.eq.f32.partialorder %v5378, inf
      %v5457 = vsel %vm5456, %v5378, %v5455
      %vm5458 = vcmp.eq.f32.partialorder %v5378, 0.0
      %v5459 = vand.u32 %v5378, 2147483648
      %v5460 = vsel %vm5458, %v5459, %v5457
      %v5461 = vrsqrt.pop %v5379
      %v5462 = vmul.f32 %v5379, %v5461
      %vm5463 = vcmp.eq.f32.partialorder %v5379, inf
      %v5464 = vsel %vm5463, %v5379, %v5462
      %vm5465 = vcmp.eq.f32.partialorder %v5379, 0.0
      %v5466 = vand.u32 %v5379, 2147483648
      %v5467 = vsel %vm5465, %v5466, %v5464
      %v5468 = vrsqrt.pop %v5380
      %v5469 = vmul.f32 %v5380, %v5468
      %vm5470 = vcmp.eq.f32.partialorder %v5380, inf
      %v5471 = vsel %vm5470, %v5380, %v5469
      %vm5472 = vcmp.eq.f32.partialorder %v5380, 0.0
      %v5473 = vand.u32 %v5380, 2147483648
      %v5474 = vsel %vm5472, %v5473, %v5471
      %v5475 = vrsqrt.pop %v5381
      %v5476 = vmul.f32 %v5381, %v5475
      %vm5477 = vcmp.eq.f32.partialorder %v5381, inf
      %v5478 = vsel %vm5477, %v5381, %v5476
      %vm5479 = vcmp.eq.f32.partialorder %v5381, 0.0
      %v5480 = vand.u32 %v5381, 2147483648
      %v5481 = vsel %vm5479, %v5480, %v5478
      %v5482 = vrsqrt.pop %v5382
      %v5483 = vmul.f32 %v5382, %v5482
      %vm5484 = vcmp.eq.f32.partialorder %v5382, inf
      %v5485 = vsel %vm5484, %v5382, %v5483
      %vm5486 = vcmp.eq.f32.partialorder %v5382, 0.0
      %v5487 = vand.u32 %v5382, 2147483648
      %v5488 = vsel %vm5486, %v5487, %v5485
      %v5489 = vrsqrt.pop %v5383
      %v5490 = vmul.f32 %v5383, %v5489
      %vm5491 = vcmp.eq.f32.partialorder %v5383, inf
      %v5492 = vsel %vm5491, %v5383, %v5490
      %vm5493 = vcmp.eq.f32.partialorder %v5383, 0.0
      %v5494 = vand.u32 %v5383, 2147483648
      %v5495 = vsel %vm5493, %v5494, %v5492
      %vm5496 = vcmp.eq.s32.totalorder %v577, 40
      %v5497 = vsel %vm5496, %v5390, %v4615
      %v5498 = vsel %vm5496, %v5397, %v4616
      %v5499 = vsel %vm5496, %v5404, %v4617
      %v5500 = vsel %vm5496, %v5411, %v4618
      %v5501 = vsel %vm5496, %v5418, %v4619
      %v5502 = vsel %vm5496, %v5425, %v4620
      %v5503 = vsel %vm5496, %v5432, %v4621
      %v5504 = vsel %vm5496, %v5439, %v4622
      %v5505 = vsel %vm5496, %v5446, %v4623
      %v5506 = vsel %vm5496, %v5453, %v4624
      %v5507 = vsel %vm5496, %v5460, %v4625
      %v5508 = vsel %vm5496, %v5467, %v4626
      %v5509 = vsel %vm5496, %v5474, %v4627
      %v5510 = vsel %vm5496, %v5481, %v4628
      %v5511 = vsel %vm5496, %v5488, %v4629
      %v5512 = vsel %vm5496, %v5495, %v4630
      %vm5513 = vcmp.eq.s32.totalorder %v577, 41
      %v5514 = vsel %vm5513, %v5256, %v5497
      %v5515 = vsel %vm5513, %v5257, %v5498
      %v5516 = vsel %vm5513, %v5258, %v5499
      %v5517 = vsel %vm5513, %v5259, %v5500
      %v5518 = vsel %vm5513, %v5260, %v5501
      %v5519 = vsel %vm5513, %v5261, %v5502
      %v5520 = vsel %vm5513, %v5262, %v5503
      %v5521 = vsel %vm5513, %v5263, %v5504
      %v5522 = vsel %vm5513, %v5264, %v5505
      %v5523 = vsel %vm5513, %v5265, %v5506
      %v5524 = vsel %vm5513, %v5266, %v5507
      %v5525 = vsel %vm5513, %v5267, %v5508
      %v5526 = vsel %vm5513, %v5268, %v5509
      %v5527 = vsel %vm5513, %v5269, %v5510
      %v5528 = vsel %vm5513, %v5270, %v5511
      %v5529 = vsel %vm5513, %v5271, %v5512
      %vm5530 = vcmp.eq.s32.totalorder %v577, 42
      %v5531 = vsel %vm5530, %v5272, %v5514
      %v5532 = vsel %vm5530, %v5273, %v5515
      %v5533 = vsel %vm5530, %v5274, %v5516
      %v5534 = vsel %vm5530, %v5275, %v5517
      %v5535 = vsel %vm5530, %v5276, %v5518
      %v5536 = vsel %vm5530, %v5277, %v5519
      %v5537 = vsel %vm5530, %v5278, %v5520
      %v5538 = vsel %vm5530, %v5279, %v5521
      %v5539 = vsel %vm5530, %v5280, %v5522
      %v5540 = vsel %vm5530, %v5281, %v5523
      %v5541 = vsel %vm5530, %v5282, %v5524
      %v5542 = vsel %vm5530, %v5283, %v5525
      %v5543 = vsel %vm5530, %v5284, %v5526
      %v5544 = vsel %vm5530, %v5285, %v5527
      %v5545 = vsel %vm5530, %v5286, %v5528
      %v5546 = vsel %vm5530, %v5287, %v5529
      %vm5547 = vcmp.eq.s32.totalorder %v577, 43
      %v5548 = vsel %vm5547, %v5288, %v5531
      %v5549 = vsel %vm5547, %v5289, %v5532
      %v5550 = vsel %vm5547, %v5290, %v5533
      %v5551 = vsel %vm5547, %v5291, %v5534
      %v5552 = vsel %vm5547, %v5292, %v5535
      %v5553 = vsel %vm5547, %v5293, %v5536
      %v5554 = vsel %vm5547, %v5294, %v5537
      %v5555 = vsel %vm5547, %v5295, %v5538
      %v5556 = vsel %vm5547, %v5296, %v5539
      %v5557 = vsel %vm5547, %v5297, %v5540
      %v5558 = vsel %vm5547, %v5298, %v5541
      %v5559 = vsel %vm5547, %v5299, %v5542
      %v5560 = vsel %vm5547, %v5300, %v5543
      %v5561 = vsel %vm5547, %v5301, %v5544
      %v5562 = vsel %vm5547, %v5302, %v5545
      %v5563 = vsel %vm5547, %v5303, %v5546
      %vm5564 = vcmp.eq.s32.totalorder %v577, 47
      %v5565 = vsel %vm5564, %v5082, %v5548
      %v5566 = vsel %vm5564, %v5085, %v5549
      %v5567 = vsel %vm5564, %v5088, %v5550
      %v5568 = vsel %vm5564, %v5091, %v5551
      %v5569 = vsel %vm5564, %v5094, %v5552
      %v5570 = vsel %vm5564, %v5097, %v5553
      %v5571 = vsel %vm5564, %v5100, %v5554
      %v5572 = vsel %vm5564, %v5103, %v5555
      %v5573 = vsel %vm5564, %v5106, %v5556
      %v5574 = vsel %vm5564, %v5109, %v5557
      %v5575 = vsel %vm5564, %v5112, %v5558
      %v5576 = vsel %vm5564, %v5115, %v5559
      %v5577 = vsel %vm5564, %v5118, %v5560
      %v5578 = vsel %vm5564, %v5121, %v5561
      %v5579 = vsel %vm5564, %v5124, %v5562
      %v5580 = vsel %vm5564, %v5127, %v5563
      %vm5581 = vcmp.eq.s32.totalorder %v577, 48
      %v5582 = vsel %vm5581, %v5146, %v5565
      %v5583 = vsel %vm5581, %v5149, %v5566
      %v5584 = vsel %vm5581, %v5152, %v5567
      %v5585 = vsel %vm5581, %v5155, %v5568
      %v5586 = vsel %vm5581, %v5158, %v5569
      %v5587 = vsel %vm5581, %v5161, %v5570
      %v5588 = vsel %vm5581, %v5164, %v5571
      %v5589 = vsel %vm5581, %v5167, %v5572
      %v5590 = vsel %vm5581, %v5170, %v5573
      %v5591 = vsel %vm5581, %v5173, %v5574
      %v5592 = vsel %vm5581, %v5176, %v5575
      %v5593 = vsel %vm5581, %v5179, %v5576
      %v5594 = vsel %vm5581, %v5182, %v5577
      %v5595 = vsel %vm5581, %v5185, %v5578
      %v5596 = vsel %vm5581, %v5188, %v5579
      %v5597 = vsel %vm5581, %v5191, %v5580
      %vm5598 = vcmp.eq.s32.totalorder %v577, 49
      %v5599 = vsel %vm5598, %v5210, %v5582
      %v5600 = vsel %vm5598, %v5213, %v5583
      %v5601 = vsel %vm5598, %v5216, %v5584
      %v5602 = vsel %vm5598, %v5219, %v5585
      %v5603 = vsel %vm5598, %v5222, %v5586
      %v5604 = vsel %vm5598, %v5225, %v5587
      %v5605 = vsel %vm5598, %v5228, %v5588
      %v5606 = vsel %vm5598, %v5231, %v5589
      %v5607 = vsel %vm5598, %v5234, %v5590
      %v5608 = vsel %vm5598, %v5237, %v5591
      %v5609 = vsel %vm5598, %v5240, %v5592
      %v5610 = vsel %vm5598, %v5243, %v5593
      %v5611 = vsel %vm5598, %v5246, %v5594
      %v5612 = vsel %vm5598, %v5249, %v5595
      %v5613 = vsel %vm5598, %v5252, %v5596
      %v5614 = vsel %vm5598, %v5255, %v5597
      %v5615 = vsel %vm4871, 3.4028235e+38, %v4759
      %v5616 = vsel %vm4872, 3.4028235e+38, %v4760
      %v5617 = vsel %vm4873, 3.4028235e+38, %v4761
      %v5618 = vsel %vm4874, 3.4028235e+38, %v4762
      %v5619 = vsel %vm4875, 3.4028235e+38, %v4763
      %v5620 = vsel %vm4876, 3.4028235e+38, %v4764
      %v5621 = vsel %vm4877, 3.4028235e+38, %v4765
      %v5622 = vsel %vm4878, 3.4028235e+38, %v4766
      %v5623 = vsel %vm4879, 3.4028235e+38, %v4767
      %v5624 = vsel %vm4880, 3.4028235e+38, %v4768
      %v5625 = vsel %vm4881, 3.4028235e+38, %v4769
      %v5626 = vsel %vm4882, 3.4028235e+38, %v4770
      %v5627 = vsel %vm4883, 3.4028235e+38, %v4771
      %v5628 = vsel %vm4884, 3.4028235e+38, %v4772
      %v5629 = vsel %vm4885, 3.4028235e+38, %v4773
      %v5630 = vsel %vm4886, 3.4028235e+38, %v4774
      %5631 = vmin.xlane.f32.xlu0 %v5615
      %v5632 = vpop.xlane.xlu0 %5631
      %5633 = vmin.xlane.f32.xlu0 %v5616
      %v5634 = vpop.xlane.xlu0 %5633
      %5635 = vmin.xlane.f32.xlu0 %v5617
      %v5636 = vpop.xlane.xlu0 %5635
      %5637 = vmin.xlane.f32.xlu0 %v5618
      %v5638 = vpop.xlane.xlu0 %5637
      %5639 = vmin.xlane.f32.xlu0 %v5619
      %v5640 = vpop.xlane.xlu0 %5639
      %5641 = vmin.xlane.f32.xlu0 %v5620
      %v5642 = vpop.xlane.xlu0 %5641
      %5643 = vmin.xlane.f32.xlu0 %v5621
      %v5644 = vpop.xlane.xlu0 %5643
      %5645 = vmin.xlane.f32.xlu0 %v5622
      %v5646 = vpop.xlane.xlu0 %5645
      %5647 = vmin.xlane.f32.xlu0 %v5623
      %v5648 = vpop.xlane.xlu0 %5647
      %5649 = vmin.xlane.f32.xlu0 %v5624
      %v5650 = vpop.xlane.xlu0 %5649
      %5651 = vmin.xlane.f32.xlu0 %v5625
      %v5652 = vpop.xlane.xlu0 %5651
      %5653 = vmin.xlane.f32.xlu0 %v5626
      %v5654 = vpop.xlane.xlu0 %5653
      %5655 = vmin.xlane.f32.xlu0 %v5627
      %v5656 = vpop.xlane.xlu0 %5655
      %5657 = vmin.xlane.f32.xlu0 %v5628
      %v5658 = vpop.xlane.xlu0 %5657
      %5659 = vmin.xlane.f32.xlu0 %v5629
      %v5660 = vpop.xlane.xlu0 %5659
      %5661 = vmin.xlane.f32.xlu0 %v5630
      %v5662 = vpop.xlane.xlu0 %5661
      %vm5663 = vcmp.eq.f32.partialorder %v5615, %v5632
      %vm5664 = vcmp.eq.f32.partialorder %v5616, %v5634
      %vm5665 = vcmp.eq.f32.partialorder %v5617, %v5636
      %vm5666 = vcmp.eq.f32.partialorder %v5618, %v5638
      %vm5667 = vcmp.eq.f32.partialorder %v5619, %v5640
      %vm5668 = vcmp.eq.f32.partialorder %v5620, %v5642
      %vm5669 = vcmp.eq.f32.partialorder %v5621, %v5644
      %vm5670 = vcmp.eq.f32.partialorder %v5622, %v5646
      %vm5671 = vcmp.eq.f32.partialorder %v5623, %v5648
      %vm5672 = vcmp.eq.f32.partialorder %v5624, %v5650
      %vm5673 = vcmp.eq.f32.partialorder %v5625, %v5652
      %vm5674 = vcmp.eq.f32.partialorder %v5626, %v5654
      %vm5675 = vcmp.eq.f32.partialorder %v5627, %v5656
      %vm5676 = vcmp.eq.f32.partialorder %v5628, %v5658
      %vm5677 = vcmp.eq.f32.partialorder %v5629, %v5660
      %vm5678 = vcmp.eq.f32.partialorder %v5630, %v5662
      %v5679 = vsel %vm5663, %v578, 128.0
      %v5680 = vsel %vm5664, %v578, 128.0
      %v5681 = vsel %vm5665, %v578, 128.0
      %v5682 = vsel %vm5666, %v578, 128.0
      %v5683 = vsel %vm5667, %v578, 128.0
      %v5684 = vsel %vm5668, %v578, 128.0
      %v5685 = vsel %vm5669, %v578, 128.0
      %v5686 = vsel %vm5670, %v578, 128.0
      %v5687 = vsel %vm5671, %v578, 128.0
      %v5688 = vsel %vm5672, %v578, 128.0
      %v5689 = vsel %vm5673, %v578, 128.0
      %v5690 = vsel %vm5674, %v578, 128.0
      %v5691 = vsel %vm5675, %v578, 128.0
      %v5692 = vsel %vm5676, %v578, 128.0
      %v5693 = vsel %vm5677, %v578, 128.0
      %v5694 = vsel %vm5678, %v578, 128.0
      %5695 = vmin.xlane.f32.xlu0 %v5679
      %v5696 = vpop.xlane.xlu0 %5695
      %5697 = vmin.xlane.f32.xlu0 %v5680
      %v5698 = vpop.xlane.xlu0 %5697
      %5699 = vmin.xlane.f32.xlu0 %v5681
      %v5700 = vpop.xlane.xlu0 %5699
      %5701 = vmin.xlane.f32.xlu0 %v5682
      %v5702 = vpop.xlane.xlu0 %5701
      %5703 = vmin.xlane.f32.xlu0 %v5683
      %v5704 = vpop.xlane.xlu0 %5703
      %5705 = vmin.xlane.f32.xlu0 %v5684
      %v5706 = vpop.xlane.xlu0 %5705
      %5707 = vmin.xlane.f32.xlu0 %v5685
      %v5708 = vpop.xlane.xlu0 %5707
      %5709 = vmin.xlane.f32.xlu0 %v5686
      %v5710 = vpop.xlane.xlu0 %5709
      %5711 = vmin.xlane.f32.xlu0 %v5687
      %v5712 = vpop.xlane.xlu0 %5711
      %5713 = vmin.xlane.f32.xlu0 %v5688
      %v5714 = vpop.xlane.xlu0 %5713
      %5715 = vmin.xlane.f32.xlu0 %v5689
      %v5716 = vpop.xlane.xlu0 %5715
      %5717 = vmin.xlane.f32.xlu0 %v5690
      %v5718 = vpop.xlane.xlu0 %5717
      %5719 = vmin.xlane.f32.xlu0 %v5691
      %v5720 = vpop.xlane.xlu0 %5719
      %5721 = vmin.xlane.f32.xlu0 %v5692
      %v5722 = vpop.xlane.xlu0 %5721
      %5723 = vmin.xlane.f32.xlu0 %v5693
      %v5724 = vpop.xlane.xlu0 %5723
      %5725 = vmin.xlane.f32.xlu0 %v5694
      %v5726 = vpop.xlane.xlu0 %5725
      %vm5727 = vcmp.eq.f32.partialorder %v578, %v5696
      %vm5728 = vcmp.eq.f32.partialorder %v578, %v5698
      %vm5729 = vcmp.eq.f32.partialorder %v578, %v5700
      %vm5730 = vcmp.eq.f32.partialorder %v578, %v5702
      %vm5731 = vcmp.eq.f32.partialorder %v578, %v5704
      %vm5732 = vcmp.eq.f32.partialorder %v578, %v5706
      %vm5733 = vcmp.eq.f32.partialorder %v578, %v5708
      %vm5734 = vcmp.eq.f32.partialorder %v578, %v5710
      %vm5735 = vcmp.eq.f32.partialorder %v578, %v5712
      %vm5736 = vcmp.eq.f32.partialorder %v578, %v5714
      %vm5737 = vcmp.eq.f32.partialorder %v578, %v5716
      %vm5738 = vcmp.eq.f32.partialorder %v578, %v5718
      %vm5739 = vcmp.eq.f32.partialorder %v578, %v5720
      %vm5740 = vcmp.eq.f32.partialorder %v578, %v5722
      %vm5741 = vcmp.eq.f32.partialorder %v578, %v5724
      %vm5742 = vcmp.eq.f32.partialorder %v578, %v5726
      %v5743 = vsel %vm5727, 3.4028235e+38, %v5615
      %v5744 = vsel %vm5728, 3.4028235e+38, %v5616
      %v5745 = vsel %vm5729, 3.4028235e+38, %v5617
      %v5746 = vsel %vm5730, 3.4028235e+38, %v5618
      %v5747 = vsel %vm5731, 3.4028235e+38, %v5619
      %v5748 = vsel %vm5732, 3.4028235e+38, %v5620
      %v5749 = vsel %vm5733, 3.4028235e+38, %v5621
      %v5750 = vsel %vm5734, 3.4028235e+38, %v5622
      %v5751 = vsel %vm5735, 3.4028235e+38, %v5623
      %v5752 = vsel %vm5736, 3.4028235e+38, %v5624
      %v5753 = vsel %vm5737, 3.4028235e+38, %v5625
      %v5754 = vsel %vm5738, 3.4028235e+38, %v5626
      %v5755 = vsel %vm5739, 3.4028235e+38, %v5627
      %v5756 = vsel %vm5740, 3.4028235e+38, %v5628
      %v5757 = vsel %vm5741, 3.4028235e+38, %v5629
      %v5758 = vsel %vm5742, 3.4028235e+38, %v5630
      %5759 = vmin.xlane.f32.xlu0 %v5743
      %v5760 = vpop.xlane.xlu0 %5759
      %5761 = vmin.xlane.f32.xlu0 %v5744
      %v5762 = vpop.xlane.xlu0 %5761
      %5763 = vmin.xlane.f32.xlu0 %v5745
      %v5764 = vpop.xlane.xlu0 %5763
      %5765 = vmin.xlane.f32.xlu0 %v5746
      %v5766 = vpop.xlane.xlu0 %5765
      %5767 = vmin.xlane.f32.xlu0 %v5747
      %v5768 = vpop.xlane.xlu0 %5767
      %5769 = vmin.xlane.f32.xlu0 %v5748
      %v5770 = vpop.xlane.xlu0 %5769
      %5771 = vmin.xlane.f32.xlu0 %v5749
      %v5772 = vpop.xlane.xlu0 %5771
      %5773 = vmin.xlane.f32.xlu0 %v5750
      %v5774 = vpop.xlane.xlu0 %5773
      %5775 = vmin.xlane.f32.xlu0 %v5751
      %v5776 = vpop.xlane.xlu0 %5775
      %5777 = vmin.xlane.f32.xlu0 %v5752
      %v5778 = vpop.xlane.xlu0 %5777
      %5779 = vmin.xlane.f32.xlu0 %v5753
      %v5780 = vpop.xlane.xlu0 %5779
      %5781 = vmin.xlane.f32.xlu0 %v5754
      %v5782 = vpop.xlane.xlu0 %5781
      %5783 = vmin.xlane.f32.xlu0 %v5755
      %v5784 = vpop.xlane.xlu0 %5783
      %5785 = vmin.xlane.f32.xlu0 %v5756
      %v5786 = vpop.xlane.xlu0 %5785
      %5787 = vmin.xlane.f32.xlu0 %v5757
      %v5788 = vpop.xlane.xlu0 %5787
      %5789 = vmin.xlane.f32.xlu0 %v5758
      %v5790 = vpop.xlane.xlu0 %5789
      %vm5791 = vcmp.eq.f32.partialorder %v5743, %v5760
      %vm5792 = vcmp.eq.f32.partialorder %v5744, %v5762
      %vm5793 = vcmp.eq.f32.partialorder %v5745, %v5764
      %vm5794 = vcmp.eq.f32.partialorder %v5746, %v5766
      %vm5795 = vcmp.eq.f32.partialorder %v5747, %v5768
      %vm5796 = vcmp.eq.f32.partialorder %v5748, %v5770
      %vm5797 = vcmp.eq.f32.partialorder %v5749, %v5772
      %vm5798 = vcmp.eq.f32.partialorder %v5750, %v5774
      %vm5799 = vcmp.eq.f32.partialorder %v5751, %v5776
      %vm5800 = vcmp.eq.f32.partialorder %v5752, %v5778
      %vm5801 = vcmp.eq.f32.partialorder %v5753, %v5780
      %vm5802 = vcmp.eq.f32.partialorder %v5754, %v5782
      %vm5803 = vcmp.eq.f32.partialorder %v5755, %v5784
      %vm5804 = vcmp.eq.f32.partialorder %v5756, %v5786
      %vm5805 = vcmp.eq.f32.partialorder %v5757, %v5788
      %vm5806 = vcmp.eq.f32.partialorder %v5758, %v5790
      %v5807 = vsel %vm5791, %v578, 128.0
      %v5808 = vsel %vm5792, %v578, 128.0
      %v5809 = vsel %vm5793, %v578, 128.0
      %v5810 = vsel %vm5794, %v578, 128.0
      %v5811 = vsel %vm5795, %v578, 128.0
      %v5812 = vsel %vm5796, %v578, 128.0
      %v5813 = vsel %vm5797, %v578, 128.0
      %v5814 = vsel %vm5798, %v578, 128.0
      %v5815 = vsel %vm5799, %v578, 128.0
      %v5816 = vsel %vm5800, %v578, 128.0
      %v5817 = vsel %vm5801, %v578, 128.0
      %v5818 = vsel %vm5802, %v578, 128.0
      %v5819 = vsel %vm5803, %v578, 128.0
      %v5820 = vsel %vm5804, %v578, 128.0
      %v5821 = vsel %vm5805, %v578, 128.0
      %v5822 = vsel %vm5806, %v578, 128.0
      %5823 = vmin.xlane.f32.xlu0 %v5807
      %v5824 = vpop.xlane.xlu0 %5823
      %5825 = vmin.xlane.f32.xlu0 %v5808
      %v5826 = vpop.xlane.xlu0 %5825
      %5827 = vmin.xlane.f32.xlu0 %v5809
      %v5828 = vpop.xlane.xlu0 %5827
      %5829 = vmin.xlane.f32.xlu0 %v5810
      %v5830 = vpop.xlane.xlu0 %5829
      %5831 = vmin.xlane.f32.xlu0 %v5811
      %v5832 = vpop.xlane.xlu0 %5831
      %5833 = vmin.xlane.f32.xlu0 %v5812
      %v5834 = vpop.xlane.xlu0 %5833
      %5835 = vmin.xlane.f32.xlu0 %v5813
      %v5836 = vpop.xlane.xlu0 %5835
      %5837 = vmin.xlane.f32.xlu0 %v5814
      %v5838 = vpop.xlane.xlu0 %5837
      %5839 = vmin.xlane.f32.xlu0 %v5815
      %v5840 = vpop.xlane.xlu0 %5839
      %5841 = vmin.xlane.f32.xlu0 %v5816
      %v5842 = vpop.xlane.xlu0 %5841
      %5843 = vmin.xlane.f32.xlu0 %v5817
      %v5844 = vpop.xlane.xlu0 %5843
      %5845 = vmin.xlane.f32.xlu0 %v5818
      %v5846 = vpop.xlane.xlu0 %5845
      %5847 = vmin.xlane.f32.xlu0 %v5819
      %v5848 = vpop.xlane.xlu0 %5847
      %5849 = vmin.xlane.f32.xlu0 %v5820
      %v5850 = vpop.xlane.xlu0 %5849
      %5851 = vmin.xlane.f32.xlu0 %v5821
      %v5852 = vpop.xlane.xlu0 %5851
      %5853 = vmin.xlane.f32.xlu0 %v5822
      %v5854 = vpop.xlane.xlu0 %5853
      %vm5855 = vcmp.eq.f32.partialorder %v578, %v5824
      %vm5856 = vcmp.eq.f32.partialorder %v578, %v5826
      %vm5857 = vcmp.eq.f32.partialorder %v578, %v5828
      %vm5858 = vcmp.eq.f32.partialorder %v578, %v5830
      %vm5859 = vcmp.eq.f32.partialorder %v578, %v5832
      %vm5860 = vcmp.eq.f32.partialorder %v578, %v5834
      %vm5861 = vcmp.eq.f32.partialorder %v578, %v5836
      %vm5862 = vcmp.eq.f32.partialorder %v578, %v5838
      %vm5863 = vcmp.eq.f32.partialorder %v578, %v5840
      %vm5864 = vcmp.eq.f32.partialorder %v578, %v5842
      %vm5865 = vcmp.eq.f32.partialorder %v578, %v5844
      %vm5866 = vcmp.eq.f32.partialorder %v578, %v5846
      %vm5867 = vcmp.eq.f32.partialorder %v578, %v5848
      %vm5868 = vcmp.eq.f32.partialorder %v578, %v5850
      %vm5869 = vcmp.eq.f32.partialorder %v578, %v5852
      %vm5870 = vcmp.eq.f32.partialorder %v578, %v5854
      %v5871 = vsel %vm5855, 1, 0
      %v5872 = vsel %vm5856, 1, 0
      %v5873 = vsel %vm5857, 1, 0
      %v5874 = vsel %vm5858, 1, 0
      %v5875 = vsel %vm5859, 1, 0
      %v5876 = vsel %vm5860, 1, 0
      %v5877 = vsel %vm5861, 1, 0
      %v5878 = vsel %vm5862, 1, 0
      %v5879 = vsel %vm5863, 1, 0
      %v5880 = vsel %vm5864, 1, 0
      %v5881 = vsel %vm5865, 1, 0
      %v5882 = vsel %vm5866, 1, 0
      %v5883 = vsel %vm5867, 1, 0
      %v5884 = vsel %vm5868, 1, 0
      %v5885 = vsel %vm5869, 1, 0
      %v5886 = vsel %vm5870, 1, 0
      %v5887 = vcvt.s32.f32 %v5871
      %v5888 = vcvt.s32.f32 %v5872
      %v5889 = vcvt.s32.f32 %v5873
      %v5890 = vcvt.s32.f32 %v5874
      %v5891 = vcvt.s32.f32 %v5875
      %v5892 = vcvt.s32.f32 %v5876
      %v5893 = vcvt.s32.f32 %v5877
      %v5894 = vcvt.s32.f32 %v5878
      %v5895 = vcvt.s32.f32 %v5879
      %v5896 = vcvt.s32.f32 %v5880
      %v5897 = vcvt.s32.f32 %v5881
      %v5898 = vcvt.s32.f32 %v5882
      %v5899 = vcvt.s32.f32 %v5883
      %v5900 = vcvt.s32.f32 %v5884
      %v5901 = vcvt.s32.f32 %v5885
      %v5902 = vcvt.s32.f32 %v5886
      %5903 = vmatprep.subr.mxu0 0.0
      %5904 = vmatpush1.msra.mxu0 %v245
      %5905 = vmatprep.subr.mxu0 0.0
      %5906 = vmatpush1.msra.mxu0 %v246
      %5907 = vmatprep.subr.mxu0 0.0
      %5908 = vmatpush1.msra.mxu0 %v247
      %5909 = vmatprep.subr.mxu0 0.0
      %5910 = vmatpush1.msra.mxu0 %v248
      %5911 = vmatprep.subr.mxu0 0.0
      %5912 = vmatpush1.msra.mxu0 %v249
      %5913 = vmatprep.subr.mxu0 0.0
      %5914 = vmatpush1.msra.mxu0 %v250
      %5915 = vmatprep.subr.mxu0 0.0
      %5916 = vmatpush1.msra.mxu0 %v251
      %5917 = vmatprep.subr.mxu0 0.0
      %5918 = vmatpush1.msra.mxu0 %v252
      %5919 = vmatprep.subr.mxu0 0.0
      %5920 = vmatpush1.msra.mxu0 %v253
      %5921 = vmatprep.subr.mxu0 0.0
      %5922 = vmatpush1.msra.mxu0 %v254
      %5923 = vmatprep.subr.mxu0 0.0
      %5924 = vmatpush1.msra.mxu0 %v255
      %5925 = vmatprep.subr.mxu0 0.0
      %5926 = vmatpush1.msra.mxu0 %v256
      %5927 = vmatprep.subr.mxu0 0.0
      %5928 = vmatpush1.msra.mxu0 %v257
      %5929 = vmatprep.subr.mxu0 0.0
      %5930 = vmatpush1.msra.mxu0 %v258
      %5931 = vmatprep.subr.mxu0 0.0
      %5932 = vmatpush1.msra.mxu0 %v259
      %5933 = vmatprep.subr.mxu0 0.0
      %5934 = vmatpush1.msra.mxu0 %v260
      %5935 = vmatprep.subr.mxu0 0.0
      %5936 = vmatpush1.msra.mxu0 0.0
      %5937 = vmatprep.subr.mxu0 0.0
      %5938 = vmatpush1.msra.mxu0 0.0
      %5939 = vmatprep.subr.mxu0 0.0
      %5940 = vmatpush1.msra.mxu0 0.0
      %5941 = vmatprep.subr.mxu0 0.0
      %5942 = vmatpush1.msra.mxu0 0.0
      %5943 = vmatprep.subr.mxu0 0.0
      %5944 = vmatpush1.msra.mxu0 0.0
      %5945 = vmatprep.subr.mxu0 0.0
      %5946 = vmatpush1.msra.mxu0 0.0
      %5947 = vmatprep.subr.mxu0 0.0
      %5948 = vmatpush1.msra.mxu0 0.0
      %5949 = vmatprep.subr.mxu0 0.0
      %5950 = vmatpush1.msra.mxu0 0.0
      %5951 = vmatprep.subr.mxu0 0.0
      %5952 = vmatpush1.msra.mxu0 0.0
      %5953 = vmatprep.subr.mxu0 0.0
      %5954 = vmatpush1.msra.mxu0 0.0
      %5955 = vmatprep.subr.mxu0 0.0
      %5956 = vmatpush1.msra.mxu0 0.0
      %5957 = vmatprep.subr.mxu0 0.0
      %5958 = vmatpush1.msra.mxu0 0.0
      %5959 = vmatprep.subr.mxu0 0.0
      %5960 = vmatpush1.msra.mxu0 0.0
      %5961 = vmatprep.subr.mxu0 0.0
      %5962 = vmatpush1.msra.mxu0 0.0
      %5963 = vmatprep.subr.mxu0 0.0
      %5964 = vmatpush1.msra.mxu0 0.0
      %5965 = vmatprep.subr.mxu0 0.0
      %5966 = vmatpush1.msra.mxu0 0.0
      %5967 = vmatprep.mubr.f32.mxu0 0.0
      %5968 = vmatmul.mubr.f32.gmra.mrb[0].mxu0 %v5887
      %v5969 = vpop.f32.mrb[0].mxu0
      %v5970 = vadd.f32 0.0, %v5969
      %v5971 = vpop.f32.mrb[0].mxu0
      %5972 = vmatprep.mubr.f32.mxu0 0.0
      %5973 = vmatmul.mubr.f32.gmra.mrb[0].mxu0 %v5888
      %v5974 = vpop.f32.mrb[0].mxu0
      %v5975 = vadd.f32 0.0, %v5974
      %v5976 = vpop.f32.mrb[0].mxu0
      %5977 = vmatprep.mubr.f32.mxu0 0.0
      %5978 = vmatmul.mubr.f32.gmra.mrb[0].mxu0 %v5889
      %v5979 = vpop.f32.mrb[0].mxu0
      %v5980 = vadd.f32 0.0, %v5979
      %v5981 = vpop.f32.mrb[0].mxu0
      %5982 = vmatprep.mubr.f32.mxu0 0.0
      %5983 = vmatmul.mubr.f32.gmra.mrb[0].mxu0 %v5890
      %v5984 = vpop.f32.mrb[0].mxu0
      %v5985 = vadd.f32 0.0, %v5984
      %v5986 = vpop.f32.mrb[0].mxu0
      %5987 = vmatprep.mubr.f32.mxu0 0.0
      %5988 = vmatmul.mubr.f32.gmra.mrb[0].mxu0 %v5891
      %v5989 = vpop.f32.mrb[0].mxu0
      %v5990 = vadd.f32 0.0, %v5989
      %v5991 = vpop.f32.mrb[0].mxu0
      %5992 = vmatprep.mubr.f32.mxu0 0.0
      %5993 = vmatmul.mubr.f32.gmra.mrb[0].mxu0 %v5892
      %v5994 = vpop.f32.mrb[0].mxu0
      %v5995 = vadd.f32 0.0, %v5994
      %v5996 = vpop.f32.mrb[0].mxu0
      %5997 = vmatprep.mubr.f32.mxu0 0.0
      %5998 = vmatmul.mubr.f32.gmra.mrb[0].mxu0 %v5893
      %v5999 = vpop.f32.mrb[0].mxu0
      %v6000 = vadd.f32 0.0, %v5999
      %v6001 = vpop.f32.mrb[0].mxu0
      %6002 = vmatprep.mubr.f32.mxu0 0.0
      %6003 = vmatmul.mubr.f32.gmra.mrb[0].mxu0 %v5894
      %v6004 = vpop.f32.mrb[0].mxu0
      %v6005 = vadd.f32 0.0, %v6004
      %v6006 = vpop.f32.mrb[0].mxu0
      %6007 = vmatprep.mubr.f32.mxu0 0.0
      %6008 = vmatmul.mubr.f32.gmra.mrb[0].mxu0 %v5895
      %v6009 = vpop.f32.mrb[0].mxu0
      %v6010 = vadd.f32 0.0, %v6009
      %v6011 = vpop.f32.mrb[0].mxu0
      %6012 = vmatprep.mubr.f32.mxu0 0.0
      %6013 = vmatmul.mubr.f32.gmra.mrb[0].mxu0 %v5896
      %v6014 = vpop.f32.mrb[0].mxu0
      %v6015 = vadd.f32 0.0, %v6014
      %v6016 = vpop.f32.mrb[0].mxu0
      %6017 = vmatprep.mubr.f32.mxu0 0.0
      %6018 = vmatmul.mubr.f32.gmra.mrb[0].mxu0 %v5897
      %v6019 = vpop.f32.mrb[0].mxu0
      %v6020 = vadd.f32 0.0, %v6019
      %v6021 = vpop.f32.mrb[0].mxu0
      %6022 = vmatprep.mubr.f32.mxu0 0.0
      %6023 = vmatmul.mubr.f32.gmra.mrb[0].mxu0 %v5898
      %v6024 = vpop.f32.mrb[0].mxu0
      %v6025 = vadd.f32 0.0, %v6024
      %v6026 = vpop.f32.mrb[0].mxu0
      %6027 = vmatprep.mubr.f32.mxu0 0.0
      %6028 = vmatmul.mubr.f32.gmra.mrb[0].mxu0 %v5899
      %v6029 = vpop.f32.mrb[0].mxu0
      %v6030 = vadd.f32 0.0, %v6029
      %v6031 = vpop.f32.mrb[0].mxu0
      %6032 = vmatprep.mubr.f32.mxu0 0.0
      %6033 = vmatmul.mubr.f32.gmra.mrb[0].mxu0 %v5900
      %v6034 = vpop.f32.mrb[0].mxu0
      %v6035 = vadd.f32 0.0, %v6034
      %v6036 = vpop.f32.mrb[0].mxu0
      %6037 = vmatprep.mubr.f32.mxu0 0.0
      %6038 = vmatmul.mubr.f32.gmra.mrb[0].mxu0 %v5901
      %v6039 = vpop.f32.mrb[0].mxu0
      %v6040 = vadd.f32 0.0, %v6039
      %v6041 = vpop.f32.mrb[0].mxu0
      %6042 = vmatprep.mubr.f32.mxu0 0.0
      %6043 = vmatmul.mubr.f32.gmra.mrb[0].mxu0 %v5902
      %v6044 = vpop.f32.mrb[0].mxu0
      %v6045 = vadd.f32 0.0, %v6044
      %v6046 = vpop.f32.mrb[0].mxu0
      %6047 = vdwg.mxu0
      %v6048 = vsel %vm595, %v5970, 0.0
      %v6049 = vsel %vm595, %v5975, 0.0
      %v6050 = vsel %vm595, %v5980, 0.0
      %v6051 = vsel %vm595, %v5985, 0.0
      %v6052 = vsel %vm595, %v5990, 0.0
      %v6053 = vsel %vm595, %v5995, 0.0
      %v6054 = vsel %vm595, %v6000, 0.0
      %v6055 = vsel %vm595, %v6005, 0.0
      %v6056 = vsel %vm595, %v6010, 0.0
      %v6057 = vsel %vm595, %v6015, 0.0
      %v6058 = vsel %vm595, %v6020, 0.0
      %v6059 = vsel %vm595, %v6025, 0.0
      %v6060 = vsel %vm595, %v6030, 0.0
      %v6061 = vsel %vm595, %v6035, 0.0
      %v6062 = vsel %vm595, %v6040, 0.0
      %v6063 = vsel %vm595, %v6045, 0.0
      %v6064 = vsel %vm612, %v6048, 0.0
      %6065 = vadd.xlane.f32.xlu0 %v6064
      %v6066 = vpop.xlane.xlu0 %6065
      %v6067 = vsel %vm612, %v6049, 0.0
      %6068 = vadd.xlane.f32.xlu0 %v6067
      %v6069 = vpop.xlane.xlu0 %6068
      %v6070 = vsel %vm612, %v6050, 0.0
      %6071 = vadd.xlane.f32.xlu0 %v6070
      %v6072 = vpop.xlane.xlu0 %6071
      %v6073 = vsel %vm612, %v6051, 0.0
      %6074 = vadd.xlane.f32.xlu0 %v6073
      %v6075 = vpop.xlane.xlu0 %6074
      %v6076 = vsel %vm612, %v6052, 0.0
      %6077 = vadd.xlane.f32.xlu0 %v6076
      %v6078 = vpop.xlane.xlu0 %6077
      %v6079 = vsel %vm612, %v6053, 0.0
      %6080 = vadd.xlane.f32.xlu0 %v6079
      %v6081 = vpop.xlane.xlu0 %6080
      %v6082 = vsel %vm612, %v6054, 0.0
      %6083 = vadd.xlane.f32.xlu0 %v6082
      %v6084 = vpop.xlane.xlu0 %6083
      %v6085 = vsel %vm612, %v6055, 0.0
      %6086 = vadd.xlane.f32.xlu0 %v6085
      %v6087 = vpop.xlane.xlu0 %6086
      %v6088 = vsel %vm612, %v6056, 0.0
      %6089 = vadd.xlane.f32.xlu0 %v6088
      %v6090 = vpop.xlane.xlu0 %6089
      %v6091 = vsel %vm612, %v6057, 0.0
      %6092 = vadd.xlane.f32.xlu0 %v6091
      %v6093 = vpop.xlane.xlu0 %6092
      %v6094 = vsel %vm612, %v6058, 0.0
      %6095 = vadd.xlane.f32.xlu0 %v6094
      %v6096 = vpop.xlane.xlu0 %6095
      %v6097 = vsel %vm612, %v6059, 0.0
      %6098 = vadd.xlane.f32.xlu0 %v6097
      %v6099 = vpop.xlane.xlu0 %6098
      %v6100 = vsel %vm612, %v6060, 0.0
      %6101 = vadd.xlane.f32.xlu0 %v6100
      %v6102 = vpop.xlane.xlu0 %6101
      %v6103 = vsel %vm612, %v6061, 0.0
      %6104 = vadd.xlane.f32.xlu0 %v6103
      %v6105 = vpop.xlane.xlu0 %6104
      %v6106 = vsel %vm612, %v6062, 0.0
      %6107 = vadd.xlane.f32.xlu0 %v6106
      %v6108 = vpop.xlane.xlu0 %6107
      %v6109 = vsel %vm612, %v6063, 0.0
      %6110 = vadd.xlane.f32.xlu0 %v6109
      %v6111 = vpop.xlane.xlu0 %6110
      %v6112 = vsel %vm661, %v5970, 0.0
      %v6113 = vsel %vm661, %v5975, 0.0
      %v6114 = vsel %vm661, %v5980, 0.0
      %v6115 = vsel %vm661, %v5985, 0.0
      %v6116 = vsel %vm661, %v5990, 0.0
      %v6117 = vsel %vm661, %v5995, 0.0
      %v6118 = vsel %vm661, %v6000, 0.0
      %v6119 = vsel %vm661, %v6005, 0.0
      %v6120 = vsel %vm661, %v6010, 0.0
      %v6121 = vsel %vm661, %v6015, 0.0
      %v6122 = vsel %vm661, %v6020, 0.0
      %v6123 = vsel %vm661, %v6025, 0.0
      %v6124 = vsel %vm661, %v6030, 0.0
      %v6125 = vsel %vm661, %v6035, 0.0
      %v6126 = vsel %vm661, %v6040, 0.0
      %v6127 = vsel %vm661, %v6045, 0.0
      %v6128 = vsel %vm612, %v6112, 0.0
      %6129 = vadd.xlane.f32.xlu0 %v6128
      %v6130 = vpop.xlane.xlu0 %6129
      %v6131 = vsel %vm612, %v6113, 0.0
      %6132 = vadd.xlane.f32.xlu0 %v6131
      %v6133 = vpop.xlane.xlu0 %6132
      %v6134 = vsel %vm612, %v6114, 0.0
      %6135 = vadd.xlane.f32.xlu0 %v6134
      %v6136 = vpop.xlane.xlu0 %6135
      %v6137 = vsel %vm612, %v6115, 0.0
      %6138 = vadd.xlane.f32.xlu0 %v6137
      %v6139 = vpop.xlane.xlu0 %6138
      %v6140 = vsel %vm612, %v6116, 0.0
      %6141 = vadd.xlane.f32.xlu0 %v6140
      %v6142 = vpop.xlane.xlu0 %6141
      %v6143 = vsel %vm612, %v6117, 0.0
      %6144 = vadd.xlane.f32.xlu0 %v6143
      %v6145 = vpop.xlane.xlu0 %6144
      %v6146 = vsel %vm612, %v6118, 0.0
      %6147 = vadd.xlane.f32.xlu0 %v6146
      %v6148 = vpop.xlane.xlu0 %6147
      %v6149 = vsel %vm612, %v6119, 0.0
      %6150 = vadd.xlane.f32.xlu0 %v6149
      %v6151 = vpop.xlane.xlu0 %6150
      %v6152 = vsel %vm612, %v6120, 0.0
      %6153 = vadd.xlane.f32.xlu0 %v6152
      %v6154 = vpop.xlane.xlu0 %6153
      %v6155 = vsel %vm612, %v6121, 0.0
      %6156 = vadd.xlane.f32.xlu0 %v6155
      %v6157 = vpop.xlane.xlu0 %6156
      %v6158 = vsel %vm612, %v6122, 0.0
      %6159 = vadd.xlane.f32.xlu0 %v6158
      %v6160 = vpop.xlane.xlu0 %6159
      %v6161 = vsel %vm612, %v6123, 0.0
      %6162 = vadd.xlane.f32.xlu0 %v6161
      %v6163 = vpop.xlane.xlu0 %6162
      %v6164 = vsel %vm612, %v6124, 0.0
      %6165 = vadd.xlane.f32.xlu0 %v6164
      %v6166 = vpop.xlane.xlu0 %6165
      %v6167 = vsel %vm612, %v6125, 0.0
      %6168 = vadd.xlane.f32.xlu0 %v6167
      %v6169 = vpop.xlane.xlu0 %6168
      %v6170 = vsel %vm612, %v6126, 0.0
      %6171 = vadd.xlane.f32.xlu0 %v6170
      %v6172 = vpop.xlane.xlu0 %6171
      %v6173 = vsel %vm612, %v6127, 0.0
      %6174 = vadd.xlane.f32.xlu0 %v6173
      %v6175 = vpop.xlane.xlu0 %6174
      %v6176 = vsel %vm726, %v5970, 0.0
      %v6177 = vsel %vm726, %v5975, 0.0
      %v6178 = vsel %vm726, %v5980, 0.0
      %v6179 = vsel %vm726, %v5985, 0.0
      %v6180 = vsel %vm726, %v5990, 0.0
      %v6181 = vsel %vm726, %v5995, 0.0
      %v6182 = vsel %vm726, %v6000, 0.0
      %v6183 = vsel %vm726, %v6005, 0.0
      %v6184 = vsel %vm726, %v6010, 0.0
      %v6185 = vsel %vm726, %v6015, 0.0
      %v6186 = vsel %vm726, %v6020, 0.0
      %v6187 = vsel %vm726, %v6025, 0.0
      %v6188 = vsel %vm726, %v6030, 0.0
      %v6189 = vsel %vm726, %v6035, 0.0
      %v6190 = vsel %vm726, %v6040, 0.0
      %v6191 = vsel %vm726, %v6045, 0.0
      %v6192 = vsel %vm612, %v6176, 0.0
      %6193 = vadd.xlane.f32.xlu0 %v6192
      %v6194 = vpop.xlane.xlu0 %6193
      %v6195 = vsel %vm612, %v6177, 0.0
      %6196 = vadd.xlane.f32.xlu0 %v6195
      %v6197 = vpop.xlane.xlu0 %6196
      %v6198 = vsel %vm612, %v6178, 0.0
      %6199 = vadd.xlane.f32.xlu0 %v6198
      %v6200 = vpop.xlane.xlu0 %6199
      %v6201 = vsel %vm612, %v6179, 0.0
      %6202 = vadd.xlane.f32.xlu0 %v6201
      %v6203 = vpop.xlane.xlu0 %6202
      %v6204 = vsel %vm612, %v6180, 0.0
      %6205 = vadd.xlane.f32.xlu0 %v6204
      %v6206 = vpop.xlane.xlu0 %6205
      %v6207 = vsel %vm612, %v6181, 0.0
      %6208 = vadd.xlane.f32.xlu0 %v6207
      %v6209 = vpop.xlane.xlu0 %6208
      %v6210 = vsel %vm612, %v6182, 0.0
      %6211 = vadd.xlane.f32.xlu0 %v6210
      %v6212 = vpop.xlane.xlu0 %6211
      %v6213 = vsel %vm612, %v6183, 0.0
      %6214 = vadd.xlane.f32.xlu0 %v6213
      %v6215 = vpop.xlane.xlu0 %6214
      %v6216 = vsel %vm612, %v6184, 0.0
      %6217 = vadd.xlane.f32.xlu0 %v6216
      %v6218 = vpop.xlane.xlu0 %6217
      %v6219 = vsel %vm612, %v6185, 0.0
      %6220 = vadd.xlane.f32.xlu0 %v6219
      %v6221 = vpop.xlane.xlu0 %6220
      %v6222 = vsel %vm612, %v6186, 0.0
      %6223 = vadd.xlane.f32.xlu0 %v6222
      %v6224 = vpop.xlane.xlu0 %6223
      %v6225 = vsel %vm612, %v6187, 0.0
      %6226 = vadd.xlane.f32.xlu0 %v6225
      %v6227 = vpop.xlane.xlu0 %6226
      %v6228 = vsel %vm612, %v6188, 0.0
      %6229 = vadd.xlane.f32.xlu0 %v6228
      %v6230 = vpop.xlane.xlu0 %6229
      %v6231 = vsel %vm612, %v6189, 0.0
      %6232 = vadd.xlane.f32.xlu0 %v6231
      %v6233 = vpop.xlane.xlu0 %6232
      %v6234 = vsel %vm612, %v6190, 0.0
      %6235 = vadd.xlane.f32.xlu0 %v6234
      %v6236 = vpop.xlane.xlu0 %6235
      %v6237 = vsel %vm612, %v6191, 0.0
      %6238 = vadd.xlane.f32.xlu0 %v6237
      %v6239 = vpop.xlane.xlu0 %6238
      %v6240 = vsub.f32 %v615, %v6066
      %v6241 = vsub.f32 %v618, %v6069
      %v6242 = vsub.f32 %v621, %v6072
      %v6243 = vsub.f32 %v624, %v6075
      %v6244 = vsub.f32 %v627, %v6078
      %v6245 = vsub.f32 %v630, %v6081
      %v6246 = vsub.f32 %v633, %v6084
      %v6247 = vsub.f32 %v636, %v6087
      %v6248 = vsub.f32 %v639, %v6090
      %v6249 = vsub.f32 %v642, %v6093
      %v6250 = vsub.f32 %v645, %v6096
      %v6251 = vsub.f32 %v648, %v6099
      %v6252 = vsub.f32 %v651, %v6102
      %v6253 = vsub.f32 %v654, %v6105
      %v6254 = vsub.f32 %v657, %v6108
      %v6255 = vsub.f32 %v660, %v6111
      %v6256 = vsub.f32 %v680, %v6130
      %v6257 = vsub.f32 %v683, %v6133
      %v6258 = vsub.f32 %v686, %v6136
      %v6259 = vsub.f32 %v689, %v6139
      %v6260 = vsub.f32 %v692, %v6142
      %v6261 = vsub.f32 %v695, %v6145
      %v6262 = vsub.f32 %v698, %v6148
      %v6263 = vsub.f32 %v701, %v6151
      %v6264 = vsub.f32 %v704, %v6154
      %v6265 = vsub.f32 %v707, %v6157
      %v6266 = vsub.f32 %v710, %v6160
      %v6267 = vsub.f32 %v713, %v6163
      %v6268 = vsub.f32 %v716, %v6166
      %v6269 = vsub.f32 %v719, %v6169
      %v6270 = vsub.f32 %v722, %v6172
      %v6271 = vsub.f32 %v725, %v6175
      %v6272 = vsub.f32 %v745, %v6194
      %v6273 = vsub.f32 %v748, %v6197
      %v6274 = vsub.f32 %v751, %v6200
      %v6275 = vsub.f32 %v754, %v6203
      %v6276 = vsub.f32 %v757, %v6206
      %v6277 = vsub.f32 %v760, %v6209
      %v6278 = vsub.f32 %v763, %v6212
      %v6279 = vsub.f32 %v766, %v6215
      %v6280 = vsub.f32 %v769, %v6218
      %v6281 = vsub.f32 %v772, %v6221
      %v6282 = vsub.f32 %v775, %v6224
      %v6283 = vsub.f32 %v778, %v6227
      %v6284 = vsub.f32 %v781, %v6230
      %v6285 = vsub.f32 %v784, %v6233
      %v6286 = vsub.f32 %v787, %v6236
      %v6287 = vsub.f32 %v790, %v6239
      %v6288 = vmul.f32 %v6240, %v6240
      %v6289 = vmul.f32 %v6241, %v6241
      %v6290 = vmul.f32 %v6242, %v6242
      %v6291 = vmul.f32 %v6243, %v6243
      %v6292 = vmul.f32 %v6244, %v6244
      %v6293 = vmul.f32 %v6245, %v6245
      %v6294 = vmul.f32 %v6246, %v6246
      %v6295 = vmul.f32 %v6247, %v6247
      %v6296 = vmul.f32 %v6248, %v6248
      %v6297 = vmul.f32 %v6249, %v6249
      %v6298 = vmul.f32 %v6250, %v6250
      %v6299 = vmul.f32 %v6251, %v6251
      %v6300 = vmul.f32 %v6252, %v6252
      %v6301 = vmul.f32 %v6253, %v6253
      %v6302 = vmul.f32 %v6254, %v6254
      %v6303 = vmul.f32 %v6255, %v6255
      %v6304 = vmul.f32 %v6256, %v6256
      %v6305 = vmul.f32 %v6257, %v6257
      %v6306 = vmul.f32 %v6258, %v6258
      %v6307 = vmul.f32 %v6259, %v6259
      %v6308 = vmul.f32 %v6260, %v6260
      %v6309 = vmul.f32 %v6261, %v6261
      %v6310 = vmul.f32 %v6262, %v6262
      %v6311 = vmul.f32 %v6263, %v6263
      %v6312 = vmul.f32 %v6264, %v6264
      %v6313 = vmul.f32 %v6265, %v6265
      %v6314 = vmul.f32 %v6266, %v6266
      %v6315 = vmul.f32 %v6267, %v6267
      %v6316 = vmul.f32 %v6268, %v6268
      %v6317 = vmul.f32 %v6269, %v6269
      %v6318 = vmul.f32 %v6270, %v6270
      %v6319 = vmul.f32 %v6271, %v6271
      %v6320 = vadd.f32 %v6288, %v6304
      %v6321 = vadd.f32 %v6289, %v6305
      %v6322 = vadd.f32 %v6290, %v6306
      %v6323 = vadd.f32 %v6291, %v6307
      %v6324 = vadd.f32 %v6292, %v6308
      %v6325 = vadd.f32 %v6293, %v6309
      %v6326 = vadd.f32 %v6294, %v6310
      %v6327 = vadd.f32 %v6295, %v6311
      %v6328 = vadd.f32 %v6296, %v6312
      %v6329 = vadd.f32 %v6297, %v6313
      %v6330 = vadd.f32 %v6298, %v6314
      %v6331 = vadd.f32 %v6299, %v6315
      %v6332 = vadd.f32 %v6300, %v6316
      %v6333 = vadd.f32 %v6301, %v6317
      %v6334 = vadd.f32 %v6302, %v6318
      %v6335 = vadd.f32 %v6303, %v6319
      %v6336 = vmul.f32 %v6272, %v6272
      %v6337 = vmul.f32 %v6273, %v6273
      %v6338 = vmul.f32 %v6274, %v6274
      %v6339 = vmul.f32 %v6275, %v6275
      %v6340 = vmul.f32 %v6276, %v6276
      %v6341 = vmul.f32 %v6277, %v6277
      %v6342 = vmul.f32 %v6278, %v6278
      %v6343 = vmul.f32 %v6279, %v6279
      %v6344 = vmul.f32 %v6280, %v6280
      %v6345 = vmul.f32 %v6281, %v6281
      %v6346 = vmul.f32 %v6282, %v6282
      %v6347 = vmul.f32 %v6283, %v6283
      %v6348 = vmul.f32 %v6284, %v6284
      %v6349 = vmul.f32 %v6285, %v6285
      %v6350 = vmul.f32 %v6286, %v6286
      %v6351 = vmul.f32 %v6287, %v6287
      %v6352 = vadd.f32 %v6320, %v6336
      %v6353 = vadd.f32 %v6321, %v6337
      %v6354 = vadd.f32 %v6322, %v6338
      %v6355 = vadd.f32 %v6323, %v6339
      %v6356 = vadd.f32 %v6324, %v6340
      %v6357 = vadd.f32 %v6325, %v6341
      %v6358 = vadd.f32 %v6326, %v6342
      %v6359 = vadd.f32 %v6327, %v6343
      %v6360 = vadd.f32 %v6328, %v6344
      %v6361 = vadd.f32 %v6329, %v6345
      %v6362 = vadd.f32 %v6330, %v6346
      %v6363 = vadd.f32 %v6331, %v6347
      %v6364 = vadd.f32 %v6332, %v6348
      %v6365 = vadd.f32 %v6333, %v6349
      %v6366 = vadd.f32 %v6334, %v6350
      %v6367 = vadd.f32 %v6335, %v6351
      %v6368 = vrsqrt.pop %v6352
      %v6369 = vmul.f32 %v6352, %v6368
      %vm6370 = vcmp.eq.f32.partialorder %v6352, inf
      %v6371 = vsel %vm6370, %v6352, %v6369
      %vm6372 = vcmp.eq.f32.partialorder %v6352, 0.0
      %v6373 = vand.u32 %v6352, 2147483648
      %v6374 = vsel %vm6372, %v6373, %v6371
      %v6375 = vrsqrt.pop %v6353
      %v6376 = vmul.f32 %v6353, %v6375
      %vm6377 = vcmp.eq.f32.partialorder %v6353, inf
      %v6378 = vsel %vm6377, %v6353, %v6376
      %vm6379 = vcmp.eq.f32.partialorder %v6353, 0.0
      %v6380 = vand.u32 %v6353, 2147483648
      %v6381 = vsel %vm6379, %v6380, %v6378
      %v6382 = vrsqrt.pop %v6354
      %v6383 = vmul.f32 %v6354, %v6382
      %vm6384 = vcmp.eq.f32.partialorder %v6354, inf
      %v6385 = vsel %vm6384, %v6354, %v6383
      %vm6386 = vcmp.eq.f32.partialorder %v6354, 0.0
      %v6387 = vand.u32 %v6354, 2147483648
      %v6388 = vsel %vm6386, %v6387, %v6385
      %v6389 = vrsqrt.pop %v6355
      %v6390 = vmul.f32 %v6355, %v6389
      %vm6391 = vcmp.eq.f32.partialorder %v6355, inf
      %v6392 = vsel %vm6391, %v6355, %v6390
      %vm6393 = vcmp.eq.f32.partialorder %v6355, 0.0
      %v6394 = vand.u32 %v6355, 2147483648
      %v6395 = vsel %vm6393, %v6394, %v6392
      %v6396 = vrsqrt.pop %v6356
      %v6397 = vmul.f32 %v6356, %v6396
      %vm6398 = vcmp.eq.f32.partialorder %v6356, inf
      %v6399 = vsel %vm6398, %v6356, %v6397
      %vm6400 = vcmp.eq.f32.partialorder %v6356, 0.0
      %v6401 = vand.u32 %v6356, 2147483648
      %v6402 = vsel %vm6400, %v6401, %v6399
      %v6403 = vrsqrt.pop %v6357
      %v6404 = vmul.f32 %v6357, %v6403
      %vm6405 = vcmp.eq.f32.partialorder %v6357, inf
      %v6406 = vsel %vm6405, %v6357, %v6404
      %vm6407 = vcmp.eq.f32.partialorder %v6357, 0.0
      %v6408 = vand.u32 %v6357, 2147483648
      %v6409 = vsel %vm6407, %v6408, %v6406
      %v6410 = vrsqrt.pop %v6358
      %v6411 = vmul.f32 %v6358, %v6410
      %vm6412 = vcmp.eq.f32.partialorder %v6358, inf
      %v6413 = vsel %vm6412, %v6358, %v6411
      %vm6414 = vcmp.eq.f32.partialorder %v6358, 0.0
      %v6415 = vand.u32 %v6358, 2147483648
      %v6416 = vsel %vm6414, %v6415, %v6413
      %v6417 = vrsqrt.pop %v6359
      %v6418 = vmul.f32 %v6359, %v6417
      %vm6419 = vcmp.eq.f32.partialorder %v6359, inf
      %v6420 = vsel %vm6419, %v6359, %v6418
      %vm6421 = vcmp.eq.f32.partialorder %v6359, 0.0
      %v6422 = vand.u32 %v6359, 2147483648
      %v6423 = vsel %vm6421, %v6422, %v6420
      %v6424 = vrsqrt.pop %v6360
      %v6425 = vmul.f32 %v6360, %v6424
      %vm6426 = vcmp.eq.f32.partialorder %v6360, inf
      %v6427 = vsel %vm6426, %v6360, %v6425
      %vm6428 = vcmp.eq.f32.partialorder %v6360, 0.0
      %v6429 = vand.u32 %v6360, 2147483648
      %v6430 = vsel %vm6428, %v6429, %v6427
      %v6431 = vrsqrt.pop %v6361
      %v6432 = vmul.f32 %v6361, %v6431
      %vm6433 = vcmp.eq.f32.partialorder %v6361, inf
      %v6434 = vsel %vm6433, %v6361, %v6432
      %vm6435 = vcmp.eq.f32.partialorder %v6361, 0.0
      %v6436 = vand.u32 %v6361, 2147483648
      %v6437 = vsel %vm6435, %v6436, %v6434
      %v6438 = vrsqrt.pop %v6362
      %v6439 = vmul.f32 %v6362, %v6438
      %vm6440 = vcmp.eq.f32.partialorder %v6362, inf
      %v6441 = vsel %vm6440, %v6362, %v6439
      %vm6442 = vcmp.eq.f32.partialorder %v6362, 0.0
      %v6443 = vand.u32 %v6362, 2147483648
      %v6444 = vsel %vm6442, %v6443, %v6441
      %v6445 = vrsqrt.pop %v6363
      %v6446 = vmul.f32 %v6363, %v6445
      %vm6447 = vcmp.eq.f32.partialorder %v6363, inf
      %v6448 = vsel %vm6447, %v6363, %v6446
      %vm6449 = vcmp.eq.f32.partialorder %v6363, 0.0
      %v6450 = vand.u32 %v6363, 2147483648
      %v6451 = vsel %vm6449, %v6450, %v6448
      %v6452 = vrsqrt.pop %v6364
      %v6453 = vmul.f32 %v6364, %v6452
      %vm6454 = vcmp.eq.f32.partialorder %v6364, inf
      %v6455 = vsel %vm6454, %v6364, %v6453
      %vm6456 = vcmp.eq.f32.partialorder %v6364, 0.0
      %v6457 = vand.u32 %v6364, 2147483648
      %v6458 = vsel %vm6456, %v6457, %v6455
      %v6459 = vrsqrt.pop %v6365
      %v6460 = vmul.f32 %v6365, %v6459
      %vm6461 = vcmp.eq.f32.partialorder %v6365, inf
      %v6462 = vsel %vm6461, %v6365, %v6460
      %vm6463 = vcmp.eq.f32.partialorder %v6365, 0.0
      %v6464 = vand.u32 %v6365, 2147483648
      %v6465 = vsel %vm6463, %v6464, %v6462
      %v6466 = vrsqrt.pop %v6366
      %v6467 = vmul.f32 %v6366, %v6466
      %vm6468 = vcmp.eq.f32.partialorder %v6366, inf
      %v6469 = vsel %vm6468, %v6366, %v6467
      %vm6470 = vcmp.eq.f32.partialorder %v6366, 0.0
      %v6471 = vand.u32 %v6366, 2147483648
      %v6472 = vsel %vm6470, %v6471, %v6469
      %v6473 = vrsqrt.pop %v6367
      %v6474 = vmul.f32 %v6367, %v6473
      %vm6475 = vcmp.eq.f32.partialorder %v6367, inf
      %v6476 = vsel %vm6475, %v6367, %v6474
      %vm6477 = vcmp.eq.f32.partialorder %v6367, 0.0
      %v6478 = vand.u32 %v6367, 2147483648
      %v6479 = vsel %vm6477, %v6478, %v6476
      %vm6480 = vcmp.eq.s32.totalorder %v577, 50
      %v6481 = vsel %vm6480, %v6374, %v5599
      %v6482 = vsel %vm6480, %v6381, %v5600
      %v6483 = vsel %vm6480, %v6388, %v5601
      %v6484 = vsel %vm6480, %v6395, %v5602
      %v6485 = vsel %vm6480, %v6402, %v5603
      %v6486 = vsel %vm6480, %v6409, %v5604
      %v6487 = vsel %vm6480, %v6416, %v5605
      %v6488 = vsel %vm6480, %v6423, %v5606
      %v6489 = vsel %vm6480, %v6430, %v5607
      %v6490 = vsel %vm6480, %v6437, %v5608
      %v6491 = vsel %vm6480, %v6444, %v5609
      %v6492 = vsel %vm6480, %v6451, %v5610
      %v6493 = vsel %vm6480, %v6458, %v5611
      %v6494 = vsel %vm6480, %v6465, %v5612
      %v6495 = vsel %vm6480, %v6472, %v5613
      %v6496 = vsel %vm6480, %v6479, %v5614
      %vm6497 = vcmp.eq.s32.totalorder %v577, 51
      %v6498 = vsel %vm6497, %v6240, %v6481
      %v6499 = vsel %vm6497, %v6241, %v6482
      %v6500 = vsel %vm6497, %v6242, %v6483
      %v6501 = vsel %vm6497, %v6243, %v6484
      %v6502 = vsel %vm6497, %v6244, %v6485
      %v6503 = vsel %vm6497, %v6245, %v6486
      %v6504 = vsel %vm6497, %v6246, %v6487
      %v6505 = vsel %vm6497, %v6247, %v6488
      %v6506 = vsel %vm6497, %v6248, %v6489
      %v6507 = vsel %vm6497, %v6249, %v6490
      %v6508 = vsel %vm6497, %v6250, %v6491
      %v6509 = vsel %vm6497, %v6251, %v6492
      %v6510 = vsel %vm6497, %v6252, %v6493
      %v6511 = vsel %vm6497, %v6253, %v6494
      %v6512 = vsel %vm6497, %v6254, %v6495
      %v6513 = vsel %vm6497, %v6255, %v6496
      %vm6514 = vcmp.eq.s32.totalorder %v577, 52
      %v6515 = vsel %vm6514, %v6256, %v6498
      %v6516 = vsel %vm6514, %v6257, %v6499
      %v6517 = vsel %vm6514, %v6258, %v6500
      %v6518 = vsel %vm6514, %v6259, %v6501
      %v6519 = vsel %vm6514, %v6260, %v6502
      %v6520 = vsel %vm6514, %v6261, %v6503
      %v6521 = vsel %vm6514, %v6262, %v6504
      %v6522 = vsel %vm6514, %v6263, %v6505
      %v6523 = vsel %vm6514, %v6264, %v6506
      %v6524 = vsel %vm6514, %v6265, %v6507
      %v6525 = vsel %vm6514, %v6266, %v6508
      %v6526 = vsel %vm6514, %v6267, %v6509
      %v6527 = vsel %vm6514, %v6268, %v6510
      %v6528 = vsel %vm6514, %v6269, %v6511
      %v6529 = vsel %vm6514, %v6270, %v6512
      %v6530 = vsel %vm6514, %v6271, %v6513
      %vm6531 = vcmp.eq.s32.totalorder %v577, 53
      %v6532 = vsel %vm6531, %v6272, %v6515
      %v6533 = vsel %vm6531, %v6273, %v6516
      %v6534 = vsel %vm6531, %v6274, %v6517
      %v6535 = vsel %vm6531, %v6275, %v6518
      %v6536 = vsel %vm6531, %v6276, %v6519
      %v6537 = vsel %vm6531, %v6277, %v6520
      %v6538 = vsel %vm6531, %v6278, %v6521
      %v6539 = vsel %vm6531, %v6279, %v6522
      %v6540 = vsel %vm6531, %v6280, %v6523
      %v6541 = vsel %vm6531, %v6281, %v6524
      %v6542 = vsel %vm6531, %v6282, %v6525
      %v6543 = vsel %vm6531, %v6283, %v6526
      %v6544 = vsel %vm6531, %v6284, %v6527
      %v6545 = vsel %vm6531, %v6285, %v6528
      %v6546 = vsel %vm6531, %v6286, %v6529
      %v6547 = vsel %vm6531, %v6287, %v6530
      %vm6548 = vcmp.eq.s32.totalorder %v577, 57
      %v6549 = vsel %vm6548, %v6066, %v6532
      %v6550 = vsel %vm6548, %v6069, %v6533
      %v6551 = vsel %vm6548, %v6072, %v6534
      %v6552 = vsel %vm6548, %v6075, %v6535
      %v6553 = vsel %vm6548, %v6078, %v6536
      %v6554 = vsel %vm6548, %v6081, %v6537
      %v6555 = vsel %vm6548, %v6084, %v6538
      %v6556 = vsel %vm6548, %v6087, %v6539
      %v6557 = vsel %vm6548, %v6090, %v6540
      %v6558 = vsel %vm6548, %v6093, %v6541
      %v6559 = vsel %vm6548, %v6096, %v6542
      %v6560 = vsel %vm6548, %v6099, %v6543
      %v6561 = vsel %vm6548, %v6102, %v6544
      %v6562 = vsel %vm6548, %v6105, %v6545
      %v6563 = vsel %vm6548, %v6108, %v6546
      %v6564 = vsel %vm6548, %v6111, %v6547
      %vm6565 = vcmp.eq.s32.totalorder %v577, 58
      %v6566 = vsel %vm6565, %v6130, %v6549
      %v6567 = vsel %vm6565, %v6133, %v6550
      %v6568 = vsel %vm6565, %v6136, %v6551
      %v6569 = vsel %vm6565, %v6139, %v6552
      %v6570 = vsel %vm6565, %v6142, %v6553
      %v6571 = vsel %vm6565, %v6145, %v6554
      %v6572 = vsel %vm6565, %v6148, %v6555
      %v6573 = vsel %vm6565, %v6151, %v6556
      %v6574 = vsel %vm6565, %v6154, %v6557
      %v6575 = vsel %vm6565, %v6157, %v6558
      %v6576 = vsel %vm6565, %v6160, %v6559
      %v6577 = vsel %vm6565, %v6163, %v6560
      %v6578 = vsel %vm6565, %v6166, %v6561
      %v6579 = vsel %vm6565, %v6169, %v6562
      %v6580 = vsel %vm6565, %v6172, %v6563
      %v6581 = vsel %vm6565, %v6175, %v6564
      %vm6582 = vcmp.eq.s32.totalorder %v577, 59
      %v6583 = vsel %vm6582, %v6194, %v6566
      %v6584 = vsel %vm6582, %v6197, %v6567
      %v6585 = vsel %vm6582, %v6200, %v6568
      %v6586 = vsel %vm6582, %v6203, %v6569
      %v6587 = vsel %vm6582, %v6206, %v6570
      %v6588 = vsel %vm6582, %v6209, %v6571
      %v6589 = vsel %vm6582, %v6212, %v6572
      %v6590 = vsel %vm6582, %v6215, %v6573
      %v6591 = vsel %vm6582, %v6218, %v6574
      %v6592 = vsel %vm6582, %v6221, %v6575
      %v6593 = vsel %vm6582, %v6224, %v6576
      %v6594 = vsel %vm6582, %v6227, %v6577
      %v6595 = vsel %vm6582, %v6230, %v6578
      %v6596 = vsel %vm6582, %v6233, %v6579
      %v6597 = vsel %vm6582, %v6236, %v6580
      %v6598 = vsel %vm6582, %v6239, %v6581
      %v6599 = vsel %vm5855, 3.4028235e+38, %v5743
      %v6600 = vsel %vm5856, 3.4028235e+38, %v5744
      %v6601 = vsel %vm5857, 3.4028235e+38, %v5745
      %v6602 = vsel %vm5858, 3.4028235e+38, %v5746
      %v6603 = vsel %vm5859, 3.4028235e+38, %v5747
      %v6604 = vsel %vm5860, 3.4028235e+38, %v5748
      %v6605 = vsel %vm5861, 3.4028235e+38, %v5749
      %v6606 = vsel %vm5862, 3.4028235e+38, %v5750
      %v6607 = vsel %vm5863, 3.4028235e+38, %v5751
      %v6608 = vsel %vm5864, 3.4028235e+38, %v5752
      %v6609 = vsel %vm5865, 3.4028235e+38, %v5753
      %v6610 = vsel %vm5866, 3.4028235e+38, %v5754
      %v6611 = vsel %vm5867, 3.4028235e+38, %v5755
      %v6612 = vsel %vm5868, 3.4028235e+38, %v5756
      %v6613 = vsel %vm5869, 3.4028235e+38, %v5757
      %v6614 = vsel %vm5870, 3.4028235e+38, %v5758
      %6615 = vmin.xlane.f32.xlu0 %v6599
      %v6616 = vpop.xlane.xlu0 %6615
      %6617 = vmin.xlane.f32.xlu0 %v6600
      %v6618 = vpop.xlane.xlu0 %6617
      %6619 = vmin.xlane.f32.xlu0 %v6601
      %v6620 = vpop.xlane.xlu0 %6619
      %6621 = vmin.xlane.f32.xlu0 %v6602
      %v6622 = vpop.xlane.xlu0 %6621
      %6623 = vmin.xlane.f32.xlu0 %v6603
      %v6624 = vpop.xlane.xlu0 %6623
      %6625 = vmin.xlane.f32.xlu0 %v6604
      %v6626 = vpop.xlane.xlu0 %6625
      %6627 = vmin.xlane.f32.xlu0 %v6605
      %v6628 = vpop.xlane.xlu0 %6627
      %6629 = vmin.xlane.f32.xlu0 %v6606
      %v6630 = vpop.xlane.xlu0 %6629
      %6631 = vmin.xlane.f32.xlu0 %v6607
      %v6632 = vpop.xlane.xlu0 %6631
      %6633 = vmin.xlane.f32.xlu0 %v6608
      %v6634 = vpop.xlane.xlu0 %6633
      %6635 = vmin.xlane.f32.xlu0 %v6609
      %v6636 = vpop.xlane.xlu0 %6635
      %6637 = vmin.xlane.f32.xlu0 %v6610
      %v6638 = vpop.xlane.xlu0 %6637
      %6639 = vmin.xlane.f32.xlu0 %v6611
      %v6640 = vpop.xlane.xlu0 %6639
      %6641 = vmin.xlane.f32.xlu0 %v6612
      %v6642 = vpop.xlane.xlu0 %6641
      %6643 = vmin.xlane.f32.xlu0 %v6613
      %v6644 = vpop.xlane.xlu0 %6643
      %6645 = vmin.xlane.f32.xlu0 %v6614
      %v6646 = vpop.xlane.xlu0 %6645
      %vm6647 = vcmp.eq.f32.partialorder %v6599, %v6616
      %vm6648 = vcmp.eq.f32.partialorder %v6600, %v6618
      %vm6649 = vcmp.eq.f32.partialorder %v6601, %v6620
      %vm6650 = vcmp.eq.f32.partialorder %v6602, %v6622
      %vm6651 = vcmp.eq.f32.partialorder %v6603, %v6624
      %vm6652 = vcmp.eq.f32.partialorder %v6604, %v6626
      %vm6653 = vcmp.eq.f32.partialorder %v6605, %v6628
      %vm6654 = vcmp.eq.f32.partialorder %v6606, %v6630
      %vm6655 = vcmp.eq.f32.partialorder %v6607, %v6632
      %vm6656 = vcmp.eq.f32.partialorder %v6608, %v6634
      %vm6657 = vcmp.eq.f32.partialorder %v6609, %v6636
      %vm6658 = vcmp.eq.f32.partialorder %v6610, %v6638
      %vm6659 = vcmp.eq.f32.partialorder %v6611, %v6640
      %vm6660 = vcmp.eq.f32.partialorder %v6612, %v6642
      %vm6661 = vcmp.eq.f32.partialorder %v6613, %v6644
      %vm6662 = vcmp.eq.f32.partialorder %v6614, %v6646
      %v6663 = vsel %vm6647, %v578, 128.0
      %v6664 = vsel %vm6648, %v578, 128.0
      %v6665 = vsel %vm6649, %v578, 128.0
      %v6666 = vsel %vm6650, %v578, 128.0
      %v6667 = vsel %vm6651, %v578, 128.0
      %v6668 = vsel %vm6652, %v578, 128.0
      %v6669 = vsel %vm6653, %v578, 128.0
      %v6670 = vsel %vm6654, %v578, 128.0
      %v6671 = vsel %vm6655, %v578, 128.0
      %v6672 = vsel %vm6656, %v578, 128.0
      %v6673 = vsel %vm6657, %v578, 128.0
      %v6674 = vsel %vm6658, %v578, 128.0
      %v6675 = vsel %vm6659, %v578, 128.0
      %v6676 = vsel %vm6660, %v578, 128.0
      %v6677 = vsel %vm6661, %v578, 128.0
      %v6678 = vsel %vm6662, %v578, 128.0
      %6679 = vmin.xlane.f32.xlu0 %v6663
      %v6680 = vpop.xlane.xlu0 %6679
      %6681 = vmin.xlane.f32.xlu0 %v6664
      %v6682 = vpop.xlane.xlu0 %6681
      %6683 = vmin.xlane.f32.xlu0 %v6665
      %v6684 = vpop.xlane.xlu0 %6683
      %6685 = vmin.xlane.f32.xlu0 %v6666
      %v6686 = vpop.xlane.xlu0 %6685
      %6687 = vmin.xlane.f32.xlu0 %v6667
      %v6688 = vpop.xlane.xlu0 %6687
      %6689 = vmin.xlane.f32.xlu0 %v6668
      %v6690 = vpop.xlane.xlu0 %6689
      %6691 = vmin.xlane.f32.xlu0 %v6669
      %v6692 = vpop.xlane.xlu0 %6691
      %6693 = vmin.xlane.f32.xlu0 %v6670
      %v6694 = vpop.xlane.xlu0 %6693
      %6695 = vmin.xlane.f32.xlu0 %v6671
      %v6696 = vpop.xlane.xlu0 %6695
      %6697 = vmin.xlane.f32.xlu0 %v6672
      %v6698 = vpop.xlane.xlu0 %6697
      %6699 = vmin.xlane.f32.xlu0 %v6673
      %v6700 = vpop.xlane.xlu0 %6699
      %6701 = vmin.xlane.f32.xlu0 %v6674
      %v6702 = vpop.xlane.xlu0 %6701
      %6703 = vmin.xlane.f32.xlu0 %v6675
      %v6704 = vpop.xlane.xlu0 %6703
      %6705 = vmin.xlane.f32.xlu0 %v6676
      %v6706 = vpop.xlane.xlu0 %6705
      %6707 = vmin.xlane.f32.xlu0 %v6677
      %v6708 = vpop.xlane.xlu0 %6707
      %6709 = vmin.xlane.f32.xlu0 %v6678
      %v6710 = vpop.xlane.xlu0 %6709
      %vm6711 = vcmp.eq.f32.partialorder %v578, %v6680
      %vm6712 = vcmp.eq.f32.partialorder %v578, %v6682
      %vm6713 = vcmp.eq.f32.partialorder %v578, %v6684
      %vm6714 = vcmp.eq.f32.partialorder %v578, %v6686
      %vm6715 = vcmp.eq.f32.partialorder %v578, %v6688
      %vm6716 = vcmp.eq.f32.partialorder %v578, %v6690
      %vm6717 = vcmp.eq.f32.partialorder %v578, %v6692
      %vm6718 = vcmp.eq.f32.partialorder %v578, %v6694
      %vm6719 = vcmp.eq.f32.partialorder %v578, %v6696
      %vm6720 = vcmp.eq.f32.partialorder %v578, %v6698
      %vm6721 = vcmp.eq.f32.partialorder %v578, %v6700
      %vm6722 = vcmp.eq.f32.partialorder %v578, %v6702
      %vm6723 = vcmp.eq.f32.partialorder %v578, %v6704
      %vm6724 = vcmp.eq.f32.partialorder %v578, %v6706
      %vm6725 = vcmp.eq.f32.partialorder %v578, %v6708
      %vm6726 = vcmp.eq.f32.partialorder %v578, %v6710
      %v6727 = vsel %vm6711, 3.4028235e+38, %v6599
      %v6728 = vsel %vm6712, 3.4028235e+38, %v6600
      %v6729 = vsel %vm6713, 3.4028235e+38, %v6601
      %v6730 = vsel %vm6714, 3.4028235e+38, %v6602
      %v6731 = vsel %vm6715, 3.4028235e+38, %v6603
      %v6732 = vsel %vm6716, 3.4028235e+38, %v6604
      %v6733 = vsel %vm6717, 3.4028235e+38, %v6605
      %v6734 = vsel %vm6718, 3.4028235e+38, %v6606
      %v6735 = vsel %vm6719, 3.4028235e+38, %v6607
      %v6736 = vsel %vm6720, 3.4028235e+38, %v6608
      %v6737 = vsel %vm6721, 3.4028235e+38, %v6609
      %v6738 = vsel %vm6722, 3.4028235e+38, %v6610
      %v6739 = vsel %vm6723, 3.4028235e+38, %v6611
      %v6740 = vsel %vm6724, 3.4028235e+38, %v6612
      %v6741 = vsel %vm6725, 3.4028235e+38, %v6613
      %v6742 = vsel %vm6726, 3.4028235e+38, %v6614
      %6743 = vmin.xlane.f32.xlu0 %v6727
      %v6744 = vpop.xlane.xlu0 %6743
      %6745 = vmin.xlane.f32.xlu0 %v6728
      %v6746 = vpop.xlane.xlu0 %6745
      %6747 = vmin.xlane.f32.xlu0 %v6729
      %v6748 = vpop.xlane.xlu0 %6747
      %6749 = vmin.xlane.f32.xlu0 %v6730
      %v6750 = vpop.xlane.xlu0 %6749
      %6751 = vmin.xlane.f32.xlu0 %v6731
      %v6752 = vpop.xlane.xlu0 %6751
      %6753 = vmin.xlane.f32.xlu0 %v6732
      %v6754 = vpop.xlane.xlu0 %6753
      %6755 = vmin.xlane.f32.xlu0 %v6733
      %v6756 = vpop.xlane.xlu0 %6755
      %6757 = vmin.xlane.f32.xlu0 %v6734
      %v6758 = vpop.xlane.xlu0 %6757
      %6759 = vmin.xlane.f32.xlu0 %v6735
      %v6760 = vpop.xlane.xlu0 %6759
      %6761 = vmin.xlane.f32.xlu0 %v6736
      %v6762 = vpop.xlane.xlu0 %6761
      %6763 = vmin.xlane.f32.xlu0 %v6737
      %v6764 = vpop.xlane.xlu0 %6763
      %6765 = vmin.xlane.f32.xlu0 %v6738
      %v6766 = vpop.xlane.xlu0 %6765
      %6767 = vmin.xlane.f32.xlu0 %v6739
      %v6768 = vpop.xlane.xlu0 %6767
      %6769 = vmin.xlane.f32.xlu0 %v6740
      %v6770 = vpop.xlane.xlu0 %6769
      %6771 = vmin.xlane.f32.xlu0 %v6741
      %v6772 = vpop.xlane.xlu0 %6771
      %6773 = vmin.xlane.f32.xlu0 %v6742
      %v6774 = vpop.xlane.xlu0 %6773
      %vm6775 = vcmp.eq.f32.partialorder %v6727, %v6744
      %vm6776 = vcmp.eq.f32.partialorder %v6728, %v6746
      %vm6777 = vcmp.eq.f32.partialorder %v6729, %v6748
      %vm6778 = vcmp.eq.f32.partialorder %v6730, %v6750
      %vm6779 = vcmp.eq.f32.partialorder %v6731, %v6752
      %vm6780 = vcmp.eq.f32.partialorder %v6732, %v6754
      %vm6781 = vcmp.eq.f32.partialorder %v6733, %v6756
      %vm6782 = vcmp.eq.f32.partialorder %v6734, %v6758
      %vm6783 = vcmp.eq.f32.partialorder %v6735, %v6760
      %vm6784 = vcmp.eq.f32.partialorder %v6736, %v6762
      %vm6785 = vcmp.eq.f32.partialorder %v6737, %v6764
      %vm6786 = vcmp.eq.f32.partialorder %v6738, %v6766
      %vm6787 = vcmp.eq.f32.partialorder %v6739, %v6768
      %vm6788 = vcmp.eq.f32.partialorder %v6740, %v6770
      %vm6789 = vcmp.eq.f32.partialorder %v6741, %v6772
      %vm6790 = vcmp.eq.f32.partialorder %v6742, %v6774
      %v6791 = vsel %vm6775, %v578, 128.0
      %v6792 = vsel %vm6776, %v578, 128.0
      %v6793 = vsel %vm6777, %v578, 128.0
      %v6794 = vsel %vm6778, %v578, 128.0
      %v6795 = vsel %vm6779, %v578, 128.0
      %v6796 = vsel %vm6780, %v578, 128.0
      %v6797 = vsel %vm6781, %v578, 128.0
      %v6798 = vsel %vm6782, %v578, 128.0
      %v6799 = vsel %vm6783, %v578, 128.0
      %v6800 = vsel %vm6784, %v578, 128.0
      %v6801 = vsel %vm6785, %v578, 128.0
      %v6802 = vsel %vm6786, %v578, 128.0
      %v6803 = vsel %vm6787, %v578, 128.0
      %v6804 = vsel %vm6788, %v578, 128.0
      %v6805 = vsel %vm6789, %v578, 128.0
      %v6806 = vsel %vm6790, %v578, 128.0
      %6807 = vmin.xlane.f32.xlu0 %v6791
      %v6808 = vpop.xlane.xlu0 %6807
      %6809 = vmin.xlane.f32.xlu0 %v6792
      %v6810 = vpop.xlane.xlu0 %6809
      %6811 = vmin.xlane.f32.xlu0 %v6793
      %v6812 = vpop.xlane.xlu0 %6811
      %6813 = vmin.xlane.f32.xlu0 %v6794
      %v6814 = vpop.xlane.xlu0 %6813
      %6815 = vmin.xlane.f32.xlu0 %v6795
      %v6816 = vpop.xlane.xlu0 %6815
      %6817 = vmin.xlane.f32.xlu0 %v6796
      %v6818 = vpop.xlane.xlu0 %6817
      %6819 = vmin.xlane.f32.xlu0 %v6797
      %v6820 = vpop.xlane.xlu0 %6819
      %6821 = vmin.xlane.f32.xlu0 %v6798
      %v6822 = vpop.xlane.xlu0 %6821
      %6823 = vmin.xlane.f32.xlu0 %v6799
      %v6824 = vpop.xlane.xlu0 %6823
      %6825 = vmin.xlane.f32.xlu0 %v6800
      %v6826 = vpop.xlane.xlu0 %6825
      %6827 = vmin.xlane.f32.xlu0 %v6801
      %v6828 = vpop.xlane.xlu0 %6827
      %6829 = vmin.xlane.f32.xlu0 %v6802
      %v6830 = vpop.xlane.xlu0 %6829
      %6831 = vmin.xlane.f32.xlu0 %v6803
      %v6832 = vpop.xlane.xlu0 %6831
      %6833 = vmin.xlane.f32.xlu0 %v6804
      %v6834 = vpop.xlane.xlu0 %6833
      %6835 = vmin.xlane.f32.xlu0 %v6805
      %v6836 = vpop.xlane.xlu0 %6835
      %6837 = vmin.xlane.f32.xlu0 %v6806
      %v6838 = vpop.xlane.xlu0 %6837
      %vm6839 = vcmp.eq.f32.partialorder %v578, %v6808
      %vm6840 = vcmp.eq.f32.partialorder %v578, %v6810
      %vm6841 = vcmp.eq.f32.partialorder %v578, %v6812
      %vm6842 = vcmp.eq.f32.partialorder %v578, %v6814
      %vm6843 = vcmp.eq.f32.partialorder %v578, %v6816
      %vm6844 = vcmp.eq.f32.partialorder %v578, %v6818
      %vm6845 = vcmp.eq.f32.partialorder %v578, %v6820
      %vm6846 = vcmp.eq.f32.partialorder %v578, %v6822
      %vm6847 = vcmp.eq.f32.partialorder %v578, %v6824
      %vm6848 = vcmp.eq.f32.partialorder %v578, %v6826
      %vm6849 = vcmp.eq.f32.partialorder %v578, %v6828
      %vm6850 = vcmp.eq.f32.partialorder %v578, %v6830
      %vm6851 = vcmp.eq.f32.partialorder %v578, %v6832
      %vm6852 = vcmp.eq.f32.partialorder %v578, %v6834
      %vm6853 = vcmp.eq.f32.partialorder %v578, %v6836
      %vm6854 = vcmp.eq.f32.partialorder %v578, %v6838
      %v6855 = vsel %vm6839, 1, 0
      %v6856 = vsel %vm6840, 1, 0
      %v6857 = vsel %vm6841, 1, 0
      %v6858 = vsel %vm6842, 1, 0
      %v6859 = vsel %vm6843, 1, 0
      %v6860 = vsel %vm6844, 1, 0
      %v6861 = vsel %vm6845, 1, 0
      %v6862 = vsel %vm6846, 1, 0
      %v6863 = vsel %vm6847, 1, 0
      %v6864 = vsel %vm6848, 1, 0
      %v6865 = vsel %vm6849, 1, 0
      %v6866 = vsel %vm6850, 1, 0
      %v6867 = vsel %vm6851, 1, 0
      %v6868 = vsel %vm6852, 1, 0
      %v6869 = vsel %vm6853, 1, 0
      %v6870 = vsel %vm6854, 1, 0
      %v6871 = vcvt.s32.f32 %v6855
      %v6872 = vcvt.s32.f32 %v6856
      %v6873 = vcvt.s32.f32 %v6857
      %v6874 = vcvt.s32.f32 %v6858
      %v6875 = vcvt.s32.f32 %v6859
      %v6876 = vcvt.s32.f32 %v6860
      %v6877 = vcvt.s32.f32 %v6861
      %v6878 = vcvt.s32.f32 %v6862
      %v6879 = vcvt.s32.f32 %v6863
      %v6880 = vcvt.s32.f32 %v6864
      %v6881 = vcvt.s32.f32 %v6865
      %v6882 = vcvt.s32.f32 %v6866
      %v6883 = vcvt.s32.f32 %v6867
      %v6884 = vcvt.s32.f32 %v6868
      %v6885 = vcvt.s32.f32 %v6869
      %v6886 = vcvt.s32.f32 %v6870
      %6887 = vmatprep.subr.mxu0 0.0
      %6888 = vmatpush1.msra.mxu0 %v245
      %6889 = vmatprep.subr.mxu0 0.0
      %6890 = vmatpush1.msra.mxu0 %v246
      %6891 = vmatprep.subr.mxu0 0.0
      %6892 = vmatpush1.msra.mxu0 %v247
      %6893 = vmatprep.subr.mxu0 0.0
      %6894 = vmatpush1.msra.mxu0 %v248
      %6895 = vmatprep.subr.mxu0 0.0
      %6896 = vmatpush1.msra.mxu0 %v249
      %6897 = vmatprep.subr.mxu0 0.0
      %6898 = vmatpush1.msra.mxu0 %v250
      %6899 = vmatprep.subr.mxu0 0.0
      %6900 = vmatpush1.msra.mxu0 %v251
      %6901 = vmatprep.subr.mxu0 0.0
      %6902 = vmatpush1.msra.mxu0 %v252
      %6903 = vmatprep.subr.mxu0 0.0
      %6904 = vmatpush1.msra.mxu0 %v253
      %6905 = vmatprep.subr.mxu0 0.0
      %6906 = vmatpush1.msra.mxu0 %v254
      %6907 = vmatprep.subr.mxu0 0.0
      %6908 = vmatpush1.msra.mxu0 %v255
      %6909 = vmatprep.subr.mxu0 0.0
      %6910 = vmatpush1.msra.mxu0 %v256
      %6911 = vmatprep.subr.mxu0 0.0
      %6912 = vmatpush1.msra.mxu0 %v257
      %6913 = vmatprep.subr.mxu0 0.0
      %6914 = vmatpush1.msra.mxu0 %v258
      %6915 = vmatprep.subr.mxu0 0.0
      %6916 = vmatpush1.msra.mxu0 %v259
      %6917 = vmatprep.subr.mxu0 0.0
      %6918 = vmatpush1.msra.mxu0 %v260
      %6919 = vmatprep.subr.mxu0 0.0
      %6920 = vmatpush1.msra.mxu0 0.0
      %6921 = vmatprep.subr.mxu0 0.0
      %6922 = vmatpush1.msra.mxu0 0.0
      %6923 = vmatprep.subr.mxu0 0.0
      %6924 = vmatpush1.msra.mxu0 0.0
      %6925 = vmatprep.subr.mxu0 0.0
      %6926 = vmatpush1.msra.mxu0 0.0
      %6927 = vmatprep.subr.mxu0 0.0
      %6928 = vmatpush1.msra.mxu0 0.0
      %6929 = vmatprep.subr.mxu0 0.0
      %6930 = vmatpush1.msra.mxu0 0.0
      %6931 = vmatprep.subr.mxu0 0.0
      %6932 = vmatpush1.msra.mxu0 0.0
      %6933 = vmatprep.subr.mxu0 0.0
      %6934 = vmatpush1.msra.mxu0 0.0
      %6935 = vmatprep.subr.mxu0 0.0
      %6936 = vmatpush1.msra.mxu0 0.0
      %6937 = vmatprep.subr.mxu0 0.0
      %6938 = vmatpush1.msra.mxu0 0.0
      %6939 = vmatprep.subr.mxu0 0.0
      %6940 = vmatpush1.msra.mxu0 0.0
      %6941 = vmatprep.subr.mxu0 0.0
      %6942 = vmatpush1.msra.mxu0 0.0
      %6943 = vmatprep.subr.mxu0 0.0
      %6944 = vmatpush1.msra.mxu0 0.0
      %6945 = vmatprep.subr.mxu0 0.0
      %6946 = vmatpush1.msra.mxu0 0.0
      %6947 = vmatprep.subr.mxu0 0.0
      %6948 = vmatpush1.msra.mxu0 0.0
      %6949 = vmatprep.subr.mxu0 0.0
      %6950 = vmatpush1.msra.mxu0 0.0
      %6951 = vmatprep.mubr.f32.mxu0 0.0
      %6952 = vmatmul.mubr.f32.gmra.mrb[0].mxu0 %v6871
      %v6953 = vpop.f32.mrb[0].mxu0
      %v6954 = vadd.f32 0.0, %v6953
      %v6955 = vpop.f32.mrb[0].mxu0
      %6956 = vmatprep.mubr.f32.mxu0 0.0
      %6957 = vmatmul.mubr.f32.gmra.mrb[0].mxu0 %v6872
      %v6958 = vpop.f32.mrb[0].mxu0
      %v6959 = vadd.f32 0.0, %v6958
      %v6960 = vpop.f32.mrb[0].mxu0
      %6961 = vmatprep.mubr.f32.mxu0 0.0
      %6962 = vmatmul.mubr.f32.gmra.mrb[0].mxu0 %v6873
      %v6963 = vpop.f32.mrb[0].mxu0
      %v6964 = vadd.f32 0.0, %v6963
      %v6965 = vpop.f32.mrb[0].mxu0
      %6966 = vmatprep.mubr.f32.mxu0 0.0
      %6967 = vmatmul.mubr.f32.gmra.mrb[0].mxu0 %v6874
      %v6968 = vpop.f32.mrb[0].mxu0
      %v6969 = vadd.f32 0.0, %v6968
      %v6970 = vpop.f32.mrb[0].mxu0
      %6971 = vmatprep.mubr.f32.mxu0 0.0
      %6972 = vmatmul.mubr.f32.gmra.mrb[0].mxu0 %v6875
      %v6973 = vpop.f32.mrb[0].mxu0
      %v6974 = vadd.f32 0.0, %v6973
      %v6975 = vpop.f32.mrb[0].mxu0
      %6976 = vmatprep.mubr.f32.mxu0 0.0
      %6977 = vmatmul.mubr.f32.gmra.mrb[0].mxu0 %v6876
      %v6978 = vpop.f32.mrb[0].mxu0
      %v6979 = vadd.f32 0.0, %v6978
      %v6980 = vpop.f32.mrb[0].mxu0
      %6981 = vmatprep.mubr.f32.mxu0 0.0
      %6982 = vmatmul.mubr.f32.gmra.mrb[0].mxu0 %v6877
      %v6983 = vpop.f32.mrb[0].mxu0
      %v6984 = vadd.f32 0.0, %v6983
      %v6985 = vpop.f32.mrb[0].mxu0
      %6986 = vmatprep.mubr.f32.mxu0 0.0
      %6987 = vmatmul.mubr.f32.gmra.mrb[0].mxu0 %v6878
      %v6988 = vpop.f32.mrb[0].mxu0
      %v6989 = vadd.f32 0.0, %v6988
      %v6990 = vpop.f32.mrb[0].mxu0
      %6991 = vmatprep.mubr.f32.mxu0 0.0
      %6992 = vmatmul.mubr.f32.gmra.mrb[0].mxu0 %v6879
      %v6993 = vpop.f32.mrb[0].mxu0
      %v6994 = vadd.f32 0.0, %v6993
      %v6995 = vpop.f32.mrb[0].mxu0
      %6996 = vmatprep.mubr.f32.mxu0 0.0
      %6997 = vmatmul.mubr.f32.gmra.mrb[0].mxu0 %v6880
      %v6998 = vpop.f32.mrb[0].mxu0
      %v6999 = vadd.f32 0.0, %v6998
      %v7000 = vpop.f32.mrb[0].mxu0
      %7001 = vmatprep.mubr.f32.mxu0 0.0
      %7002 = vmatmul.mubr.f32.gmra.mrb[0].mxu0 %v6881
      %v7003 = vpop.f32.mrb[0].mxu0
      %v7004 = vadd.f32 0.0, %v7003
      %v7005 = vpop.f32.mrb[0].mxu0
      %7006 = vmatprep.mubr.f32.mxu0 0.0
      %7007 = vmatmul.mubr.f32.gmra.mrb[0].mxu0 %v6882
      %v7008 = vpop.f32.mrb[0].mxu0
      %v7009 = vadd.f32 0.0, %v7008
      %v7010 = vpop.f32.mrb[0].mxu0
      %7011 = vmatprep.mubr.f32.mxu0 0.0
      %7012 = vmatmul.mubr.f32.gmra.mrb[0].mxu0 %v6883
      %v7013 = vpop.f32.mrb[0].mxu0
      %v7014 = vadd.f32 0.0, %v7013
      %v7015 = vpop.f32.mrb[0].mxu0
      %7016 = vmatprep.mubr.f32.mxu0 0.0
      %7017 = vmatmul.mubr.f32.gmra.mrb[0].mxu0 %v6884
      %v7018 = vpop.f32.mrb[0].mxu0
      %v7019 = vadd.f32 0.0, %v7018
      %v7020 = vpop.f32.mrb[0].mxu0
      %7021 = vmatprep.mubr.f32.mxu0 0.0
      %7022 = vmatmul.mubr.f32.gmra.mrb[0].mxu0 %v6885
      %v7023 = vpop.f32.mrb[0].mxu0
      %v7024 = vadd.f32 0.0, %v7023
      %v7025 = vpop.f32.mrb[0].mxu0
      %7026 = vmatprep.mubr.f32.mxu0 0.0
      %7027 = vmatmul.mubr.f32.gmra.mrb[0].mxu0 %v6886
      %v7028 = vpop.f32.mrb[0].mxu0
      %v7029 = vadd.f32 0.0, %v7028
      %v7030 = vpop.f32.mrb[0].mxu0
      %7031 = vdwg.mxu0
      %v7032 = vsel %vm595, %v6954, 0.0
      %v7033 = vsel %vm595, %v6959, 0.0
      %v7034 = vsel %vm595, %v6964, 0.0
      %v7035 = vsel %vm595, %v6969, 0.0
      %v7036 = vsel %vm595, %v6974, 0.0
      %v7037 = vsel %vm595, %v6979, 0.0
      %v7038 = vsel %vm595, %v6984, 0.0
      %v7039 = vsel %vm595, %v6989, 0.0
      %v7040 = vsel %vm595, %v6994, 0.0
      %v7041 = vsel %vm595, %v6999, 0.0
      %v7042 = vsel %vm595, %v7004, 0.0
      %v7043 = vsel %vm595, %v7009, 0.0
      %v7044 = vsel %vm595, %v7014, 0.0
      %v7045 = vsel %vm595, %v7019, 0.0
      %v7046 = vsel %vm595, %v7024, 0.0
      %v7047 = vsel %vm595, %v7029, 0.0
      %v7048 = vsel %vm612, %v7032, 0.0
      %7049 = vadd.xlane.f32.xlu0 %v7048
      %v7050 = vpop.xlane.xlu0 %7049
      %v7051 = vsel %vm612, %v7033, 0.0
      %7052 = vadd.xlane.f32.xlu0 %v7051
      %v7053 = vpop.xlane.xlu0 %7052
      %v7054 = vsel %vm612, %v7034, 0.0
      %7055 = vadd.xlane.f32.xlu0 %v7054
      %v7056 = vpop.xlane.xlu0 %7055
      %v7057 = vsel %vm612, %v7035, 0.0
      %7058 = vadd.xlane.f32.xlu0 %v7057
      %v7059 = vpop.xlane.xlu0 %7058
      %v7060 = vsel %vm612, %v7036, 0.0
      %7061 = vadd.xlane.f32.xlu0 %v7060
      %v7062 = vpop.xlane.xlu0 %7061
      %v7063 = vsel %vm612, %v7037, 0.0
      %7064 = vadd.xlane.f32.xlu0 %v7063
      %v7065 = vpop.xlane.xlu0 %7064
      %v7066 = vsel %vm612, %v7038, 0.0
      %7067 = vadd.xlane.f32.xlu0 %v7066
      %v7068 = vpop.xlane.xlu0 %7067
      %v7069 = vsel %vm612, %v7039, 0.0
      %7070 = vadd.xlane.f32.xlu0 %v7069
      %v7071 = vpop.xlane.xlu0 %7070
      %v7072 = vsel %vm612, %v7040, 0.0
      %7073 = vadd.xlane.f32.xlu0 %v7072
      %v7074 = vpop.xlane.xlu0 %7073
      %v7075 = vsel %vm612, %v7041, 0.0
      %7076 = vadd.xlane.f32.xlu0 %v7075
      %v7077 = vpop.xlane.xlu0 %7076
      %v7078 = vsel %vm612, %v7042, 0.0
      %7079 = vadd.xlane.f32.xlu0 %v7078
      %v7080 = vpop.xlane.xlu0 %7079
      %v7081 = vsel %vm612, %v7043, 0.0
      %7082 = vadd.xlane.f32.xlu0 %v7081
      %v7083 = vpop.xlane.xlu0 %7082
      %v7084 = vsel %vm612, %v7044, 0.0
      %7085 = vadd.xlane.f32.xlu0 %v7084
      %v7086 = vpop.xlane.xlu0 %7085
      %v7087 = vsel %vm612, %v7045, 0.0
      %7088 = vadd.xlane.f32.xlu0 %v7087
      %v7089 = vpop.xlane.xlu0 %7088
      %v7090 = vsel %vm612, %v7046, 0.0
      %7091 = vadd.xlane.f32.xlu0 %v7090
      %v7092 = vpop.xlane.xlu0 %7091
      %v7093 = vsel %vm612, %v7047, 0.0
      %7094 = vadd.xlane.f32.xlu0 %v7093
      %v7095 = vpop.xlane.xlu0 %7094
      %v7096 = vsel %vm661, %v6954, 0.0
      %v7097 = vsel %vm661, %v6959, 0.0
      %v7098 = vsel %vm661, %v6964, 0.0
      %v7099 = vsel %vm661, %v6969, 0.0
      %v7100 = vsel %vm661, %v6974, 0.0
      %v7101 = vsel %vm661, %v6979, 0.0
      %v7102 = vsel %vm661, %v6984, 0.0
      %v7103 = vsel %vm661, %v6989, 0.0
      %v7104 = vsel %vm661, %v6994, 0.0
      %v7105 = vsel %vm661, %v6999, 0.0
      %v7106 = vsel %vm661, %v7004, 0.0
      %v7107 = vsel %vm661, %v7009, 0.0
      %v7108 = vsel %vm661, %v7014, 0.0
      %v7109 = vsel %vm661, %v7019, 0.0
      %v7110 = vsel %vm661, %v7024, 0.0
      %v7111 = vsel %vm661, %v7029, 0.0
      %v7112 = vsel %vm612, %v7096, 0.0
      %7113 = vadd.xlane.f32.xlu0 %v7112
      %v7114 = vpop.xlane.xlu0 %7113
      %v7115 = vsel %vm612, %v7097, 0.0
      %7116 = vadd.xlane.f32.xlu0 %v7115
      %v7117 = vpop.xlane.xlu0 %7116
      %v7118 = vsel %vm612, %v7098, 0.0
      %7119 = vadd.xlane.f32.xlu0 %v7118
      %v7120 = vpop.xlane.xlu0 %7119
      %v7121 = vsel %vm612, %v7099, 0.0
      %7122 = vadd.xlane.f32.xlu0 %v7121
      %v7123 = vpop.xlane.xlu0 %7122
      %v7124 = vsel %vm612, %v7100, 0.0
      %7125 = vadd.xlane.f32.xlu0 %v7124
      %v7126 = vpop.xlane.xlu0 %7125
      %v7127 = vsel %vm612, %v7101, 0.0
      %7128 = vadd.xlane.f32.xlu0 %v7127
      %v7129 = vpop.xlane.xlu0 %7128
      %v7130 = vsel %vm612, %v7102, 0.0
      %7131 = vadd.xlane.f32.xlu0 %v7130
      %v7132 = vpop.xlane.xlu0 %7131
      %v7133 = vsel %vm612, %v7103, 0.0
      %7134 = vadd.xlane.f32.xlu0 %v7133
      %v7135 = vpop.xlane.xlu0 %7134
      %v7136 = vsel %vm612, %v7104, 0.0
      %7137 = vadd.xlane.f32.xlu0 %v7136
      %v7138 = vpop.xlane.xlu0 %7137
      %v7139 = vsel %vm612, %v7105, 0.0
      %7140 = vadd.xlane.f32.xlu0 %v7139
      %v7141 = vpop.xlane.xlu0 %7140
      %v7142 = vsel %vm612, %v7106, 0.0
      %7143 = vadd.xlane.f32.xlu0 %v7142
      %v7144 = vpop.xlane.xlu0 %7143
      %v7145 = vsel %vm612, %v7107, 0.0
      %7146 = vadd.xlane.f32.xlu0 %v7145
      %v7147 = vpop.xlane.xlu0 %7146
      %v7148 = vsel %vm612, %v7108, 0.0
      %7149 = vadd.xlane.f32.xlu0 %v7148
      %v7150 = vpop.xlane.xlu0 %7149
      %v7151 = vsel %vm612, %v7109, 0.0
      %7152 = vadd.xlane.f32.xlu0 %v7151
      %v7153 = vpop.xlane.xlu0 %7152
      %v7154 = vsel %vm612, %v7110, 0.0
      %7155 = vadd.xlane.f32.xlu0 %v7154
      %v7156 = vpop.xlane.xlu0 %7155
      %v7157 = vsel %vm612, %v7111, 0.0
      %7158 = vadd.xlane.f32.xlu0 %v7157
      %v7159 = vpop.xlane.xlu0 %7158
      %v7160 = vsel %vm726, %v6954, 0.0
      %v7161 = vsel %vm726, %v6959, 0.0
      %v7162 = vsel %vm726, %v6964, 0.0
      %v7163 = vsel %vm726, %v6969, 0.0
      %v7164 = vsel %vm726, %v6974, 0.0
      %v7165 = vsel %vm726, %v6979, 0.0
      %v7166 = vsel %vm726, %v6984, 0.0
      %v7167 = vsel %vm726, %v6989, 0.0
      %v7168 = vsel %vm726, %v6994, 0.0
      %v7169 = vsel %vm726, %v6999, 0.0
      %v7170 = vsel %vm726, %v7004, 0.0
      %v7171 = vsel %vm726, %v7009, 0.0
      %v7172 = vsel %vm726, %v7014, 0.0
      %v7173 = vsel %vm726, %v7019, 0.0
      %v7174 = vsel %vm726, %v7024, 0.0
      %v7175 = vsel %vm726, %v7029, 0.0
      %v7176 = vsel %vm612, %v7160, 0.0
      %7177 = vadd.xlane.f32.xlu0 %v7176
      %v7178 = vpop.xlane.xlu0 %7177
      %v7179 = vsel %vm612, %v7161, 0.0
      %7180 = vadd.xlane.f32.xlu0 %v7179
      %v7181 = vpop.xlane.xlu0 %7180
      %v7182 = vsel %vm612, %v7162, 0.0
      %7183 = vadd.xlane.f32.xlu0 %v7182
      %v7184 = vpop.xlane.xlu0 %7183
      %v7185 = vsel %vm612, %v7163, 0.0
      %7186 = vadd.xlane.f32.xlu0 %v7185
      %v7187 = vpop.xlane.xlu0 %7186
      %v7188 = vsel %vm612, %v7164, 0.0
      %7189 = vadd.xlane.f32.xlu0 %v7188
      %v7190 = vpop.xlane.xlu0 %7189
      %v7191 = vsel %vm612, %v7165, 0.0
      %7192 = vadd.xlane.f32.xlu0 %v7191
      %v7193 = vpop.xlane.xlu0 %7192
      %v7194 = vsel %vm612, %v7166, 0.0
      %7195 = vadd.xlane.f32.xlu0 %v7194
      %v7196 = vpop.xlane.xlu0 %7195
      %v7197 = vsel %vm612, %v7167, 0.0
      %7198 = vadd.xlane.f32.xlu0 %v7197
      %v7199 = vpop.xlane.xlu0 %7198
      %v7200 = vsel %vm612, %v7168, 0.0
      %7201 = vadd.xlane.f32.xlu0 %v7200
      %v7202 = vpop.xlane.xlu0 %7201
      %v7203 = vsel %vm612, %v7169, 0.0
      %7204 = vadd.xlane.f32.xlu0 %v7203
      %v7205 = vpop.xlane.xlu0 %7204
      %v7206 = vsel %vm612, %v7170, 0.0
      %7207 = vadd.xlane.f32.xlu0 %v7206
      %v7208 = vpop.xlane.xlu0 %7207
      %v7209 = vsel %vm612, %v7171, 0.0
      %7210 = vadd.xlane.f32.xlu0 %v7209
      %v7211 = vpop.xlane.xlu0 %7210
      %v7212 = vsel %vm612, %v7172, 0.0
      %7213 = vadd.xlane.f32.xlu0 %v7212
      %v7214 = vpop.xlane.xlu0 %7213
      %v7215 = vsel %vm612, %v7173, 0.0
      %7216 = vadd.xlane.f32.xlu0 %v7215
      %v7217 = vpop.xlane.xlu0 %7216
      %v7218 = vsel %vm612, %v7174, 0.0
      %7219 = vadd.xlane.f32.xlu0 %v7218
      %v7220 = vpop.xlane.xlu0 %7219
      %v7221 = vsel %vm612, %v7175, 0.0
      %7222 = vadd.xlane.f32.xlu0 %v7221
      %v7223 = vpop.xlane.xlu0 %7222
      %v7224 = vsub.f32 %v615, %v7050
      %v7225 = vsub.f32 %v618, %v7053
      %v7226 = vsub.f32 %v621, %v7056
      %v7227 = vsub.f32 %v624, %v7059
      %v7228 = vsub.f32 %v627, %v7062
      %v7229 = vsub.f32 %v630, %v7065
      %v7230 = vsub.f32 %v633, %v7068
      %v7231 = vsub.f32 %v636, %v7071
      %v7232 = vsub.f32 %v639, %v7074
      %v7233 = vsub.f32 %v642, %v7077
      %v7234 = vsub.f32 %v645, %v7080
      %v7235 = vsub.f32 %v648, %v7083
      %v7236 = vsub.f32 %v651, %v7086
      %v7237 = vsub.f32 %v654, %v7089
      %v7238 = vsub.f32 %v657, %v7092
      %v7239 = vsub.f32 %v660, %v7095
      %v7240 = vsub.f32 %v680, %v7114
      %v7241 = vsub.f32 %v683, %v7117
      %v7242 = vsub.f32 %v686, %v7120
      %v7243 = vsub.f32 %v689, %v7123
      %v7244 = vsub.f32 %v692, %v7126
      %v7245 = vsub.f32 %v695, %v7129
      %v7246 = vsub.f32 %v698, %v7132
      %v7247 = vsub.f32 %v701, %v7135
      %v7248 = vsub.f32 %v704, %v7138
      %v7249 = vsub.f32 %v707, %v7141
      %v7250 = vsub.f32 %v710, %v7144
      %v7251 = vsub.f32 %v713, %v7147
      %v7252 = vsub.f32 %v716, %v7150
      %v7253 = vsub.f32 %v719, %v7153
      %v7254 = vsub.f32 %v722, %v7156
      %v7255 = vsub.f32 %v725, %v7159
      %v7256 = vsub.f32 %v745, %v7178
      %v7257 = vsub.f32 %v748, %v7181
      %v7258 = vsub.f32 %v751, %v7184
      %v7259 = vsub.f32 %v754, %v7187
      %v7260 = vsub.f32 %v757, %v7190
      %v7261 = vsub.f32 %v760, %v7193
      %v7262 = vsub.f32 %v763, %v7196
      %v7263 = vsub.f32 %v766, %v7199
      %v7264 = vsub.f32 %v769, %v7202
      %v7265 = vsub.f32 %v772, %v7205
      %v7266 = vsub.f32 %v775, %v7208
      %v7267 = vsub.f32 %v778, %v7211
      %v7268 = vsub.f32 %v781, %v7214
      %v7269 = vsub.f32 %v784, %v7217
      %v7270 = vsub.f32 %v787, %v7220
      %v7271 = vsub.f32 %v790, %v7223
      %v7272 = vmul.f32 %v7224, %v7224
      %v7273 = vmul.f32 %v7225, %v7225
      %v7274 = vmul.f32 %v7226, %v7226
      %v7275 = vmul.f32 %v7227, %v7227
      %v7276 = vmul.f32 %v7228, %v7228
      %v7277 = vmul.f32 %v7229, %v7229
      %v7278 = vmul.f32 %v7230, %v7230
      %v7279 = vmul.f32 %v7231, %v7231
      %v7280 = vmul.f32 %v7232, %v7232
      %v7281 = vmul.f32 %v7233, %v7233
      %v7282 = vmul.f32 %v7234, %v7234
      %v7283 = vmul.f32 %v7235, %v7235
      %v7284 = vmul.f32 %v7236, %v7236
      %v7285 = vmul.f32 %v7237, %v7237
      %v7286 = vmul.f32 %v7238, %v7238
      %v7287 = vmul.f32 %v7239, %v7239
      %v7288 = vmul.f32 %v7240, %v7240
      %v7289 = vmul.f32 %v7241, %v7241
      %v7290 = vmul.f32 %v7242, %v7242
      %v7291 = vmul.f32 %v7243, %v7243
      %v7292 = vmul.f32 %v7244, %v7244
      %v7293 = vmul.f32 %v7245, %v7245
      %v7294 = vmul.f32 %v7246, %v7246
      %v7295 = vmul.f32 %v7247, %v7247
      %v7296 = vmul.f32 %v7248, %v7248
      %v7297 = vmul.f32 %v7249, %v7249
      %v7298 = vmul.f32 %v7250, %v7250
      %v7299 = vmul.f32 %v7251, %v7251
      %v7300 = vmul.f32 %v7252, %v7252
      %v7301 = vmul.f32 %v7253, %v7253
      %v7302 = vmul.f32 %v7254, %v7254
      %v7303 = vmul.f32 %v7255, %v7255
      %v7304 = vadd.f32 %v7272, %v7288
      %v7305 = vadd.f32 %v7273, %v7289
      %v7306 = vadd.f32 %v7274, %v7290
      %v7307 = vadd.f32 %v7275, %v7291
      %v7308 = vadd.f32 %v7276, %v7292
      %v7309 = vadd.f32 %v7277, %v7293
      %v7310 = vadd.f32 %v7278, %v7294
      %v7311 = vadd.f32 %v7279, %v7295
      %v7312 = vadd.f32 %v7280, %v7296
      %v7313 = vadd.f32 %v7281, %v7297
      %v7314 = vadd.f32 %v7282, %v7298
      %v7315 = vadd.f32 %v7283, %v7299
      %v7316 = vadd.f32 %v7284, %v7300
      %v7317 = vadd.f32 %v7285, %v7301
      %v7318 = vadd.f32 %v7286, %v7302
      %v7319 = vadd.f32 %v7287, %v7303
      %v7320 = vmul.f32 %v7256, %v7256
      %v7321 = vmul.f32 %v7257, %v7257
      %v7322 = vmul.f32 %v7258, %v7258
      %v7323 = vmul.f32 %v7259, %v7259
      %v7324 = vmul.f32 %v7260, %v7260
      %v7325 = vmul.f32 %v7261, %v7261
      %v7326 = vmul.f32 %v7262, %v7262
      %v7327 = vmul.f32 %v7263, %v7263
      %v7328 = vmul.f32 %v7264, %v7264
      %v7329 = vmul.f32 %v7265, %v7265
      %v7330 = vmul.f32 %v7266, %v7266
      %v7331 = vmul.f32 %v7267, %v7267
      %v7332 = vmul.f32 %v7268, %v7268
      %v7333 = vmul.f32 %v7269, %v7269
      %v7334 = vmul.f32 %v7270, %v7270
      %v7335 = vmul.f32 %v7271, %v7271
      %v7336 = vadd.f32 %v7304, %v7320
      %v7337 = vadd.f32 %v7305, %v7321
      %v7338 = vadd.f32 %v7306, %v7322
      %v7339 = vadd.f32 %v7307, %v7323
      %v7340 = vadd.f32 %v7308, %v7324
      %v7341 = vadd.f32 %v7309, %v7325
      %v7342 = vadd.f32 %v7310, %v7326
      %v7343 = vadd.f32 %v7311, %v7327
      %v7344 = vadd.f32 %v7312, %v7328
      %v7345 = vadd.f32 %v7313, %v7329
      %v7346 = vadd.f32 %v7314, %v7330
      %v7347 = vadd.f32 %v7315, %v7331
      %v7348 = vadd.f32 %v7316, %v7332
      %v7349 = vadd.f32 %v7317, %v7333
      %v7350 = vadd.f32 %v7318, %v7334
      %v7351 = vadd.f32 %v7319, %v7335
      %v7352 = vrsqrt.pop %v7336
      %v7353 = vmul.f32 %v7336, %v7352
      %vm7354 = vcmp.eq.f32.partialorder %v7336, inf
      %v7355 = vsel %vm7354, %v7336, %v7353
      %vm7356 = vcmp.eq.f32.partialorder %v7336, 0.0
      %v7357 = vand.u32 %v7336, 2147483648
      %v7358 = vsel %vm7356, %v7357, %v7355
      %v7359 = vrsqrt.pop %v7337
      %v7360 = vmul.f32 %v7337, %v7359
      %vm7361 = vcmp.eq.f32.partialorder %v7337, inf
      %v7362 = vsel %vm7361, %v7337, %v7360
      %vm7363 = vcmp.eq.f32.partialorder %v7337, 0.0
      %v7364 = vand.u32 %v7337, 2147483648
      %v7365 = vsel %vm7363, %v7364, %v7362
      %v7366 = vrsqrt.pop %v7338
      %v7367 = vmul.f32 %v7338, %v7366
      %vm7368 = vcmp.eq.f32.partialorder %v7338, inf
      %v7369 = vsel %vm7368, %v7338, %v7367
      %vm7370 = vcmp.eq.f32.partialorder %v7338, 0.0
      %v7371 = vand.u32 %v7338, 2147483648
      %v7372 = vsel %vm7370, %v7371, %v7369
      %v7373 = vrsqrt.pop %v7339
      %v7374 = vmul.f32 %v7339, %v7373
      %vm7375 = vcmp.eq.f32.partialorder %v7339, inf
      %v7376 = vsel %vm7375, %v7339, %v7374
      %vm7377 = vcmp.eq.f32.partialorder %v7339, 0.0
      %v7378 = vand.u32 %v7339, 2147483648
      %v7379 = vsel %vm7377, %v7378, %v7376
      %v7380 = vrsqrt.pop %v7340
      %v7381 = vmul.f32 %v7340, %v7380
      %vm7382 = vcmp.eq.f32.partialorder %v7340, inf
      %v7383 = vsel %vm7382, %v7340, %v7381
      %vm7384 = vcmp.eq.f32.partialorder %v7340, 0.0
      %v7385 = vand.u32 %v7340, 2147483648
      %v7386 = vsel %vm7384, %v7385, %v7383
      %v7387 = vrsqrt.pop %v7341
      %v7388 = vmul.f32 %v7341, %v7387
      %vm7389 = vcmp.eq.f32.partialorder %v7341, inf
      %v7390 = vsel %vm7389, %v7341, %v7388
      %vm7391 = vcmp.eq.f32.partialorder %v7341, 0.0
      %v7392 = vand.u32 %v7341, 2147483648
      %v7393 = vsel %vm7391, %v7392, %v7390
      %v7394 = vrsqrt.pop %v7342
      %v7395 = vmul.f32 %v7342, %v7394
      %vm7396 = vcmp.eq.f32.partialorder %v7342, inf
      %v7397 = vsel %vm7396, %v7342, %v7395
      %vm7398 = vcmp.eq.f32.partialorder %v7342, 0.0
      %v7399 = vand.u32 %v7342, 2147483648
      %v7400 = vsel %vm7398, %v7399, %v7397
      %v7401 = vrsqrt.pop %v7343
      %v7402 = vmul.f32 %v7343, %v7401
      %vm7403 = vcmp.eq.f32.partialorder %v7343, inf
      %v7404 = vsel %vm7403, %v7343, %v7402
      %vm7405 = vcmp.eq.f32.partialorder %v7343, 0.0
      %v7406 = vand.u32 %v7343, 2147483648
      %v7407 = vsel %vm7405, %v7406, %v7404
      %v7408 = vrsqrt.pop %v7344
      %v7409 = vmul.f32 %v7344, %v7408
      %vm7410 = vcmp.eq.f32.partialorder %v7344, inf
      %v7411 = vsel %vm7410, %v7344, %v7409
      %vm7412 = vcmp.eq.f32.partialorder %v7344, 0.0
      %v7413 = vand.u32 %v7344, 2147483648
      %v7414 = vsel %vm7412, %v7413, %v7411
      %v7415 = vrsqrt.pop %v7345
      %v7416 = vmul.f32 %v7345, %v7415
      %vm7417 = vcmp.eq.f32.partialorder %v7345, inf
      %v7418 = vsel %vm7417, %v7345, %v7416
      %vm7419 = vcmp.eq.f32.partialorder %v7345, 0.0
      %v7420 = vand.u32 %v7345, 2147483648
      %v7421 = vsel %vm7419, %v7420, %v7418
      %v7422 = vrsqrt.pop %v7346
      %v7423 = vmul.f32 %v7346, %v7422
      %vm7424 = vcmp.eq.f32.partialorder %v7346, inf
      %v7425 = vsel %vm7424, %v7346, %v7423
      %vm7426 = vcmp.eq.f32.partialorder %v7346, 0.0
      %v7427 = vand.u32 %v7346, 2147483648
      %v7428 = vsel %vm7426, %v7427, %v7425
      %v7429 = vrsqrt.pop %v7347
      %v7430 = vmul.f32 %v7347, %v7429
      %vm7431 = vcmp.eq.f32.partialorder %v7347, inf
      %v7432 = vsel %vm7431, %v7347, %v7430
      %vm7433 = vcmp.eq.f32.partialorder %v7347, 0.0
      %v7434 = vand.u32 %v7347, 2147483648
      %v7435 = vsel %vm7433, %v7434, %v7432
      %v7436 = vrsqrt.pop %v7348
      %v7437 = vmul.f32 %v7348, %v7436
      %vm7438 = vcmp.eq.f32.partialorder %v7348, inf
      %v7439 = vsel %vm7438, %v7348, %v7437
      %vm7440 = vcmp.eq.f32.partialorder %v7348, 0.0
      %v7441 = vand.u32 %v7348, 2147483648
      %v7442 = vsel %vm7440, %v7441, %v7439
      %v7443 = vrsqrt.pop %v7349
      %v7444 = vmul.f32 %v7349, %v7443
      %vm7445 = vcmp.eq.f32.partialorder %v7349, inf
      %v7446 = vsel %vm7445, %v7349, %v7444
      %vm7447 = vcmp.eq.f32.partialorder %v7349, 0.0
      %v7448 = vand.u32 %v7349, 2147483648
      %v7449 = vsel %vm7447, %v7448, %v7446
      %v7450 = vrsqrt.pop %v7350
      %v7451 = vmul.f32 %v7350, %v7450
      %vm7452 = vcmp.eq.f32.partialorder %v7350, inf
      %v7453 = vsel %vm7452, %v7350, %v7451
      %vm7454 = vcmp.eq.f32.partialorder %v7350, 0.0
      %v7455 = vand.u32 %v7350, 2147483648
      %v7456 = vsel %vm7454, %v7455, %v7453
      %v7457 = vrsqrt.pop %v7351
      %v7458 = vmul.f32 %v7351, %v7457
      %vm7459 = vcmp.eq.f32.partialorder %v7351, inf
      %v7460 = vsel %vm7459, %v7351, %v7458
      %vm7461 = vcmp.eq.f32.partialorder %v7351, 0.0
      %v7462 = vand.u32 %v7351, 2147483648
      %v7463 = vsel %vm7461, %v7462, %v7460
      %vm7464 = vcmp.eq.s32.totalorder %v577, 60
      %v7465 = vsel %vm7464, %v7358, %v6583
      %v7466 = vsel %vm7464, %v7365, %v6584
      %v7467 = vsel %vm7464, %v7372, %v6585
      %v7468 = vsel %vm7464, %v7379, %v6586
      %v7469 = vsel %vm7464, %v7386, %v6587
      %v7470 = vsel %vm7464, %v7393, %v6588
      %v7471 = vsel %vm7464, %v7400, %v6589
      %v7472 = vsel %vm7464, %v7407, %v6590
      %v7473 = vsel %vm7464, %v7414, %v6591
      %v7474 = vsel %vm7464, %v7421, %v6592
      %v7475 = vsel %vm7464, %v7428, %v6593
      %v7476 = vsel %vm7464, %v7435, %v6594
      %v7477 = vsel %vm7464, %v7442, %v6595
      %v7478 = vsel %vm7464, %v7449, %v6596
      %v7479 = vsel %vm7464, %v7456, %v6597
      %v7480 = vsel %vm7464, %v7463, %v6598
      %vm7481 = vcmp.eq.s32.totalorder %v577, 61
      %v7482 = vsel %vm7481, %v7224, %v7465
      %v7483 = vsel %vm7481, %v7225, %v7466
      %v7484 = vsel %vm7481, %v7226, %v7467
      %v7485 = vsel %vm7481, %v7227, %v7468
      %v7486 = vsel %vm7481, %v7228, %v7469
      %v7487 = vsel %vm7481, %v7229, %v7470
      %v7488 = vsel %vm7481, %v7230, %v7471
      %v7489 = vsel %vm7481, %v7231, %v7472
      %v7490 = vsel %vm7481, %v7232, %v7473
      %v7491 = vsel %vm7481, %v7233, %v7474
      %v7492 = vsel %vm7481, %v7234, %v7475
      %v7493 = vsel %vm7481, %v7235, %v7476
      %v7494 = vsel %vm7481, %v7236, %v7477
      %v7495 = vsel %vm7481, %v7237, %v7478
      %v7496 = vsel %vm7481, %v7238, %v7479
      %v7497 = vsel %vm7481, %v7239, %v7480
      %vm7498 = vcmp.eq.s32.totalorder %v577, 62
      %v7499 = vsel %vm7498, %v7240, %v7482
      %v7500 = vsel %vm7498, %v7241, %v7483
      %v7501 = vsel %vm7498, %v7242, %v7484
      %v7502 = vsel %vm7498, %v7243, %v7485
      %v7503 = vsel %vm7498, %v7244, %v7486
      %v7504 = vsel %vm7498, %v7245, %v7487
      %v7505 = vsel %vm7498, %v7246, %v7488
      %v7506 = vsel %vm7498, %v7247, %v7489
      %v7507 = vsel %vm7498, %v7248, %v7490
      %v7508 = vsel %vm7498, %v7249, %v7491
      %v7509 = vsel %vm7498, %v7250, %v7492
      %v7510 = vsel %vm7498, %v7251, %v7493
      %v7511 = vsel %vm7498, %v7252, %v7494
      %v7512 = vsel %vm7498, %v7253, %v7495
      %v7513 = vsel %vm7498, %v7254, %v7496
      %v7514 = vsel %vm7498, %v7255, %v7497
      %vm7515 = vcmp.eq.s32.totalorder %v577, 63
      %v7516 = vsel %vm7515, %v7256, %v7499
      %v7517 = vsel %vm7515, %v7257, %v7500
      %v7518 = vsel %vm7515, %v7258, %v7501
      %v7519 = vsel %vm7515, %v7259, %v7502
      %v7520 = vsel %vm7515, %v7260, %v7503
      %v7521 = vsel %vm7515, %v7261, %v7504
      %v7522 = vsel %vm7515, %v7262, %v7505
      %v7523 = vsel %vm7515, %v7263, %v7506
      %v7524 = vsel %vm7515, %v7264, %v7507
      %v7525 = vsel %vm7515, %v7265, %v7508
      %v7526 = vsel %vm7515, %v7266, %v7509
      %v7527 = vsel %vm7515, %v7267, %v7510
      %v7528 = vsel %vm7515, %v7268, %v7511
      %v7529 = vsel %vm7515, %v7269, %v7512
      %v7530 = vsel %vm7515, %v7270, %v7513
      %v7531 = vsel %vm7515, %v7271, %v7514
      %vm7532 = vcmp.eq.s32.totalorder %v577, 67
      %v7533 = vsel %vm7532, %v7050, %v7516
      %v7534 = vsel %vm7532, %v7053, %v7517
      %v7535 = vsel %vm7532, %v7056, %v7518
      %v7536 = vsel %vm7532, %v7059, %v7519
      %v7537 = vsel %vm7532, %v7062, %v7520
      %v7538 = vsel %vm7532, %v7065, %v7521
      %v7539 = vsel %vm7532, %v7068, %v7522
      %v7540 = vsel %vm7532, %v7071, %v7523
      %v7541 = vsel %vm7532, %v7074, %v7524
      %v7542 = vsel %vm7532, %v7077, %v7525
      %v7543 = vsel %vm7532, %v7080, %v7526
      %v7544 = vsel %vm7532, %v7083, %v7527
      %v7545 = vsel %vm7532, %v7086, %v7528
      %v7546 = vsel %vm7532, %v7089, %v7529
      %v7547 = vsel %vm7532, %v7092, %v7530
      %v7548 = vsel %vm7532, %v7095, %v7531
      %vm7549 = vcmp.eq.s32.totalorder %v577, 68
      %v7550 = vsel %vm7549, %v7114, %v7533
      %v7551 = vsel %vm7549, %v7117, %v7534
      %v7552 = vsel %vm7549, %v7120, %v7535
      %v7553 = vsel %vm7549, %v7123, %v7536
      %v7554 = vsel %vm7549, %v7126, %v7537
      %v7555 = vsel %vm7549, %v7129, %v7538
      %v7556 = vsel %vm7549, %v7132, %v7539
      %v7557 = vsel %vm7549, %v7135, %v7540
      %v7558 = vsel %vm7549, %v7138, %v7541
      %v7559 = vsel %vm7549, %v7141, %v7542
      %v7560 = vsel %vm7549, %v7144, %v7543
      %v7561 = vsel %vm7549, %v7147, %v7544
      %v7562 = vsel %vm7549, %v7150, %v7545
      %v7563 = vsel %vm7549, %v7153, %v7546
      %v7564 = vsel %vm7549, %v7156, %v7547
      %v7565 = vsel %vm7549, %v7159, %v7548
      %vm7566 = vcmp.eq.s32.totalorder %v577, 69
      %v7567 = vsel %vm7566, %v7178, %v7550
      %v7568 = vsel %vm7566, %v7181, %v7551
      %v7569 = vsel %vm7566, %v7184, %v7552
      %v7570 = vsel %vm7566, %v7187, %v7553
      %v7571 = vsel %vm7566, %v7190, %v7554
      %v7572 = vsel %vm7566, %v7193, %v7555
      %v7573 = vsel %vm7566, %v7196, %v7556
      %v7574 = vsel %vm7566, %v7199, %v7557
      %v7575 = vsel %vm7566, %v7202, %v7558
      %v7576 = vsel %vm7566, %v7205, %v7559
      %v7577 = vsel %vm7566, %v7208, %v7560
      %v7578 = vsel %vm7566, %v7211, %v7561
      %v7579 = vsel %vm7566, %v7214, %v7562
      %v7580 = vsel %vm7566, %v7217, %v7563
      %v7581 = vsel %vm7566, %v7220, %v7564
      %v7582 = vsel %vm7566, %v7223, %v7565
      %v7583 = vsel %vm6839, 3.4028235e+38, %v6727
      %v7584 = vsel %vm6840, 3.4028235e+38, %v6728
      %v7585 = vsel %vm6841, 3.4028235e+38, %v6729
      %v7586 = vsel %vm6842, 3.4028235e+38, %v6730
      %v7587 = vsel %vm6843, 3.4028235e+38, %v6731
      %v7588 = vsel %vm6844, 3.4028235e+38, %v6732
      %v7589 = vsel %vm6845, 3.4028235e+38, %v6733
      %v7590 = vsel %vm6846, 3.4028235e+38, %v6734
      %v7591 = vsel %vm6847, 3.4028235e+38, %v6735
      %v7592 = vsel %vm6848, 3.4028235e+38, %v6736
      %v7593 = vsel %vm6849, 3.4028235e+38, %v6737
      %v7594 = vsel %vm6850, 3.4028235e+38, %v6738
      %v7595 = vsel %vm6851, 3.4028235e+38, %v6739
      %v7596 = vsel %vm6852, 3.4028235e+38, %v6740
      %v7597 = vsel %vm6853, 3.4028235e+38, %v6741
      %v7598 = vsel %vm6854, 3.4028235e+38, %v6742
      %7599 = vmin.xlane.f32.xlu0 %v7583
      %v7600 = vpop.xlane.xlu0 %7599
      %7601 = vmin.xlane.f32.xlu0 %v7584
      %v7602 = vpop.xlane.xlu0 %7601
      %7603 = vmin.xlane.f32.xlu0 %v7585
      %v7604 = vpop.xlane.xlu0 %7603
      %7605 = vmin.xlane.f32.xlu0 %v7586
      %v7606 = vpop.xlane.xlu0 %7605
      %7607 = vmin.xlane.f32.xlu0 %v7587
      %v7608 = vpop.xlane.xlu0 %7607
      %7609 = vmin.xlane.f32.xlu0 %v7588
      %v7610 = vpop.xlane.xlu0 %7609
      %7611 = vmin.xlane.f32.xlu0 %v7589
      %v7612 = vpop.xlane.xlu0 %7611
      %7613 = vmin.xlane.f32.xlu0 %v7590
      %v7614 = vpop.xlane.xlu0 %7613
      %7615 = vmin.xlane.f32.xlu0 %v7591
      %v7616 = vpop.xlane.xlu0 %7615
      %7617 = vmin.xlane.f32.xlu0 %v7592
      %v7618 = vpop.xlane.xlu0 %7617
      %7619 = vmin.xlane.f32.xlu0 %v7593
      %v7620 = vpop.xlane.xlu0 %7619
      %7621 = vmin.xlane.f32.xlu0 %v7594
      %v7622 = vpop.xlane.xlu0 %7621
      %7623 = vmin.xlane.f32.xlu0 %v7595
      %v7624 = vpop.xlane.xlu0 %7623
      %7625 = vmin.xlane.f32.xlu0 %v7596
      %v7626 = vpop.xlane.xlu0 %7625
      %7627 = vmin.xlane.f32.xlu0 %v7597
      %v7628 = vpop.xlane.xlu0 %7627
      %7629 = vmin.xlane.f32.xlu0 %v7598
      %v7630 = vpop.xlane.xlu0 %7629
      %vm7631 = vcmp.eq.f32.partialorder %v7583, %v7600
      %vm7632 = vcmp.eq.f32.partialorder %v7584, %v7602
      %vm7633 = vcmp.eq.f32.partialorder %v7585, %v7604
      %vm7634 = vcmp.eq.f32.partialorder %v7586, %v7606
      %vm7635 = vcmp.eq.f32.partialorder %v7587, %v7608
      %vm7636 = vcmp.eq.f32.partialorder %v7588, %v7610
      %vm7637 = vcmp.eq.f32.partialorder %v7589, %v7612
      %vm7638 = vcmp.eq.f32.partialorder %v7590, %v7614
      %vm7639 = vcmp.eq.f32.partialorder %v7591, %v7616
      %vm7640 = vcmp.eq.f32.partialorder %v7592, %v7618
      %vm7641 = vcmp.eq.f32.partialorder %v7593, %v7620
      %vm7642 = vcmp.eq.f32.partialorder %v7594, %v7622
      %vm7643 = vcmp.eq.f32.partialorder %v7595, %v7624
      %vm7644 = vcmp.eq.f32.partialorder %v7596, %v7626
      %vm7645 = vcmp.eq.f32.partialorder %v7597, %v7628
      %vm7646 = vcmp.eq.f32.partialorder %v7598, %v7630
      %v7647 = vsel %vm7631, %v578, 128.0
      %v7648 = vsel %vm7632, %v578, 128.0
      %v7649 = vsel %vm7633, %v578, 128.0
      %v7650 = vsel %vm7634, %v578, 128.0
      %v7651 = vsel %vm7635, %v578, 128.0
      %v7652 = vsel %vm7636, %v578, 128.0
      %v7653 = vsel %vm7637, %v578, 128.0
      %v7654 = vsel %vm7638, %v578, 128.0
      %v7655 = vsel %vm7639, %v578, 128.0
      %v7656 = vsel %vm7640, %v578, 128.0
      %v7657 = vsel %vm7641, %v578, 128.0
      %v7658 = vsel %vm7642, %v578, 128.0
      %v7659 = vsel %vm7643, %v578, 128.0
      %v7660 = vsel %vm7644, %v578, 128.0
      %v7661 = vsel %vm7645, %v578, 128.0
      %v7662 = vsel %vm7646, %v578, 128.0
      %7663 = vmin.xlane.f32.xlu0 %v7647
      %v7664 = vpop.xlane.xlu0 %7663
      %7665 = vmin.xlane.f32.xlu0 %v7648
      %v7666 = vpop.xlane.xlu0 %7665
      %7667 = vmin.xlane.f32.xlu0 %v7649
      %v7668 = vpop.xlane.xlu0 %7667
      %7669 = vmin.xlane.f32.xlu0 %v7650
      %v7670 = vpop.xlane.xlu0 %7669
      %7671 = vmin.xlane.f32.xlu0 %v7651
      %v7672 = vpop.xlane.xlu0 %7671
      %7673 = vmin.xlane.f32.xlu0 %v7652
      %v7674 = vpop.xlane.xlu0 %7673
      %7675 = vmin.xlane.f32.xlu0 %v7653
      %v7676 = vpop.xlane.xlu0 %7675
      %7677 = vmin.xlane.f32.xlu0 %v7654
      %v7678 = vpop.xlane.xlu0 %7677
      %7679 = vmin.xlane.f32.xlu0 %v7655
      %v7680 = vpop.xlane.xlu0 %7679
      %7681 = vmin.xlane.f32.xlu0 %v7656
      %v7682 = vpop.xlane.xlu0 %7681
      %7683 = vmin.xlane.f32.xlu0 %v7657
      %v7684 = vpop.xlane.xlu0 %7683
      %7685 = vmin.xlane.f32.xlu0 %v7658
      %v7686 = vpop.xlane.xlu0 %7685
      %7687 = vmin.xlane.f32.xlu0 %v7659
      %v7688 = vpop.xlane.xlu0 %7687
      %7689 = vmin.xlane.f32.xlu0 %v7660
      %v7690 = vpop.xlane.xlu0 %7689
      %7691 = vmin.xlane.f32.xlu0 %v7661
      %v7692 = vpop.xlane.xlu0 %7691
      %7693 = vmin.xlane.f32.xlu0 %v7662
      %v7694 = vpop.xlane.xlu0 %7693
      %vm7695 = vcmp.eq.f32.partialorder %v578, %v7664
      %vm7696 = vcmp.eq.f32.partialorder %v578, %v7666
      %vm7697 = vcmp.eq.f32.partialorder %v578, %v7668
      %vm7698 = vcmp.eq.f32.partialorder %v578, %v7670
      %vm7699 = vcmp.eq.f32.partialorder %v578, %v7672
      %vm7700 = vcmp.eq.f32.partialorder %v578, %v7674
      %vm7701 = vcmp.eq.f32.partialorder %v578, %v7676
      %vm7702 = vcmp.eq.f32.partialorder %v578, %v7678
      %vm7703 = vcmp.eq.f32.partialorder %v578, %v7680
      %vm7704 = vcmp.eq.f32.partialorder %v578, %v7682
      %vm7705 = vcmp.eq.f32.partialorder %v578, %v7684
      %vm7706 = vcmp.eq.f32.partialorder %v578, %v7686
      %vm7707 = vcmp.eq.f32.partialorder %v578, %v7688
      %vm7708 = vcmp.eq.f32.partialorder %v578, %v7690
      %vm7709 = vcmp.eq.f32.partialorder %v578, %v7692
      %vm7710 = vcmp.eq.f32.partialorder %v578, %v7694
      %v7711 = vsel %vm7695, 3.4028235e+38, %v7583
      %v7712 = vsel %vm7696, 3.4028235e+38, %v7584
      %v7713 = vsel %vm7697, 3.4028235e+38, %v7585
      %v7714 = vsel %vm7698, 3.4028235e+38, %v7586
      %v7715 = vsel %vm7699, 3.4028235e+38, %v7587
      %v7716 = vsel %vm7700, 3.4028235e+38, %v7588
      %v7717 = vsel %vm7701, 3.4028235e+38, %v7589
      %v7718 = vsel %vm7702, 3.4028235e+38, %v7590
      %v7719 = vsel %vm7703, 3.4028235e+38, %v7591
      %v7720 = vsel %vm7704, 3.4028235e+38, %v7592
      %v7721 = vsel %vm7705, 3.4028235e+38, %v7593
      %v7722 = vsel %vm7706, 3.4028235e+38, %v7594
      %v7723 = vsel %vm7707, 3.4028235e+38, %v7595
      %v7724 = vsel %vm7708, 3.4028235e+38, %v7596
      %v7725 = vsel %vm7709, 3.4028235e+38, %v7597
      %v7726 = vsel %vm7710, 3.4028235e+38, %v7598
      %7727 = vmin.xlane.f32.xlu0 %v7711
      %v7728 = vpop.xlane.xlu0 %7727
      %7729 = vmin.xlane.f32.xlu0 %v7712
      %v7730 = vpop.xlane.xlu0 %7729
      %7731 = vmin.xlane.f32.xlu0 %v7713
      %v7732 = vpop.xlane.xlu0 %7731
      %7733 = vmin.xlane.f32.xlu0 %v7714
      %v7734 = vpop.xlane.xlu0 %7733
      %7735 = vmin.xlane.f32.xlu0 %v7715
      %v7736 = vpop.xlane.xlu0 %7735
      %7737 = vmin.xlane.f32.xlu0 %v7716
      %v7738 = vpop.xlane.xlu0 %7737
      %7739 = vmin.xlane.f32.xlu0 %v7717
      %v7740 = vpop.xlane.xlu0 %7739
      %7741 = vmin.xlane.f32.xlu0 %v7718
      %v7742 = vpop.xlane.xlu0 %7741
      %7743 = vmin.xlane.f32.xlu0 %v7719
      %v7744 = vpop.xlane.xlu0 %7743
      %7745 = vmin.xlane.f32.xlu0 %v7720
      %v7746 = vpop.xlane.xlu0 %7745
      %7747 = vmin.xlane.f32.xlu0 %v7721
      %v7748 = vpop.xlane.xlu0 %7747
      %7749 = vmin.xlane.f32.xlu0 %v7722
      %v7750 = vpop.xlane.xlu0 %7749
      %7751 = vmin.xlane.f32.xlu0 %v7723
      %v7752 = vpop.xlane.xlu0 %7751
      %7753 = vmin.xlane.f32.xlu0 %v7724
      %v7754 = vpop.xlane.xlu0 %7753
      %7755 = vmin.xlane.f32.xlu0 %v7725
      %v7756 = vpop.xlane.xlu0 %7755
      %7757 = vmin.xlane.f32.xlu0 %v7726
      %v7758 = vpop.xlane.xlu0 %7757
      %vm7759 = vcmp.eq.f32.partialorder %v7711, %v7728
      %vm7760 = vcmp.eq.f32.partialorder %v7712, %v7730
      %vm7761 = vcmp.eq.f32.partialorder %v7713, %v7732
      %vm7762 = vcmp.eq.f32.partialorder %v7714, %v7734
      %vm7763 = vcmp.eq.f32.partialorder %v7715, %v7736
      %vm7764 = vcmp.eq.f32.partialorder %v7716, %v7738
      %vm7765 = vcmp.eq.f32.partialorder %v7717, %v7740
      %vm7766 = vcmp.eq.f32.partialorder %v7718, %v7742
      %vm7767 = vcmp.eq.f32.partialorder %v7719, %v7744
      %vm7768 = vcmp.eq.f32.partialorder %v7720, %v7746
      %vm7769 = vcmp.eq.f32.partialorder %v7721, %v7748
      %vm7770 = vcmp.eq.f32.partialorder %v7722, %v7750
      %vm7771 = vcmp.eq.f32.partialorder %v7723, %v7752
      %vm7772 = vcmp.eq.f32.partialorder %v7724, %v7754
      %vm7773 = vcmp.eq.f32.partialorder %v7725, %v7756
      %vm7774 = vcmp.eq.f32.partialorder %v7726, %v7758
      %v7775 = vsel %vm7759, %v578, 128.0
      %v7776 = vsel %vm7760, %v578, 128.0
      %v7777 = vsel %vm7761, %v578, 128.0
      %v7778 = vsel %vm7762, %v578, 128.0
      %v7779 = vsel %vm7763, %v578, 128.0
      %v7780 = vsel %vm7764, %v578, 128.0
      %v7781 = vsel %vm7765, %v578, 128.0
      %v7782 = vsel %vm7766, %v578, 128.0
      %v7783 = vsel %vm7767, %v578, 128.0
      %v7784 = vsel %vm7768, %v578, 128.0
      %v7785 = vsel %vm7769, %v578, 128.0
      %v7786 = vsel %vm7770, %v578, 128.0
      %v7787 = vsel %vm7771, %v578, 128.0
      %v7788 = vsel %vm7772, %v578, 128.0
      %v7789 = vsel %vm7773, %v578, 128.0
      %v7790 = vsel %vm7774, %v578, 128.0
      %7791 = vmin.xlane.f32.xlu0 %v7775
      %v7792 = vpop.xlane.xlu0 %7791
      %7793 = vmin.xlane.f32.xlu0 %v7776
      %v7794 = vpop.xlane.xlu0 %7793
      %7795 = vmin.xlane.f32.xlu0 %v7777
      %v7796 = vpop.xlane.xlu0 %7795
      %7797 = vmin.xlane.f32.xlu0 %v7778
      %v7798 = vpop.xlane.xlu0 %7797
      %7799 = vmin.xlane.f32.xlu0 %v7779
      %v7800 = vpop.xlane.xlu0 %7799
      %7801 = vmin.xlane.f32.xlu0 %v7780
      %v7802 = vpop.xlane.xlu0 %7801
      %7803 = vmin.xlane.f32.xlu0 %v7781
      %v7804 = vpop.xlane.xlu0 %7803
      %7805 = vmin.xlane.f32.xlu0 %v7782
      %v7806 = vpop.xlane.xlu0 %7805
      %7807 = vmin.xlane.f32.xlu0 %v7783
      %v7808 = vpop.xlane.xlu0 %7807
      %7809 = vmin.xlane.f32.xlu0 %v7784
      %v7810 = vpop.xlane.xlu0 %7809
      %7811 = vmin.xlane.f32.xlu0 %v7785
      %v7812 = vpop.xlane.xlu0 %7811
      %7813 = vmin.xlane.f32.xlu0 %v7786
      %v7814 = vpop.xlane.xlu0 %7813
      %7815 = vmin.xlane.f32.xlu0 %v7787
      %v7816 = vpop.xlane.xlu0 %7815
      %7817 = vmin.xlane.f32.xlu0 %v7788
      %v7818 = vpop.xlane.xlu0 %7817
      %7819 = vmin.xlane.f32.xlu0 %v7789
      %v7820 = vpop.xlane.xlu0 %7819
      %7821 = vmin.xlane.f32.xlu0 %v7790
      %v7822 = vpop.xlane.xlu0 %7821
      %vm7823 = vcmp.eq.f32.partialorder %v578, %v7792
      %vm7824 = vcmp.eq.f32.partialorder %v578, %v7794
      %vm7825 = vcmp.eq.f32.partialorder %v578, %v7796
      %vm7826 = vcmp.eq.f32.partialorder %v578, %v7798
      %vm7827 = vcmp.eq.f32.partialorder %v578, %v7800
      %vm7828 = vcmp.eq.f32.partialorder %v578, %v7802
      %vm7829 = vcmp.eq.f32.partialorder %v578, %v7804
      %vm7830 = vcmp.eq.f32.partialorder %v578, %v7806
      %vm7831 = vcmp.eq.f32.partialorder %v578, %v7808
      %vm7832 = vcmp.eq.f32.partialorder %v578, %v7810
      %vm7833 = vcmp.eq.f32.partialorder %v578, %v7812
      %vm7834 = vcmp.eq.f32.partialorder %v578, %v7814
      %vm7835 = vcmp.eq.f32.partialorder %v578, %v7816
      %vm7836 = vcmp.eq.f32.partialorder %v578, %v7818
      %vm7837 = vcmp.eq.f32.partialorder %v578, %v7820
      %vm7838 = vcmp.eq.f32.partialorder %v578, %v7822
      %v7839 = vsel %vm7823, 1, 0
      %v7840 = vsel %vm7824, 1, 0
      %v7841 = vsel %vm7825, 1, 0
      %v7842 = vsel %vm7826, 1, 0
      %v7843 = vsel %vm7827, 1, 0
      %v7844 = vsel %vm7828, 1, 0
      %v7845 = vsel %vm7829, 1, 0
      %v7846 = vsel %vm7830, 1, 0
      %v7847 = vsel %vm7831, 1, 0
      %v7848 = vsel %vm7832, 1, 0
      %v7849 = vsel %vm7833, 1, 0
      %v7850 = vsel %vm7834, 1, 0
      %v7851 = vsel %vm7835, 1, 0
      %v7852 = vsel %vm7836, 1, 0
      %v7853 = vsel %vm7837, 1, 0
      %v7854 = vsel %vm7838, 1, 0
      %v7855 = vcvt.s32.f32 %v7839
      %v7856 = vcvt.s32.f32 %v7840
      %v7857 = vcvt.s32.f32 %v7841
      %v7858 = vcvt.s32.f32 %v7842
      %v7859 = vcvt.s32.f32 %v7843
      %v7860 = vcvt.s32.f32 %v7844
      %v7861 = vcvt.s32.f32 %v7845
      %v7862 = vcvt.s32.f32 %v7846
      %v7863 = vcvt.s32.f32 %v7847
      %v7864 = vcvt.s32.f32 %v7848
      %v7865 = vcvt.s32.f32 %v7849
      %v7866 = vcvt.s32.f32 %v7850
      %v7867 = vcvt.s32.f32 %v7851
      %v7868 = vcvt.s32.f32 %v7852
      %v7869 = vcvt.s32.f32 %v7853
      %v7870 = vcvt.s32.f32 %v7854
      %7871 = vmatprep.subr.mxu0 0.0
      %7872 = vmatpush1.msra.mxu0 %v245
      %7873 = vmatprep.subr.mxu0 0.0
      %7874 = vmatpush1.msra.mxu0 %v246
      %7875 = vmatprep.subr.mxu0 0.0
      %7876 = vmatpush1.msra.mxu0 %v247
      %7877 = vmatprep.subr.mxu0 0.0
      %7878 = vmatpush1.msra.mxu0 %v248
      %7879 = vmatprep.subr.mxu0 0.0
      %7880 = vmatpush1.msra.mxu0 %v249
      %7881 = vmatprep.subr.mxu0 0.0
      %7882 = vmatpush1.msra.mxu0 %v250
      %7883 = vmatprep.subr.mxu0 0.0
      %7884 = vmatpush1.msra.mxu0 %v251
      %7885 = vmatprep.subr.mxu0 0.0
      %7886 = vmatpush1.msra.mxu0 %v252
      %7887 = vmatprep.subr.mxu0 0.0
      %7888 = vmatpush1.msra.mxu0 %v253
      %7889 = vmatprep.subr.mxu0 0.0
      %7890 = vmatpush1.msra.mxu0 %v254
      %7891 = vmatprep.subr.mxu0 0.0
      %7892 = vmatpush1.msra.mxu0 %v255
      %7893 = vmatprep.subr.mxu0 0.0
      %7894 = vmatpush1.msra.mxu0 %v256
      %7895 = vmatprep.subr.mxu0 0.0
      %7896 = vmatpush1.msra.mxu0 %v257
      %7897 = vmatprep.subr.mxu0 0.0
      %7898 = vmatpush1.msra.mxu0 %v258
      %7899 = vmatprep.subr.mxu0 0.0
      %7900 = vmatpush1.msra.mxu0 %v259
      %7901 = vmatprep.subr.mxu0 0.0
      %7902 = vmatpush1.msra.mxu0 %v260
      %7903 = vmatprep.subr.mxu0 0.0
      %7904 = vmatpush1.msra.mxu0 0.0
      %7905 = vmatprep.subr.mxu0 0.0
      %7906 = vmatpush1.msra.mxu0 0.0
      %7907 = vmatprep.subr.mxu0 0.0
      %7908 = vmatpush1.msra.mxu0 0.0
      %7909 = vmatprep.subr.mxu0 0.0
      %7910 = vmatpush1.msra.mxu0 0.0
      %7911 = vmatprep.subr.mxu0 0.0
      %7912 = vmatpush1.msra.mxu0 0.0
      %7913 = vmatprep.subr.mxu0 0.0
      %7914 = vmatpush1.msra.mxu0 0.0
      %7915 = vmatprep.subr.mxu0 0.0
      %7916 = vmatpush1.msra.mxu0 0.0
      %7917 = vmatprep.subr.mxu0 0.0
      %7918 = vmatpush1.msra.mxu0 0.0
      %7919 = vmatprep.subr.mxu0 0.0
      %7920 = vmatpush1.msra.mxu0 0.0
      %7921 = vmatprep.subr.mxu0 0.0
      %7922 = vmatpush1.msra.mxu0 0.0
      %7923 = vmatprep.subr.mxu0 0.0
      %7924 = vmatpush1.msra.mxu0 0.0
      %7925 = vmatprep.subr.mxu0 0.0
      %7926 = vmatpush1.msra.mxu0 0.0
      %7927 = vmatprep.subr.mxu0 0.0
      %7928 = vmatpush1.msra.mxu0 0.0
      %7929 = vmatprep.subr.mxu0 0.0
      %7930 = vmatpush1.msra.mxu0 0.0
      %7931 = vmatprep.subr.mxu0 0.0
      %7932 = vmatpush1.msra.mxu0 0.0
      %7933 = vmatprep.subr.mxu0 0.0
      %7934 = vmatpush1.msra.mxu0 0.0
      %7935 = vmatprep.mubr.f32.mxu0 0.0
      %7936 = vmatmul.mubr.f32.gmra.mrb[0].mxu0 %v7855
      %v7937 = vpop.f32.mrb[0].mxu0
      %v7938 = vadd.f32 0.0, %v7937
      %v7939 = vpop.f32.mrb[0].mxu0
      %7940 = vmatprep.mubr.f32.mxu0 0.0
      %7941 = vmatmul.mubr.f32.gmra.mrb[0].mxu0 %v7856
      %v7942 = vpop.f32.mrb[0].mxu0
      %v7943 = vadd.f32 0.0, %v7942
      %v7944 = vpop.f32.mrb[0].mxu0
      %7945 = vmatprep.mubr.f32.mxu0 0.0
      %7946 = vmatmul.mubr.f32.gmra.mrb[0].mxu0 %v7857
      %v7947 = vpop.f32.mrb[0].mxu0
      %v7948 = vadd.f32 0.0, %v7947
      %v7949 = vpop.f32.mrb[0].mxu0
      %7950 = vmatprep.mubr.f32.mxu0 0.0
      %7951 = vmatmul.mubr.f32.gmra.mrb[0].mxu0 %v7858
      %v7952 = vpop.f32.mrb[0].mxu0
      %v7953 = vadd.f32 0.0, %v7952
      %v7954 = vpop.f32.mrb[0].mxu0
      %7955 = vmatprep.mubr.f32.mxu0 0.0
      %7956 = vmatmul.mubr.f32.gmra.mrb[0].mxu0 %v7859
      %v7957 = vpop.f32.mrb[0].mxu0
      %v7958 = vadd.f32 0.0, %v7957
      %v7959 = vpop.f32.mrb[0].mxu0
      %7960 = vmatprep.mubr.f32.mxu0 0.0
      %7961 = vmatmul.mubr.f32.gmra.mrb[0].mxu0 %v7860
      %v7962 = vpop.f32.mrb[0].mxu0
      %v7963 = vadd.f32 0.0, %v7962
      %v7964 = vpop.f32.mrb[0].mxu0
      %7965 = vmatprep.mubr.f32.mxu0 0.0
      %7966 = vmatmul.mubr.f32.gmra.mrb[0].mxu0 %v7861
      %v7967 = vpop.f32.mrb[0].mxu0
      %v7968 = vadd.f32 0.0, %v7967
      %v7969 = vpop.f32.mrb[0].mxu0
      %7970 = vmatprep.mubr.f32.mxu0 0.0
      %7971 = vmatmul.mubr.f32.gmra.mrb[0].mxu0 %v7862
      %v7972 = vpop.f32.mrb[0].mxu0
      %v7973 = vadd.f32 0.0, %v7972
      %v7974 = vpop.f32.mrb[0].mxu0
      %7975 = vmatprep.mubr.f32.mxu0 0.0
      %7976 = vmatmul.mubr.f32.gmra.mrb[0].mxu0 %v7863
      %v7977 = vpop.f32.mrb[0].mxu0
      %v7978 = vadd.f32 0.0, %v7977
      %v7979 = vpop.f32.mrb[0].mxu0
      %7980 = vmatprep.mubr.f32.mxu0 0.0
      %7981 = vmatmul.mubr.f32.gmra.mrb[0].mxu0 %v7864
      %v7982 = vpop.f32.mrb[0].mxu0
      %v7983 = vadd.f32 0.0, %v7982
      %v7984 = vpop.f32.mrb[0].mxu0
      %7985 = vmatprep.mubr.f32.mxu0 0.0
      %7986 = vmatmul.mubr.f32.gmra.mrb[0].mxu0 %v7865
      %v7987 = vpop.f32.mrb[0].mxu0
      %v7988 = vadd.f32 0.0, %v7987
      %v7989 = vpop.f32.mrb[0].mxu0
      %7990 = vmatprep.mubr.f32.mxu0 0.0
      %7991 = vmatmul.mubr.f32.gmra.mrb[0].mxu0 %v7866
      %v7992 = vpop.f32.mrb[0].mxu0
      %v7993 = vadd.f32 0.0, %v7992
      %v7994 = vpop.f32.mrb[0].mxu0
      %7995 = vmatprep.mubr.f32.mxu0 0.0
      %7996 = vmatmul.mubr.f32.gmra.mrb[0].mxu0 %v7867
      %v7997 = vpop.f32.mrb[0].mxu0
      %v7998 = vadd.f32 0.0, %v7997
      %v7999 = vpop.f32.mrb[0].mxu0
      %8000 = vmatprep.mubr.f32.mxu0 0.0
      %8001 = vmatmul.mubr.f32.gmra.mrb[0].mxu0 %v7868
      %v8002 = vpop.f32.mrb[0].mxu0
      %v8003 = vadd.f32 0.0, %v8002
      %v8004 = vpop.f32.mrb[0].mxu0
      %8005 = vmatprep.mubr.f32.mxu0 0.0
      %8006 = vmatmul.mubr.f32.gmra.mrb[0].mxu0 %v7869
      %v8007 = vpop.f32.mrb[0].mxu0
      %v8008 = vadd.f32 0.0, %v8007
      %v8009 = vpop.f32.mrb[0].mxu0
      %8010 = vmatprep.mubr.f32.mxu0 0.0
      %8011 = vmatmul.mubr.f32.gmra.mrb[0].mxu0 %v7870
      %v8012 = vpop.f32.mrb[0].mxu0
      %v8013 = vadd.f32 0.0, %v8012
      %v8014 = vpop.f32.mrb[0].mxu0
      %8015 = vdwg.mxu0
      %v8016 = vsel %vm595, %v7938, 0.0
      %v8017 = vsel %vm595, %v7943, 0.0
      %v8018 = vsel %vm595, %v7948, 0.0
      %v8019 = vsel %vm595, %v7953, 0.0
      %v8020 = vsel %vm595, %v7958, 0.0
      %v8021 = vsel %vm595, %v7963, 0.0
      %v8022 = vsel %vm595, %v7968, 0.0
      %v8023 = vsel %vm595, %v7973, 0.0
      %v8024 = vsel %vm595, %v7978, 0.0
      %v8025 = vsel %vm595, %v7983, 0.0
      %v8026 = vsel %vm595, %v7988, 0.0
      %v8027 = vsel %vm595, %v7993, 0.0
      %v8028 = vsel %vm595, %v7998, 0.0
      %v8029 = vsel %vm595, %v8003, 0.0
      %v8030 = vsel %vm595, %v8008, 0.0
      %v8031 = vsel %vm595, %v8013, 0.0
      %v8032 = vsel %vm612, %v8016, 0.0
      %8033 = vadd.xlane.f32.xlu0 %v8032
      %v8034 = vpop.xlane.xlu0 %8033
      %v8035 = vsel %vm612, %v8017, 0.0
      %8036 = vadd.xlane.f32.xlu0 %v8035
      %v8037 = vpop.xlane.xlu0 %8036
      %v8038 = vsel %vm612, %v8018, 0.0
      %8039 = vadd.xlane.f32.xlu0 %v8038
      %v8040 = vpop.xlane.xlu0 %8039
      %v8041 = vsel %vm612, %v8019, 0.0
      %8042 = vadd.xlane.f32.xlu0 %v8041
      %v8043 = vpop.xlane.xlu0 %8042
      %v8044 = vsel %vm612, %v8020, 0.0
      %8045 = vadd.xlane.f32.xlu0 %v8044
      %v8046 = vpop.xlane.xlu0 %8045
      %v8047 = vsel %vm612, %v8021, 0.0
      %8048 = vadd.xlane.f32.xlu0 %v8047
      %v8049 = vpop.xlane.xlu0 %8048
      %v8050 = vsel %vm612, %v8022, 0.0
      %8051 = vadd.xlane.f32.xlu0 %v8050
      %v8052 = vpop.xlane.xlu0 %8051
      %v8053 = vsel %vm612, %v8023, 0.0
      %8054 = vadd.xlane.f32.xlu0 %v8053
      %v8055 = vpop.xlane.xlu0 %8054
      %v8056 = vsel %vm612, %v8024, 0.0
      %8057 = vadd.xlane.f32.xlu0 %v8056
      %v8058 = vpop.xlane.xlu0 %8057
      %v8059 = vsel %vm612, %v8025, 0.0
      %8060 = vadd.xlane.f32.xlu0 %v8059
      %v8061 = vpop.xlane.xlu0 %8060
      %v8062 = vsel %vm612, %v8026, 0.0
      %8063 = vadd.xlane.f32.xlu0 %v8062
      %v8064 = vpop.xlane.xlu0 %8063
      %v8065 = vsel %vm612, %v8027, 0.0
      %8066 = vadd.xlane.f32.xlu0 %v8065
      %v8067 = vpop.xlane.xlu0 %8066
      %v8068 = vsel %vm612, %v8028, 0.0
      %8069 = vadd.xlane.f32.xlu0 %v8068
      %v8070 = vpop.xlane.xlu0 %8069
      %v8071 = vsel %vm612, %v8029, 0.0
      %8072 = vadd.xlane.f32.xlu0 %v8071
      %v8073 = vpop.xlane.xlu0 %8072
      %v8074 = vsel %vm612, %v8030, 0.0
      %8075 = vadd.xlane.f32.xlu0 %v8074
      %v8076 = vpop.xlane.xlu0 %8075
      %v8077 = vsel %vm612, %v8031, 0.0
      %8078 = vadd.xlane.f32.xlu0 %v8077
      %v8079 = vpop.xlane.xlu0 %8078
      %v8080 = vsel %vm661, %v7938, 0.0
      %v8081 = vsel %vm661, %v7943, 0.0
      %v8082 = vsel %vm661, %v7948, 0.0
      %v8083 = vsel %vm661, %v7953, 0.0
      %v8084 = vsel %vm661, %v7958, 0.0
      %v8085 = vsel %vm661, %v7963, 0.0
      %v8086 = vsel %vm661, %v7968, 0.0
      %v8087 = vsel %vm661, %v7973, 0.0
      %v8088 = vsel %vm661, %v7978, 0.0
      %v8089 = vsel %vm661, %v7983, 0.0
      %v8090 = vsel %vm661, %v7988, 0.0
      %v8091 = vsel %vm661, %v7993, 0.0
      %v8092 = vsel %vm661, %v7998, 0.0
      %v8093 = vsel %vm661, %v8003, 0.0
      %v8094 = vsel %vm661, %v8008, 0.0
      %v8095 = vsel %vm661, %v8013, 0.0
      %v8096 = vsel %vm612, %v8080, 0.0
      %8097 = vadd.xlane.f32.xlu0 %v8096
      %v8098 = vpop.xlane.xlu0 %8097
      %v8099 = vsel %vm612, %v8081, 0.0
      %8100 = vadd.xlane.f32.xlu0 %v8099
      %v8101 = vpop.xlane.xlu0 %8100
      %v8102 = vsel %vm612, %v8082, 0.0
      %8103 = vadd.xlane.f32.xlu0 %v8102
      %v8104 = vpop.xlane.xlu0 %8103
      %v8105 = vsel %vm612, %v8083, 0.0
      %8106 = vadd.xlane.f32.xlu0 %v8105
      %v8107 = vpop.xlane.xlu0 %8106
      %v8108 = vsel %vm612, %v8084, 0.0
      %8109 = vadd.xlane.f32.xlu0 %v8108
      %v8110 = vpop.xlane.xlu0 %8109
      %v8111 = vsel %vm612, %v8085, 0.0
      %8112 = vadd.xlane.f32.xlu0 %v8111
      %v8113 = vpop.xlane.xlu0 %8112
      %v8114 = vsel %vm612, %v8086, 0.0
      %8115 = vadd.xlane.f32.xlu0 %v8114
      %v8116 = vpop.xlane.xlu0 %8115
      %v8117 = vsel %vm612, %v8087, 0.0
      %8118 = vadd.xlane.f32.xlu0 %v8117
      %v8119 = vpop.xlane.xlu0 %8118
      %v8120 = vsel %vm612, %v8088, 0.0
      %8121 = vadd.xlane.f32.xlu0 %v8120
      %v8122 = vpop.xlane.xlu0 %8121
      %v8123 = vsel %vm612, %v8089, 0.0
      %8124 = vadd.xlane.f32.xlu0 %v8123
      %v8125 = vpop.xlane.xlu0 %8124
      %v8126 = vsel %vm612, %v8090, 0.0
      %8127 = vadd.xlane.f32.xlu0 %v8126
      %v8128 = vpop.xlane.xlu0 %8127
      %v8129 = vsel %vm612, %v8091, 0.0
      %8130 = vadd.xlane.f32.xlu0 %v8129
      %v8131 = vpop.xlane.xlu0 %8130
      %v8132 = vsel %vm612, %v8092, 0.0
      %8133 = vadd.xlane.f32.xlu0 %v8132
      %v8134 = vpop.xlane.xlu0 %8133
      %v8135 = vsel %vm612, %v8093, 0.0
      %8136 = vadd.xlane.f32.xlu0 %v8135
      %v8137 = vpop.xlane.xlu0 %8136
      %v8138 = vsel %vm612, %v8094, 0.0
      %8139 = vadd.xlane.f32.xlu0 %v8138
      %v8140 = vpop.xlane.xlu0 %8139
      %v8141 = vsel %vm612, %v8095, 0.0
      %8142 = vadd.xlane.f32.xlu0 %v8141
      %v8143 = vpop.xlane.xlu0 %8142
      %v8144 = vsel %vm726, %v7938, 0.0
      %v8145 = vsel %vm726, %v7943, 0.0
      %v8146 = vsel %vm726, %v7948, 0.0
      %v8147 = vsel %vm726, %v7953, 0.0
      %v8148 = vsel %vm726, %v7958, 0.0
      %v8149 = vsel %vm726, %v7963, 0.0
      %v8150 = vsel %vm726, %v7968, 0.0
      %v8151 = vsel %vm726, %v7973, 0.0
      %v8152 = vsel %vm726, %v7978, 0.0
      %v8153 = vsel %vm726, %v7983, 0.0
      %v8154 = vsel %vm726, %v7988, 0.0
      %v8155 = vsel %vm726, %v7993, 0.0
      %v8156 = vsel %vm726, %v7998, 0.0
      %v8157 = vsel %vm726, %v8003, 0.0
      %v8158 = vsel %vm726, %v8008, 0.0
      %v8159 = vsel %vm726, %v8013, 0.0
      %v8160 = vsel %vm612, %v8144, 0.0
      %8161 = vadd.xlane.f32.xlu0 %v8160
      %v8162 = vpop.xlane.xlu0 %8161
      %v8163 = vsel %vm612, %v8145, 0.0
      %8164 = vadd.xlane.f32.xlu0 %v8163
      %v8165 = vpop.xlane.xlu0 %8164
      %v8166 = vsel %vm612, %v8146, 0.0
      %8167 = vadd.xlane.f32.xlu0 %v8166
      %v8168 = vpop.xlane.xlu0 %8167
      %v8169 = vsel %vm612, %v8147, 0.0
      %8170 = vadd.xlane.f32.xlu0 %v8169
      %v8171 = vpop.xlane.xlu0 %8170
      %v8172 = vsel %vm612, %v8148, 0.0
      %8173 = vadd.xlane.f32.xlu0 %v8172
      %v8174 = vpop.xlane.xlu0 %8173
      %v8175 = vsel %vm612, %v8149, 0.0
      %8176 = vadd.xlane.f32.xlu0 %v8175
      %v8177 = vpop.xlane.xlu0 %8176
      %v8178 = vsel %vm612, %v8150, 0.0
      %8179 = vadd.xlane.f32.xlu0 %v8178
      %v8180 = vpop.xlane.xlu0 %8179
      %v8181 = vsel %vm612, %v8151, 0.0
      %8182 = vadd.xlane.f32.xlu0 %v8181
      %v8183 = vpop.xlane.xlu0 %8182
      %v8184 = vsel %vm612, %v8152, 0.0
      %8185 = vadd.xlane.f32.xlu0 %v8184
      %v8186 = vpop.xlane.xlu0 %8185
      %v8187 = vsel %vm612, %v8153, 0.0
      %8188 = vadd.xlane.f32.xlu0 %v8187
      %v8189 = vpop.xlane.xlu0 %8188
      %v8190 = vsel %vm612, %v8154, 0.0
      %8191 = vadd.xlane.f32.xlu0 %v8190
      %v8192 = vpop.xlane.xlu0 %8191
      %v8193 = vsel %vm612, %v8155, 0.0
      %8194 = vadd.xlane.f32.xlu0 %v8193
      %v8195 = vpop.xlane.xlu0 %8194
      %v8196 = vsel %vm612, %v8156, 0.0
      %8197 = vadd.xlane.f32.xlu0 %v8196
      %v8198 = vpop.xlane.xlu0 %8197
      %v8199 = vsel %vm612, %v8157, 0.0
      %8200 = vadd.xlane.f32.xlu0 %v8199
      %v8201 = vpop.xlane.xlu0 %8200
      %v8202 = vsel %vm612, %v8158, 0.0
      %8203 = vadd.xlane.f32.xlu0 %v8202
      %v8204 = vpop.xlane.xlu0 %8203
      %v8205 = vsel %vm612, %v8159, 0.0
      %8206 = vadd.xlane.f32.xlu0 %v8205
      %v8207 = vpop.xlane.xlu0 %8206
      %v8208 = vsub.f32 %v615, %v8034
      %v8209 = vsub.f32 %v618, %v8037
      %v8210 = vsub.f32 %v621, %v8040
      %v8211 = vsub.f32 %v624, %v8043
      %v8212 = vsub.f32 %v627, %v8046
      %v8213 = vsub.f32 %v630, %v8049
      %v8214 = vsub.f32 %v633, %v8052
      %v8215 = vsub.f32 %v636, %v8055
      %v8216 = vsub.f32 %v639, %v8058
      %v8217 = vsub.f32 %v642, %v8061
      %v8218 = vsub.f32 %v645, %v8064
      %v8219 = vsub.f32 %v648, %v8067
      %v8220 = vsub.f32 %v651, %v8070
      %v8221 = vsub.f32 %v654, %v8073
      %v8222 = vsub.f32 %v657, %v8076
      %v8223 = vsub.f32 %v660, %v8079
      %v8224 = vsub.f32 %v680, %v8098
      %v8225 = vsub.f32 %v683, %v8101
      %v8226 = vsub.f32 %v686, %v8104
      %v8227 = vsub.f32 %v689, %v8107
      %v8228 = vsub.f32 %v692, %v8110
      %v8229 = vsub.f32 %v695, %v8113
      %v8230 = vsub.f32 %v698, %v8116
      %v8231 = vsub.f32 %v701, %v8119
      %v8232 = vsub.f32 %v704, %v8122
      %v8233 = vsub.f32 %v707, %v8125
      %v8234 = vsub.f32 %v710, %v8128
      %v8235 = vsub.f32 %v713, %v8131
      %v8236 = vsub.f32 %v716, %v8134
      %v8237 = vsub.f32 %v719, %v8137
      %v8238 = vsub.f32 %v722, %v8140
      %v8239 = vsub.f32 %v725, %v8143
      %v8240 = vsub.f32 %v745, %v8162
      %v8241 = vsub.f32 %v748, %v8165
      %v8242 = vsub.f32 %v751, %v8168
      %v8243 = vsub.f32 %v754, %v8171
      %v8244 = vsub.f32 %v757, %v8174
      %v8245 = vsub.f32 %v760, %v8177
      %v8246 = vsub.f32 %v763, %v8180
      %v8247 = vsub.f32 %v766, %v8183
      %v8248 = vsub.f32 %v769, %v8186
      %v8249 = vsub.f32 %v772, %v8189
      %v8250 = vsub.f32 %v775, %v8192
      %v8251 = vsub.f32 %v778, %v8195
      %v8252 = vsub.f32 %v781, %v8198
      %v8253 = vsub.f32 %v784, %v8201
      %v8254 = vsub.f32 %v787, %v8204
      %v8255 = vsub.f32 %v790, %v8207
      %v8256 = vmul.f32 %v8208, %v8208
      %v8257 = vmul.f32 %v8209, %v8209
      %v8258 = vmul.f32 %v8210, %v8210
      %v8259 = vmul.f32 %v8211, %v8211
      %v8260 = vmul.f32 %v8212, %v8212
      %v8261 = vmul.f32 %v8213, %v8213
      %v8262 = vmul.f32 %v8214, %v8214
      %v8263 = vmul.f32 %v8215, %v8215
      %v8264 = vmul.f32 %v8216, %v8216
      %v8265 = vmul.f32 %v8217, %v8217
      %v8266 = vmul.f32 %v8218, %v8218
      %v8267 = vmul.f32 %v8219, %v8219
      %v8268 = vmul.f32 %v8220, %v8220
      %v8269 = vmul.f32 %v8221, %v8221
      %v8270 = vmul.f32 %v8222, %v8222
      %v8271 = vmul.f32 %v8223, %v8223
      %v8272 = vmul.f32 %v8224, %v8224
      %v8273 = vmul.f32 %v8225, %v8225
      %v8274 = vmul.f32 %v8226, %v8226
      %v8275 = vmul.f32 %v8227, %v8227
      %v8276 = vmul.f32 %v8228, %v8228
      %v8277 = vmul.f32 %v8229, %v8229
      %v8278 = vmul.f32 %v8230, %v8230
      %v8279 = vmul.f32 %v8231, %v8231
      %v8280 = vmul.f32 %v8232, %v8232
      %v8281 = vmul.f32 %v8233, %v8233
      %v8282 = vmul.f32 %v8234, %v8234
      %v8283 = vmul.f32 %v8235, %v8235
      %v8284 = vmul.f32 %v8236, %v8236
      %v8285 = vmul.f32 %v8237, %v8237
      %v8286 = vmul.f32 %v8238, %v8238
      %v8287 = vmul.f32 %v8239, %v8239
      %v8288 = vadd.f32 %v8256, %v8272
      %v8289 = vadd.f32 %v8257, %v8273
      %v8290 = vadd.f32 %v8258, %v8274
      %v8291 = vadd.f32 %v8259, %v8275
      %v8292 = vadd.f32 %v8260, %v8276
      %v8293 = vadd.f32 %v8261, %v8277
      %v8294 = vadd.f32 %v8262, %v8278
      %v8295 = vadd.f32 %v8263, %v8279
      %v8296 = vadd.f32 %v8264, %v8280
      %v8297 = vadd.f32 %v8265, %v8281
      %v8298 = vadd.f32 %v8266, %v8282
      %v8299 = vadd.f32 %v8267, %v8283
      %v8300 = vadd.f32 %v8268, %v8284
      %v8301 = vadd.f32 %v8269, %v8285
      %v8302 = vadd.f32 %v8270, %v8286
      %v8303 = vadd.f32 %v8271, %v8287
      %v8304 = vmul.f32 %v8240, %v8240
      %v8305 = vmul.f32 %v8241, %v8241
      %v8306 = vmul.f32 %v8242, %v8242
      %v8307 = vmul.f32 %v8243, %v8243
      %v8308 = vmul.f32 %v8244, %v8244
      %v8309 = vmul.f32 %v8245, %v8245
      %v8310 = vmul.f32 %v8246, %v8246
      %v8311 = vmul.f32 %v8247, %v8247
      %v8312 = vmul.f32 %v8248, %v8248
      %v8313 = vmul.f32 %v8249, %v8249
      %v8314 = vmul.f32 %v8250, %v8250
      %v8315 = vmul.f32 %v8251, %v8251
      %v8316 = vmul.f32 %v8252, %v8252
      %v8317 = vmul.f32 %v8253, %v8253
      %v8318 = vmul.f32 %v8254, %v8254
      %v8319 = vmul.f32 %v8255, %v8255
      %v8320 = vadd.f32 %v8288, %v8304
      %v8321 = vadd.f32 %v8289, %v8305
      %v8322 = vadd.f32 %v8290, %v8306
      %v8323 = vadd.f32 %v8291, %v8307
      %v8324 = vadd.f32 %v8292, %v8308
      %v8325 = vadd.f32 %v8293, %v8309
      %v8326 = vadd.f32 %v8294, %v8310
      %v8327 = vadd.f32 %v8295, %v8311
      %v8328 = vadd.f32 %v8296, %v8312
      %v8329 = vadd.f32 %v8297, %v8313
      %v8330 = vadd.f32 %v8298, %v8314
      %v8331 = vadd.f32 %v8299, %v8315
      %v8332 = vadd.f32 %v8300, %v8316
      %v8333 = vadd.f32 %v8301, %v8317
      %v8334 = vadd.f32 %v8302, %v8318
      %v8335 = vadd.f32 %v8303, %v8319
      %v8336 = vrsqrt.pop %v8320
      %v8337 = vmul.f32 %v8320, %v8336
      %vm8338 = vcmp.eq.f32.partialorder %v8320, inf
      %v8339 = vsel %vm8338, %v8320, %v8337
      %vm8340 = vcmp.eq.f32.partialorder %v8320, 0.0
      %v8341 = vand.u32 %v8320, 2147483648
      %v8342 = vsel %vm8340, %v8341, %v8339
      %v8343 = vrsqrt.pop %v8321
      %v8344 = vmul.f32 %v8321, %v8343
      %vm8345 = vcmp.eq.f32.partialorder %v8321, inf
      %v8346 = vsel %vm8345, %v8321, %v8344
      %vm8347 = vcmp.eq.f32.partialorder %v8321, 0.0
      %v8348 = vand.u32 %v8321, 2147483648
      %v8349 = vsel %vm8347, %v8348, %v8346
      %v8350 = vrsqrt.pop %v8322
      %v8351 = vmul.f32 %v8322, %v8350
      %vm8352 = vcmp.eq.f32.partialorder %v8322, inf
      %v8353 = vsel %vm8352, %v8322, %v8351
      %vm8354 = vcmp.eq.f32.partialorder %v8322, 0.0
      %v8355 = vand.u32 %v8322, 2147483648
      %v8356 = vsel %vm8354, %v8355, %v8353
      %v8357 = vrsqrt.pop %v8323
      %v8358 = vmul.f32 %v8323, %v8357
      %vm8359 = vcmp.eq.f32.partialorder %v8323, inf
      %v8360 = vsel %vm8359, %v8323, %v8358
      %vm8361 = vcmp.eq.f32.partialorder %v8323, 0.0
      %v8362 = vand.u32 %v8323, 2147483648
      %v8363 = vsel %vm8361, %v8362, %v8360
      %v8364 = vrsqrt.pop %v8324
      %v8365 = vmul.f32 %v8324, %v8364
      %vm8366 = vcmp.eq.f32.partialorder %v8324, inf
      %v8367 = vsel %vm8366, %v8324, %v8365
      %vm8368 = vcmp.eq.f32.partialorder %v8324, 0.0
      %v8369 = vand.u32 %v8324, 2147483648
      %v8370 = vsel %vm8368, %v8369, %v8367
      %v8371 = vrsqrt.pop %v8325
      %v8372 = vmul.f32 %v8325, %v8371
      %vm8373 = vcmp.eq.f32.partialorder %v8325, inf
      %v8374 = vsel %vm8373, %v8325, %v8372
      %vm8375 = vcmp.eq.f32.partialorder %v8325, 0.0
      %v8376 = vand.u32 %v8325, 2147483648
      %v8377 = vsel %vm8375, %v8376, %v8374
      %v8378 = vrsqrt.pop %v8326
      %v8379 = vmul.f32 %v8326, %v8378
      %vm8380 = vcmp.eq.f32.partialorder %v8326, inf
      %v8381 = vsel %vm8380, %v8326, %v8379
      %vm8382 = vcmp.eq.f32.partialorder %v8326, 0.0
      %v8383 = vand.u32 %v8326, 2147483648
      %v8384 = vsel %vm8382, %v8383, %v8381
      %v8385 = vrsqrt.pop %v8327
      %v8386 = vmul.f32 %v8327, %v8385
      %vm8387 = vcmp.eq.f32.partialorder %v8327, inf
      %v8388 = vsel %vm8387, %v8327, %v8386
      %vm8389 = vcmp.eq.f32.partialorder %v8327, 0.0
      %v8390 = vand.u32 %v8327, 2147483648
      %v8391 = vsel %vm8389, %v8390, %v8388
      %v8392 = vrsqrt.pop %v8328
      %v8393 = vmul.f32 %v8328, %v8392
      %vm8394 = vcmp.eq.f32.partialorder %v8328, inf
      %v8395 = vsel %vm8394, %v8328, %v8393
      %vm8396 = vcmp.eq.f32.partialorder %v8328, 0.0
      %v8397 = vand.u32 %v8328, 2147483648
      %v8398 = vsel %vm8396, %v8397, %v8395
      %v8399 = vrsqrt.pop %v8329
      %v8400 = vmul.f32 %v8329, %v8399
      %vm8401 = vcmp.eq.f32.partialorder %v8329, inf
      %v8402 = vsel %vm8401, %v8329, %v8400
      %vm8403 = vcmp.eq.f32.partialorder %v8329, 0.0
      %v8404 = vand.u32 %v8329, 2147483648
      %v8405 = vsel %vm8403, %v8404, %v8402
      %v8406 = vrsqrt.pop %v8330
      %v8407 = vmul.f32 %v8330, %v8406
      %vm8408 = vcmp.eq.f32.partialorder %v8330, inf
      %v8409 = vsel %vm8408, %v8330, %v8407
      %vm8410 = vcmp.eq.f32.partialorder %v8330, 0.0
      %v8411 = vand.u32 %v8330, 2147483648
      %v8412 = vsel %vm8410, %v8411, %v8409
      %v8413 = vrsqrt.pop %v8331
      %v8414 = vmul.f32 %v8331, %v8413
      %vm8415 = vcmp.eq.f32.partialorder %v8331, inf
      %v8416 = vsel %vm8415, %v8331, %v8414
      %vm8417 = vcmp.eq.f32.partialorder %v8331, 0.0
      %v8418 = vand.u32 %v8331, 2147483648
      %v8419 = vsel %vm8417, %v8418, %v8416
      %v8420 = vrsqrt.pop %v8332
      %v8421 = vmul.f32 %v8332, %v8420
      %vm8422 = vcmp.eq.f32.partialorder %v8332, inf
      %v8423 = vsel %vm8422, %v8332, %v8421
      %vm8424 = vcmp.eq.f32.partialorder %v8332, 0.0
      %v8425 = vand.u32 %v8332, 2147483648
      %v8426 = vsel %vm8424, %v8425, %v8423
      %v8427 = vrsqrt.pop %v8333
      %v8428 = vmul.f32 %v8333, %v8427
      %vm8429 = vcmp.eq.f32.partialorder %v8333, inf
      %v8430 = vsel %vm8429, %v8333, %v8428
      %vm8431 = vcmp.eq.f32.partialorder %v8333, 0.0
      %v8432 = vand.u32 %v8333, 2147483648
      %v8433 = vsel %vm8431, %v8432, %v8430
      %v8434 = vrsqrt.pop %v8334
      %v8435 = vmul.f32 %v8334, %v8434
      %vm8436 = vcmp.eq.f32.partialorder %v8334, inf
      %v8437 = vsel %vm8436, %v8334, %v8435
      %vm8438 = vcmp.eq.f32.partialorder %v8334, 0.0
      %v8439 = vand.u32 %v8334, 2147483648
      %v8440 = vsel %vm8438, %v8439, %v8437
      %v8441 = vrsqrt.pop %v8335
      %v8442 = vmul.f32 %v8335, %v8441
      %vm8443 = vcmp.eq.f32.partialorder %v8335, inf
      %v8444 = vsel %vm8443, %v8335, %v8442
      %vm8445 = vcmp.eq.f32.partialorder %v8335, 0.0
      %v8446 = vand.u32 %v8335, 2147483648
      %v8447 = vsel %vm8445, %v8446, %v8444
      %vm8448 = vcmp.eq.s32.totalorder %v577, 70
      %v8449 = vsel %vm8448, %v8342, %v7567
      %v8450 = vsel %vm8448, %v8349, %v7568
      %v8451 = vsel %vm8448, %v8356, %v7569
      %v8452 = vsel %vm8448, %v8363, %v7570
      %v8453 = vsel %vm8448, %v8370, %v7571
      %v8454 = vsel %vm8448, %v8377, %v7572
      %v8455 = vsel %vm8448, %v8384, %v7573
      %v8456 = vsel %vm8448, %v8391, %v7574
      %v8457 = vsel %vm8448, %v8398, %v7575
      %v8458 = vsel %vm8448, %v8405, %v7576
      %v8459 = vsel %vm8448, %v8412, %v7577
      %v8460 = vsel %vm8448, %v8419, %v7578
      %v8461 = vsel %vm8448, %v8426, %v7579
      %v8462 = vsel %vm8448, %v8433, %v7580
      %v8463 = vsel %vm8448, %v8440, %v7581
      %v8464 = vsel %vm8448, %v8447, %v7582
      %vm8465 = vcmp.eq.s32.totalorder %v577, 71
      %v8466 = vsel %vm8465, %v8208, %v8449
      %v8467 = vsel %vm8465, %v8209, %v8450
      %v8468 = vsel %vm8465, %v8210, %v8451
      %v8469 = vsel %vm8465, %v8211, %v8452
      %v8470 = vsel %vm8465, %v8212, %v8453
      %v8471 = vsel %vm8465, %v8213, %v8454
      %v8472 = vsel %vm8465, %v8214, %v8455
      %v8473 = vsel %vm8465, %v8215, %v8456
      %v8474 = vsel %vm8465, %v8216, %v8457
      %v8475 = vsel %vm8465, %v8217, %v8458
      %v8476 = vsel %vm8465, %v8218, %v8459
      %v8477 = vsel %vm8465, %v8219, %v8460
      %v8478 = vsel %vm8465, %v8220, %v8461
      %v8479 = vsel %vm8465, %v8221, %v8462
      %v8480 = vsel %vm8465, %v8222, %v8463
      %v8481 = vsel %vm8465, %v8223, %v8464
      %vm8482 = vcmp.eq.s32.totalorder %v577, 72
      %v8483 = vsel %vm8482, %v8224, %v8466
      %v8484 = vsel %vm8482, %v8225, %v8467
      %v8485 = vsel %vm8482, %v8226, %v8468
      %v8486 = vsel %vm8482, %v8227, %v8469
      %v8487 = vsel %vm8482, %v8228, %v8470
      %v8488 = vsel %vm8482, %v8229, %v8471
      %v8489 = vsel %vm8482, %v8230, %v8472
      %v8490 = vsel %vm8482, %v8231, %v8473
      %v8491 = vsel %vm8482, %v8232, %v8474
      %v8492 = vsel %vm8482, %v8233, %v8475
      %v8493 = vsel %vm8482, %v8234, %v8476
      %v8494 = vsel %vm8482, %v8235, %v8477
      %v8495 = vsel %vm8482, %v8236, %v8478
      %v8496 = vsel %vm8482, %v8237, %v8479
      %v8497 = vsel %vm8482, %v8238, %v8480
      %v8498 = vsel %vm8482, %v8239, %v8481
      %vm8499 = vcmp.eq.s32.totalorder %v577, 73
      %v8500 = vsel %vm8499, %v8240, %v8483
      %v8501 = vsel %vm8499, %v8241, %v8484
      %v8502 = vsel %vm8499, %v8242, %v8485
      %v8503 = vsel %vm8499, %v8243, %v8486
      %v8504 = vsel %vm8499, %v8244, %v8487
      %v8505 = vsel %vm8499, %v8245, %v8488
      %v8506 = vsel %vm8499, %v8246, %v8489
      %v8507 = vsel %vm8499, %v8247, %v8490
      %v8508 = vsel %vm8499, %v8248, %v8491
      %v8509 = vsel %vm8499, %v8249, %v8492
      %v8510 = vsel %vm8499, %v8250, %v8493
      %v8511 = vsel %vm8499, %v8251, %v8494
      %v8512 = vsel %vm8499, %v8252, %v8495
      %v8513 = vsel %vm8499, %v8253, %v8496
      %v8514 = vsel %vm8499, %v8254, %v8497
      %v8515 = vsel %vm8499, %v8255, %v8498
      %vm8516 = vcmp.eq.s32.totalorder %v577, 77
      %v8517 = vsel %vm8516, %v8034, %v8500
      %v8518 = vsel %vm8516, %v8037, %v8501
      %v8519 = vsel %vm8516, %v8040, %v8502
      %v8520 = vsel %vm8516, %v8043, %v8503
      %v8521 = vsel %vm8516, %v8046, %v8504
      %v8522 = vsel %vm8516, %v8049, %v8505
      %v8523 = vsel %vm8516, %v8052, %v8506
      %v8524 = vsel %vm8516, %v8055, %v8507
      %v8525 = vsel %vm8516, %v8058, %v8508
      %v8526 = vsel %vm8516, %v8061, %v8509
      %v8527 = vsel %vm8516, %v8064, %v8510
      %v8528 = vsel %vm8516, %v8067, %v8511
      %v8529 = vsel %vm8516, %v8070, %v8512
      %v8530 = vsel %vm8516, %v8073, %v8513
      %v8531 = vsel %vm8516, %v8076, %v8514
      %v8532 = vsel %vm8516, %v8079, %v8515
      %vm8533 = vcmp.eq.s32.totalorder %v577, 78
      %v8534 = vsel %vm8533, %v8098, %v8517
      %v8535 = vsel %vm8533, %v8101, %v8518
      %v8536 = vsel %vm8533, %v8104, %v8519
      %v8537 = vsel %vm8533, %v8107, %v8520
      %v8538 = vsel %vm8533, %v8110, %v8521
      %v8539 = vsel %vm8533, %v8113, %v8522
      %v8540 = vsel %vm8533, %v8116, %v8523
      %v8541 = vsel %vm8533, %v8119, %v8524
      %v8542 = vsel %vm8533, %v8122, %v8525
      %v8543 = vsel %vm8533, %v8125, %v8526
      %v8544 = vsel %vm8533, %v8128, %v8527
      %v8545 = vsel %vm8533, %v8131, %v8528
      %v8546 = vsel %vm8533, %v8134, %v8529
      %v8547 = vsel %vm8533, %v8137, %v8530
      %v8548 = vsel %vm8533, %v8140, %v8531
      %v8549 = vsel %vm8533, %v8143, %v8532
      %vm8550 = vcmp.eq.s32.totalorder %v577, 79
      %v8551 = vsel %vm8550, %v8162, %v8534
      %v8552 = vsel %vm8550, %v8165, %v8535
      %v8553 = vsel %vm8550, %v8168, %v8536
      %v8554 = vsel %vm8550, %v8171, %v8537
      %v8555 = vsel %vm8550, %v8174, %v8538
      %v8556 = vsel %vm8550, %v8177, %v8539
      %v8557 = vsel %vm8550, %v8180, %v8540
      %v8558 = vsel %vm8550, %v8183, %v8541
      %v8559 = vsel %vm8550, %v8186, %v8542
      %v8560 = vsel %vm8550, %v8189, %v8543
      %v8561 = vsel %vm8550, %v8192, %v8544
      %v8562 = vsel %vm8550, %v8195, %v8545
      %v8563 = vsel %vm8550, %v8198, %v8546
      %v8564 = vsel %vm8550, %v8201, %v8547
      %v8565 = vsel %vm8550, %v8204, %v8548
      %v8566 = vsel %vm8550, %v8207, %v8549
      %vm8567 = vcmask 654336
      %8568 = vst.msk [vmem:[%s226] sm:$0xff] %vm8567, %v8551
      %8569 = vst.msk [vmem:[%s226 + $0x8] sm:$0xff] %vm8567, %v8552
      %8570 = vst.msk [vmem:[%s226 + $0x10] sm:$0xff] %vm8567, %v8553
      %8571 = vst.msk [vmem:[%s226 + $0x18] sm:$0xff] %vm8567, %v8554
      %8572 = vst.msk [vmem:[%s226 + $0x20] sm:$0xff] %vm8567, %v8555
      %8573 = vst.msk [vmem:[%s226 + $0x28] sm:$0xff] %vm8567, %v8556
      %8574 = vst.msk [vmem:[%s226 + $0x30] sm:$0xff] %vm8567, %v8557
      %8575 = vst.msk [vmem:[%s226 + $0x38] sm:$0xff] %vm8567, %v8558
      %8576 = vst.msk [vmem:[%s226 + $0x40] sm:$0xff] %vm8567, %v8559
      %8577 = vst.msk [vmem:[%s226 + $0x48] sm:$0xff] %vm8567, %v8560
      %8578 = vst.msk [vmem:[%s226 + $0x50] sm:$0xff] %vm8567, %v8561
      %8579 = vst.msk [vmem:[%s226 + $0x58] sm:$0xff] %vm8567, %v8562
      %8580 = vst.msk [vmem:[%s226 + $0x60] sm:$0xff] %vm8567, %v8563
      %8581 = vst.msk [vmem:[%s226 + $0x68] sm:$0xff] %vm8567, %v8564
      %8582 = vst.msk [vmem:[%s226 + $0x70] sm:$0xff] %vm8567, %v8565
      %8583 = vst.msk [vmem:[%s226 + $0x78] sm:$0xff] %vm8567, %v8566
      %s8584 = smul.u32 16, %s19
      %p8585 = scmp.lt.s32.totalorder %s18, 1
      %s8586 = scalar_select %p8585, %s18, 1
      %p8587 = scmp.lt.s32.totalorder %s8584, 15
      %s8588 = scalar_select %p8587, %s8584, 15
      %s8589 = smul.addr %s8586, 16
      %s8590 = sadd.s32 %s8588, %s8589
      %s8591 = smul.addr %s8590, 8
      %s8592 = scalar_lea.vmem %s3, %s8591
      // Predicated region
      $region33: #{tpu_custom_call.1} parent=31 // pred_check
        %p8593 = pneg %p124
      $region34: #{tpu_custom_call.1} parent=31 // pred_check_branch
        %8595 = sbr.rel (%p8593) target = $region36
      $region35: #{tpu_custom_call.1} parent=31 // pred_region
        %s8596 = smul.u32 16, %s19
      $region36: #{tpu_custom_call.1} parent=31 // pred_fallthru
        _
    $region32: #{tpu_custom_call.1} parent=5 // pred_fallthru
      _
    %p8597 = scmp.le.s32.totalorder 2, %s9
    // Predicated region
    $region37: #{tpu_custom_call.1} parent=5 // pred_check
      %p8598 = pneg %p8597
    $region38: #{tpu_custom_call.1} parent=5 // pred_check_branch
      %8600 = sbr.rel (%p8598) target = $region40
    $region39: #{tpu_custom_call.1} parent=5 // pred_region
      %s8601 = ssub.s32 %s9, 2
      // Predicated region
      $region41: #{tpu_custom_call.1} parent=39 // pred_check
        %p8602 = pneg %p130
      $region42: #{tpu_custom_call.1} parent=39 // pred_check_branch
        %8604 = sbr.rel (%p8602) target = $region44
      $region43: #{tpu_custom_call.1} parent=39 // pred_region
        %s8605 = smul.u32 16, %s21
        %p8606 = scmp.lt.s32.totalorder %s20, 1
        %s8607 = scalar_select %p8606, %s20, 1
        %p8608 = scmp.lt.s32.totalorder %s8605, 15
        %s8609 = scalar_select %p8608, %s8605, 15
        %s8610 = smul.addr %s8607, 16
        %s8611 = sadd.s32 %s8609, %s8610
        %s8612 = smul.addr %s8611, 8
        %s8613 = scalar_lea.vmem %s3, %s8612
      $region44: #{tpu_custom_call.1} parent=39 // pred_fallthru
        _
    $region40: #{tpu_custom_call.1} parent=5 // pred_fallthru
      _
  $region6: #{tpu_custom_call.1} parent=0 // loop_footer
    %s13 = sadd.s32 1, %s9
  $region7: #{tpu_custom_call.1} parent=0 // loop_footer_branch
    %8 = sbr.rel target = $region3
  $region8: #{tpu_custom_call.1} parent=0 // loop_exit
    _

</llo_original>
